<compile_context>
chip_gen: v7x
topology: tpu7x:2x2x1
jax: 0.10.0
libtpu: 0.0.40
codegen_flags: <defaults>
</compile_context>

<pallas_src>
import functools
import math

import jax
import jax.numpy as jnp
from jax.experimental import pallas as pl
from jax.experimental.pallas import tpu as pltpu

COMPUTE_DTYPE = jnp.bfloat16          # MXU-native inputs; accumulation stays f32
VMEM_LIMIT = 64 * 1024 * 1024         # raise the 16/32 MiB scoped-VMEM default


def _compiler_params(semantics):
    return pltpu.CompilerParams(dimension_semantics=semantics,
                                vmem_limit_bytes=VMEM_LIMIT)


# ------------------------- in-kernel im2col helper ---------------------------
def _im2col_value(x, K, h_out, w_out):
    """x: (h_out+K-1, w_out+K-1, C) VMEM value -> (h_out*w_out, K*K*C) patches.

    Static slices + one lane-axis concat so the whole conv is a single big MXU
    matmul (contraction dim K*K*C instead of K*K separate C-wide dots)."""
    C = x.shape[-1]
    taps = []
    for kh in range(K):
        for kw in range(K):
            taps.append(x[kh:kh + h_out, kw:kw + w_out, :].reshape(h_out * w_out, C))
    return jnp.concatenate(taps, axis=-1)


def _pick_tile_rows(H, W, max_rows=2048):
    """Largest row tile th dividing H with th*W <= max_rows and (th*W) % 8 == 0."""
    if H * W <= max_rows:
        return H
    for th in range(H, 0, -1):
        if H % th == 0 and th * W <= max_rows and (th * W) % 8 == 0:
            return th
    return H


# ----------------------------- 3x3 conv kernel --------------------------------
def _conv3x3_kernel(W, tile_h, relu):
    K, pad = 3, 1
    cd = COMPUTE_DTYPE

    def kernel(x_ref, w_ref, b_ref, o_ref):
        t = pl.program_id(1)
        row0 = t * tile_h
        # rows [row0, row0 + tile_h + 2) of the 'same'-padded image (halo incl.)
        xt = x_ref[0, pl.ds(row0, tile_h + 2 * pad), :, :].astype(jnp.float32)
        patch = _im2col_value(xt, K, tile_h, W).astype(cd)       # (th*W, 9*Cin)
        acc = jnp.dot(patch, w_ref[...], preferred_element_type=jnp.float32)
        acc = acc + b_ref[...]
        if relu:
            acc = jnp.maximum(acc, 0.0)
        o_ref[0] = acc.astype(o_ref.dtype)

    return kernel


def conv3x3(x, w, b, *, relu=False):
    """Stride-1 'same' 3x3 conv. x: (N,H,W,Cin) NHWC, w: (3,3,Cin,Cout), b: (Cout,)."""
    N, H, W, Cin = x.shape
    K = w.shape[0]
    Cout = w.shape[-1]
    assert K == 3
    pad = 1
    xp = jnp.pad(x, ((0, 0), (pad, pad), (pad, pad), (0, 0)))
    Hp, Wp = H + 2 * pad, W + 2 * pad

    th = _pick_tile_rows(H, W)
    n_tiles = H // th

    w2 = w.reshape(K * K * Cin, Cout).astype(COMPUTE_DTYPE)
    b2 = b.reshape(1, Cout).astype(jnp.float32)

    out = pl.pallas_call(
        _conv3x3_kernel(W, th, relu),
        out_shape=jax.ShapeDtypeStruct((N, H * W, Cout), x.dtype),
        grid=(N, n_tiles),
        in_specs=[
            pl.BlockSpec((1, Hp, Wp, Cin), lambda n, t: (n, 0, 0, 0)),
            pl.BlockSpec((K * K * Cin, Cout), lambda n, t: (0, 0)),
            pl.BlockSpec((1, Cout), lambda n, t: (0, 0)),
        ],
        out_specs=pl.BlockSpec((1, th * W, Cout), lambda n, t: (n, t, 0)),
        compiler_params=_compiler_params(("parallel", "parallel")),
    )(xp, w2, b2)
    return out.reshape(N, H, W, Cout)


# --------------------------- fused ResBlock kernel -----------------------------
def _resblock_kernel(H, W, C, res_scale):
    K, pad = 3, 1
    HW = H * W
    cd = COMPUTE_DTYPE

    def kernel(x_ref, w1_ref, b1_ref, w2_ref, b2_ref, o_ref, hpad_ref):
        xv = x_ref[0, :, :, :].astype(jnp.float32)               # (Hp, Wp, C)

        # conv1 + ReLU — single big matmul, f32 accumulation
        patch1 = _im2col_value(xv, K, H, W).astype(cd)
        h = jnp.dot(patch1, w1_ref[...], preferred_element_type=jnp.float32)
        h = jnp.maximum(h + b1_ref[...], 0.0)

        # zero-padded intermediate kept in VMEM scratch (no HBM round trip)
        hpad_ref[...] = jnp.zeros_like(hpad_ref)
        hpad_ref[pad:pad + H, pad:pad + W, :] = h.reshape(H, W, C)

        # conv2 + residual: x + res_scale * body(x)
        patch2 = _im2col_value(hpad_ref[...], K, H, W).astype(cd)
        acc = jnp.dot(patch2, w2_ref[...], preferred_element_type=jnp.float32)
        acc = acc + b2_ref[...]
        resid = xv[pad:pad + H, pad:pad + W, :].reshape(HW, C)
        o_ref[0] = (resid + res_scale * acc).astype(o_ref.dtype)

    return kernel


def resblock_fused(x, bp, res_scale=1.0):
    """ops.ResBlock fused into ONE pallas_call (conv3x3 -> ReLU -> conv3x3 -> +x)."""
    N, H, W, C = x.shape
    K, pad = 3, 1
    xp = jnp.pad(x, ((0, 0), (pad, pad), (pad, pad), (0, 0)))
    Hp, Wp = H + 2 * pad, W + 2 * pad

    w1 = bp["conv1"]["w"].reshape(K * K * C, C).astype(COMPUTE_DTYPE)
    b1 = bp["conv1"]["b"].reshape(1, C).astype(jnp.float32)
    w2 = bp["conv2"]["w"].reshape(K * K * C, C).astype(COMPUTE_DTYPE)
    b2 = bp["conv2"]["b"].reshape(1, C).astype(jnp.float32)

    out = pl.pallas_call(
        _resblock_kernel(H, W, C, float(res_scale)),
        out_shape=jax.ShapeDtypeStruct((N, H * W, C), x.dtype),
        grid=(N,),
        in_specs=[
            pl.BlockSpec((1, Hp, Wp, C), lambda n: (n, 0, 0, 0)),
            pl.BlockSpec((K * K * C, C), lambda n: (0, 0)),
            pl.BlockSpec((1, C), lambda n: (0, 0)),
            pl.BlockSpec((K * K * C, C), lambda n: (0, 0)),
            pl.BlockSpec((1, C), lambda n: (0, 0)),
        ],
        out_specs=pl.BlockSpec((1, H * W, C), lambda n: (n, 0, 0)),
        scratch_shapes=[pltpu.VMEM((Hp, Wp, C), jnp.float32)],
        compiler_params=_compiler_params(("parallel",)),
    )(xp, w1, b1, w2, b2)
    return out.reshape(N, H, W, C)


# ------------------- fused cascade: concat + 1x1 conv kernel --------------------
def _cascade_kernel(P):
    cd = COMPUTE_DTYPE

    def kernel(*refs):
        x_refs = refs[:P]
        w_ref, b_ref, o_ref = refs[P], refs[P + 1], refs[P + 2]
        xcat = jnp.concatenate([r[0] for r in x_refs], axis=-1).astype(cd)
        acc = jnp.dot(xcat, w_ref[...], preferred_element_type=jnp.float32)
        acc = acc + b_ref[...]
        o_ref[0] = acc.astype(o_ref.dtype)

    return kernel


def cascade_conv1x1(parts, w, b):
    """Fused `concat(parts, channel) -> 1x1 conv`.

    The concatenated (up to 4C-channel) tensor never touches HBM: each operand is
    a separate kernel input, concatenated in VMEM and fed to one MXU matmul."""
    N, H, W, _ = parts[0].shape
    HW = H * W
    Cs = [p.shape[-1] for p in parts]
    Cin = sum(Cs)
    Cout = w.shape[-1]

    w2 = w.reshape(Cin, Cout).astype(COMPUTE_DTYPE)   # Cin ordering == concat ordering
    b2 = b.reshape(1, Cout).astype(jnp.float32)
    args = [p.reshape(N, HW, c) for p, c in zip(parts, Cs)] + [w2, b2]

    in_specs = [pl.BlockSpec((1, HW, c), lambda n: (n, 0, 0)) for c in Cs]
    in_specs += [pl.BlockSpec((Cin, Cout), lambda n: (0, 0)),
                 pl.BlockSpec((1, Cout), lambda n: (0, 0))]

    out = pl.pallas_call(
        _cascade_kernel(len(parts)),
        out_shape=jax.ShapeDtypeStruct((N, HW, Cout), parts[0].dtype),
        grid=(N,),
        in_specs=in_specs,
        out_specs=pl.BlockSpec((1, HW, Cout), lambda n: (n, 0, 0)),
        compiler_params=_compiler_params(("parallel",)),
    )(*args)
    return out.reshape(N, H, W, Cout)


# ----------------------------- layout-only glue -------------------------------
def down_block(x, s):
    # pixel-unshuffle (space-to-depth), channel-major like torch.pixel_unshuffle.
    N, H, W, C = x.shape
    x = x.reshape(N, H // s, s, W // s, s, C)
    x = x.transpose(0, 1, 3, 5, 2, 4)                  # (N, H/s, W/s, C, s, s)
    return x.reshape(N, H // s, W // s, C * s * s)


def pixel_shuffle(x, r):
    # depth-to-space, matching torch.nn.PixelShuffle channel ordering.
    # TODO(synk): fuse this permute into the upsampler conv's out BlockSpec to
    # avoid one full-resolution HBM round trip.
    N, H, W, Cr2 = x.shape
    C = Cr2 // (r * r)
    x = x.reshape(N, H, W, C, r, r)
    x = x.transpose(0, 1, 4, 2, 5, 3)                  # (N, H, r, W, r, C)
    return x.reshape(N, H * r, W * r, C)


# ----------------------------- model definition -------------------------------
class Opt:
    def __init__(self, scale, num_channels, num_groups, num_blocks):
        self.scale = scale
        self.num_channels = num_channels
        self.num_groups = num_groups
        self.num_blocks = num_blocks


def init_params(key, opt):
    C = opt.num_channels
    s = opt.scale

    def conv_p(k, K, cin, cout):
        k1, k2 = jax.random.split(k)
        return {
            "w": jax.random.normal(k1, (K, K, cin, cout), jnp.float32) * 0.05,
            "b": jax.random.normal(k2, (cout,), jnp.float32) * 0.05,
        }

    keys = iter(jax.random.split(key, 64))
    p = {}

    # MeanShift(255) is an identity 1x1 conv + bias; folded into the wrapper.
    p["head"] = conv_p(next(keys), 3, 3 * s * s, C)

    p["cs"], p["groups"] = [], []
    for ng in range(opt.num_groups):
        p["cs"].append(conv_p(next(keys), 1, C * (ng + 2), C))
        gp = {"b": [], "c": []}
        for nb in range(opt.num_blocks):
            gp["b"].append({
                "conv1": conv_p(next(keys), 3, C, C),
                "conv2": conv_p(next(keys), 3, C, C),
            })
            gp["c"].append(conv_p(next(keys), 1, C * (nb + 2), C))
        p["groups"].append(gp)

    n_stages = int(round(math.log2(s)))
    p["up"] = [conv_p(next(keys), 3, C, 4 * C) for _ in range(n_stages)]
    p["tail"] = conv_p(next(keys), 3, C, 3)
    return p


def group_forward(gp, x, num_blocks, res_scale=1.0):
    parts = [x]
    out = x
    for nb in range(num_blocks):
        b = resblock_fused(out, gp["b"][nb], res_scale)
        parts.append(b)
        out = cascade_conv1x1(parts, gp["c"][nb]["w"], gp["c"][nb]["b"])
    return out


def net_forward(params, x_nchw, opt):
    rgb_mean = 255.0 * jnp.array([0.4488, 0.4371, 0.4040], jnp.float32)

    x = jnp.transpose(x_nchw, (0, 2, 3, 1))              # NCHW -> NHWC
    x = (x - rgb_mean).astype(COMPUTE_DTYPE)             # sub_mean (identity conv folded)
    x = down_block(x, opt.scale)                         # ops.DownBlock
    x = conv3x3(x, params["head"]["w"], params["head"]["b"])   # head conv

    parts = [x]
    out = x
    for ng in range(opt.num_groups):
        g = group_forward(params["groups"][ng], out, opt.num_blocks)
        parts.append(g)
        out = cascade_conv1x1(parts, params["cs"][ng]["w"], params["cs"][ng]["b"])

    res = out + x                                        # res += x

    u = res                                              # tail: Upsampler + conv3x3
    for up_p in params["up"]:
        u = conv3x3(u, up_p["w"], up_p["b"])
        u = pixel_shuffle(u, 2)
    y = conv3x3(u, params["tail"]["w"], params["tail"]["b"])

    y = y.astype(jnp.float32) + rgb_mean                 # add_mean (folded)
    return jnp.transpose(y, (0, 3, 1, 2))                # back to NCHW


# ----------------------------------- main --------------------------------------
if __name__ == "__main__":
    opt = Opt(scale=2, num_channels=32, num_groups=2, num_blocks=2)

    key = jax.random.PRNGKey(0)
    kp, kx = jax.random.split(key)
    params = init_params(kp, opt)
    x = jax.random.uniform(kx, (2, 3, 16, 16), jnp.float32) * 255.0   # NCHW image

    fwd = jax.jit(functools.partial(net_forward, opt=opt))
    y = fwd(params, x)
    jax.block_until_ready(y)
    assert y.shape == (2, 3, 16, 16) and y.dtype == jnp.float32
    print("KERNEL_OK")
</pallas_src>

<mosaic_0001>
module attributes {stable_mosaic.version = 11 : i64} {
  func.func @kernel(%arg0: i32, %arg1: i32, %arg2: memref<1x10x10x12xbf16, #tpu.memory_space<vmem>>, %arg3: memref<108x32xbf16, #tpu.memory_space<vmem>>, %arg4: memref<1x32xf32, #tpu.memory_space<vmem>>, %arg5: memref<1x64x32xbf16, #tpu.memory_space<vmem>>) attributes {dimension_semantics = [#tpu.dimension_semantics<parallel>, #tpu.dimension_semantics<parallel>], iteration_bounds = array<i64: 2, 1>, scalar_prefetch = 0 : i64, scratch_operands = 0 : i64, tpu.core_type = #tpu.core_type<tc>, window_params = [{transform_indices = @transform_0, window_bounds = array<i64: 1, 10, 10, 12>}, {pipeline_mode = #tpu.pipeline_mode<synchronous>, transform_indices = @transform_1, window_bounds = array<i64: 108, 32>}, {pipeline_mode = #tpu.pipeline_mode<synchronous>, transform_indices = @transform_2, window_bounds = array<i64: 1, 32>}, {transform_indices = @transform_3, window_bounds = array<i64: 1, 64, 32>}]} {
    %c8_i32 = arith.constant 8 : i32
    %0 = arith.muli %arg1, %c8_i32 : i32
    %c0 = arith.constant 0 : index
    %1 = arith.index_cast %0 : i32 to index
    %c0_0 = arith.constant 0 : index
    %c0_1 = arith.constant 0 : index
    %2 = vector.load %arg2[%c0, %1, %c0_0, %c0_1] : memref<1x10x10x12xbf16, #tpu.memory_space<vmem>>, vector<1x10x10x12xbf16>
    %3 = vector.shape_cast %2 : vector<1x10x10x12xbf16> to vector<10x10x12xbf16>
    %4 = arith.extf %3 : vector<10x10x12xbf16> to vector<10x10x12xf32>
    %5 = vector.extract_strided_slice %4 {offsets = [0, 0, 0], sizes = [8, 8, 12], strides = [1, 1, 1]} : vector<10x10x12xf32> to vector<8x8x12xf32>
    %6 = vector.shape_cast %5 : vector<8x8x12xf32> to vector<64x12xf32>
    %7 = vector.extract_strided_slice %4 {offsets = [0, 1, 0], sizes = [8, 8, 12], strides = [1, 1, 1]} : vector<10x10x12xf32> to vector<8x8x12xf32>
    %8 = vector.shape_cast %7 : vector<8x8x12xf32> to vector<64x12xf32>
    %9 = vector.extract_strided_slice %4 {offsets = [0, 2, 0], sizes = [8, 8, 12], strides = [1, 1, 1]} : vector<10x10x12xf32> to vector<8x8x12xf32>
    %10 = vector.shape_cast %9 : vector<8x8x12xf32> to vector<64x12xf32>
    %11 = vector.extract_strided_slice %4 {offsets = [1, 0, 0], sizes = [8, 8, 12], strides = [1, 1, 1]} : vector<10x10x12xf32> to vector<8x8x12xf32>
    %12 = vector.shape_cast %11 : vector<8x8x12xf32> to vector<64x12xf32>
    %13 = vector.extract_strided_slice %4 {offsets = [1, 1, 0], sizes = [8, 8, 12], strides = [1, 1, 1]} : vector<10x10x12xf32> to vector<8x8x12xf32>
    %14 = vector.shape_cast %13 : vector<8x8x12xf32> to vector<64x12xf32>
    %15 = vector.extract_strided_slice %4 {offsets = [1, 2, 0], sizes = [8, 8, 12], strides = [1, 1, 1]} : vector<10x10x12xf32> to vector<8x8x12xf32>
    %16 = vector.shape_cast %15 : vector<8x8x12xf32> to vector<64x12xf32>
    %17 = vector.extract_strided_slice %4 {offsets = [2, 0, 0], sizes = [8, 8, 12], strides = [1, 1, 1]} : vector<10x10x12xf32> to vector<8x8x12xf32>
    %18 = vector.shape_cast %17 : vector<8x8x12xf32> to vector<64x12xf32>
    %19 = vector.extract_strided_slice %4 {offsets = [2, 1, 0], sizes = [8, 8, 12], strides = [1, 1, 1]} : vector<10x10x12xf32> to vector<8x8x12xf32>
    %20 = vector.shape_cast %19 : vector<8x8x12xf32> to vector<64x12xf32>
    %21 = vector.extract_strided_slice %4 {offsets = [2, 2, 0], sizes = [8, 8, 12], strides = [1, 1, 1]} : vector<10x10x12xf32> to vector<8x8x12xf32>
    %22 = vector.shape_cast %21 : vector<8x8x12xf32> to vector<64x12xf32>
    %23 = tpu.concatenate %6, %8, %10, %12, %14, %16, %18, %20, %22 in 1 : vector<64x12xf32>, vector<64x12xf32>, vector<64x12xf32>, vector<64x12xf32>, vector<64x12xf32>, vector<64x12xf32>, vector<64x12xf32>, vector<64x12xf32>, vector<64x12xf32> -> vector<64x108xf32>
    %24 = arith.truncf %23 : vector<64x108xf32> to vector<64x108xbf16>
    %c0_2 = arith.constant 0 : index
    %c0_3 = arith.constant 0 : index
    %25 = vector.load %arg3[%c0_2, %c0_3] : memref<108x32xbf16, #tpu.memory_space<vmem>>, vector<108x32xbf16>
    %cst = arith.constant dense<0.000000e+00> : vector<64x32xf32>
    %26 = tpu.matmul %24, %25, %cst {dimension_numbers = #tpu.dot_dimension_numbers<[1], [0], [0], [1], [0, 0, 1, 1], [], []>} : vector<64x108xbf16>, vector<108x32xbf16>, vector<64x32xf32> -> vector<64x32xf32>
    %c0_4 = arith.constant 0 : index
    %c0_5 = arith.constant 0 : index
    %27 = vector.load %arg4[%c0_4, %c0_5] : memref<1x32xf32, #tpu.memory_space<vmem>>, vector<1x32xf32>
    %28 = vector.broadcast %27 : vector<1x32xf32> to vector<64x32xf32>
    %29 = arith.addf %26, %28 : vector<64x32xf32>
    %30 = arith.truncf %29 : vector<64x32xf32> to vector<64x32xbf16>
    %c0_6 = arith.constant 0 : index
    %c0_7 = arith.constant 0 : index
    %c0_8 = arith.constant 0 : index
    %31 = vector.load %arg5[%c0_6, %c0_7, %c0_8] : memref<1x64x32xbf16, #tpu.memory_space<vmem>>, vector<1x64x32xbf16>
    %32 = vector.shape_cast %31 : vector<1x64x32xbf16> to vector<64x32xbf16>
    %33 = vector.shape_cast %30 : vector<64x32xbf16> to vector<1x64x32xbf16>
    tpu.vector_store %arg5[%c0_6, %c0_7, %c0_8], %33 {strides = array<i32>} : memref<1x64x32xbf16, #tpu.memory_space<vmem>>, vector<1x64x32xbf16>,
    return
  }
  func.func @transform_0(%arg0: i32, %arg1: i32) -> (i32, i32, i32, i32) {
    %c0_i32 = arith.constant 0 : i32
    %c0_i32_0 = arith.constant 0 : i32
    %c0_i32_1 = arith.constant 0 : i32
    %c0_i32_2 = arith.constant 0 : i32
    return %arg0, %c0_i32, %c0_i32_0, %c0_i32_1 : i32, i32, i32, i32
  }
  func.func @transform_1(%arg0: i32, %arg1: i32) -> (i32, i32) {
    %c0_i32 = arith.constant 0 : i32
    %c0_i32_0 = arith.constant 0 : i32
    %c0_i32_1 = arith.constant 0 : i32
    return %c0_i32, %c0_i32_0 : i32, i32
  }
  func.func @transform_2(%arg0: i32, %arg1: i32) -> (i32, i32) {
    %c0_i32 = arith.constant 0 : i32
    %c0_i32_0 = arith.constant 0 : i32
    %c0_i32_1 = arith.constant 0 : i32
    return %c0_i32, %c0_i32_0 : i32, i32
  }
  func.func @transform_3(%arg0: i32, %arg1: i32) -> (i32, i32, i32) {
    %c0_i32 = arith.constant 0 : i32
    %c0_i32_0 = arith.constant 0 : i32
    return %arg0, %arg1, %c0_i32 : i32, i32, i32
  }
}

module attributes {stable_mosaic.version = 11 : i64} {
  func.func @kernel(%arg0: i32, %arg1: memref<1x10x10x32xbf16, #tpu.memory_space<vmem>>, %arg2: memref<288x32xbf16, #tpu.memory_space<vmem>>, %arg3: memref<1x32xf32, #tpu.memory_space<vmem>>, %arg4: memref<288x32xbf16, #tpu.memory_space<vmem>>, %arg5: memref<1x32xf32, #tpu.memory_space<vmem>>, %arg6: memref<1x64x32xbf16, #tpu.memory_space<vmem>>, %arg7: memref<10x10x32xf32, #tpu.memory_space<vmem>>) attributes {dimension_semantics = [#tpu.dimension_semantics<parallel>], iteration_bounds = array<i64: 2>, scalar_prefetch = 0 : i64, scratch_operands = 1 : i64, tpu.core_type = #tpu.core_type<tc>, window_params = [{transform_indices = @transform_0, window_bounds = array<i64: 1, 10, 10, 32>}, {pipeline_mode = #tpu.pipeline_mode<synchronous>, transform_indices = @transform_1, window_bounds = array<i64: 288, 32>}, {pipeline_mode = #tpu.pipeline_mode<synchronous>, transform_indices = @transform_2, window_bounds = array<i64: 1, 32>}, {pipeline_mode = #tpu.pipeline_mode<synchronous>, transform_indices = @transform_3, window_bounds = array<i64: 288, 32>}, {pipeline_mode = #tpu.pipeline_mode<synchronous>, transform_indices = @transform_4, window_bounds = array<i64: 1, 32>}, {transform_indices = @transform_5, window_bounds = array<i64: 1, 64, 32>}]} {
    %c0 = arith.constant 0 : index
    %c0_0 = arith.constant 0 : index
    %c0_1 = arith.constant 0 : index
    %c0_2 = arith.constant 0 : index
    %0 = vector.load %arg1[%c0, %c0_0, %c0_1, %c0_2] : memref<1x10x10x32xbf16, #tpu.memory_space<vmem>>, vector<1x10x10x32xbf16>
    %1 = vector.shape_cast %0 : vector<1x10x10x32xbf16> to vector<10x10x32xbf16>
    %2 = arith.extf %1 : vector<10x10x32xbf16> to vector<10x10x32xf32>
    %3 = vector.extract_strided_slice %2 {offsets = [0, 0, 0], sizes = [8, 8, 32], strides = [1, 1, 1]} : vector<10x10x32xf32> to vector<8x8x32xf32>
    %4 = vector.shape_cast %3 : vector<8x8x32xf32> to vector<64x32xf32>
    %5 = vector.extract_strided_slice %2 {offsets = [0, 1, 0], sizes = [8, 8, 32], strides = [1, 1, 1]} : vector<10x10x32xf32> to vector<8x8x32xf32>
    %6 = vector.shape_cast %5 : vector<8x8x32xf32> to vector<64x32xf32>
    %7 = vector.extract_strided_slice %2 {offsets = [0, 2, 0], sizes = [8, 8, 32], strides = [1, 1, 1]} : vector<10x10x32xf32> to vector<8x8x32xf32>
    %8 = vector.shape_cast %7 : vector<8x8x32xf32> to vector<64x32xf32>
    %9 = vector.extract_strided_slice %2 {offsets = [1, 0, 0], sizes = [8, 8, 32], strides = [1, 1, 1]} : vector<10x10x32xf32> to vector<8x8x32xf32>
    %10 = vector.shape_cast %9 : vector<8x8x32xf32> to vector<64x32xf32>
    %11 = vector.extract_strided_slice %2 {offsets = [1, 1, 0], sizes = [8, 8, 32], strides = [1, 1, 1]} : vector<10x10x32xf32> to vector<8x8x32xf32>
    %12 = vector.shape_cast %11 : vector<8x8x32xf32> to vector<64x32xf32>
    %13 = vector.extract_strided_slice %2 {offsets = [1, 2, 0], sizes = [8, 8, 32], strides = [1, 1, 1]} : vector<10x10x32xf32> to vector<8x8x32xf32>
    %14 = vector.shape_cast %13 : vector<8x8x32xf32> to vector<64x32xf32>
    %15 = vector.extract_strided_slice %2 {offsets = [2, 0, 0], sizes = [8, 8, 32], strides = [1, 1, 1]} : vector<10x10x32xf32> to vector<8x8x32xf32>
    %16 = vector.shape_cast %15 : vector<8x8x32xf32> to vector<64x32xf32>
    %17 = vector.extract_strided_slice %2 {offsets = [2, 1, 0], sizes = [8, 8, 32], strides = [1, 1, 1]} : vector<10x10x32xf32> to vector<8x8x32xf32>
    %18 = vector.shape_cast %17 : vector<8x8x32xf32> to vector<64x32xf32>
    %19 = vector.extract_strided_slice %2 {offsets = [2, 2, 0], sizes = [8, 8, 32], strides = [1, 1, 1]} : vector<10x10x32xf32> to vector<8x8x32xf32>
    %20 = vector.shape_cast %19 : vector<8x8x32xf32> to vector<64x32xf32>
    %21 = tpu.concatenate %4, %6, %8, %10, %12, %14, %16, %18, %20 in 1 : vector<64x32xf32>, vector<64x32xf32>, vector<64x32xf32>, vector<64x32xf32>, vector<64x32xf32>, vector<64x32xf32>, vector<64x32xf32>, vector<64x32xf32>, vector<64x32xf32> -> vector<64x288xf32>
    %22 = arith.truncf %21 : vector<64x288xf32> to vector<64x288xbf16>
    %c0_3 = arith.constant 0 : index
    %c0_4 = arith.constant 0 : index
    %23 = vector.load %arg2[%c0_3, %c0_4] : memref<288x32xbf16, #tpu.memory_space<vmem>>, vector<288x32xbf16>
    %cst = arith.constant dense<0.000000e+00> : vector<64x32xf32>
    %24 = tpu.matmul %22, %23, %cst {dimension_numbers = #tpu.dot_dimension_numbers<[1], [0], [0], [1], [0, 0, 1, 1], [], []>} : vector<64x288xbf16>, vector<288x32xbf16>, vector<64x32xf32> -> vector<64x32xf32>
    %c0_5 = arith.constant 0 : index
    %c0_6 = arith.constant 0 : index
    %25 = vector.load %arg3[%c0_5, %c0_6] : memref<1x32xf32, #tpu.memory_space<vmem>>, vector<1x32xf32>
    %26 = vector.broadcast %25 : vector<1x32xf32> to vector<64x32xf32>
    %27 = arith.addf %24, %26 : vector<64x32xf32>
    %cst_7 = arith.constant 0.000000e+00 : f32
    %28 = vector.broadcast %cst_7 : f32 to vector<64x32xf32>
    %29 = arith.maximumf %27, %28 : vector<64x32xf32>
    %cst_8 = arith.constant 0.000000e+00 : f32
    %30 = vector.broadcast %cst_8 : f32 to vector<10x10x32xf32>
    %c0_9 = arith.constant 0 : index
    %c0_10 = arith.constant 0 : index
    %c0_11 = arith.constant 0 : index
    %31 = vector.load %arg7[%c0_9, %c0_10, %c0_11] : memref<10x10x32xf32, #tpu.memory_space<vmem>>, vector<10x10x32xf32>
    tpu.vector_store %arg7[%c0_9, %c0_10, %c0_11], %30 {strides = array<i32>} : memref<10x10x32xf32, #tpu.memory_space<vmem>>, vector<10x10x32xf32>,
    %32 = vector.shape_cast %29 : vector<64x32xf32> to vector<8x8x32xf32>
    %c1 = arith.constant 1 : index
    %c1_12 = arith.constant 1 : index
    %c0_13 = arith.constant 0 : index
    %33 = vector.load %arg7[%c1, %c1_12, %c0_13] : memref<10x10x32xf32, #tpu.memory_space<vmem>>, vector<8x8x32xf32>
    tpu.vector_store %arg7[%c1, %c1_12, %c0_13], %32 {strides = array<i32>} : memref<10x10x32xf32, #tpu.memory_space<vmem>>, vector<8x8x32xf32>,
    %c0_14 = arith.constant 0 : index
    %c0_15 = arith.constant 0 : index
    %c0_16 = arith.constant 0 : index
    %34 = vector.load %arg7[%c0_14, %c0_15, %c0_16] : memref<10x10x32xf32, #tpu.memory_space<vmem>>, vector<10x10x32xf32>
    %35 = vector.extract_strided_slice %34 {offsets = [0, 0, 0], sizes = [8, 8, 32], strides = [1, 1, 1]} : vector<10x10x32xf32> to vector<8x8x32xf32>
    %36 = vector.shape_cast %35 : vector<8x8x32xf32> to vector<64x32xf32>
    %37 = vector.extract_strided_slice %34 {offsets = [0, 1, 0], sizes = [8, 8, 32], strides = [1, 1, 1]} : vector<10x10x32xf32> to vector<8x8x32xf32>
    %38 = vector.shape_cast %37 : vector<8x8x32xf32> to vector<64x32xf32>
    %39 = vector.extract_strided_slice %34 {offsets = [0, 2, 0], sizes = [8, 8, 32], strides = [1, 1, 1]} : vector<10x10x32xf32> to vector<8x8x32xf32>
    %40 = vector.shape_cast %39 : vector<8x8x32xf32> to vector<64x32xf32>
    %41 = vector.extract_strided_slice %34 {offsets = [1, 0, 0], sizes = [8, 8, 32], strides = [1, 1, 1]} : vector<10x10x32xf32> to vector<8x8x32xf32>
    %42 = vector.shape_cast %41 : vector<8x8x32xf32> to vector<64x32xf32>
    %43 = vector.extract_strided_slice %34 {offsets = [1, 1, 0], sizes = [8, 8, 32], strides = [1, 1, 1]} : vector<10x10x32xf32> to vector<8x8x32xf32>
    %44 = vector.shape_cast %43 : vector<8x8x32xf32> to vector<64x32xf32>
    %45 = vector.extract_strided_slice %34 {offsets = [1, 2, 0], sizes = [8, 8, 32], strides = [1, 1, 1]} : vector<10x10x32xf32> to vector<8x8x32xf32>
    %46 = vector.shape_cast %45 : vector<8x8x32xf32> to vector<64x32xf32>
    %47 = vector.extract_strided_slice %34 {offsets = [2, 0, 0], sizes = [8, 8, 32], strides = [1, 1, 1]} : vector<10x10x32xf32> to vector<8x8x32xf32>
    %48 = vector.shape_cast %47 : vector<8x8x32xf32> to vector<64x32xf32>
    %49 = vector.extract_strided_slice %34 {offsets = [2, 1, 0], sizes = [8, 8, 32], strides = [1, 1, 1]} : vector<10x10x32xf32> to vector<8x8x32xf32>
    %50 = vector.shape_cast %49 : vector<8x8x32xf32> to vector<64x32xf32>
    %51 = vector.extract_strided_slice %34 {offsets = [2, 2, 0], sizes = [8, 8, 32], strides = [1, 1, 1]} : vector<10x10x32xf32> to vector<8x8x32xf32>
    %52 = vector.shape_cast %51 : vector<8x8x32xf32> to vector<64x32xf32>
    %53 = tpu.concatenate %36, %38, %40, %42, %44, %46, %48, %50, %52 in 1 : vector<64x32xf32>, vector<64x32xf32>, vector<64x32xf32>, vector<64x32xf32>, vector<64x32xf32>, vector<64x32xf32>, vector<64x32xf32>, vector<64x32xf32>, vector<64x32xf32> -> vector<64x288xf32>
    %54 = arith.truncf %53 : vector<64x288xf32> to vector<64x288xbf16>
    %c0_17 = arith.constant 0 : index
    %c0_18 = arith.constant 0 : index
    %55 = vector.load %arg4[%c0_17, %c0_18] : memref<288x32xbf16, #tpu.memory_space<vmem>>, vector<288x32xbf16>
    %cst_19 = arith.constant dense<0.000000e+00> : vector<64x32xf32>
    %56 = tpu.matmul %54, %55, %cst_19 {dimension_numbers = #tpu.dot_dimension_numbers<[1], [0], [0], [1], [0, 0, 1, 1], [], []>} : vector<64x288xbf16>, vector<288x32xbf16>, vector<64x32xf32> -> vector<64x32xf32>
    %c0_20 = arith.constant 0 : index
    %c0_21 = arith.constant 0 : index
    %57 = vector.load %arg5[%c0_20, %c0_21] : memref<1x32xf32, #tpu.memory_space<vmem>>, vector<1x32xf32>
    %58 = vector.broadcast %57 : vector<1x32xf32> to vector<64x32xf32>
    %59 = arith.addf %56, %58 : vector<64x32xf32>
    %60 = vector.extract_strided_slice %2 {offsets = [1, 1, 0], sizes = [8, 8, 32], strides = [1, 1, 1]} : vector<10x10x32xf32> to vector<8x8x32xf32>
    %61 = vector.shape_cast %60 : vector<8x8x32xf32> to vector<64x32xf32>
    %cst_22 = arith.constant 1.000000e+00 : f32
    %62 = vector.broadcast %cst_22 : f32 to vector<64x32xf32>
    %63 = arith.mulf %62, %59 : vector<64x32xf32>
    %64 = arith.addf %61, %63 : vector<64x32xf32>
    %65 = arith.truncf %64 : vector<64x32xf32> to vector<64x32xbf16>
    %c0_23 = arith.constant 0 : index
    %c0_24 = arith.constant 0 : index
    %c0_25 = arith.constant 0 : index
    %66 = vector.load %arg6[%c0_23, %c0_24, %c0_25] : memref<1x64x32xbf16, #tpu.memory_space<vmem>>, vector<1x64x32xbf16>
    %67 = vector.shape_cast %66 : vector<1x64x32xbf16> to vector<64x32xbf16>
    %68 = vector.shape_cast %65 : vector<64x32xbf16> to vector<1x64x32xbf16>
    tpu.vector_store %arg6[%c0_23, %c0_24, %c0_25], %68 {strides = array<i32>} : memref<1x64x32xbf16, #tpu.memory_space<vmem>>, vector<1x64x32xbf16>,
    return
  }
  func.func @transform_0(%arg0: i32) -> (i32, i32, i32, i32) {
    %c0_i32 = arith.constant 0 : i32
    %c0_i32_0 = arith.constant 0 : i32
    %c0_i32_1 = arith.constant 0 : i32
    %c0_i32_2 = arith.constant 0 : i32
    return %arg0, %c0_i32, %c0_i32_0, %c0_i32_1 : i32, i32, i32, i32
  }
  func.func @transform_1(%arg0: i32) -> (i32, i32) {
    %c0_i32 = arith.constant 0 : i32
    %c0_i32_0 = arith.constant 0 : i32
    %c0_i32_1 = arith.constant 0 : i32
    return %c0_i32, %c0_i32_0 : i32, i32
  }
  func.func @transform_2(%arg0: i32) -> (i32, i32) {
    %c0_i32 = arith.constant 0 : i32
    %c0_i32_0 = arith.constant 0 : i32
    %c0_i32_1 = arith.constant 0 : i32
    return %c0_i32, %c0_i32_0 : i32, i32
  }
  func.func @transform_3(%arg0: i32) -> (i32, i32) {
    %c0_i32 = arith.constant 0 : i32
    %c0_i32_0 = arith.constant 0 : i32
    %c0_i32_1 = arith.constant 0 : i32
    return %c0_i32, %c0_i32_0 : i32, i32
  }
  func.func @transform_4(%arg0: i32) -> (i32, i32) {
    %c0_i32 = arith.constant 0 : i32
    %c0_i32_0 = arith.constant 0 : i32
    %c0_i32_1 = arith.constant 0 : i32
    return %c0_i32, %c0_i32_0 : i32, i32
  }
  func.func @transform_5(%arg0: i32) -> (i32, i32, i32) {
    %c0_i32 = arith.constant 0 : i32
    %c0_i32_0 = arith.constant 0 : i32
    %c0_i32_1 = arith.constant 0 : i32
    return %arg0, %c0_i32, %c0_i32_0 : i32, i32, i32
  }
}

module attributes {stable_mosaic.version = 11 : i64} {
  func.func @kernel(%arg0: i32, %arg1: memref<1x64x32xbf16, #tpu.memory_space<vmem>>, %arg2: memref<1x64x32xbf16, #tpu.memory_space<vmem>>, %arg3: memref<64x32xbf16, #tpu.memory_space<vmem>>, %arg4: memref<1x32xf32, #tpu.memory_space<vmem>>, %arg5: memref<1x64x32xbf16, #tpu.memory_space<vmem>>) attributes {dimension_semantics = [#tpu.dimension_semantics<parallel>], iteration_bounds = array<i64: 2>, scalar_prefetch = 0 : i64, scratch_operands = 0 : i64, tpu.core_type = #tpu.core_type<tc>, window_params = [{transform_indices = @transform_0, window_bounds = array<i64: 1, 64, 32>}, {transform_indices = @transform_1, window_bounds = array<i64: 1, 64, 32>}, {pipeline_mode = #tpu.pipeline_mode<synchronous>, transform_indices = @transform_2, window_bounds = array<i64: 64, 32>}, {pipeline_mode = #tpu.pipeline_mode<synchronous>, transform_indices = @transform_3, window_bounds = array<i64: 1, 32>}, {transform_indices = @transform_4, window_bounds = array<i64: 1, 64, 32>}]} {
    %c0 = arith.constant 0 : index
    %c0_0 = arith.constant 0 : index
    %c0_1 = arith.constant 0 : index
    %0 = vector.load %arg1[%c0, %c0_0, %c0_1] : memref<1x64x32xbf16, #tpu.memory_space<vmem>>, vector<1x64x32xbf16>
    %1 = vector.shape_cast %0 : vector<1x64x32xbf16> to vector<64x32xbf16>
    %c0_2 = arith.constant 0 : index
    %c0_3 = arith.constant 0 : index
    %c0_4 = arith.constant 0 : index
    %2 = vector.load %arg2[%c0_2, %c0_3, %c0_4] : memref<1x64x32xbf16, #tpu.memory_space<vmem>>, vector<1x64x32xbf16>
    %3 = vector.shape_cast %2 : vector<1x64x32xbf16> to vector<64x32xbf16>
    %4 = tpu.concatenate %1, %3 in 1 : vector<64x32xbf16>, vector<64x32xbf16> -> vector<64x64xbf16>
    %c0_5 = arith.constant 0 : index
    %c0_6 = arith.constant 0 : index
    %5 = vector.load %arg3[%c0_5, %c0_6] : memref<64x32xbf16, #tpu.memory_space<vmem>>, vector<64x32xbf16>
    %cst = arith.constant dense<0.000000e+00> : vector<64x32xf32>
    %6 = tpu.matmul %4, %5, %cst {dimension_numbers = #tpu.dot_dimension_numbers<[1], [0], [0], [1], [0, 0, 1, 1], [], []>} : vector<64x64xbf16>, vector<64x32xbf16>, vector<64x32xf32> -> vector<64x32xf32>
    %c0_7 = arith.constant 0 : index
    %c0_8 = arith.constant 0 : index
    %7 = vector.load %arg4[%c0_7, %c0_8] : memref<1x32xf32, #tpu.memory_space<vmem>>, vector<1x32xf32>
    %8 = vector.broadcast %7 : vector<1x32xf32> to vector<64x32xf32>
    %9 = arith.addf %6, %8 : vector<64x32xf32>
    %10 = arith.truncf %9 : vector<64x32xf32> to vector<64x32xbf16>
    %c0_9 = arith.constant 0 : index
    %c0_10 = arith.constant 0 : index
    %c0_11 = arith.constant 0 : index
    %11 = vector.load %arg5[%c0_9, %c0_10, %c0_11] : memref<1x64x32xbf16, #tpu.memory_space<vmem>>, vector<1x64x32xbf16>
    %12 = vector.shape_cast %11 : vector<1x64x32xbf16> to vector<64x32xbf16>
    %13 = vector.shape_cast %10 : vector<64x32xbf16> to vector<1x64x32xbf16>
    tpu.vector_store %arg5[%c0_9, %c0_10, %c0_11], %13 {strides = array<i32>} : memref<1x64x32xbf16, #tpu.memory_space<vmem>>, vector<1x64x32xbf16>,
    return
  }
  func.func @transform_0(%arg0: i32) -> (i32, i32, i32) {
    %c0_i32 = arith.constant 0 : i32
    %c0_i32_0 = arith.constant 0 : i32
    %c0_i32_1 = arith.constant 0 : i32
    return %arg0, %c0_i32, %c0_i32_0 : i32, i32, i32
  }
  func.func @transform_1(%arg0: i32) -> (i32, i32, i32) {
    %c0_i32 = arith.constant 0 : i32
    %c0_i32_0 = arith.constant 0 : i32
    %c0_i32_1 = arith.constant 0 : i32
    return %arg0, %c0_i32, %c0_i32_0 : i32, i32, i32
  }
  func.func @transform_2(%arg0: i32) -> (i32, i32) {
    %c0_i32 = arith.constant 0 : i32
    %c0_i32_0 = arith.constant 0 : i32
    %c0_i32_1 = arith.constant 0 : i32
    return %c0_i32, %c0_i32_0 : i32, i32
  }
  func.func @transform_3(%arg0: i32) -> (i32, i32) {
    %c0_i32 = arith.constant 0 : i32
    %c0_i32_0 = arith.constant 0 : i32
    %c0_i32_1 = arith.constant 0 : i32
    return %c0_i32, %c0_i32_0 : i32, i32
  }
  func.func @transform_4(%arg0: i32) -> (i32, i32, i32) {
    %c0_i32 = arith.constant 0 : i32
    %c0_i32_0 = arith.constant 0 : i32
    %c0_i32_1 = arith.constant 0 : i32
    return %arg0, %c0_i32, %c0_i32_0 : i32, i32, i32
  }
}

module attributes {stable_mosaic.version = 11 : i64} {
  func.func @kernel(%arg0: i32, %arg1: memref<1x64x32xbf16, #tpu.memory_space<vmem>>, %arg2: memref<1x64x32xbf16, #tpu.memory_space<vmem>>, %arg3: memref<1x64x32xbf16, #tpu.memory_space<vmem>>, %arg4: memref<96x32xbf16, #tpu.memory_space<vmem>>, %arg5: memref<1x32xf32, #tpu.memory_space<vmem>>, %arg6: memref<1x64x32xbf16, #tpu.memory_space<vmem>>) attributes {dimension_semantics = [#tpu.dimension_semantics<parallel>], iteration_bounds = array<i64: 2>, scalar_prefetch = 0 : i64, scratch_operands = 0 : i64, tpu.core_type = #tpu.core_type<tc>, window_params = [{transform_indices = @transform_0, window_bounds = array<i64: 1, 64, 32>}, {transform_indices = @transform_1, window_bounds = array<i64: 1, 64, 32>}, {transform_indices = @transform_2, window_bounds = array<i64: 1, 64, 32>}, {pipeline_mode = #tpu.pipeline_mode<synchronous>, transform_indices = @transform_3, window_bounds = array<i64: 96, 32>}, {pipeline_mode = #tpu.pipeline_mode<synchronous>, transform_indices = @transform_4, window_bounds = array<i64: 1, 32>}, {transform_indices = @transform_5, window_bounds = array<i64: 1, 64, 32>}]} {
    %c0 = arith.constant 0 : index
    %c0_0 = arith.constant 0 : index
    %c0_1 = arith.constant 0 : index
    %0 = vector.load %arg1[%c0, %c0_0, %c0_1] : memref<1x64x32xbf16, #tpu.memory_space<vmem>>, vector<1x64x32xbf16>
    %1 = vector.shape_cast %0 : vector<1x64x32xbf16> to vector<64x32xbf16>
    %c0_2 = arith.constant 0 : index
    %c0_3 = arith.constant 0 : index
    %c0_4 = arith.constant 0 : index
    %2 = vector.load %arg2[%c0_2, %c0_3, %c0_4] : memref<1x64x32xbf16, #tpu.memory_space<vmem>>, vector<1x64x32xbf16>
    %3 = vector.shape_cast %2 : vector<1x64x32xbf16> to vector<64x32xbf16>
    %c0_5 = arith.constant 0 : index
    %c0_6 = arith.constant 0 : index
    %c0_7 = arith.constant 0 : index
    %4 = vector.load %arg3[%c0_5, %c0_6, %c0_7] : memref<1x64x32xbf16, #tpu.memory_space<vmem>>, vector<1x64x32xbf16>
    %5 = vector.shape_cast %4 : vector<1x64x32xbf16> to vector<64x32xbf16>
    %6 = tpu.concatenate %1, %3, %5 in 1 : vector<64x32xbf16>, vector<64x32xbf16>, vector<64x32xbf16> -> vector<64x96xbf16>
    %c0_8 = arith.constant 0 : index
    %c0_9 = arith.constant 0 : index
    %7 = vector.load %arg4[%c0_8, %c0_9] : memref<96x32xbf16, #tpu.memory_space<vmem>>, vector<96x32xbf16>
    %cst = arith.constant dense<0.000000e+00> : vector<64x32xf32>
    %8 = tpu.matmul %6, %7, %cst {dimension_numbers = #tpu.dot_dimension_numbers<[1], [0], [0], [1], [0, 0, 1, 1], [], []>} : vector<64x96xbf16>, vector<96x32xbf16>, vector<64x32xf32> -> vector<64x32xf32>
    %c0_10 = arith.constant 0 : index
    %c0_11 = arith.constant 0 : index
    %9 = vector.load %arg5[%c0_10, %c0_11] : memref<1x32xf32, #tpu.memory_space<vmem>>, vector<1x32xf32>
    %10 = vector.broadcast %9 : vector<1x32xf32> to vector<64x32xf32>
    %11 = arith.addf %8, %10 : vector<64x32xf32>
    %12 = arith.truncf %11 : vector<64x32xf32> to vector<64x32xbf16>
    %c0_12 = arith.constant 0 : index
    %c0_13 = arith.constant 0 : index
    %c0_14 = arith.constant 0 : index
    %13 = vector.load %arg6[%c0_12, %c0_13, %c0_14] : memref<1x64x32xbf16, #tpu.memory_space<vmem>>, vector<1x64x32xbf16>
    %14 = vector.shape_cast %13 : vector<1x64x32xbf16> to vector<64x32xbf16>
    %15 = vector.shape_cast %12 : vector<64x32xbf16> to vector<1x64x32xbf16>
    tpu.vector_store %arg6[%c0_12, %c0_13, %c0_14], %15 {strides = array<i32>} : memref<1x64x32xbf16, #tpu.memory_space<vmem>>, vector<1x64x32xbf16>,
    return
  }
  func.func @transform_0(%arg0: i32) -> (i32, i32, i32) {
    %c0_i32 = arith.constant 0 : i32
    %c0_i32_0 = arith.constant 0 : i32
    %c0_i32_1 = arith.constant 0 : i32
    return %arg0, %c0_i32, %c0_i32_0 : i32, i32, i32
  }
  func.func @transform_1(%arg0: i32) -> (i32, i32, i32) {
    %c0_i32 = arith.constant 0 : i32
    %c0_i32_0 = arith.constant 0 : i32
    %c0_i32_1 = arith.constant 0 : i32
    return %arg0, %c0_i32, %c0_i32_0 : i32, i32, i32
  }
  func.func @transform_2(%arg0: i32) -> (i32, i32, i32) {
    %c0_i32 = arith.constant 0 : i32
    %c0_i32_0 = arith.constant 0 : i32
    %c0_i32_1 = arith.constant 0 : i32
    return %arg0, %c0_i32, %c0_i32_0 : i32, i32, i32
  }
  func.func @transform_3(%arg0: i32) -> (i32, i32) {
    %c0_i32 = arith.constant 0 : i32
    %c0_i32_0 = arith.constant 0 : i32
    %c0_i32_1 = arith.constant 0 : i32
    return %c0_i32, %c0_i32_0 : i32, i32
  }
  func.func @transform_4(%arg0: i32) -> (i32, i32) {
    %c0_i32 = arith.constant 0 : i32
    %c0_i32_0 = arith.constant 0 : i32
    %c0_i32_1 = arith.constant 0 : i32
    return %c0_i32, %c0_i32_0 : i32, i32
  }
  func.func @transform_5(%arg0: i32) -> (i32, i32, i32) {
    %c0_i32 = arith.constant 0 : i32
    %c0_i32_0 = arith.constant 0 : i32
    %c0_i32_1 = arith.constant 0 : i32
    return %arg0, %c0_i32, %c0_i32_0 : i32, i32, i32
  }
}

module attributes {stable_mosaic.version = 11 : i64} {
  func.func @kernel(%arg0: i32, %arg1: i32, %arg2: memref<1x10x10x32xbf16, #tpu.memory_space<vmem>>, %arg3: memref<288x128xbf16, #tpu.memory_space<vmem>>, %arg4: memref<1x128xf32, #tpu.memory_space<vmem>>, %arg5: memref<1x64x128xbf16, #tpu.memory_space<vmem>>) attributes {dimension_semantics = [#tpu.dimension_semantics<parallel>, #tpu.dimension_semantics<parallel>], iteration_bounds = array<i64: 2, 1>, scalar_prefetch = 0 : i64, scratch_operands = 0 : i64, tpu.core_type = #tpu.core_type<tc>, window_params = [{transform_indices = @transform_0, window_bounds = array<i64: 1, 10, 10, 32>}, {pipeline_mode = #tpu.pipeline_mode<synchronous>, transform_indices = @transform_1, window_bounds = array<i64: 288, 128>}, {pipeline_mode = #tpu.pipeline_mode<synchronous>, transform_indices = @transform_2, window_bounds = array<i64: 1, 128>}, {transform_indices = @transform_3, window_bounds = array<i64: 1, 64, 128>}]} {
    %c8_i32 = arith.constant 8 : i32
    %0 = arith.muli %arg1, %c8_i32 : i32
    %c0 = arith.constant 0 : index
    %1 = arith.index_cast %0 : i32 to index
    %c0_0 = arith.constant 0 : index
    %c0_1 = arith.constant 0 : index
    %2 = vector.load %arg2[%c0, %1, %c0_0, %c0_1] : memref<1x10x10x32xbf16, #tpu.memory_space<vmem>>, vector<1x10x10x32xbf16>
    %3 = vector.shape_cast %2 : vector<1x10x10x32xbf16> to vector<10x10x32xbf16>
    %4 = arith.extf %3 : vector<10x10x32xbf16> to vector<10x10x32xf32>
    %5 = vector.extract_strided_slice %4 {offsets = [0, 0, 0], sizes = [8, 8, 32], strides = [1, 1, 1]} : vector<10x10x32xf32> to vector<8x8x32xf32>
    %6 = vector.shape_cast %5 : vector<8x8x32xf32> to vector<64x32xf32>
    %7 = vector.extract_strided_slice %4 {offsets = [0, 1, 0], sizes = [8, 8, 32], strides = [1, 1, 1]} : vector<10x10x32xf32> to vector<8x8x32xf32>
    %8 = vector.shape_cast %7 : vector<8x8x32xf32> to vector<64x32xf32>
    %9 = vector.extract_strided_slice %4 {offsets = [0, 2, 0], sizes = [8, 8, 32], strides = [1, 1, 1]} : vector<10x10x32xf32> to vector<8x8x32xf32>
    %10 = vector.shape_cast %9 : vector<8x8x32xf32> to vector<64x32xf32>
    %11 = vector.extract_strided_slice %4 {offsets = [1, 0, 0], sizes = [8, 8, 32], strides = [1, 1, 1]} : vector<10x10x32xf32> to vector<8x8x32xf32>
    %12 = vector.shape_cast %11 : vector<8x8x32xf32> to vector<64x32xf32>
    %13 = vector.extract_strided_slice %4 {offsets = [1, 1, 0], sizes = [8, 8, 32], strides = [1, 1, 1]} : vector<10x10x32xf32> to vector<8x8x32xf32>
    %14 = vector.shape_cast %13 : vector<8x8x32xf32> to vector<64x32xf32>
    %15 = vector.extract_strided_slice %4 {offsets = [1, 2, 0], sizes = [8, 8, 32], strides = [1, 1, 1]} : vector<10x10x32xf32> to vector<8x8x32xf32>
    %16 = vector.shape_cast %15 : vector<8x8x32xf32> to vector<64x32xf32>
    %17 = vector.extract_strided_slice %4 {offsets = [2, 0, 0], sizes = [8, 8, 32], strides = [1, 1, 1]} : vector<10x10x32xf32> to vector<8x8x32xf32>
    %18 = vector.shape_cast %17 : vector<8x8x32xf32> to vector<64x32xf32>
    %19 = vector.extract_strided_slice %4 {offsets = [2, 1, 0], sizes = [8, 8, 32], strides = [1, 1, 1]} : vector<10x10x32xf32> to vector<8x8x32xf32>
    %20 = vector.shape_cast %19 : vector<8x8x32xf32> to vector<64x32xf32>
    %21 = vector.extract_strided_slice %4 {offsets = [2, 2, 0], sizes = [8, 8, 32], strides = [1, 1, 1]} : vector<10x10x32xf32> to vector<8x8x32xf32>
    %22 = vector.shape_cast %21 : vector<8x8x32xf32> to vector<64x32xf32>
    %23 = tpu.concatenate %6, %8, %10, %12, %14, %16, %18, %20, %22 in 1 : vector<64x32xf32>, vector<64x32xf32>, vector<64x32xf32>, vector<64x32xf32>, vector<64x32xf32>, vector<64x32xf32>, vector<64x32xf32>, vector<64x32xf32>, vector<64x32xf32> -> vector<64x288xf32>
    %24 = arith.truncf %23 : vector<64x288xf32> to vector<64x288xbf16>
    %c0_2 = arith.constant 0 : index
    %c0_3 = arith.constant 0 : index
    %25 = vector.load %arg3[%c0_2, %c0_3] : memref<288x128xbf16, #tpu.memory_space<vmem>>, vector<288x128xbf16>
    %cst = arith.constant dense<0.000000e+00> : vector<64x128xf32>
    %26 = tpu.matmul %24, %25, %cst {dimension_numbers = #tpu.dot_dimension_numbers<[1], [0], [0], [1], [0, 0, 1, 1], [], []>} : vector<64x288xbf16>, vector<288x128xbf16>, vector<64x128xf32> -> vector<64x128xf32>
    %c0_4 = arith.constant 0 : index
    %c0_5 = arith.constant 0 : index
    %27 = vector.load %arg4[%c0_4, %c0_5] : memref<1x128xf32, #tpu.memory_space<vmem>>, vector<1x128xf32>
    %28 = vector.broadcast %27 : vector<1x128xf32> to vector<64x128xf32>
    %29 = arith.addf %26, %28 : vector<64x128xf32>
    %30 = arith.truncf %29 : vector<64x128xf32> to vector<64x128xbf16>
    %c0_6 = arith.constant 0 : index
    %c0_7 = arith.constant 0 : index
    %c0_8 = arith.constant 0 : index
    %31 = vector.load %arg5[%c0_6, %c0_7, %c0_8] : memref<1x64x128xbf16, #tpu.memory_space<vmem>>, vector<1x64x128xbf16>
    %32 = vector.shape_cast %31 : vector<1x64x128xbf16> to vector<64x128xbf16>
    %33 = vector.shape_cast %30 : vector<64x128xbf16> to vector<1x64x128xbf16>
    tpu.vector_store %arg5[%c0_6, %c0_7, %c0_8], %33 {strides = array<i32>} : memref<1x64x128xbf16, #tpu.memory_space<vmem>>, vector<1x64x128xbf16>,
    return
  }
  func.func @transform_0(%arg0: i32, %arg1: i32) -> (i32, i32, i32, i32) {
    %c0_i32 = arith.constant 0 : i32
    %c0_i32_0 = arith.constant 0 : i32
    %c0_i32_1 = arith.constant 0 : i32
    %c0_i32_2 = arith.constant 0 : i32
    return %arg0, %c0_i32, %c0_i32_0, %c0_i32_1 : i32, i32, i32, i32
  }
  func.func @transform_1(%arg0: i32, %arg1: i32) -> (i32, i32) {
    %c0_i32 = arith.constant 0 : i32
    %c0_i32_0 = arith.constant 0 : i32
    %c0_i32_1 = arith.constant 0 : i32
    return %c0_i32, %c0_i32_0 : i32, i32
  }
  func.func @transform_2(%arg0: i32, %arg1: i32) -> (i32, i32) {
    %c0_i32 = arith.constant 0 : i32
    %c0_i32_0 = arith.constant 0 : i32
    %c0_i32_1 = arith.constant 0 : i32
    return %c0_i32, %c0_i32_0 : i32, i32
  }
  func.func @transform_3(%arg0: i32, %arg1: i32) -> (i32, i32, i32) {
    %c0_i32 = arith.constant 0 : i32
    %c0_i32_0 = arith.constant 0 : i32
    return %arg0, %arg1, %c0_i32 : i32, i32, i32
  }
}

module attributes {stable_mosaic.version = 11 : i64} {
  func.func @kernel(%arg0: i32, %arg1: i32, %arg2: memref<1x18x18x32xbf16, #tpu.memory_space<vmem>>, %arg3: memref<288x3xbf16, #tpu.memory_space<vmem>>, %arg4: memref<1x3xf32, #tpu.memory_space<vmem>>, %arg5: memref<1x256x3xbf16, #tpu.memory_space<vmem>>) attributes {dimension_semantics = [#tpu.dimension_semantics<parallel>, #tpu.dimension_semantics<parallel>], iteration_bounds = array<i64: 2, 1>, scalar_prefetch = 0 : i64, scratch_operands = 0 : i64, tpu.core_type = #tpu.core_type<tc>, window_params = [{transform_indices = @transform_0, window_bounds = array<i64: 1, 18, 18, 32>}, {pipeline_mode = #tpu.pipeline_mode<synchronous>, transform_indices = @transform_1, window_bounds = array<i64: 288, 3>}, {pipeline_mode = #tpu.pipeline_mode<synchronous>, transform_indices = @transform_2, window_bounds = array<i64: 1, 3>}, {transform_indices = @transform_3, window_bounds = array<i64: 1, 256, 3>}]} {
    %c16_i32 = arith.constant 16 : i32
    %0 = arith.muli %arg1, %c16_i32 : i32
    %c0 = arith.constant 0 : index
    %1 = arith.index_cast %0 : i32 to index
    %c0_0 = arith.constant 0 : index
    %c0_1 = arith.constant 0 : index
    %2 = vector.load %arg2[%c0, %1, %c0_0, %c0_1] : memref<1x18x18x32xbf16, #tpu.memory_space<vmem>>, vector<1x18x18x32xbf16>
    %3 = vector.shape_cast %2 : vector<1x18x18x32xbf16> to vector<18x18x32xbf16>
    %4 = arith.extf %3 : vector<18x18x32xbf16> to vector<18x18x32xf32>
    %5 = vector.extract_strided_slice %4 {offsets = [0, 0, 0], sizes = [16, 16, 32], strides = [1, 1, 1]} : vector<18x18x32xf32> to vector<16x16x32xf32>
    %6 = vector.shape_cast %5 : vector<16x16x32xf32> to vector<256x32xf32>
    %7 = vector.extract_strided_slice %4 {offsets = [0, 1, 0], sizes = [16, 16, 32], strides = [1, 1, 1]} : vector<18x18x32xf32> to vector<16x16x32xf32>
    %8 = vector.shape_cast %7 : vector<16x16x32xf32> to vector<256x32xf32>
    %9 = vector.extract_strided_slice %4 {offsets = [0, 2, 0], sizes = [16, 16, 32], strides = [1, 1, 1]} : vector<18x18x32xf32> to vector<16x16x32xf32>
    %10 = vector.shape_cast %9 : vector<16x16x32xf32> to vector<256x32xf32>
    %11 = vector.extract_strided_slice %4 {offsets = [1, 0, 0], sizes = [16, 16, 32], strides = [1, 1, 1]} : vector<18x18x32xf32> to vector<16x16x32xf32>
    %12 = vector.shape_cast %11 : vector<16x16x32xf32> to vector<256x32xf32>
    %13 = vector.extract_strided_slice %4 {offsets = [1, 1, 0], sizes = [16, 16, 32], strides = [1, 1, 1]} : vector<18x18x32xf32> to vector<16x16x32xf32>
    %14 = vector.shape_cast %13 : vector<16x16x32xf32> to vector<256x32xf32>
    %15 = vector.extract_strided_slice %4 {offsets = [1, 2, 0], sizes = [16, 16, 32], strides = [1, 1, 1]} : vector<18x18x32xf32> to vector<16x16x32xf32>
    %16 = vector.shape_cast %15 : vector<16x16x32xf32> to vector<256x32xf32>
    %17 = vector.extract_strided_slice %4 {offsets = [2, 0, 0], sizes = [16, 16, 32], strides = [1, 1, 1]} : vector<18x18x32xf32> to vector<16x16x32xf32>
    %18 = vector.shape_cast %17 : vector<16x16x32xf32> to vector<256x32xf32>
    %19 = vector.extract_strided_slice %4 {offsets = [2, 1, 0], sizes = [16, 16, 32], strides = [1, 1, 1]} : vector<18x18x32xf32> to vector<16x16x32xf32>
    %20 = vector.shape_cast %19 : vector<16x16x32xf32> to vector<256x32xf32>
    %21 = vector.extract_strided_slice %4 {offsets = [2, 2, 0], sizes = [16, 16, 32], strides = [1, 1, 1]} : vector<18x18x32xf32> to vector<16x16x32xf32>
    %22 = vector.shape_cast %21 : vector<16x16x32xf32> to vector<256x32xf32>
    %23 = tpu.concatenate %6, %8, %10, %12, %14, %16, %18, %20, %22 in 1 : vector<256x32xf32>, vector<256x32xf32>, vector<256x32xf32>, vector<256x32xf32>, vector<256x32xf32>, vector<256x32xf32>, vector<256x32xf32>, vector<256x32xf32>, vector<256x32xf32> -> vector<256x288xf32>
    %24 = arith.truncf %23 : vector<256x288xf32> to vector<256x288xbf16>
    %c0_2 = arith.constant 0 : index
    %c0_3 = arith.constant 0 : index
    %25 = vector.load %arg3[%c0_2, %c0_3] : memref<288x3xbf16, #tpu.memory_space<vmem>>, vector<288x3xbf16>
    %cst = arith.constant dense<0.000000e+00> : vector<256x3xf32>
    %26 = tpu.matmul %24, %25, %cst {dimension_numbers = #tpu.dot_dimension_numbers<[1], [0], [0], [1], [0, 0, 1, 1], [], []>} : vector<256x288xbf16>, vector<288x3xbf16>, vector<256x3xf32> -> vector<256x3xf32>
    %c0_4 = arith.constant 0 : index
    %c0_5 = arith.constant 0 : index
    %27 = vector.load %arg4[%c0_4, %c0_5] : memref<1x3xf32, #tpu.memory_space<vmem>>, vector<1x3xf32>
    %28 = vector.broadcast %27 : vector<1x3xf32> to vector<256x3xf32>
    %29 = arith.addf %26, %28 : vector<256x3xf32>
    %30 = arith.truncf %29 : vector<256x3xf32> to vector<256x3xbf16>
    %c0_6 = arith.constant 0 : index
    %c0_7 = arith.constant 0 : index
    %c0_8 = arith.constant 0 : index
    %31 = vector.load %arg5[%c0_6, %c0_7, %c0_8] : memref<1x256x3xbf16, #tpu.memory_space<vmem>>, vector<1x256x3xbf16>
    %32 = vector.shape_cast %31 : vector<1x256x3xbf16> to vector<256x3xbf16>
    %33 = vector.shape_cast %30 : vector<256x3xbf16> to vector<1x256x3xbf16>
    tpu.vector_store %arg5[%c0_6, %c0_7, %c0_8], %33 {strides = array<i32>} : memref<1x256x3xbf16, #tpu.memory_space<vmem>>, vector<1x256x3xbf16>,
    return
  }
  func.func @transform_0(%arg0: i32, %arg1: i32) -> (i32, i32, i32, i32) {
    %c0_i32 = arith.constant 0 : i32
    %c0_i32_0 = arith.constant 0 : i32
    %c0_i32_1 = arith.constant 0 : i32
    %c0_i32_2 = arith.constant 0 : i32
    return %arg0, %c0_i32, %c0_i32_0, %c0_i32_1 : i32, i32, i32, i32
  }
  func.func @transform_1(%arg0: i32, %arg1: i32) -> (i32, i32) {
    %c0_i32 = arith.constant 0 : i32
    %c0_i32_0 = arith.constant 0 : i32
    %c0_i32_1 = arith.constant 0 : i32
    return %c0_i32, %c0_i32_0 : i32, i32
  }
  func.func @transform_2(%arg0: i32, %arg1: i32) -> (i32, i32) {
    %c0_i32 = arith.constant 0 : i32
    %c0_i32_0 = arith.constant 0 : i32
    %c0_i32_1 = arith.constant 0 : i32
    return %c0_i32, %c0_i32_0 : i32, i32
  }
  func.func @transform_3(%arg0: i32, %arg1: i32) -> (i32, i32, i32) {
    %c0_i32 = arith.constant 0 : i32
    %c0_i32_0 = arith.constant 0 : i32
    return %arg0, %arg1, %c0_i32 : i32, i32, i32
  }
}

</mosaic_0001>

<llo_original>
// kernel: net_forward.15
$region0: #{net_forward.15}
  #allocation0 [shape = 'u32[]', space=smem, size = 0x4, offset = 0x4, fixed_abs, tag = 'smem constant byte address 0x4 - core index']
  #allocation1 [shape = 'u32[144,128]{1,0:T(1,128)}', space=vmem, size = 0x12000, scoped, tag = 'internal scratch']
  %s0 = inlined_call_operand.hbm [shape: bf16[2,64,32], index: 0, kind: input, shape index: {}]
  %s1 = inlined_call_operand.hbm [shape: bf16[2,64,32], index: 1, kind: input, shape index: {}]
  %s2 = inlined_call_operand.hbm [shape: bf16[64,32], index: 2, kind: input, shape index: {}]
  %s3 = inlined_call_operand.hbm [shape: f32[1,32], index: 3, kind: input, shape index: {}]
  %s4 = inlined_call_operand.hbm [shape: bf16[2,64,32], index: 4, kind: output, shape index: {}]
  %s5 = sld [smem:[#allocation0]]
  $region65: #{net_forward.15} parent=0
    _
  %s7 = ssub.s32 1, %s5
  %s8 = scalar_select 0, %s7, %s5
  $region1: #{net_forward.15} parent=0
    #allocation2 [shape = 'u8[32768]{0}', space=vmem, size = 0x8000, scoped, tag = 'input window, operand 0']
    #allocation3 [shape = 's32[2]{0}', space=sflag, size = 0x8, scoped, tag = 'scoped memory for net_forward.15']
    #allocation4 [shape = 's32[2]{0}', space=sflag, size = 0x8, scoped, tag = 'scoped memory for net_forward.15']
    #allocation5 [shape = 'u8[32768]{0}', space=vmem, size = 0x8000, scoped, tag = 'input window, operand 1']
    #allocation6 [shape = 's32[2]{0}', space=sflag, size = 0x8, scoped, tag = 'scoped memory for net_forward.15']
    #allocation7 [shape = 'u8[16384]{0}', space=vmem, size = 0x4000, scoped, tag = 'input window, operand 2, single buffered']
    #allocation8 [shape = 'u8[512]{0}', space=vmem, size = 0x400, scoped, tag = 'input window, operand 3, single buffered']
    #allocation9 [shape = 's32[1]{0}', space=sflag, size = 0x4, scoped, tag = 'scoped memory for net_forward.15']
    #allocation10 [shape = 'u8[32768]{0}', space=vmem, size = 0x8000, scoped, tag = 'output window, operand 0']
    %9 = vsyncpa [#allocation3], 0
    %s10 = scalar_lea.sflag [#allocation3], 1
    %11 = vsyncpa %s10, 0
    %12 = vsyncpa [#allocation6], 0
    %s13 = scalar_lea.sflag [#allocation6], 1
    %14 = vsyncpa %s13, 0
    %15 = vsyncpa [#allocation9], 0
    %16 = vsyncpa [#allocation4], 0
    %s17 = scalar_lea.sflag [#allocation4], 1
    %18 = vsyncpa %s17, 0
    loop: start=0, step=1, limit=4
    $region2: #{net_forward.15} parent=1 // loop_pre_header
      _
    $region3: #{net_forward.15} parent=1 // loop_header
      %s20 = sphi 0, %s24
      %p21 = scmp.ge.s32.totalorder %s20, 4
      %s30 = sphi 0, %s32
      %s33 = sphi 0, %s30
      %s34 = sphi 0, %s33
      %s50 = sphi 0, %s34
      %s56 = sphi 0, %s58
      %s59 = sphi 0, %s56
      %s60 = sphi 0, %s59
      %s76 = sphi 0, %s60
      %s80 = sphi 0, %s80
      %s82 = sphi 0, %s80
      %s83 = sphi 0, %s82
      %s97 = sphi 0, %s83
      %s101 = sphi 0, %s101
      %s103 = sphi 0, %s101
      %s104 = sphi 0, %s103
      %s118 = sphi 0, %s104
      %s124 = sphi 0, %s126
      %s127 = sphi 0, %s124
      %s128 = sphi 0, %s127
      %s144 = sphi 0, %s128
    $region4: #{net_forward.15} parent=1 // loop_header_branch
      %23 = sbr.rel (%p21) target = $region8
    $region5: #{net_forward.15} parent=1 // loop_body
      %s25 = ssub.s32 %s20, 1
      %s26 = ssub.s32 %s20, 2
      %s27 = sadd.s32 %s20, 1
      %s28 = ssub.s32 %s20, %s27
      %p29 = scmp.eq.s32.totalorder %s28, 0
      %s31 = sadd.s32 %s30, 1
      %s32 = scalar_select %p29, %s30, %s31
      %p35 = pneg %p29
      %p36 = scmp.eq.s32.totalorder %s20, 1
      %p37 = por %p35, %p36
      %p38 = scmp.ne.s32.totalorder %s30, %s33
      %p39 = scmp.eq.s32.totalorder %s20, 0
      %p40 = por %p38, %p39
      %p41 = scmp.ne.s32.totalorder %s30, %s33
      %p42 = scmp.eq.s32.totalorder %s25, 1
      %p43 = por %p41, %p42
      %p44 = scmp.ne.s32.totalorder %s33, %s34
      %p45 = scmp.eq.s32.totalorder %s25, 0
      %p46 = por %p44, %p45
      %p47 = scmp.ne.s32.totalorder %s33, %s34
      %p48 = scmp.eq.s32.totalorder %s26, 1
      %p49 = por %p47, %p48
      %p51 = scmp.ne.s32.totalorder %s34, %s50
      %p52 = scmp.eq.s32.totalorder %s26, 0
      %p53 = por %p51, %p52
      %s54 = ssub.s32 %s20, %s27
      %p55 = scmp.eq.s32.totalorder %s54, 0
      %s57 = sadd.s32 %s56, 1
      %s58 = scalar_select %p55, %s56, %s57
      %p61 = pneg %p55
      %p62 = scmp.eq.s32.totalorder %s20, 1
      %p63 = por %p61, %p62
      %p64 = scmp.ne.s32.totalorder %s56, %s59
      %p65 = scmp.eq.s32.totalorder %s20, 0
      %p66 = por %p64, %p65
      %p67 = scmp.ne.s32.totalorder %s56, %s59
      %p68 = scmp.eq.s32.totalorder %s25, 1
      %p69 = por %p67, %p68
      %p70 = scmp.ne.s32.totalorder %s59, %s60
      %p71 = scmp.eq.s32.totalorder %s25, 0
      %p72 = por %p70, %p71
      %p73 = scmp.ne.s32.totalorder %s59, %s60
      %p74 = scmp.eq.s32.totalorder %s26, 1
      %p75 = por %p73, %p74
      %p77 = scmp.ne.s32.totalorder %s60, %s76
      %p78 = scmp.eq.s32.totalorder %s26, 0
      %p79 = por %p77, %p78
      %s81 = sadd.s32 %s80, 1
      %p84 = scmp.eq.s32.totalorder %s20, 1
      %p85 = scmp.ne.s32.totalorder %s80, %s82
      %p86 = scmp.eq.s32.totalorder %s20, 0
      %p87 = por %p85, %p86
      %p88 = scmp.ne.s32.totalorder %s80, %s82
      %p89 = scmp.eq.s32.totalorder %s25, 1
      %p90 = por %p88, %p89
      %p91 = scmp.ne.s32.totalorder %s82, %s83
      %p92 = scmp.eq.s32.totalorder %s25, 0
      %p93 = por %p91, %p92
      %p94 = scmp.ne.s32.totalorder %s82, %s83
      %p95 = scmp.eq.s32.totalorder %s26, 1
      %p96 = por %p94, %p95
      %p98 = scmp.ne.s32.totalorder %s83, %s97
      %p99 = scmp.eq.s32.totalorder %s26, 0
      %p100 = por %p98, %p99
      %s102 = sadd.s32 %s101, 1
      %p105 = scmp.eq.s32.totalorder %s20, 1
      %p106 = scmp.ne.s32.totalorder %s101, %s103
      %p107 = scmp.eq.s32.totalorder %s20, 0
      %p108 = por %p106, %p107
      %p109 = scmp.ne.s32.totalorder %s101, %s103
      %p110 = scmp.eq.s32.totalorder %s25, 1
      %p111 = por %p109, %p110
      %p112 = scmp.ne.s32.totalorder %s103, %s104
      %p113 = scmp.eq.s32.totalorder %s25, 0
      %p114 = por %p112, %p113
      %p115 = scmp.ne.s32.totalorder %s103, %s104
      %p116 = scmp.eq.s32.totalorder %s26, 1
      %p117 = por %p115, %p116
      %p119 = scmp.ne.s32.totalorder %s104, %s118
      %p120 = scmp.eq.s32.totalorder %s26, 0
      %p121 = por %p119, %p120
      %s122 = ssub.s32 %s20, %s27
      %p123 = scmp.eq.s32.totalorder %s122, 0
      %s125 = sadd.s32 %s124, 1
      %s126 = scalar_select %p123, %s124, %s125
      %p129 = pneg %p123
      %p130 = scmp.eq.s32.totalorder %s20, 1
      %p131 = por %p129, %p130
      %p132 = scmp.ne.s32.totalorder %s124, %s127
      %p133 = scmp.eq.s32.totalorder %s20, 0
      %p134 = por %p132, %p133
      %p135 = scmp.ne.s32.totalorder %s124, %s127
      %p136 = scmp.eq.s32.totalorder %s25, 1
      %p137 = por %p135, %p136
      %p138 = scmp.ne.s32.totalorder %s127, %s128
      %p139 = scmp.eq.s32.totalorder %s25, 0
      %p140 = por %p138, %p139
      %p141 = scmp.ne.s32.totalorder %s127, %s128
      %p142 = scmp.eq.s32.totalorder %s26, 1
      %p143 = por %p141, %p142
      %p145 = scmp.ne.s32.totalorder %s128, %s144
      %p146 = scmp.eq.s32.totalorder %s26, 0
      %p147 = por %p145, %p146
      %p148 = scmp.le.s32.totalorder 1, %s20
      %p149 = scmp.lt.s32.totalorder %s20, 3
      %p150 = pnand %p148, %p149
      %p151 = pneg %p150
      // Predicated region
      $region9: #{net_forward.15} parent=5 // pred_check
        _
      $region10: #{net_forward.15} parent=5 // pred_check_branch
        %153 = sbr.rel (%p150) target = $region12
      $region11: #{net_forward.15} parent=5 // pred_region
        %s154 = ssub.s32 %s20, 1
        // Predicated region
        $region13: #{net_forward.15} parent=11 // pred_check
          %p155 = pneg %p93
        $region14: #{net_forward.15} parent=11 // pred_check_branch
          %157 = sbr.rel (%p155) target = $region16
        $region15: #{net_forward.15} parent=11 // pred_region
          %s159 = ssub.s32 512, 512
          %160 = vsyncadd [#allocation6], %s159
          %s161 = sshll.u32 [#allocation7], 4
          %s162 = int_to_ptr.vmem [resolvable:$true] %s161
          %167 = dma.hbm_to_vmem [thread:$0]  %s2, 512, %s162, [#allocation6], 64, 64, 4
        $region16: #{net_forward.15} parent=11 // pred_fallthru
          _
        // Predicated region
        $region17: #{net_forward.15} parent=11 // pred_check
          %p168 = pneg %p114
        $region18: #{net_forward.15} parent=11 // pred_check_branch
          %170 = sbr.rel (%p168) target = $region20
        $region19: #{net_forward.15} parent=11 // pred_region
          %s172 = ssub.s32 16, 16
          %173 = vsyncadd [#allocation9], %s172
          %s175 = sshll.u32 [#allocation8], 4
          %s176 = int_to_ptr.vmem [resolvable:$true] %s175
          %178 = dma.hbm_to_vmem [thread:$0]  %s3, 16, %s176, [#allocation9]
        $region20: #{net_forward.15} parent=11 // pred_fallthru
          _
      $region12: #{net_forward.15} parent=5 // pred_fallthru
        _
      %p179 = scmp.lt.s32.totalorder %s20, 2
      // Predicated region
      $region21: #{net_forward.15} parent=5 // pred_check
        %p180 = pneg %p179
      $region22: #{net_forward.15} parent=5 // pred_check_branch
        %182 = sbr.rel (%p180) target = $region24
      $region23: #{net_forward.15} parent=5 // pred_region
        // Predicated region
        $region25: #{net_forward.15} parent=23 // pred_check
          %p183 = pneg %p40
        $region26: #{net_forward.15} parent=23 // pred_check_branch
          %185 = sbr.rel (%p183) target = $region28
        $region27: #{net_forward.15} parent=23 // pred_region
          %s186 = sand.u32 %s30, 1
          %s187 = scalar_lea.sflag [#allocation3], %s186
          %s188 = sand.u32 %s30, 1
          %s189 = smul.addr %s188, 32
          %s190 = scalar_lea.vmem [#allocation2], %s189
          %s192 = ssub.s32 512, 512
          %193 = vsyncadd %s187, %s192
          %s194 = smul.addr %s20, 8
          %s195 = smul.addr %s194, 64
          %s196 = scalar_lea.hbm %s0, %s195
          %s197 = sshll.u32 %s190, 4
          %s198 = int_to_ptr.vmem [resolvable:$true] %s197
          %203 = dma.hbm_to_vmem [thread:$0]  %s196, 512, %s198, %s187, 64, 64, 4
        $region28: #{net_forward.15} parent=23 // pred_fallthru
          _
        // Predicated region
        $region29: #{net_forward.15} parent=23 // pred_check
          %p204 = pneg %p66
        $region30: #{net_forward.15} parent=23 // pred_check_branch
          %206 = sbr.rel (%p204) target = $region32
        $region31: #{net_forward.15} parent=23 // pred_region
          %s207 = sand.u32 %s20, 1
          %s208 = scalar_lea.sflag [#allocation6], %s207
          %s209 = sand.u32 %s56, 1
          %s210 = smul.addr %s209, 32
          %s211 = scalar_lea.vmem [#allocation5], %s210
          %s213 = ssub.s32 512, 512
          %214 = vsyncadd %s208, %s213
          %s215 = smul.addr %s20, 8
          %s216 = smul.addr %s215, 64
          %s217 = scalar_lea.hbm %s1, %s216
          %s218 = sshll.u32 %s211, 4
          %s219 = int_to_ptr.vmem [resolvable:$true] %s218
          %224 = dma.hbm_to_vmem [thread:$0]  %s217, 512, %s219, %s208, 64, 64, 4
        $region32: #{net_forward.15} parent=23 // pred_fallthru
          _
      $region24: #{net_forward.15} parent=5 // pred_fallthru
        _
      %p225 = scmp.le.s32.totalorder 1, %s20
      %p226 = scmp.lt.s32.totalorder %s20, 3
      %p227 = pnand %p225, %p226
      %p228 = pneg %p227
      // Predicated region
      $region33: #{net_forward.15} parent=5 // pred_check
        _
      $region34: #{net_forward.15} parent=5 // pred_check_branch
        %230 = sbr.rel (%p227) target = $region36
      $region35: #{net_forward.15} parent=5 // pred_region
        %s231 = ssub.s32 %s20, 1
        %s232 = sand.u32 %s33, 1
        %s233 = scalar_lea.sflag [#allocation3], %s232
        %s234 = sand.u32 %s33, 1
        %s235 = smul.addr %s234, 32
        %s236 = scalar_lea.vmem [#allocation2], %s235
        // Predicated region
        $region37: #{net_forward.15} parent=35 // pred_check
          %p237 = pneg %p46
        $region38: #{net_forward.15} parent=35 // pred_check_branch
          %239 = sbr.rel (%p237) target = $region40
        $region39: #{net_forward.15} parent=35 // pred_region
          %240 = dma.done %s233, 512
        $region40: #{net_forward.15} parent=35 // pred_fallthru
          _
        %s241 = sand.u32 %s25, 1
        %s242 = scalar_lea.sflag [#allocation6], %s241
        %s243 = sand.u32 %s59, 1
        %s244 = smul.addr %s243, 32
        %s245 = scalar_lea.vmem [#allocation5], %s244
        // Predicated region
        $region41: #{net_forward.15} parent=35 // pred_check
          %p246 = pneg %p72
        $region42: #{net_forward.15} parent=35 // pred_check_branch
          %248 = sbr.rel (%p246) target = $region44
        $region43: #{net_forward.15} parent=35 // pred_region
          %249 = dma.done %s242, 512
        $region44: #{net_forward.15} parent=35 // pred_fallthru
          _
        // Predicated region
        $region45: #{net_forward.15} parent=35 // pred_check
          %p250 = pneg %p93
        $region46: #{net_forward.15} parent=35 // pred_check_branch
          %252 = sbr.rel (%p250) target = $region48
        $region47: #{net_forward.15} parent=35 // pred_region
          %253 = dma.done [#allocation6], 512
        $region48: #{net_forward.15} parent=35 // pred_fallthru
          _
        // Predicated region
        $region49: #{net_forward.15} parent=35 // pred_check
          %p254 = pneg %p114
        $region50: #{net_forward.15} parent=35 // pred_check_branch
          %256 = sbr.rel (%p254) target = $region52
        $region51: #{net_forward.15} parent=35 // pred_region
          %257 = dma.done [#allocation9], 16
        $region52: #{net_forward.15} parent=35 // pred_fallthru
          _
        %s258 = sand.u32 %s33, 1
        %s259 = scalar_lea.sflag [#allocation3], %s258
        %s260 = sand.u32 %s33, 1
        %s261 = smul.addr %s260, 32
        %s262 = scalar_lea.vmem [#allocation2], %s261
        %p263 = pneg %p46
        %p264 = pneg %p43
        %s265 = sand.u32 %s25, 1
        %s266 = scalar_lea.sflag [#allocation6], %s265
        %s267 = sand.u32 %s59, 1
        %s268 = smul.addr %s267, 32
        %s269 = scalar_lea.vmem [#allocation5], %s268
        %p270 = pneg %p72
        %p271 = pneg %p69
        %p272 = pneg %p93
        %p273 = pneg %p90
        %p274 = pneg %p114
        %p275 = pneg %p111
        %p276 = pneg %p140
        %p277 = pneg %p137
        %s278 = sand.u32 %s127, 1
        %s279 = scalar_lea.sflag [#allocation4], %s278
        %s280 = sand.u32 %s127, 1
        %s281 = smul.addr %s280, 32
        %s282 = scalar_lea.vmem [#allocation10], %s281
        %v284 = vld [vmem:[%s236] sm:$0xf]
        %v285 = vld [vmem:[%s236 + $0x4] sm:$0xf]
        %v286 = vld [vmem:[%s236 + $0x8] sm:$0xf]
        %v287 = vld [vmem:[%s236 + $0xc] sm:$0xf]
        %v288 = vld [vmem:[%s236 + $0x10] sm:$0xf]
        %v289 = vld [vmem:[%s236 + $0x14] sm:$0xf]
        %v290 = vld [vmem:[%s236 + $0x18] sm:$0xf]
        %v291 = vld [vmem:[%s236 + $0x1c] sm:$0xf]
        %v292 = vld [vmem:[%s245] sm:$0xf]
        %v293 = vld [vmem:[%s245 + $0x4] sm:$0xf]
        %v294 = vld [vmem:[%s245 + $0x8] sm:$0xf]
        %v295 = vld [vmem:[%s245 + $0xc] sm:$0xf]
        %v296 = vld [vmem:[%s245 + $0x10] sm:$0xf]
        %v297 = vld [vmem:[%s245 + $0x14] sm:$0xf]
        %v298 = vld [vmem:[%s245 + $0x18] sm:$0xf]
        %v299 = vld [vmem:[%s245 + $0x1c] sm:$0xf]
        %v308 = vunpack.c.l.b16 %v284
        %v309 = vunpack.c.l.b16 %v285
        %v310 = vunpack.c.l.b16 %v286
        %v311 = vunpack.c.l.b16 %v287
        %v312 = vunpack.c.l.b16 %v288
        %v313 = vunpack.c.l.b16 %v289
        %v314 = vunpack.c.l.b16 %v290
        %v315 = vunpack.c.l.b16 %v291
        %v316 = vpack.c.b16 %v309, %v308
        %v317 = vpack.c.b16 %v311, %v310
        %v318 = vpack.c.b16 %v313, %v312
        %v319 = vpack.c.b16 %v315, %v314
        %v328 = vunpack.c.l.b16 %v292
        %v329 = vunpack.c.l.b16 %v293
        %v330 = vunpack.c.l.b16 %v294
        %v331 = vunpack.c.l.b16 %v295
        %v332 = vunpack.c.l.b16 %v296
        %v333 = vunpack.c.l.b16 %v297
        %v334 = vunpack.c.l.b16 %v298
        %v335 = vunpack.c.l.b16 %v299
        %v336 = vpack.c.b16 %v329, %v328
        %v337 = vpack.c.b16 %v331, %v330
        %v338 = vpack.c.b16 %v333, %v332
        %v339 = vpack.c.b16 %v335, %v334
        %340 = vrot.lane.b32.xlu0 %v336, 32
        %v341 = vpop.permute.xlu0 %340
        %342 = vrot.lane.b32.xlu0 %v337, 32
        %v343 = vpop.permute.xlu0 %342
        %344 = vrot.lane.b32.xlu0 %v338, 32
        %v345 = vpop.permute.xlu0 %344
        %346 = vrot.lane.b32.xlu0 %v339, 32
        %v347 = vpop.permute.xlu0 %346
        %vm348 = vcmask 261120
        %v351 = vsel %vm348, %v316, %v341
        %v354 = vsel %vm348, %v317, %v343
        %v357 = vsel %vm348, %v318, %v345
        %v360 = vsel %vm348, %v319, %v347
        %v361 = vld [vmem:[#allocation7] sm:$0xf]
        %v362 = vld [vmem:[#allocation7 + $0x4] sm:$0xf]
        %v363 = vld [vmem:[#allocation7 + $0x8] sm:$0xf]
        %v364 = vld [vmem:[#allocation7 + $0xc] sm:$0xf]
        %v365 = vld [vmem:[#allocation7 + $0x10] sm:$0xf]
        %v366 = vld [vmem:[#allocation7 + $0x14] sm:$0xf]
        %v367 = vld [vmem:[#allocation7 + $0x18] sm:$0xf]
        %v368 = vld [vmem:[#allocation7 + $0x1c] sm:$0xf]
        %v369 = vld [vmem:[#allocation8] sm:$0x1]
        %v371 = vlaneseq
        %v372 = vshrl.u32 %v371, 7
        %v373 = vsub.s32 0, %v372
        %v374 = vrot.slane %v369, %v373
        %v384 = vunpack.c.l.b16 %v361
        %v385 = vunpack.c.l.b16 %v362
        %v386 = vunpack.c.l.b16 %v363
        %v387 = vunpack.c.l.b16 %v364
        %v388 = vunpack.c.l.b16 %v365
        %v389 = vunpack.c.l.b16 %v366
        %v390 = vunpack.c.l.b16 %v367
        %v391 = vunpack.c.l.b16 %v368
        %v392 = vpack.c.b16 %v385, %v384
        %v393 = vpack.c.b16 %v387, %v386
        %v394 = vpack.c.b16 %v389, %v388
        %v395 = vpack.c.b16 %v391, %v390
        %vm400 = vcmask 523264
        %v401 = vsel %vm400, %v351, 0
        %v403 = vsel %vm400, %v354, 0
        %v405 = vsel %vm400, %v357, 0
        %v407 = vsel %vm400, %v360, 0
        %409 = vmatprep.subr.bf16.mxu0 0
        %410 = vmatpush1.bf16.msra.mxu0 %v392
        %411 = vmatprep.subr.bf16.mxu0 0
        %412 = vmatpush1.bf16.msra.mxu0 %v393
        %413 = vmatprep.subr.bf16.mxu0 0
        %414 = vmatpush1.bf16.msra.mxu0 %v394
        %415 = vmatprep.subr.bf16.mxu0 0
        %416 = vmatpush1.bf16.msra.mxu0 %v395
        %417 = vmatprep.subr.bf16.mxu0 0
        %418 = vmatpush1.bf16.msra.mxu0 0
        %419 = vmatprep.subr.bf16.mxu0 0
        %420 = vmatpush1.bf16.msra.mxu0 0
        %421 = vmatprep.subr.bf16.mxu0 0
        %422 = vmatpush1.bf16.msra.mxu0 0
        %423 = vmatprep.subr.bf16.mxu0 0
        %424 = vmatpush1.bf16.msra.mxu0 0
        %425 = vmatprep.subr.bf16.mxu0 0
        %426 = vmatpush1.bf16.msra.mxu0 0
        %427 = vmatprep.subr.bf16.mxu0 0
        %428 = vmatpush1.bf16.msra.mxu0 0
        %429 = vmatprep.subr.bf16.mxu0 0
        %430 = vmatpush1.bf16.msra.mxu0 0
        %431 = vmatprep.subr.bf16.mxu0 0
        %432 = vmatpush1.bf16.msra.mxu0 0
        %433 = vmatprep.subr.bf16.mxu0 0
        %434 = vmatpush1.bf16.msra.mxu0 0
        %435 = vmatprep.subr.bf16.mxu0 0
        %436 = vmatpush1.bf16.msra.mxu0 0
        %437 = vmatprep.subr.bf16.mxu0 0
        %438 = vmatpush1.bf16.msra.mxu0 0
        %439 = vmatprep.subr.bf16.mxu0 0
        %440 = vmatpush1.bf16.msra.mxu0 0
        %441 = vmatprep.mubr.bf16.mxu0 0
        %442 = vmatmul.mubr.bf16.gmra.mrb[0].mxu0 %v401
        %v443 = vpop.f32.mrb[0].mxu0
        %v444 = vadd.f32 %v374, %v443
        %v445 = vpop.f32.mrb[0].mxu0
        %v446 = vpop.f32.mrb[0].mxu0
        %v447 = vadd.f32 %v374, %v446
        %v448 = vpop.f32.mrb[0].mxu0
        %449 = vmatprep.mubr.bf16.mxu0 0
        %450 = vmatmul.mubr.bf16.gmra.mrb[0].mxu0 %v403
        %v451 = vpop.f32.mrb[0].mxu0
        %v452 = vadd.f32 %v374, %v451
        %v453 = vpop.f32.mrb[0].mxu0
        %v454 = vpop.f32.mrb[0].mxu0
        %v455 = vadd.f32 %v374, %v454
        %v456 = vpop.f32.mrb[0].mxu0
        %457 = vmatprep.mubr.bf16.mxu0 0
        %458 = vmatmul.mubr.bf16.gmra.mrb[0].mxu0 %v405
        %v459 = vpop.f32.mrb[0].mxu0
        %v460 = vadd.f32 %v374, %v459
        %v461 = vpop.f32.mrb[0].mxu0
        %v462 = vpop.f32.mrb[0].mxu0
        %v463 = vadd.f32 %v374, %v462
        %v464 = vpop.f32.mrb[0].mxu0
        %465 = vmatprep.mubr.bf16.mxu0 0
        %466 = vmatmul.mubr.bf16.gmra.mrb[0].mxu0 %v407
        %v467 = vpop.f32.mrb[0].mxu0
        %v468 = vadd.f32 %v374, %v467
        %v469 = vpop.f32.mrb[0].mxu0
        %v470 = vpop.f32.mrb[0].mxu0
        %v471 = vadd.f32 %v374, %v470
        %v472 = vpop.f32.mrb[0].mxu0
        %473 = vdwg.mxu0
        %v474 = vpack.c.bf16 %v447, %v444
        %v475 = vpack.c.bf16 %v455, %v452
        %v476 = vpack.c.bf16 %v463, %v460
        %v477 = vpack.c.bf16 %v471, %v468
        %v482 = vunpack.c.l.b16 %v474
        %v483 = vunpack.c.h.b16 %v474
        %v484 = vunpack.c.l.b16 %v475
        %v485 = vunpack.c.h.b16 %v475
        %v486 = vunpack.c.l.b16 %v476
        %v487 = vunpack.c.h.b16 %v476
        %v488 = vunpack.c.l.b16 %v477
        %v489 = vunpack.c.h.b16 %v477
        %v490 = vpack.c.b16 %v482, %v482
        %v491 = vpack.c.b16 %v483, %v483
        %v492 = vpack.c.b16 %v484, %v484
        %v493 = vpack.c.b16 %v485, %v485
        %v494 = vpack.c.b16 %v486, %v486
        %v495 = vpack.c.b16 %v487, %v487
        %v496 = vpack.c.b16 %v488, %v488
        %v497 = vpack.c.b16 %v489, %v489
        %vm506 = vcmask 257024
        %507 = vst.msk [vmem:[%s282] sm:$0xf] %vm506, %v490
        %508 = vst.msk [vmem:[%s282 + $0x4] sm:$0xf] %vm506, %v491
        %509 = vst.msk [vmem:[%s282 + $0x8] sm:$0xf] %vm506, %v492
        %510 = vst.msk [vmem:[%s282 + $0xc] sm:$0xf] %vm506, %v493
        %511 = vst.msk [vmem:[%s282 + $0x10] sm:$0xf] %vm506, %v494
        %512 = vst.msk [vmem:[%s282 + $0x14] sm:$0xf] %vm506, %v495
        %513 = vst.msk [vmem:[%s282 + $0x18] sm:$0xf] %vm506, %v496
        %514 = vst.msk [vmem:[%s282 + $0x1c] sm:$0xf] %vm506, %v497
        %s515 = sand.u32 %s127, 1
        %s516 = scalar_lea.sflag [#allocation4], %s515
        %s517 = sand.u32 %s127, 1
        %s518 = smul.addr %s517, 32
        %s519 = scalar_lea.vmem [#allocation10], %s518
        // Predicated region
        $region53: #{net_forward.15} parent=35 // pred_check
          %p520 = pneg %p137
        $region54: #{net_forward.15} parent=35 // pred_check_branch
          %522 = sbr.rel (%p520) target = $region56
        $region55: #{net_forward.15} parent=35 // pred_region
          %s524 = ssub.s32 512, 512
          %525 = vsyncadd %s516, %s524
          %s526 = smul.addr %s25, 8
          %s527 = smul.addr %s526, 64
          %s528 = scalar_lea.hbm %s4, %s527
          %s529 = sshll.u32 %s519, 4
          %s530 = int_to_ptr.vmem [resolvable:$true] %s529
          %535 = dma.vmem_to_hbm [thread:$0]  %s530, 512, %s528, %s516, 64, 64, 4
        $region56: #{net_forward.15} parent=35 // pred_fallthru
          _
      $region36: #{net_forward.15} parent=5 // pred_fallthru
        _
      %p536 = scmp.le.s32.totalorder 2, %s20
      // Predicated region
      $region57: #{net_forward.15} parent=5 // pred_check
        %p537 = pneg %p536
      $region58: #{net_forward.15} parent=5 // pred_check_branch
        %539 = sbr.rel (%p537) target = $region60
      $region59: #{net_forward.15} parent=5 // pred_region
        %s540 = ssub.s32 %s20, 2
        // Predicated region
        $region61: #{net_forward.15} parent=59 // pred_check
          %p541 = pneg %p143
        $region62: #{net_forward.15} parent=59 // pred_check_branch
          %543 = sbr.rel (%p541) target = $region64
        $region63: #{net_forward.15} parent=59 // pred_region
          %s544 = sand.u32 %s128, 1
          %s545 = scalar_lea.sflag [#allocation4], %s544
          %s546 = sand.u32 %s128, 1
          %s547 = smul.addr %s546, 32
          %s548 = scalar_lea.vmem [#allocation10], %s547
          %549 = dma.done %s545, 512
        $region64: #{net_forward.15} parent=59 // pred_fallthru
          _
      $region60: #{net_forward.15} parent=5 // pred_fallthru
        _
    $region6: #{net_forward.15} parent=1 // loop_footer
      %s24 = sadd.s32 1, %s20
    $region7: #{net_forward.15} parent=1 // loop_footer_branch
      %19 = sbr.rel target = $region3
    $region8: #{net_forward.15} parent=1 // loop_exit
      _
    %550 = vsyncpa [#allocation3], 1
    %s551 = scalar_lea.sflag [#allocation3], 1
    %552 = vsyncpa %s551, 1
    %553 = vsyncpa [#allocation6], 1
    %s554 = scalar_lea.sflag [#allocation6], 1
    %555 = vsyncpa %s554, 1
    %556 = vsyncpa [#allocation9], 1
    %557 = vsyncpa [#allocation4], 1
    %s558 = scalar_lea.sflag [#allocation4], 1
    %559 = vsyncpa %s558, 1

// kernel: net_forward.13
$region0: #{net_forward.13}
  #allocation0 [shape = 'u32[]', space=smem, size = 0x4, offset = 0x4, fixed_abs, tag = 'smem constant byte address 0x4 - core index']
  #allocation1 [shape = 'u32[144,128]{1,0:T(1,128)}', space=vmem, size = 0x12000, scoped, tag = 'internal scratch']
  %s0 = inlined_call_operand.hbm [shape: bf16[2,10,10,12], index: 0, kind: input, shape index: {}]
  %s1 = inlined_call_operand.hbm [shape: bf16[108,32], index: 1, kind: input, shape index: {}]
  %s2 = inlined_call_operand.hbm [shape: f32[1,32], index: 2, kind: input, shape index: {}]
  %s3 = inlined_call_operand.hbm [shape: bf16[2,64,32], index: 3, kind: output, shape index: {}]
  %s4 = sld [smem:[#allocation0]]
  $region57: #{net_forward.13} parent=0
    _
  %s6 = ssub.s32 1, %s4
  %s7 = scalar_select 0, %s6, %s4
  $region1: #{net_forward.13} parent=0
    #allocation2 [shape = 'u8[81920]{0}', space=vmem, size = 0x14000, scoped, tag = 'input window, operand 0']
    #allocation3 [shape = 's32[2]{0}', space=sflag, size = 0x8, scoped, tag = 'scoped memory for net_forward.13']
    #allocation4 [shape = 's32[2]{0}', space=sflag, size = 0x8, scoped, tag = 'scoped memory for net_forward.13']
    #allocation5 [shape = 'u8[28672]{0}', space=vmem, size = 0x7000, scoped, tag = 'input window, operand 1, single buffered']
    #allocation6 [shape = 's32[1]{0}', space=sflag, size = 0x4, scoped, tag = 'scoped memory for net_forward.13']
    #allocation7 [shape = 'u8[512]{0}', space=vmem, size = 0x400, scoped, tag = 'input window, operand 2, single buffered']
    #allocation8 [shape = 'u8[32768]{0}', space=vmem, size = 0x8000, scoped, tag = 'output window, operand 0']
    %8 = vsyncpa [#allocation3], 0
    %s9 = scalar_lea.sflag [#allocation3], 1
    %10 = vsyncpa %s9, 0
    %11 = vsyncpa [#allocation6], 0
    %12 = vsyncpa [#allocation4], 0
    %s13 = scalar_lea.sflag [#allocation4], 1
    %14 = vsyncpa %s13, 0
    loop: start=0, step=1, limit=4
    $region2: #{net_forward.13} parent=1 // loop_pre_header
      _
    $region3: #{net_forward.13} parent=1 // loop_header
      %s16 = sphi 0, %s20
      %p17 = scmp.ge.s32.totalorder %s16, 4
      %s23 = sphi 0, %s35
      %s24 = sphi 0, %s31
      %s25 = sphi 0, %s23
      %s26 = sphi 0, %s24
      %s27 = sphi 0, %s25
      %s28 = sphi 0, %s26
      %s38 = sphi 0, %s40
      %s41 = sphi 0, %s38
      %s42 = sphi 0, %s41
      %s58 = sphi 0, %s42
      %s62 = sphi 0, %s62
      %s64 = sphi 0, %s62
      %s65 = sphi 0, %s64
      %s79 = sphi 0, %s65
      %s83 = sphi 0, %s83
      %s85 = sphi 0, %s83
      %s86 = sphi 0, %s85
      %s100 = sphi 0, %s86
      %s108 = sphi 0, %s110
      %s111 = sphi 0, %s108
      %s112 = sphi 0, %s111
      %s128 = sphi 0, %s112
    $region4: #{net_forward.13} parent=1 // loop_header_branch
      %19 = sbr.rel (%p17) target = $region8
    $region5: #{net_forward.13} parent=1 // loop_body
      %s21 = ssub.s32 %s16, 1
      %s22 = ssub.s32 %s16, 2
      %s29 = sadd.s32 1, %s24
      %p30 = scmp.ge.s32.totalorder %s29, 1
      %s31 = scalar_select %p30, 0, %s29
      %s32 = sadd.s32 1, %s23
      %s33 = scalar_select %p30, %s32, %s23
      %p34 = scmp.ge.s32.totalorder %s33, 2
      %s35 = scalar_select %p34, 0, %s33
      %s36 = ssub.s32 %s23, %s35
      %p37 = scmp.eq.s32.totalorder %s36, 0
      %s39 = sadd.s32 %s38, 1
      %s40 = scalar_select %p37, %s38, %s39
      %p43 = pneg %p37
      %p44 = scmp.eq.s32.totalorder %s16, 1
      %p45 = por %p43, %p44
      %p46 = scmp.ne.s32.totalorder %s38, %s41
      %p47 = scmp.eq.s32.totalorder %s16, 0
      %p48 = por %p46, %p47
      %p49 = scmp.ne.s32.totalorder %s38, %s41
      %p50 = scmp.eq.s32.totalorder %s21, 1
      %p51 = por %p49, %p50
      %p52 = scmp.ne.s32.totalorder %s41, %s42
      %p53 = scmp.eq.s32.totalorder %s21, 0
      %p54 = por %p52, %p53
      %p55 = scmp.ne.s32.totalorder %s41, %s42
      %p56 = scmp.eq.s32.totalorder %s22, 1
      %p57 = por %p55, %p56
      %p59 = scmp.ne.s32.totalorder %s42, %s58
      %p60 = scmp.eq.s32.totalorder %s22, 0
      %p61 = por %p59, %p60
      %s63 = sadd.s32 %s62, 1
      %p66 = scmp.eq.s32.totalorder %s16, 1
      %p67 = scmp.ne.s32.totalorder %s62, %s64
      %p68 = scmp.eq.s32.totalorder %s16, 0
      %p69 = por %p67, %p68
      %p70 = scmp.ne.s32.totalorder %s62, %s64
      %p71 = scmp.eq.s32.totalorder %s21, 1
      %p72 = por %p70, %p71
      %p73 = scmp.ne.s32.totalorder %s64, %s65
      %p74 = scmp.eq.s32.totalorder %s21, 0
      %p75 = por %p73, %p74
      %p76 = scmp.ne.s32.totalorder %s64, %s65
      %p77 = scmp.eq.s32.totalorder %s22, 1
      %p78 = por %p76, %p77
      %p80 = scmp.ne.s32.totalorder %s65, %s79
      %p81 = scmp.eq.s32.totalorder %s22, 0
      %p82 = por %p80, %p81
      %s84 = sadd.s32 %s83, 1
      %p87 = scmp.eq.s32.totalorder %s16, 1
      %p88 = scmp.ne.s32.totalorder %s83, %s85
      %p89 = scmp.eq.s32.totalorder %s16, 0
      %p90 = por %p88, %p89
      %p91 = scmp.ne.s32.totalorder %s83, %s85
      %p92 = scmp.eq.s32.totalorder %s21, 1
      %p93 = por %p91, %p92
      %p94 = scmp.ne.s32.totalorder %s85, %s86
      %p95 = scmp.eq.s32.totalorder %s21, 0
      %p96 = por %p94, %p95
      %p97 = scmp.ne.s32.totalorder %s85, %s86
      %p98 = scmp.eq.s32.totalorder %s22, 1
      %p99 = por %p97, %p98
      %p101 = scmp.ne.s32.totalorder %s86, %s100
      %p102 = scmp.eq.s32.totalorder %s22, 0
      %p103 = por %p101, %p102
      %s104 = ssub.s32 %s23, %s35
      %s105 = ssub.s32 %s24, %s31
      %s106 = sor.u32 %s104, %s105
      %p107 = scmp.eq.s32.totalorder %s106, 0
      %s109 = sadd.s32 %s108, 1
      %s110 = scalar_select %p107, %s108, %s109
      %p113 = pneg %p107
      %p114 = scmp.eq.s32.totalorder %s16, 1
      %p115 = por %p113, %p114
      %p116 = scmp.ne.s32.totalorder %s108, %s111
      %p117 = scmp.eq.s32.totalorder %s16, 0
      %p118 = por %p116, %p117
      %p119 = scmp.ne.s32.totalorder %s108, %s111
      %p120 = scmp.eq.s32.totalorder %s21, 1
      %p121 = por %p119, %p120
      %p122 = scmp.ne.s32.totalorder %s111, %s112
      %p123 = scmp.eq.s32.totalorder %s21, 0
      %p124 = por %p122, %p123
      %p125 = scmp.ne.s32.totalorder %s111, %s112
      %p126 = scmp.eq.s32.totalorder %s22, 1
      %p127 = por %p125, %p126
      %p129 = scmp.ne.s32.totalorder %s112, %s128
      %p130 = scmp.eq.s32.totalorder %s22, 0
      %p131 = por %p129, %p130
      %p132 = scmp.le.s32.totalorder 1, %s16
      %p133 = scmp.lt.s32.totalorder %s16, 3
      %p134 = pnand %p132, %p133
      %p135 = pneg %p134
      // Predicated region
      $region9: #{net_forward.13} parent=5 // pred_check
        _
      $region10: #{net_forward.13} parent=5 // pred_check_branch
        %137 = sbr.rel (%p134) target = $region12
      $region11: #{net_forward.13} parent=5 // pred_region
        %s138 = ssub.s32 %s16, 1
        // Predicated region
        $region13: #{net_forward.13} parent=11 // pred_check
          %p139 = pneg %p75
        $region14: #{net_forward.13} parent=11 // pred_check_branch
          %141 = sbr.rel (%p139) target = $region16
        $region15: #{net_forward.13} parent=11 // pred_region
          %s143 = ssub.s32 896, 896
          %144 = vsyncadd [#allocation6], %s143
          %s145 = sshll.u32 [#allocation5], 4
          %s146 = int_to_ptr.vmem [resolvable:$true] %s145
          %151 = dma.hbm_to_vmem [thread:$0]  %s1, 896, %s146, [#allocation6], 64, 64, 4
        $region16: #{net_forward.13} parent=11 // pred_fallthru
          _
        // Predicated region
        $region17: #{net_forward.13} parent=11 // pred_check
          %p152 = pneg %p96
        $region18: #{net_forward.13} parent=11 // pred_check_branch
          %154 = sbr.rel (%p152) target = $region20
        $region19: #{net_forward.13} parent=11 // pred_region
          %s156 = ssub.s32 16, 16
          %157 = vsyncadd [#allocation6], %s156
          %s159 = sshll.u32 [#allocation7], 4
          %s160 = int_to_ptr.vmem [resolvable:$true] %s159
          %162 = dma.hbm_to_vmem [thread:$0]  %s2, 16, %s160, [#allocation6]
        $region20: #{net_forward.13} parent=11 // pred_fallthru
          _
      $region12: #{net_forward.13} parent=5 // pred_fallthru
        _
      %p163 = scmp.lt.s32.totalorder %s16, 2
      // Predicated region
      $region21: #{net_forward.13} parent=5 // pred_check
        %p164 = pneg %p163
      $region22: #{net_forward.13} parent=5 // pred_check_branch
        %166 = sbr.rel (%p164) target = $region24
      $region23: #{net_forward.13} parent=5 // pred_region
        // Predicated region
        $region25: #{net_forward.13} parent=23 // pred_check
          %p167 = pneg %p48
        $region26: #{net_forward.13} parent=23 // pred_check_branch
          %169 = sbr.rel (%p167) target = $region28
        $region27: #{net_forward.13} parent=23 // pred_region
          %s170 = sand.u32 %s38, 1
          %s171 = scalar_lea.sflag [#allocation3], %s170
          %s172 = sand.u32 %s38, 1
          %s173 = smul.addr %s172, 80
          %s174 = scalar_lea.vmem [#allocation2], %s173
          %s176 = ssub.s32 1280, 1280
          %177 = vsyncadd %s171, %s176
          %s178 = smul.addr %s23, 20
          %s179 = smul.addr %s178, 64
          %s180 = scalar_lea.hbm %s0, %s179
          %s181 = sshll.u32 %s174, 4
          %s182 = int_to_ptr.vmem [resolvable:$true] %s181
          %187 = dma.hbm_to_vmem [thread:$0]  %s180, 1280, %s182, %s171, 64, 64, 4
        $region28: #{net_forward.13} parent=23 // pred_fallthru
          _
      $region24: #{net_forward.13} parent=5 // pred_fallthru
        _
      %p188 = scmp.le.s32.totalorder 1, %s16
      %p189 = scmp.lt.s32.totalorder %s16, 3
      %p190 = pnand %p188, %p189
      %p191 = pneg %p190
      // Predicated region
      $region29: #{net_forward.13} parent=5 // pred_check
        _
      $region30: #{net_forward.13} parent=5 // pred_check_branch
        %193 = sbr.rel (%p190) target = $region32
      $region31: #{net_forward.13} parent=5 // pred_region
        %s194 = ssub.s32 %s16, 1
        %s195 = sand.u32 %s41, 1
        %s196 = scalar_lea.sflag [#allocation3], %s195
        %s197 = sand.u32 %s41, 1
        %s198 = smul.addr %s197, 80
        %s199 = scalar_lea.vmem [#allocation2], %s198
        // Predicated region
        $region33: #{net_forward.13} parent=31 // pred_check
          %p200 = pneg %p54
        $region34: #{net_forward.13} parent=31 // pred_check_branch
          %202 = sbr.rel (%p200) target = $region36
        $region35: #{net_forward.13} parent=31 // pred_region
          %203 = dma.done %s196, 1280
        $region36: #{net_forward.13} parent=31 // pred_fallthru
          _
        // Predicated region
        $region37: #{net_forward.13} parent=31 // pred_check
          %p204 = pneg %p75
        $region38: #{net_forward.13} parent=31 // pred_check_branch
          %206 = sbr.rel (%p204) target = $region40
        $region39: #{net_forward.13} parent=31 // pred_region
          %207 = dma.done [#allocation6], 896
        $region40: #{net_forward.13} parent=31 // pred_fallthru
          _
        // Predicated region
        $region41: #{net_forward.13} parent=31 // pred_check
          %p208 = pneg %p96
        $region42: #{net_forward.13} parent=31 // pred_check_branch
          %210 = sbr.rel (%p208) target = $region44
        $region43: #{net_forward.13} parent=31 // pred_region
          %211 = dma.done [#allocation6], 16
        $region44: #{net_forward.13} parent=31 // pred_fallthru
          _
        %s212 = sand.u32 %s41, 1
        %s213 = scalar_lea.sflag [#allocation3], %s212
        %s214 = sand.u32 %s41, 1
        %s215 = smul.addr %s214, 80
        %s216 = scalar_lea.vmem [#allocation2], %s215
        %p217 = pneg %p54
        %p218 = pneg %p51
        %p219 = pneg %p75
        %p220 = pneg %p72
        %p221 = pneg %p96
        %p222 = pneg %p93
        %p223 = pneg %p124
        %p224 = pneg %p121
        %s225 = sand.u32 %s111, 1
        %s226 = scalar_lea.sflag [#allocation4], %s225
        %s227 = sand.u32 %s111, 1
        %s228 = smul.addr %s227, 32
        %s229 = scalar_lea.vmem [#allocation8], %s228
        %s230 = smul.u32 8, %s26
        %s232 = smul.u32 %s26, 8
        %s233 = smul.u32 %s232, 2
        %s234 = smul.addr %s233, 4
        %s235 = scalar_lea.vmem %s199, %s234 [#allocation2]
        %v236 = vld [vmem:[%s235] sm:$0xf]
        %v237 = vld [vmem:[%s235 + $0x4] sm:$0x1]
        %v238 = vld [vmem:[%s235 + $0x8] sm:$0xf]
        %v239 = vld [vmem:[%s235 + $0xc] sm:$0x1]
        %v240 = vld [vmem:[%s235 + $0x10] sm:$0xf]
        %v241 = vld [vmem:[%s235 + $0x14] sm:$0x1]
        %v242 = vld [vmem:[%s235 + $0x18] sm:$0xf]
        %v243 = vld [vmem:[%s235 + $0x1c] sm:$0x1]
        %v244 = vld [vmem:[%s235 + $0x20] sm:$0xf]
        %v245 = vld [vmem:[%s235 + $0x24] sm:$0x1]
        %v246 = vld [vmem:[%s235 + $0x28] sm:$0xf]
        %v247 = vld [vmem:[%s235 + $0x2c] sm:$0x1]
        %v248 = vld [vmem:[%s235 + $0x30] sm:$0xf]
        %v249 = vld [vmem:[%s235 + $0x34] sm:$0x1]
        %v250 = vld [vmem:[%s235 + $0x38] sm:$0xf]
        %v251 = vld [vmem:[%s235 + $0x3c] sm:$0x1]
        %v252 = vld [vmem:[%s235 + $0x40] sm:$0xf]
        %v253 = vld [vmem:[%s235 + $0x44] sm:$0x1]
        %v254 = vld [vmem:[%s235 + $0x48] sm:$0xf]
        %v255 = vld [vmem:[%s235 + $0x4c] sm:$0x1]
        %v256 = vunpack.c.l.bf16 %v236
        %v257 = vunpack.c.l.bf16 %v237
        %v258 = vunpack.c.l.bf16 %v238
        %v259 = vunpack.c.l.bf16 %v239
        %v260 = vunpack.c.l.bf16 %v240
        %v261 = vunpack.c.l.bf16 %v241
        %v262 = vunpack.c.l.bf16 %v242
        %v263 = vunpack.c.l.bf16 %v243
        %v264 = vunpack.c.l.bf16 %v244
        %v265 = vunpack.c.l.bf16 %v245
        %v266 = vunpack.c.l.bf16 %v246
        %v267 = vunpack.c.l.bf16 %v247
        %v268 = vunpack.c.l.bf16 %v248
        %v269 = vunpack.c.l.bf16 %v249
        %v270 = vunpack.c.l.bf16 %v250
        %v271 = vunpack.c.l.bf16 %v251
        %v272 = vunpack.c.l.bf16 %v252
        %v273 = vunpack.c.l.bf16 %v253
        %v274 = vunpack.c.l.bf16 %v254
        %v275 = vunpack.c.l.bf16 %v255
        %vm292 = vcmask 1046528
        %v293 = vrot.slane %v256, 1
        %v294 = vrot.slane %v257, 1
        %v295 = vsel %vm292, %v293, %v294
        %v296 = vrot.slane %v258, 1
        %v297 = vrot.slane %v259, 1
        %v298 = vsel %vm292, %v296, %v297
        %v299 = vrot.slane %v260, 1
        %v300 = vrot.slane %v261, 1
        %v301 = vsel %vm292, %v299, %v300
        %v302 = vrot.slane %v262, 1
        %v303 = vrot.slane %v263, 1
        %v304 = vsel %vm292, %v302, %v303
        %v305 = vrot.slane %v264, 1
        %v306 = vrot.slane %v265, 1
        %v307 = vsel %vm292, %v305, %v306
        %v308 = vrot.slane %v266, 1
        %v309 = vrot.slane %v267, 1
        %v310 = vsel %vm292, %v308, %v309
        %v311 = vrot.slane %v268, 1
        %v312 = vrot.slane %v269, 1
        %v313 = vsel %vm292, %v311, %v312
        %v314 = vrot.slane %v270, 1
        %v315 = vrot.slane %v271, 1
        %v316 = vsel %vm292, %v314, %v315
        %vm317 = vcmask 1045504
        %v318 = vrot.slane %v256, 2
        %v319 = vrot.slane %v257, 2
        %v320 = vsel %vm317, %v318, %v319
        %v321 = vrot.slane %v258, 2
        %v322 = vrot.slane %v259, 2
        %v323 = vsel %vm317, %v321, %v322
        %v324 = vrot.slane %v260, 2
        %v325 = vrot.slane %v261, 2
        %v326 = vsel %vm317, %v324, %v325
        %v327 = vrot.slane %v262, 2
        %v328 = vrot.slane %v263, 2
        %v329 = vsel %vm317, %v327, %v328
        %v330 = vrot.slane %v264, 2
        %v331 = vrot.slane %v265, 2
        %v332 = vsel %vm317, %v330, %v331
        %v333 = vrot.slane %v266, 2
        %v334 = vrot.slane %v267, 2
        %v335 = vsel %vm317, %v333, %v334
        %v336 = vrot.slane %v268, 2
        %v337 = vrot.slane %v269, 2
        %v338 = vsel %vm317, %v336, %v337
        %v339 = vrot.slane %v270, 2
        %v340 = vrot.slane %v271, 2
        %v341 = vsel %vm317, %v339, %v340
        %v344 = vrot.slane %v272, 1
        %v345 = vrot.slane %v273, 1
        %v346 = vsel %vm292, %v344, %v345
        %v347 = vrot.slane %v272, 2
        %v348 = vrot.slane %v273, 2
        %v349 = vsel %vm317, %v347, %v348
        %v352 = vrot.slane %v274, 1
        %v353 = vrot.slane %v275, 1
        %v354 = vsel %vm292, %v352, %v353
        %v355 = vrot.slane %v274, 2
        %v356 = vrot.slane %v275, 2
        %v357 = vsel %vm317, %v355, %v356
        %358 = vrot.lane.b32.xlu0 %v295, 12
        %v359 = vpop.permute.xlu0 %358
        %360 = vrot.lane.b32.xlu0 %v298, 12
        %v361 = vpop.permute.xlu0 %360
        %362 = vrot.lane.b32.xlu0 %v301, 12
        %v363 = vpop.permute.xlu0 %362
        %364 = vrot.lane.b32.xlu0 %v304, 12
        %v365 = vpop.permute.xlu0 %364
        %366 = vrot.lane.b32.xlu0 %v307, 12
        %v367 = vpop.permute.xlu0 %366
        %368 = vrot.lane.b32.xlu0 %v310, 12
        %v369 = vpop.permute.xlu0 %368
        %370 = vrot.lane.b32.xlu0 %v313, 12
        %v371 = vpop.permute.xlu0 %370
        %372 = vrot.lane.b32.xlu0 %v316, 12
        %v373 = vpop.permute.xlu0 %372
        %382 = vrot.lane.b32.xlu0 %v320, 24
        %v383 = vpop.permute.xlu0 %382
        %384 = vrot.lane.b32.xlu0 %v323, 24
        %v385 = vpop.permute.xlu0 %384
        %386 = vrot.lane.b32.xlu0 %v326, 24
        %v387 = vpop.permute.xlu0 %386
        %388 = vrot.lane.b32.xlu0 %v329, 24
        %v389 = vpop.permute.xlu0 %388
        %390 = vrot.lane.b32.xlu0 %v332, 24
        %v391 = vpop.permute.xlu0 %390
        %392 = vrot.lane.b32.xlu0 %v335, 24
        %v393 = vpop.permute.xlu0 %392
        %394 = vrot.lane.b32.xlu0 %v338, 24
        %v395 = vpop.permute.xlu0 %394
        %396 = vrot.lane.b32.xlu0 %v341, 24
        %v397 = vpop.permute.xlu0 %396
        %406 = vrot.lane.b32.xlu0 %v258, 36
        %v407 = vpop.permute.xlu0 %406
        %408 = vrot.lane.b32.xlu0 %v260, 36
        %v409 = vpop.permute.xlu0 %408
        %410 = vrot.lane.b32.xlu0 %v262, 36
        %v411 = vpop.permute.xlu0 %410
        %412 = vrot.lane.b32.xlu0 %v264, 36
        %v413 = vpop.permute.xlu0 %412
        %414 = vrot.lane.b32.xlu0 %v266, 36
        %v415 = vpop.permute.xlu0 %414
        %416 = vrot.lane.b32.xlu0 %v268, 36
        %v417 = vpop.permute.xlu0 %416
        %418 = vrot.lane.b32.xlu0 %v270, 36
        %v419 = vpop.permute.xlu0 %418
        %420 = vrot.lane.b32.xlu0 %v272, 36
        %v421 = vpop.permute.xlu0 %420
        %430 = vrot.lane.b32.xlu0 %v298, 48
        %v431 = vpop.permute.xlu0 %430
        %432 = vrot.lane.b32.xlu0 %v301, 48
        %v433 = vpop.permute.xlu0 %432
        %434 = vrot.lane.b32.xlu0 %v304, 48
        %v435 = vpop.permute.xlu0 %434
        %436 = vrot.lane.b32.xlu0 %v307, 48
        %v437 = vpop.permute.xlu0 %436
        %438 = vrot.lane.b32.xlu0 %v310, 48
        %v439 = vpop.permute.xlu0 %438
        %440 = vrot.lane.b32.xlu0 %v313, 48
        %v441 = vpop.permute.xlu0 %440
        %442 = vrot.lane.b32.xlu0 %v316, 48
        %v443 = vpop.permute.xlu0 %442
        %444 = vrot.lane.b32.xlu0 %v346, 48
        %v445 = vpop.permute.xlu0 %444
        %454 = vrot.lane.b32.xlu0 %v323, 60
        %v455 = vpop.permute.xlu0 %454
        %456 = vrot.lane.b32.xlu0 %v326, 60
        %v457 = vpop.permute.xlu0 %456
        %458 = vrot.lane.b32.xlu0 %v329, 60
        %v459 = vpop.permute.xlu0 %458
        %460 = vrot.lane.b32.xlu0 %v332, 60
        %v461 = vpop.permute.xlu0 %460
        %462 = vrot.lane.b32.xlu0 %v335, 60
        %v463 = vpop.permute.xlu0 %462
        %464 = vrot.lane.b32.xlu0 %v338, 60
        %v465 = vpop.permute.xlu0 %464
        %466 = vrot.lane.b32.xlu0 %v341, 60
        %v467 = vpop.permute.xlu0 %466
        %468 = vrot.lane.b32.xlu0 %v349, 60
        %v469 = vpop.permute.xlu0 %468
        %478 = vrot.lane.b32.xlu0 %v260, 72
        %v479 = vpop.permute.xlu0 %478
        %480 = vrot.lane.b32.xlu0 %v262, 72
        %v481 = vpop.permute.xlu0 %480
        %482 = vrot.lane.b32.xlu0 %v264, 72
        %v483 = vpop.permute.xlu0 %482
        %484 = vrot.lane.b32.xlu0 %v266, 72
        %v485 = vpop.permute.xlu0 %484
        %486 = vrot.lane.b32.xlu0 %v268, 72
        %v487 = vpop.permute.xlu0 %486
        %488 = vrot.lane.b32.xlu0 %v270, 72
        %v489 = vpop.permute.xlu0 %488
        %490 = vrot.lane.b32.xlu0 %v272, 72
        %v491 = vpop.permute.xlu0 %490
        %492 = vrot.lane.b32.xlu0 %v274, 72
        %v493 = vpop.permute.xlu0 %492
        %502 = vrot.lane.b32.xlu0 %v301, 84
        %v503 = vpop.permute.xlu0 %502
        %504 = vrot.lane.b32.xlu0 %v304, 84
        %v505 = vpop.permute.xlu0 %504
        %506 = vrot.lane.b32.xlu0 %v307, 84
        %v507 = vpop.permute.xlu0 %506
        %508 = vrot.lane.b32.xlu0 %v310, 84
        %v509 = vpop.permute.xlu0 %508
        %510 = vrot.lane.b32.xlu0 %v313, 84
        %v511 = vpop.permute.xlu0 %510
        %512 = vrot.lane.b32.xlu0 %v316, 84
        %v513 = vpop.permute.xlu0 %512
        %514 = vrot.lane.b32.xlu0 %v346, 84
        %v515 = vpop.permute.xlu0 %514
        %516 = vrot.lane.b32.xlu0 %v354, 84
        %v517 = vpop.permute.xlu0 %516
        %526 = vrot.lane.b32.xlu0 %v326, 96
        %v527 = vpop.permute.xlu0 %526
        %528 = vrot.lane.b32.xlu0 %v329, 96
        %v529 = vpop.permute.xlu0 %528
        %530 = vrot.lane.b32.xlu0 %v332, 96
        %v531 = vpop.permute.xlu0 %530
        %532 = vrot.lane.b32.xlu0 %v335, 96
        %v533 = vpop.permute.xlu0 %532
        %534 = vrot.lane.b32.xlu0 %v338, 96
        %v535 = vpop.permute.xlu0 %534
        %536 = vrot.lane.b32.xlu0 %v341, 96
        %v537 = vpop.permute.xlu0 %536
        %538 = vrot.lane.b32.xlu0 %v349, 96
        %v539 = vpop.permute.xlu0 %538
        %540 = vrot.lane.b32.xlu0 %v357, 96
        %v541 = vpop.permute.xlu0 %540
        %vm550 = vcmask 97280
        %v551 = vsel %vm550, %v256, %v359
        %v552 = vsel %vm550, %v258, %v361
        %v553 = vsel %vm550, %v260, %v363
        %v554 = vsel %vm550, %v262, %v365
        %v555 = vsel %vm550, %v264, %v367
        %v556 = vsel %vm550, %v266, %v369
        %v557 = vsel %vm550, %v268, %v371
        %v558 = vsel %vm550, %v270, %v373
        %vm559 = vcmask 195584
        %v560 = vsel %vm559, %v551, %v383
        %v561 = vsel %vm559, %v552, %v385
        %v562 = vsel %vm559, %v553, %v387
        %v563 = vsel %vm559, %v554, %v389
        %v564 = vsel %vm559, %v555, %v391
        %v565 = vsel %vm559, %v556, %v393
        %v566 = vsel %vm559, %v557, %v395
        %v567 = vsel %vm559, %v558, %v397
        %vm568 = vcmask 293888
        %v569 = vsel %vm568, %v560, %v407
        %v570 = vsel %vm568, %v561, %v409
        %v571 = vsel %vm568, %v562, %v411
        %v572 = vsel %vm568, %v563, %v413
        %v573 = vsel %vm568, %v564, %v415
        %v574 = vsel %vm568, %v565, %v417
        %v575 = vsel %vm568, %v566, %v419
        %v576 = vsel %vm568, %v567, %v421
        %vm577 = vcmask 392192
        %v578 = vsel %vm577, %v569, %v431
        %v579 = vsel %vm577, %v570, %v433
        %v580 = vsel %vm577, %v571, %v435
        %v581 = vsel %vm577, %v572, %v437
        %v582 = vsel %vm577, %v573, %v439
        %v583 = vsel %vm577, %v574, %v441
        %v584 = vsel %vm577, %v575, %v443
        %v585 = vsel %vm577, %v576, %v445
        %vm586 = vcmask 490496
        %v587 = vsel %vm586, %v578, %v455
        %v588 = vsel %vm586, %v579, %v457
        %v589 = vsel %vm586, %v580, %v459
        %v590 = vsel %vm586, %v581, %v461
        %v591 = vsel %vm586, %v582, %v463
        %v592 = vsel %vm586, %v583, %v465
        %v593 = vsel %vm586, %v584, %v467
        %v594 = vsel %vm586, %v585, %v469
        %vm595 = vcmask 588800
        %v596 = vsel %vm595, %v587, %v479
        %v597 = vsel %vm595, %v588, %v481
        %v598 = vsel %vm595, %v589, %v483
        %v599 = vsel %vm595, %v590, %v485
        %v600 = vsel %vm595, %v591, %v487
        %v601 = vsel %vm595, %v592, %v489
        %v602 = vsel %vm595, %v593, %v491
        %v603 = vsel %vm595, %v594, %v493
        %vm604 = vcmask 687104
        %v605 = vsel %vm604, %v596, %v503
        %v606 = vsel %vm604, %v597, %v505
        %v607 = vsel %vm604, %v598, %v507
        %v608 = vsel %vm604, %v599, %v509
        %v609 = vsel %vm604, %v600, %v511
        %v610 = vsel %vm604, %v601, %v513
        %v611 = vsel %vm604, %v602, %v515
        %v612 = vsel %vm604, %v603, %v517
        %vm613 = vcmask 785408
        %v614 = vsel %vm613, %v605, %v527
        %v615 = vsel %vm613, %v606, %v529
        %v616 = vsel %vm613, %v607, %v531
        %v617 = vsel %vm613, %v608, %v533
        %v618 = vsel %vm613, %v609, %v535
        %v619 = vsel %vm613, %v610, %v537
        %v620 = vsel %vm613, %v611, %v539
        %v621 = vsel %vm613, %v612, %v541
        %v622 = vpack.c.bf16 %v615, %v614
        %v623 = vpack.c.bf16 %v617, %v616
        %v624 = vpack.c.bf16 %v619, %v618
        %v625 = vpack.c.bf16 %v621, %v620
        %v626 = vld [vmem:[#allocation5] sm:$0xf]
        %v627 = vld [vmem:[#allocation5 + $0x4] sm:$0xf]
        %v628 = vld [vmem:[#allocation5 + $0x8] sm:$0xf]
        %v629 = vld [vmem:[#allocation5 + $0xc] sm:$0xf]
        %v630 = vld [vmem:[#allocation5 + $0x10] sm:$0xf]
        %v631 = vld [vmem:[#allocation5 + $0x14] sm:$0xf]
        %v632 = vld [vmem:[#allocation5 + $0x18] sm:$0xf]
        %v633 = vld [vmem:[#allocation5 + $0x1c] sm:$0xf]
        %v634 = vld [vmem:[#allocation5 + $0x20] sm:$0xf]
        %v635 = vld [vmem:[#allocation5 + $0x24] sm:$0xf]
        %v636 = vld [vmem:[#allocation5 + $0x28] sm:$0xf]
        %v637 = vld [vmem:[#allocation5 + $0x2c] sm:$0xf]
        %v638 = vld [vmem:[#allocation5 + $0x30] sm:$0xf]
        %v639 = vld [vmem:[#allocation5 + $0x34] sm:$0x3]
        %v640 = vld [vmem:[#allocation7] sm:$0x1]
        %v642 = vlaneseq
        %v643 = vshrl.u32 %v642, 7
        %v644 = vsub.s32 0, %v643
        %v645 = vrot.slane %v640, %v644
        %v661 = vunpack.c.l.b16 %v626
        %v662 = vunpack.c.l.b16 %v627
        %v663 = vunpack.c.l.b16 %v628
        %v664 = vunpack.c.l.b16 %v629
        %v665 = vunpack.c.l.b16 %v630
        %v666 = vunpack.c.l.b16 %v631
        %v667 = vunpack.c.l.b16 %v632
        %v668 = vunpack.c.l.b16 %v633
        %v669 = vunpack.c.l.b16 %v634
        %v670 = vunpack.c.l.b16 %v635
        %v671 = vunpack.c.l.b16 %v636
        %v672 = vunpack.c.l.b16 %v637
        %v673 = vunpack.c.l.b16 %v638
        %v674 = vunpack.c.l.b16 %v639
        %v675 = vpack.c.b16 %v662, %v661
        %v676 = vpack.c.b16 %v664, %v663
        %v677 = vpack.c.b16 %v666, %v665
        %v678 = vpack.c.b16 %v668, %v667
        %v679 = vpack.c.b16 %v670, %v669
        %v680 = vpack.c.b16 %v672, %v671
        %v681 = vpack.c.b16 %v674, %v673
        %vm688 = vcmask 883712
        %v690 = vsel %vm688, %v622, 0
        %v693 = vsel %vm688, %v623, 0
        %v696 = vsel %vm688, %v624, 0
        %v699 = vsel %vm688, %v625, 0
        %v702 = vsel %vm317, %v681, 0
        %704 = vmatprep.subr.bf16.mxu0 0
        %705 = vmatpush1.bf16.msra.mxu0 %v675
        %706 = vmatprep.subr.bf16.mxu0 0
        %707 = vmatpush1.bf16.msra.mxu0 %v676
        %708 = vmatprep.subr.bf16.mxu0 0
        %709 = vmatpush1.bf16.msra.mxu0 %v677
        %710 = vmatprep.subr.bf16.mxu0 0
        %711 = vmatpush1.bf16.msra.mxu0 %v678
        %712 = vmatprep.subr.bf16.mxu0 0
        %713 = vmatpush1.bf16.msra.mxu0 %v679
        %714 = vmatprep.subr.bf16.mxu0 0
        %715 = vmatpush1.bf16.msra.mxu0 %v680
        %716 = vmatprep.subr.bf16.mxu0 0
        %717 = vmatpush1.bf16.msra.mxu0 %v702
        %718 = vmatprep.subr.bf16.mxu0 0
        %719 = vmatpush1.bf16.msra.mxu0 0
        %720 = vmatprep.subr.bf16.mxu0 0
        %721 = vmatpush1.bf16.msra.mxu0 0
        %722 = vmatprep.subr.bf16.mxu0 0
        %723 = vmatpush1.bf16.msra.mxu0 0
        %724 = vmatprep.subr.bf16.mxu0 0
        %725 = vmatpush1.bf16.msra.mxu0 0
        %726 = vmatprep.subr.bf16.mxu0 0
        %727 = vmatpush1.bf16.msra.mxu0 0
        %728 = vmatprep.subr.bf16.mxu0 0
        %729 = vmatpush1.bf16.msra.mxu0 0
        %730 = vmatprep.subr.bf16.mxu0 0
        %731 = vmatpush1.bf16.msra.mxu0 0
        %732 = vmatprep.subr.bf16.mxu0 0
        %733 = vmatpush1.bf16.msra.mxu0 0
        %734 = vmatprep.subr.bf16.mxu0 0
        %735 = vmatpush1.bf16.msra.mxu0 0
        %736 = vmatprep.mubr.bf16.mxu0 0
        %737 = vmatmul.mubr.bf16.gmra.mrb[0].mxu0 %v690
        %v738 = vpop.f32.mrb[0].mxu0
        %v739 = vadd.f32 %v645, %v738
        %v740 = vpop.f32.mrb[0].mxu0
        %v741 = vpop.f32.mrb[0].mxu0
        %v742 = vadd.f32 %v645, %v741
        %v743 = vpop.f32.mrb[0].mxu0
        %744 = vmatprep.mubr.bf16.mxu0 0
        %745 = vmatmul.mubr.bf16.gmra.mrb[0].mxu0 %v693
        %v746 = vpop.f32.mrb[0].mxu0
        %v747 = vadd.f32 %v645, %v746
        %v748 = vpop.f32.mrb[0].mxu0
        %v749 = vpop.f32.mrb[0].mxu0
        %v750 = vadd.f32 %v645, %v749
        %v751 = vpop.f32.mrb[0].mxu0
        %752 = vmatprep.mubr.bf16.mxu0 0
        %753 = vmatmul.mubr.bf16.gmra.mrb[0].mxu0 %v696
        %v754 = vpop.f32.mrb[0].mxu0
        %v755 = vadd.f32 %v645, %v754
        %v756 = vpop.f32.mrb[0].mxu0
        %v757 = vpop.f32.mrb[0].mxu0
        %v758 = vadd.f32 %v645, %v757
        %v759 = vpop.f32.mrb[0].mxu0
        %760 = vmatprep.mubr.bf16.mxu0 0
        %761 = vmatmul.mubr.bf16.gmra.mrb[0].mxu0 %v699
        %v762 = vpop.f32.mrb[0].mxu0
        %v763 = vadd.f32 %v645, %v762
        %v764 = vpop.f32.mrb[0].mxu0
        %v765 = vpop.f32.mrb[0].mxu0
        %v766 = vadd.f32 %v645, %v765
        %v767 = vpop.f32.mrb[0].mxu0
        %768 = vdwg.mxu0
        %v769 = vpack.c.bf16 %v742, %v739
        %v770 = vpack.c.bf16 %v750, %v747
        %v771 = vpack.c.bf16 %v758, %v755
        %v772 = vpack.c.bf16 %v766, %v763
        %v777 = vunpack.c.l.b16 %v769
        %v778 = vunpack.c.h.b16 %v769
        %v779 = vunpack.c.l.b16 %v770
        %v780 = vunpack.c.h.b16 %v770
        %v781 = vunpack.c.l.b16 %v771
        %v782 = vunpack.c.h.b16 %v771
        %v783 = vunpack.c.l.b16 %v772
        %v784 = vunpack.c.h.b16 %v772
        %v785 = vpack.c.b16 %v777, %v777
        %v786 = vpack.c.b16 %v778, %v778
        %v787 = vpack.c.b16 %v779, %v779
        %v788 = vpack.c.b16 %v780, %v780
        %v789 = vpack.c.b16 %v781, %v781
        %v790 = vpack.c.b16 %v782, %v782
        %v791 = vpack.c.b16 %v783, %v783
        %v792 = vpack.c.b16 %v784, %v784
        %vm801 = vcmask 257024
        %802 = vst.msk [vmem:[%s229] sm:$0xf] %vm801, %v785
        %803 = vst.msk [vmem:[%s229 + $0x4] sm:$0xf] %vm801, %v786
        %804 = vst.msk [vmem:[%s229 + $0x8] sm:$0xf] %vm801, %v787
        %805 = vst.msk [vmem:[%s229 + $0xc] sm:$0xf] %vm801, %v788
        %806 = vst.msk [vmem:[%s229 + $0x10] sm:$0xf] %vm801, %v789
        %807 = vst.msk [vmem:[%s229 + $0x14] sm:$0xf] %vm801, %v790
        %808 = vst.msk [vmem:[%s229 + $0x18] sm:$0xf] %vm801, %v791
        %809 = vst.msk [vmem:[%s229 + $0x1c] sm:$0xf] %vm801, %v792
        %s810 = sand.u32 %s111, 1
        %s811 = scalar_lea.sflag [#allocation4], %s810
        %s812 = sand.u32 %s111, 1
        %s813 = smul.addr %s812, 32
        %s814 = scalar_lea.vmem [#allocation8], %s813
        // Predicated region
        $region45: #{net_forward.13} parent=31 // pred_check
          %p815 = pneg %p121
        $region46: #{net_forward.13} parent=31 // pred_check_branch
          %817 = sbr.rel (%p815) target = $region48
        $region47: #{net_forward.13} parent=31 // pred_region
          %s818 = smul.u32 8, %s26
          %s820 = ssub.s32 512, 512
          %821 = vsyncadd %s811, %s820
          %s822 = smul.addr %s25, 8
          %s823 = sadd.s32 %s818, %s822
          %s824 = smul.addr %s823, 64
          %s825 = scalar_lea.hbm %s3, %s824
          %s826 = sshll.u32 %s814, 4
          %s827 = int_to_ptr.vmem [resolvable:$true] %s826
          %832 = dma.vmem_to_hbm [thread:$0]  %s827, 512, %s825, %s811, 64, 64, 4
        $region48: #{net_forward.13} parent=31 // pred_fallthru
          _
      $region32: #{net_forward.13} parent=5 // pred_fallthru
        _
      %p833 = scmp.le.s32.totalorder 2, %s16
      // Predicated region
      $region49: #{net_forward.13} parent=5 // pred_check
        %p834 = pneg %p833
      $region50: #{net_forward.13} parent=5 // pred_check_branch
        %836 = sbr.rel (%p834) target = $region52
      $region51: #{net_forward.13} parent=5 // pred_region
        %s837 = ssub.s32 %s16, 2
        // Predicated region
        $region53: #{net_forward.13} parent=51 // pred_check
          %p838 = pneg %p127
        $region54: #{net_forward.13} parent=51 // pred_check_branch
          %840 = sbr.rel (%p838) target = $region56
        $region55: #{net_forward.13} parent=51 // pred_region
          %s841 = sand.u32 %s112, 1
          %s842 = scalar_lea.sflag [#allocation4], %s841
          %s843 = sand.u32 %s112, 1
          %s844 = smul.addr %s843, 32
          %s845 = scalar_lea.vmem [#allocation8], %s844
          %846 = dma.done %s842, 512
        $region56: #{net_forward.13} parent=51 // pred_fallthru
          _
      $region52: #{net_forward.13} parent=5 // pred_fallthru
        _
    $region6: #{net_forward.13} parent=1 // loop_footer
      %s20 = sadd.s32 1, %s16
    $region7: #{net_forward.13} parent=1 // loop_footer_branch
      %15 = sbr.rel target = $region3
    $region8: #{net_forward.13} parent=1 // loop_exit
      _
    %847 = vsyncpa [#allocation3], 1
    %s848 = scalar_lea.sflag [#allocation3], 1
    %849 = vsyncpa %s848, 1
    %850 = vsyncpa [#allocation6], 1
    %851 = vsyncpa [#allocation4], 1
    %s852 = scalar_lea.sflag [#allocation4], 1
    %853 = vsyncpa %s852, 1

// kernel: net_forward.17
$region0: #{net_forward.17}
  #allocation0 [shape = 'u32[]', space=smem, size = 0x4, offset = 0x4, fixed_abs, tag = 'smem constant byte address 0x4 - core index']
  #allocation1 [shape = 'u32[144,128]{1,0:T(1,128)}', space=vmem, size = 0x12000, scoped, tag = 'internal scratch']
  %s0 = inlined_call_operand.hbm [shape: bf16[2,64,32], index: 0, kind: input, shape index: {}]
  %s1 = inlined_call_operand.hbm [shape: bf16[2,64,32], index: 1, kind: input, shape index: {}]
  %s2 = inlined_call_operand.hbm [shape: bf16[2,64,32], index: 2, kind: input, shape index: {}]
  %s3 = inlined_call_operand.hbm [shape: bf16[96,32], index: 3, kind: input, shape index: {}]
  %s4 = inlined_call_operand.hbm [shape: f32[1,32], index: 4, kind: input, shape index: {}]
  %s5 = inlined_call_operand.hbm [shape: bf16[2,64,32], index: 5, kind: output, shape index: {}]
  %s6 = sld [smem:[#allocation0]]
  $region73: #{net_forward.17} parent=0
    _
  %s8 = ssub.s32 1, %s6
  %s9 = scalar_select 0, %s8, %s6
  $region1: #{net_forward.17} parent=0
    #allocation2 [shape = 'u8[32768]{0}', space=vmem, size = 0x8000, scoped, tag = 'input window, operand 0']
    #allocation3 [shape = 's32[2]{0}', space=sflag, size = 0x8, scoped, tag = 'scoped memory for net_forward.17']
    #allocation4 [shape = 's32[2]{0}', space=sflag, size = 0x8, scoped, tag = 'scoped memory for net_forward.17']
    #allocation5 [shape = 'u8[32768]{0}', space=vmem, size = 0x8000, scoped, tag = 'input window, operand 1']
    #allocation6 [shape = 's32[2]{0}', space=sflag, size = 0x8, scoped, tag = 'scoped memory for net_forward.17']
    #allocation7 [shape = 'u8[32768]{0}', space=vmem, size = 0x8000, scoped, tag = 'input window, operand 2']
    #allocation8 [shape = 'u8[24576]{0}', space=vmem, size = 0x6000, scoped, tag = 'input window, operand 3, single buffered']
    #allocation9 [shape = 's32[1]{0}', space=sflag, size = 0x4, scoped, tag = 'scoped memory for net_forward.17']
    #allocation10 [shape = 'u8[512]{0}', space=vmem, size = 0x400, scoped, tag = 'input window, operand 4, single buffered']
    #allocation11 [shape = 'u8[32768]{0}', space=vmem, size = 0x8000, scoped, tag = 'output window, operand 0']
    %10 = vsyncpa [#allocation3], 0
    %s11 = scalar_lea.sflag [#allocation3], 1
    %12 = vsyncpa %s11, 0
    %13 = vsyncpa [#allocation6], 0
    %s14 = scalar_lea.sflag [#allocation6], 1
    %15 = vsyncpa %s14, 0
    %16 = vsyncpa [#allocation9], 0
    %17 = vsyncpa [#allocation4], 0
    %s18 = scalar_lea.sflag [#allocation4], 1
    %19 = vsyncpa %s18, 0
    loop: start=0, step=1, limit=4
    $region2: #{net_forward.17} parent=1 // loop_pre_header
      _
    $region3: #{net_forward.17} parent=1 // loop_header
      %s21 = sphi 0, %s25
      %p22 = scmp.ge.s32.totalorder %s21, 4
      %s31 = sphi 0, %s33
      %s34 = sphi 0, %s31
      %s35 = sphi 0, %s34
      %s51 = sphi 0, %s35
      %s57 = sphi 0, %s59
      %s60 = sphi 0, %s57
      %s61 = sphi 0, %s60
      %s77 = sphi 0, %s61
      %s83 = sphi 0, %s85
      %s86 = sphi 0, %s83
      %s87 = sphi 0, %s86
      %s103 = sphi 0, %s87
      %s107 = sphi 0, %s107
      %s109 = sphi 0, %s107
      %s110 = sphi 0, %s109
      %s124 = sphi 0, %s110
      %s128 = sphi 0, %s128
      %s130 = sphi 0, %s128
      %s131 = sphi 0, %s130
      %s145 = sphi 0, %s131
      %s151 = sphi 0, %s153
      %s154 = sphi 0, %s151
      %s155 = sphi 0, %s154
      %s171 = sphi 0, %s155
    $region4: #{net_forward.17} parent=1 // loop_header_branch
      %24 = sbr.rel (%p22) target = $region8
    $region5: #{net_forward.17} parent=1 // loop_body
      %s26 = ssub.s32 %s21, 1
      %s27 = ssub.s32 %s21, 2
      %s28 = sadd.s32 %s21, 1
      %s29 = ssub.s32 %s21, %s28
      %p30 = scmp.eq.s32.totalorder %s29, 0
      %s32 = sadd.s32 %s31, 1
      %s33 = scalar_select %p30, %s31, %s32
      %p36 = pneg %p30
      %p37 = scmp.eq.s32.totalorder %s21, 1
      %p38 = por %p36, %p37
      %p39 = scmp.ne.s32.totalorder %s31, %s34
      %p40 = scmp.eq.s32.totalorder %s21, 0
      %p41 = por %p39, %p40
      %p42 = scmp.ne.s32.totalorder %s31, %s34
      %p43 = scmp.eq.s32.totalorder %s26, 1
      %p44 = por %p42, %p43
      %p45 = scmp.ne.s32.totalorder %s34, %s35
      %p46 = scmp.eq.s32.totalorder %s26, 0
      %p47 = por %p45, %p46
      %p48 = scmp.ne.s32.totalorder %s34, %s35
      %p49 = scmp.eq.s32.totalorder %s27, 1
      %p50 = por %p48, %p49
      %p52 = scmp.ne.s32.totalorder %s35, %s51
      %p53 = scmp.eq.s32.totalorder %s27, 0
      %p54 = por %p52, %p53
      %s55 = ssub.s32 %s21, %s28
      %p56 = scmp.eq.s32.totalorder %s55, 0
      %s58 = sadd.s32 %s57, 1
      %s59 = scalar_select %p56, %s57, %s58
      %p62 = pneg %p56
      %p63 = scmp.eq.s32.totalorder %s21, 1
      %p64 = por %p62, %p63
      %p65 = scmp.ne.s32.totalorder %s57, %s60
      %p66 = scmp.eq.s32.totalorder %s21, 0
      %p67 = por %p65, %p66
      %p68 = scmp.ne.s32.totalorder %s57, %s60
      %p69 = scmp.eq.s32.totalorder %s26, 1
      %p70 = por %p68, %p69
      %p71 = scmp.ne.s32.totalorder %s60, %s61
      %p72 = scmp.eq.s32.totalorder %s26, 0
      %p73 = por %p71, %p72
      %p74 = scmp.ne.s32.totalorder %s60, %s61
      %p75 = scmp.eq.s32.totalorder %s27, 1
      %p76 = por %p74, %p75
      %p78 = scmp.ne.s32.totalorder %s61, %s77
      %p79 = scmp.eq.s32.totalorder %s27, 0
      %p80 = por %p78, %p79
      %s81 = ssub.s32 %s21, %s28
      %p82 = scmp.eq.s32.totalorder %s81, 0
      %s84 = sadd.s32 %s83, 1
      %s85 = scalar_select %p82, %s83, %s84
      %p88 = pneg %p82
      %p89 = scmp.eq.s32.totalorder %s21, 1
      %p90 = por %p88, %p89
      %p91 = scmp.ne.s32.totalorder %s83, %s86
      %p92 = scmp.eq.s32.totalorder %s21, 0
      %p93 = por %p91, %p92
      %p94 = scmp.ne.s32.totalorder %s83, %s86
      %p95 = scmp.eq.s32.totalorder %s26, 1
      %p96 = por %p94, %p95
      %p97 = scmp.ne.s32.totalorder %s86, %s87
      %p98 = scmp.eq.s32.totalorder %s26, 0
      %p99 = por %p97, %p98
      %p100 = scmp.ne.s32.totalorder %s86, %s87
      %p101 = scmp.eq.s32.totalorder %s27, 1
      %p102 = por %p100, %p101
      %p104 = scmp.ne.s32.totalorder %s87, %s103
      %p105 = scmp.eq.s32.totalorder %s27, 0
      %p106 = por %p104, %p105
      %s108 = sadd.s32 %s107, 1
      %p111 = scmp.eq.s32.totalorder %s21, 1
      %p112 = scmp.ne.s32.totalorder %s107, %s109
      %p113 = scmp.eq.s32.totalorder %s21, 0
      %p114 = por %p112, %p113
      %p115 = scmp.ne.s32.totalorder %s107, %s109
      %p116 = scmp.eq.s32.totalorder %s26, 1
      %p117 = por %p115, %p116
      %p118 = scmp.ne.s32.totalorder %s109, %s110
      %p119 = scmp.eq.s32.totalorder %s26, 0
      %p120 = por %p118, %p119
      %p121 = scmp.ne.s32.totalorder %s109, %s110
      %p122 = scmp.eq.s32.totalorder %s27, 1
      %p123 = por %p121, %p122
      %p125 = scmp.ne.s32.totalorder %s110, %s124
      %p126 = scmp.eq.s32.totalorder %s27, 0
      %p127 = por %p125, %p126
      %s129 = sadd.s32 %s128, 1
      %p132 = scmp.eq.s32.totalorder %s21, 1
      %p133 = scmp.ne.s32.totalorder %s128, %s130
      %p134 = scmp.eq.s32.totalorder %s21, 0
      %p135 = por %p133, %p134
      %p136 = scmp.ne.s32.totalorder %s128, %s130
      %p137 = scmp.eq.s32.totalorder %s26, 1
      %p138 = por %p136, %p137
      %p139 = scmp.ne.s32.totalorder %s130, %s131
      %p140 = scmp.eq.s32.totalorder %s26, 0
      %p141 = por %p139, %p140
      %p142 = scmp.ne.s32.totalorder %s130, %s131
      %p143 = scmp.eq.s32.totalorder %s27, 1
      %p144 = por %p142, %p143
      %p146 = scmp.ne.s32.totalorder %s131, %s145
      %p147 = scmp.eq.s32.totalorder %s27, 0
      %p148 = por %p146, %p147
      %s149 = ssub.s32 %s21, %s28
      %p150 = scmp.eq.s32.totalorder %s149, 0
      %s152 = sadd.s32 %s151, 1
      %s153 = scalar_select %p150, %s151, %s152
      %p156 = pneg %p150
      %p157 = scmp.eq.s32.totalorder %s21, 1
      %p158 = por %p156, %p157
      %p159 = scmp.ne.s32.totalorder %s151, %s154
      %p160 = scmp.eq.s32.totalorder %s21, 0
      %p161 = por %p159, %p160
      %p162 = scmp.ne.s32.totalorder %s151, %s154
      %p163 = scmp.eq.s32.totalorder %s26, 1
      %p164 = por %p162, %p163
      %p165 = scmp.ne.s32.totalorder %s154, %s155
      %p166 = scmp.eq.s32.totalorder %s26, 0
      %p167 = por %p165, %p166
      %p168 = scmp.ne.s32.totalorder %s154, %s155
      %p169 = scmp.eq.s32.totalorder %s27, 1
      %p170 = por %p168, %p169
      %p172 = scmp.ne.s32.totalorder %s155, %s171
      %p173 = scmp.eq.s32.totalorder %s27, 0
      %p174 = por %p172, %p173
      %p175 = scmp.le.s32.totalorder 1, %s21
      %p176 = scmp.lt.s32.totalorder %s21, 3
      %p177 = pnand %p175, %p176
      %p178 = pneg %p177
      // Predicated region
      $region9: #{net_forward.17} parent=5 // pred_check
        _
      $region10: #{net_forward.17} parent=5 // pred_check_branch
        %180 = sbr.rel (%p177) target = $region12
      $region11: #{net_forward.17} parent=5 // pred_region
        %s181 = ssub.s32 %s21, 1
        // Predicated region
        $region13: #{net_forward.17} parent=11 // pred_check
          %p182 = pneg %p120
        $region14: #{net_forward.17} parent=11 // pred_check_branch
          %184 = sbr.rel (%p182) target = $region16
        $region15: #{net_forward.17} parent=11 // pred_region
          %s186 = ssub.s32 768, 768
          %187 = vsyncadd [#allocation9], %s186
          %s188 = sshll.u32 [#allocation8], 4
          %s189 = int_to_ptr.vmem [resolvable:$true] %s188
          %194 = dma.hbm_to_vmem [thread:$0]  %s3, 768, %s189, [#allocation9], 64, 64, 4
        $region16: #{net_forward.17} parent=11 // pred_fallthru
          _
        // Predicated region
        $region17: #{net_forward.17} parent=11 // pred_check
          %p195 = pneg %p141
        $region18: #{net_forward.17} parent=11 // pred_check_branch
          %197 = sbr.rel (%p195) target = $region20
        $region19: #{net_forward.17} parent=11 // pred_region
          %s199 = ssub.s32 16, 16
          %200 = vsyncadd [#allocation9], %s199
          %s202 = sshll.u32 [#allocation10], 4
          %s203 = int_to_ptr.vmem [resolvable:$true] %s202
          %205 = dma.hbm_to_vmem [thread:$0]  %s4, 16, %s203, [#allocation9]
        $region20: #{net_forward.17} parent=11 // pred_fallthru
          _
      $region12: #{net_forward.17} parent=5 // pred_fallthru
        _
      %p206 = scmp.lt.s32.totalorder %s21, 2
      // Predicated region
      $region21: #{net_forward.17} parent=5 // pred_check
        %p207 = pneg %p206
      $region22: #{net_forward.17} parent=5 // pred_check_branch
        %209 = sbr.rel (%p207) target = $region24
      $region23: #{net_forward.17} parent=5 // pred_region
        // Predicated region
        $region25: #{net_forward.17} parent=23 // pred_check
          %p210 = pneg %p41
        $region26: #{net_forward.17} parent=23 // pred_check_branch
          %212 = sbr.rel (%p210) target = $region28
        $region27: #{net_forward.17} parent=23 // pred_region
          %s213 = sand.u32 %s31, 1
          %s214 = scalar_lea.sflag [#allocation3], %s213
          %s215 = sand.u32 %s31, 1
          %s216 = smul.addr %s215, 32
          %s217 = scalar_lea.vmem [#allocation2], %s216
          %s219 = ssub.s32 512, 512
          %220 = vsyncadd %s214, %s219
          %s221 = smul.addr %s21, 8
          %s222 = smul.addr %s221, 64
          %s223 = scalar_lea.hbm %s0, %s222
          %s224 = sshll.u32 %s217, 4
          %s225 = int_to_ptr.vmem [resolvable:$true] %s224
          %230 = dma.hbm_to_vmem [thread:$0]  %s223, 512, %s225, %s214, 64, 64, 4
        $region28: #{net_forward.17} parent=23 // pred_fallthru
          _
        // Predicated region
        $region29: #{net_forward.17} parent=23 // pred_check
          %p231 = pneg %p67
        $region30: #{net_forward.17} parent=23 // pred_check_branch
          %233 = sbr.rel (%p231) target = $region32
        $region31: #{net_forward.17} parent=23 // pred_region
          %s234 = sand.u32 %s21, 1
          %s235 = scalar_lea.sflag [#allocation6], %s234
          %s236 = sand.u32 %s57, 1
          %s237 = smul.addr %s236, 32
          %s238 = scalar_lea.vmem [#allocation5], %s237
          %s240 = ssub.s32 512, 512
          %241 = vsyncadd %s235, %s240
          %s242 = smul.addr %s21, 8
          %s243 = smul.addr %s242, 64
          %s244 = scalar_lea.hbm %s1, %s243
          %s245 = sshll.u32 %s238, 4
          %s246 = int_to_ptr.vmem [resolvable:$true] %s245
          %251 = dma.hbm_to_vmem [thread:$0]  %s244, 512, %s246, %s235, 64, 64, 4
        $region32: #{net_forward.17} parent=23 // pred_fallthru
          _
        // Predicated region
        $region33: #{net_forward.17} parent=23 // pred_check
          %p252 = pneg %p93
        $region34: #{net_forward.17} parent=23 // pred_check_branch
          %254 = sbr.rel (%p252) target = $region36
        $region35: #{net_forward.17} parent=23 // pred_region
          %s255 = sand.u32 %s21, 1
          %s256 = scalar_lea.sflag [#allocation6], %s255
          %s257 = sand.u32 %s83, 1
          %s258 = smul.addr %s257, 32
          %s259 = scalar_lea.vmem [#allocation7], %s258
          %s261 = ssub.s32 512, 512
          %262 = vsyncadd %s256, %s261
          %s263 = smul.addr %s21, 8
          %s264 = smul.addr %s263, 64
          %s265 = scalar_lea.hbm %s2, %s264
          %s266 = sshll.u32 %s259, 4
          %s267 = int_to_ptr.vmem [resolvable:$true] %s266
          %272 = dma.hbm_to_vmem [thread:$0]  %s265, 512, %s267, %s256, 64, 64, 4
        $region36: #{net_forward.17} parent=23 // pred_fallthru
          _
      $region24: #{net_forward.17} parent=5 // pred_fallthru
        _
      %p273 = scmp.le.s32.totalorder 1, %s21
      %p274 = scmp.lt.s32.totalorder %s21, 3
      %p275 = pnand %p273, %p274
      %p276 = pneg %p275
      // Predicated region
      $region37: #{net_forward.17} parent=5 // pred_check
        _
      $region38: #{net_forward.17} parent=5 // pred_check_branch
        %278 = sbr.rel (%p275) target = $region40
      $region39: #{net_forward.17} parent=5 // pred_region
        %s279 = ssub.s32 %s21, 1
        %s280 = sand.u32 %s34, 1
        %s281 = scalar_lea.sflag [#allocation3], %s280
        %s282 = sand.u32 %s34, 1
        %s283 = smul.addr %s282, 32
        %s284 = scalar_lea.vmem [#allocation2], %s283
        // Predicated region
        $region41: #{net_forward.17} parent=39 // pred_check
          %p285 = pneg %p47
        $region42: #{net_forward.17} parent=39 // pred_check_branch
          %287 = sbr.rel (%p285) target = $region44
        $region43: #{net_forward.17} parent=39 // pred_region
          %288 = dma.done %s281, 512
        $region44: #{net_forward.17} parent=39 // pred_fallthru
          _
        %s289 = sand.u32 %s26, 1
        %s290 = scalar_lea.sflag [#allocation6], %s289
        %s291 = sand.u32 %s60, 1
        %s292 = smul.addr %s291, 32
        %s293 = scalar_lea.vmem [#allocation5], %s292
        // Predicated region
        $region45: #{net_forward.17} parent=39 // pred_check
          %p294 = pneg %p73
        $region46: #{net_forward.17} parent=39 // pred_check_branch
          %296 = sbr.rel (%p294) target = $region48
        $region47: #{net_forward.17} parent=39 // pred_region
          %297 = dma.done %s290, 512
        $region48: #{net_forward.17} parent=39 // pred_fallthru
          _
        %s298 = sand.u32 %s26, 1
        %s299 = scalar_lea.sflag [#allocation6], %s298
        %s300 = sand.u32 %s86, 1
        %s301 = smul.addr %s300, 32
        %s302 = scalar_lea.vmem [#allocation7], %s301
        // Predicated region
        $region49: #{net_forward.17} parent=39 // pred_check
          %p303 = pneg %p99
        $region50: #{net_forward.17} parent=39 // pred_check_branch
          %305 = sbr.rel (%p303) target = $region52
        $region51: #{net_forward.17} parent=39 // pred_region
          %306 = dma.done %s299, 512
        $region52: #{net_forward.17} parent=39 // pred_fallthru
          _
        // Predicated region
        $region53: #{net_forward.17} parent=39 // pred_check
          %p307 = pneg %p120
        $region54: #{net_forward.17} parent=39 // pred_check_branch
          %309 = sbr.rel (%p307) target = $region56
        $region55: #{net_forward.17} parent=39 // pred_region
          %310 = dma.done [#allocation9], 768
        $region56: #{net_forward.17} parent=39 // pred_fallthru
          _
        // Predicated region
        $region57: #{net_forward.17} parent=39 // pred_check
          %p311 = pneg %p141
        $region58: #{net_forward.17} parent=39 // pred_check_branch
          %313 = sbr.rel (%p311) target = $region60
        $region59: #{net_forward.17} parent=39 // pred_region
          %314 = dma.done [#allocation9], 16
        $region60: #{net_forward.17} parent=39 // pred_fallthru
          _
        %s315 = sand.u32 %s34, 1
        %s316 = scalar_lea.sflag [#allocation3], %s315
        %s317 = sand.u32 %s34, 1
        %s318 = smul.addr %s317, 32
        %s319 = scalar_lea.vmem [#allocation2], %s318
        %p320 = pneg %p47
        %p321 = pneg %p44
        %s322 = sand.u32 %s26, 1
        %s323 = scalar_lea.sflag [#allocation6], %s322
        %s324 = sand.u32 %s60, 1
        %s325 = smul.addr %s324, 32
        %s326 = scalar_lea.vmem [#allocation5], %s325
        %p327 = pneg %p73
        %p328 = pneg %p70
        %s329 = sand.u32 %s26, 1
        %s330 = scalar_lea.sflag [#allocation6], %s329
        %s331 = sand.u32 %s86, 1
        %s332 = smul.addr %s331, 32
        %s333 = scalar_lea.vmem [#allocation7], %s332
        %p334 = pneg %p99
        %p335 = pneg %p96
        %p336 = pneg %p120
        %p337 = pneg %p117
        %p338 = pneg %p141
        %p339 = pneg %p138
        %p340 = pneg %p167
        %p341 = pneg %p164
        %s342 = sand.u32 %s154, 1
        %s343 = scalar_lea.sflag [#allocation4], %s342
        %s344 = sand.u32 %s154, 1
        %s345 = smul.addr %s344, 32
        %s346 = scalar_lea.vmem [#allocation11], %s345
        %v348 = vld [vmem:[%s284] sm:$0xf]
        %v349 = vld [vmem:[%s284 + $0x4] sm:$0xf]
        %v350 = vld [vmem:[%s284 + $0x8] sm:$0xf]
        %v351 = vld [vmem:[%s284 + $0xc] sm:$0xf]
        %v352 = vld [vmem:[%s284 + $0x10] sm:$0xf]
        %v353 = vld [vmem:[%s284 + $0x14] sm:$0xf]
        %v354 = vld [vmem:[%s284 + $0x18] sm:$0xf]
        %v355 = vld [vmem:[%s284 + $0x1c] sm:$0xf]
        %v356 = vld [vmem:[%s293] sm:$0xf]
        %v357 = vld [vmem:[%s293 + $0x4] sm:$0xf]
        %v358 = vld [vmem:[%s293 + $0x8] sm:$0xf]
        %v359 = vld [vmem:[%s293 + $0xc] sm:$0xf]
        %v360 = vld [vmem:[%s293 + $0x10] sm:$0xf]
        %v361 = vld [vmem:[%s293 + $0x14] sm:$0xf]
        %v362 = vld [vmem:[%s293 + $0x18] sm:$0xf]
        %v363 = vld [vmem:[%s293 + $0x1c] sm:$0xf]
        %v364 = vld [vmem:[%s302] sm:$0xf]
        %v365 = vld [vmem:[%s302 + $0x4] sm:$0xf]
        %v366 = vld [vmem:[%s302 + $0x8] sm:$0xf]
        %v367 = vld [vmem:[%s302 + $0xc] sm:$0xf]
        %v368 = vld [vmem:[%s302 + $0x10] sm:$0xf]
        %v369 = vld [vmem:[%s302 + $0x14] sm:$0xf]
        %v370 = vld [vmem:[%s302 + $0x18] sm:$0xf]
        %v371 = vld [vmem:[%s302 + $0x1c] sm:$0xf]
        %v380 = vunpack.c.l.b16 %v348
        %v381 = vunpack.c.l.b16 %v349
        %v382 = vunpack.c.l.b16 %v350
        %v383 = vunpack.c.l.b16 %v351
        %v384 = vunpack.c.l.b16 %v352
        %v385 = vunpack.c.l.b16 %v353
        %v386 = vunpack.c.l.b16 %v354
        %v387 = vunpack.c.l.b16 %v355
        %v388 = vpack.c.b16 %v381, %v380
        %v389 = vpack.c.b16 %v383, %v382
        %v390 = vpack.c.b16 %v385, %v384
        %v391 = vpack.c.b16 %v387, %v386
        %v400 = vunpack.c.l.b16 %v356
        %v401 = vunpack.c.l.b16 %v357
        %v402 = vunpack.c.l.b16 %v358
        %v403 = vunpack.c.l.b16 %v359
        %v404 = vunpack.c.l.b16 %v360
        %v405 = vunpack.c.l.b16 %v361
        %v406 = vunpack.c.l.b16 %v362
        %v407 = vunpack.c.l.b16 %v363
        %v408 = vpack.c.b16 %v401, %v400
        %v409 = vpack.c.b16 %v403, %v402
        %v410 = vpack.c.b16 %v405, %v404
        %v411 = vpack.c.b16 %v407, %v406
        %412 = vrot.lane.b32.xlu0 %v408, 32
        %v413 = vpop.permute.xlu0 %412
        %414 = vrot.lane.b32.xlu0 %v409, 32
        %v415 = vpop.permute.xlu0 %414
        %416 = vrot.lane.b32.xlu0 %v410, 32
        %v417 = vpop.permute.xlu0 %416
        %418 = vrot.lane.b32.xlu0 %v411, 32
        %v419 = vpop.permute.xlu0 %418
        %v428 = vunpack.c.l.b16 %v364
        %v429 = vunpack.c.l.b16 %v365
        %v430 = vunpack.c.l.b16 %v366
        %v431 = vunpack.c.l.b16 %v367
        %v432 = vunpack.c.l.b16 %v368
        %v433 = vunpack.c.l.b16 %v369
        %v434 = vunpack.c.l.b16 %v370
        %v435 = vunpack.c.l.b16 %v371
        %v436 = vpack.c.b16 %v429, %v428
        %v437 = vpack.c.b16 %v431, %v430
        %v438 = vpack.c.b16 %v433, %v432
        %v439 = vpack.c.b16 %v435, %v434
        %440 = vrot.lane.b32.xlu0 %v436, 64
        %v441 = vpop.permute.xlu0 %440
        %442 = vrot.lane.b32.xlu0 %v437, 64
        %v443 = vpop.permute.xlu0 %442
        %444 = vrot.lane.b32.xlu0 %v438, 64
        %v445 = vpop.permute.xlu0 %444
        %446 = vrot.lane.b32.xlu0 %v439, 64
        %v447 = vpop.permute.xlu0 %446
        %vm448 = vcmask 261120
        %v451 = vsel %vm448, %v388, %v413
        %v454 = vsel %vm448, %v389, %v415
        %v457 = vsel %vm448, %v390, %v417
        %v460 = vsel %vm448, %v391, %v419
        %vm461 = vcmask 523264
        %v463 = vsel %vm461, %v451, %v441
        %v465 = vsel %vm461, %v454, %v443
        %v467 = vsel %vm461, %v457, %v445
        %v469 = vsel %vm461, %v460, %v447
        %v470 = vld [vmem:[#allocation8] sm:$0xf]
        %v471 = vld [vmem:[#allocation8 + $0x4] sm:$0xf]
        %v472 = vld [vmem:[#allocation8 + $0x8] sm:$0xf]
        %v473 = vld [vmem:[#allocation8 + $0xc] sm:$0xf]
        %v474 = vld [vmem:[#allocation8 + $0x10] sm:$0xf]
        %v475 = vld [vmem:[#allocation8 + $0x14] sm:$0xf]
        %v476 = vld [vmem:[#allocation8 + $0x18] sm:$0xf]
        %v477 = vld [vmem:[#allocation8 + $0x1c] sm:$0xf]
        %v478 = vld [vmem:[#allocation8 + $0x20] sm:$0xf]
        %v479 = vld [vmem:[#allocation8 + $0x24] sm:$0xf]
        %v480 = vld [vmem:[#allocation8 + $0x28] sm:$0xf]
        %v481 = vld [vmem:[#allocation8 + $0x2c] sm:$0xf]
        %v482 = vld [vmem:[#allocation10] sm:$0x1]
        %v484 = vlaneseq
        %v485 = vshrl.u32 %v484, 7
        %v486 = vsub.s32 0, %v485
        %v487 = vrot.slane %v482, %v486
        %v501 = vunpack.c.l.b16 %v470
        %v502 = vunpack.c.l.b16 %v471
        %v503 = vunpack.c.l.b16 %v472
        %v504 = vunpack.c.l.b16 %v473
        %v505 = vunpack.c.l.b16 %v474
        %v506 = vunpack.c.l.b16 %v475
        %v507 = vunpack.c.l.b16 %v476
        %v508 = vunpack.c.l.b16 %v477
        %v509 = vunpack.c.l.b16 %v478
        %v510 = vunpack.c.l.b16 %v479
        %v511 = vunpack.c.l.b16 %v480
        %v512 = vunpack.c.l.b16 %v481
        %v513 = vpack.c.b16 %v502, %v501
        %v514 = vpack.c.b16 %v504, %v503
        %v515 = vpack.c.b16 %v506, %v505
        %v516 = vpack.c.b16 %v508, %v507
        %v517 = vpack.c.b16 %v510, %v509
        %v518 = vpack.c.b16 %v512, %v511
        %vm525 = vcmask 785408
        %v526 = vsel %vm525, %v463, 0
        %v528 = vsel %vm525, %v465, 0
        %v530 = vsel %vm525, %v467, 0
        %v532 = vsel %vm525, %v469, 0
        %534 = vmatprep.subr.bf16.mxu0 0
        %535 = vmatpush1.bf16.msra.mxu0 %v513
        %536 = vmatprep.subr.bf16.mxu0 0
        %537 = vmatpush1.bf16.msra.mxu0 %v514
        %538 = vmatprep.subr.bf16.mxu0 0
        %539 = vmatpush1.bf16.msra.mxu0 %v515
        %540 = vmatprep.subr.bf16.mxu0 0
        %541 = vmatpush1.bf16.msra.mxu0 %v516
        %542 = vmatprep.subr.bf16.mxu0 0
        %543 = vmatpush1.bf16.msra.mxu0 %v517
        %544 = vmatprep.subr.bf16.mxu0 0
        %545 = vmatpush1.bf16.msra.mxu0 %v518
        %546 = vmatprep.subr.bf16.mxu0 0
        %547 = vmatpush1.bf16.msra.mxu0 0
        %548 = vmatprep.subr.bf16.mxu0 0
        %549 = vmatpush1.bf16.msra.mxu0 0
        %550 = vmatprep.subr.bf16.mxu0 0
        %551 = vmatpush1.bf16.msra.mxu0 0
        %552 = vmatprep.subr.bf16.mxu0 0
        %553 = vmatpush1.bf16.msra.mxu0 0
        %554 = vmatprep.subr.bf16.mxu0 0
        %555 = vmatpush1.bf16.msra.mxu0 0
        %556 = vmatprep.subr.bf16.mxu0 0
        %557 = vmatpush1.bf16.msra.mxu0 0
        %558 = vmatprep.subr.bf16.mxu0 0
        %559 = vmatpush1.bf16.msra.mxu0 0
        %560 = vmatprep.subr.bf16.mxu0 0
        %561 = vmatpush1.bf16.msra.mxu0 0
        %562 = vmatprep.subr.bf16.mxu0 0
        %563 = vmatpush1.bf16.msra.mxu0 0
        %564 = vmatprep.subr.bf16.mxu0 0
        %565 = vmatpush1.bf16.msra.mxu0 0
        %566 = vmatprep.mubr.bf16.mxu0 0
        %567 = vmatmul.mubr.bf16.gmra.mrb[0].mxu0 %v526
        %v568 = vpop.f32.mrb[0].mxu0
        %v569 = vadd.f32 %v487, %v568
        %v570 = vpop.f32.mrb[0].mxu0
        %v571 = vpop.f32.mrb[0].mxu0
        %v572 = vadd.f32 %v487, %v571
        %v573 = vpop.f32.mrb[0].mxu0
        %574 = vmatprep.mubr.bf16.mxu0 0
        %575 = vmatmul.mubr.bf16.gmra.mrb[0].mxu0 %v528
        %v576 = vpop.f32.mrb[0].mxu0
        %v577 = vadd.f32 %v487, %v576
        %v578 = vpop.f32.mrb[0].mxu0
        %v579 = vpop.f32.mrb[0].mxu0
        %v580 = vadd.f32 %v487, %v579
        %v581 = vpop.f32.mrb[0].mxu0
        %582 = vmatprep.mubr.bf16.mxu0 0
        %583 = vmatmul.mubr.bf16.gmra.mrb[0].mxu0 %v530
        %v584 = vpop.f32.mrb[0].mxu0
        %v585 = vadd.f32 %v487, %v584
        %v586 = vpop.f32.mrb[0].mxu0
        %v587 = vpop.f32.mrb[0].mxu0
        %v588 = vadd.f32 %v487, %v587
        %v589 = vpop.f32.mrb[0].mxu0
        %590 = vmatprep.mubr.bf16.mxu0 0
        %591 = vmatmul.mubr.bf16.gmra.mrb[0].mxu0 %v532
        %v592 = vpop.f32.mrb[0].mxu0
        %v593 = vadd.f32 %v487, %v592
        %v594 = vpop.f32.mrb[0].mxu0
        %v595 = vpop.f32.mrb[0].mxu0
        %v596 = vadd.f32 %v487, %v595
        %v597 = vpop.f32.mrb[0].mxu0
        %598 = vdwg.mxu0
        %v599 = vpack.c.bf16 %v572, %v569
        %v600 = vpack.c.bf16 %v580, %v577
        %v601 = vpack.c.bf16 %v588, %v585
        %v602 = vpack.c.bf16 %v596, %v593
        %v607 = vunpack.c.l.b16 %v599
        %v608 = vunpack.c.h.b16 %v599
        %v609 = vunpack.c.l.b16 %v600
        %v610 = vunpack.c.h.b16 %v600
        %v611 = vunpack.c.l.b16 %v601
        %v612 = vunpack.c.h.b16 %v601
        %v613 = vunpack.c.l.b16 %v602
        %v614 = vunpack.c.h.b16 %v602
        %v615 = vpack.c.b16 %v607, %v607
        %v616 = vpack.c.b16 %v608, %v608
        %v617 = vpack.c.b16 %v609, %v609
        %v618 = vpack.c.b16 %v610, %v610
        %v619 = vpack.c.b16 %v611, %v611
        %v620 = vpack.c.b16 %v612, %v612
        %v621 = vpack.c.b16 %v613, %v613
        %v622 = vpack.c.b16 %v614, %v614
        %vm631 = vcmask 257024
        %632 = vst.msk [vmem:[%s346] sm:$0xf] %vm631, %v615
        %633 = vst.msk [vmem:[%s346 + $0x4] sm:$0xf] %vm631, %v616
        %634 = vst.msk [vmem:[%s346 + $0x8] sm:$0xf] %vm631, %v617
        %635 = vst.msk [vmem:[%s346 + $0xc] sm:$0xf] %vm631, %v618
        %636 = vst.msk [vmem:[%s346 + $0x10] sm:$0xf] %vm631, %v619
        %637 = vst.msk [vmem:[%s346 + $0x14] sm:$0xf] %vm631, %v620
        %638 = vst.msk [vmem:[%s346 + $0x18] sm:$0xf] %vm631, %v621
        %639 = vst.msk [vmem:[%s346 + $0x1c] sm:$0xf] %vm631, %v622
        %s640 = sand.u32 %s154, 1
        %s641 = scalar_lea.sflag [#allocation4], %s640
        %s642 = sand.u32 %s154, 1
        %s643 = smul.addr %s642, 32
        %s644 = scalar_lea.vmem [#allocation11], %s643
        // Predicated region
        $region61: #{net_forward.17} parent=39 // pred_check
          %p645 = pneg %p164
        $region62: #{net_forward.17} parent=39 // pred_check_branch
          %647 = sbr.rel (%p645) target = $region64
        $region63: #{net_forward.17} parent=39 // pred_region
          %s649 = ssub.s32 512, 512
          %650 = vsyncadd %s641, %s649
          %s651 = smul.addr %s26, 8
          %s652 = smul.addr %s651, 64
          %s653 = scalar_lea.hbm %s5, %s652
          %s654 = sshll.u32 %s644, 4
          %s655 = int_to_ptr.vmem [resolvable:$true] %s654
          %660 = dma.vmem_to_hbm [thread:$0]  %s655, 512, %s653, %s641, 64, 64, 4
        $region64: #{net_forward.17} parent=39 // pred_fallthru
          _
      $region40: #{net_forward.17} parent=5 // pred_fallthru
        _
      %p661 = scmp.le.s32.totalorder 2, %s21
      // Predicated region
      $region65: #{net_forward.17} parent=5 // pred_check
        %p662 = pneg %p661
      $region66: #{net_forward.17} parent=5 // pred_check_branch
        %664 = sbr.rel (%p662) target = $region68
      $region67: #{net_forward.17} parent=5 // pred_region
        %s665 = ssub.s32 %s21, 2
        // Predicated region
        $region69: #{net_forward.17} parent=67 // pred_check
          %p666 = pneg %p170
        $region70: #{net_forward.17} parent=67 // pred_check_branch
          %668 = sbr.rel (%p666) target = $region72
        $region71: #{net_forward.17} parent=67 // pred_region
          %s669 = sand.u32 %s155, 1
          %s670 = scalar_lea.sflag [#allocation4], %s669
          %s671 = sand.u32 %s155, 1
          %s672 = smul.addr %s671, 32
          %s673 = scalar_lea.vmem [#allocation11], %s672
          %674 = dma.done %s670, 512
        $region72: #{net_forward.17} parent=67 // pred_fallthru
          _
      $region68: #{net_forward.17} parent=5 // pred_fallthru
        _
    $region6: #{net_forward.17} parent=1 // loop_footer
      %s25 = sadd.s32 1, %s21
    $region7: #{net_forward.17} parent=1 // loop_footer_branch
      %20 = sbr.rel target = $region3
    $region8: #{net_forward.17} parent=1 // loop_exit
      _
    %675 = vsyncpa [#allocation3], 1
    %s676 = scalar_lea.sflag [#allocation3], 1
    %677 = vsyncpa %s676, 1
    %678 = vsyncpa [#allocation6], 1
    %s679 = scalar_lea.sflag [#allocation6], 1
    %680 = vsyncpa %s679, 1
    %681 = vsyncpa [#allocation9], 1
    %682 = vsyncpa [#allocation4], 1
    %s683 = scalar_lea.sflag [#allocation4], 1
    %684 = vsyncpa %s683, 1

// kernel: net_forward.14
$region0: #{net_forward.14}
  #allocation0 [shape = 'u32[]', space=smem, size = 0x4, offset = 0x4, fixed_abs, tag = 'smem constant byte address 0x4 - core index']
  #allocation1 [shape = 'u32[144,128]{1,0:T(1,128)}', space=vmem, size = 0x12000, scoped, tag = 'internal scratch']
  #allocation2 [shape = 'f32[10,10,32]{2,1,0:T(8,128)}', space=vmem, size = 0x14000, scoped, tag = 'scratch operand']
  %s0 = inlined_call_operand.hbm [shape: bf16[2,10,10,32], index: 0, kind: input, shape index: {}]
  %s1 = inlined_call_operand.hbm [shape: bf16[288,32], index: 1, kind: input, shape index: {}]
  %s2 = inlined_call_operand.hbm [shape: f32[1,32], index: 2, kind: input, shape index: {}]
  %s3 = inlined_call_operand.hbm [shape: bf16[288,32], index: 3, kind: input, shape index: {}]
  %s4 = inlined_call_operand.hbm [shape: f32[1,32], index: 4, kind: input, shape index: {}]
  %s5 = inlined_call_operand.hbm [shape: bf16[2,64,32], index: 5, kind: output, shape index: {}]
  %s6 = sld [smem:[#allocation0]]
  $region73: #{net_forward.14} parent=0
    _
  %s8 = ssub.s32 1, %s6
  %s9 = scalar_select 0, %s8, %s6
  $region1: #{net_forward.14} parent=0
    #allocation3 [shape = 'u8[81920]{0}', space=vmem, size = 0x14000, scoped, tag = 'input window, operand 0']
    #allocation4 [shape = 's32[2]{0}', space=sflag, size = 0x8, scoped, tag = 'scoped memory for net_forward.14']
    #allocation5 [shape = 's32[2]{0}', space=sflag, size = 0x8, scoped, tag = 'scoped memory for net_forward.14']
    #allocation6 [shape = 'u8[73728]{0}', space=vmem, size = 0x12000, scoped, tag = 'input window, operand 1, single buffered']
    #allocation7 [shape = 's32[1]{0}', space=sflag, size = 0x4, scoped, tag = 'scoped memory for net_forward.14']
    #allocation8 [shape = 'u8[512]{0}', space=vmem, size = 0x400, scoped, tag = 'input window, operand 2, single buffered']
    #allocation9 [shape = 'u8[73728]{0}', space=vmem, size = 0x12000, scoped, tag = 'input window, operand 3, single buffered']
    #allocation10 [shape = 's32[1]{0}', space=sflag, size = 0x4, scoped, tag = 'scoped memory for net_forward.14']
    #allocation11 [shape = 'u8[512]{0}', space=vmem, size = 0x400, scoped, tag = 'input window, operand 4, single buffered']
    #allocation12 [shape = 'u8[32768]{0}', space=vmem, size = 0x8000, scoped, tag = 'output window, operand 0']
    %10 = vsyncpa [#allocation4], 0
    %s11 = scalar_lea.sflag [#allocation4], 1
    %12 = vsyncpa %s11, 0
    %13 = vsyncpa [#allocation7], 0
    %14 = vsyncpa [#allocation10], 0
    %15 = vsyncpa [#allocation5], 0
    %s16 = scalar_lea.sflag [#allocation5], 1
    %17 = vsyncpa %s16, 0
    loop: start=0, step=1, limit=4
    $region2: #{net_forward.14} parent=1 // loop_pre_header
      _
    $region3: #{net_forward.14} parent=1 // loop_header
      %s19 = sphi 0, %s23
      %p20 = scmp.ge.s32.totalorder %s19, 4
      %s29 = sphi 0, %s31
      %s32 = sphi 0, %s29
      %s33 = sphi 0, %s32
      %s49 = sphi 0, %s33
      %s53 = sphi 0, %s53
      %s55 = sphi 0, %s53
      %s56 = sphi 0, %s55
      %s70 = sphi 0, %s56
      %s74 = sphi 0, %s74
      %s76 = sphi 0, %s74
      %s77 = sphi 0, %s76
      %s91 = sphi 0, %s77
      %s95 = sphi 0, %s95
      %s97 = sphi 0, %s95
      %s98 = sphi 0, %s97
      %s112 = sphi 0, %s98
      %s116 = sphi 0, %s116
      %s118 = sphi 0, %s116
      %s119 = sphi 0, %s118
      %s133 = sphi 0, %s119
      %s139 = sphi 0, %s141
      %s142 = sphi 0, %s139
      %s143 = sphi 0, %s142
      %s159 = sphi 0, %s143
    $region4: #{net_forward.14} parent=1 // loop_header_branch
      %22 = sbr.rel (%p20) target = $region8
    $region5: #{net_forward.14} parent=1 // loop_body
      %s24 = ssub.s32 %s19, 1
      %s25 = ssub.s32 %s19, 2
      %s26 = sadd.s32 %s19, 1
      %s27 = ssub.s32 %s19, %s26
      %p28 = scmp.eq.s32.totalorder %s27, 0
      %s30 = sadd.s32 %s29, 1
      %s31 = scalar_select %p28, %s29, %s30
      %p34 = pneg %p28
      %p35 = scmp.eq.s32.totalorder %s19, 1
      %p36 = por %p34, %p35
      %p37 = scmp.ne.s32.totalorder %s29, %s32
      %p38 = scmp.eq.s32.totalorder %s19, 0
      %p39 = por %p37, %p38
      %p40 = scmp.ne.s32.totalorder %s29, %s32
      %p41 = scmp.eq.s32.totalorder %s24, 1
      %p42 = por %p40, %p41
      %p43 = scmp.ne.s32.totalorder %s32, %s33
      %p44 = scmp.eq.s32.totalorder %s24, 0
      %p45 = por %p43, %p44
      %p46 = scmp.ne.s32.totalorder %s32, %s33
      %p47 = scmp.eq.s32.totalorder %s25, 1
      %p48 = por %p46, %p47
      %p50 = scmp.ne.s32.totalorder %s33, %s49
      %p51 = scmp.eq.s32.totalorder %s25, 0
      %p52 = por %p50, %p51
      %s54 = sadd.s32 %s53, 1
      %p57 = scmp.eq.s32.totalorder %s19, 1
      %p58 = scmp.ne.s32.totalorder %s53, %s55
      %p59 = scmp.eq.s32.totalorder %s19, 0
      %p60 = por %p58, %p59
      %p61 = scmp.ne.s32.totalorder %s53, %s55
      %p62 = scmp.eq.s32.totalorder %s24, 1
      %p63 = por %p61, %p62
      %p64 = scmp.ne.s32.totalorder %s55, %s56
      %p65 = scmp.eq.s32.totalorder %s24, 0
      %p66 = por %p64, %p65
      %p67 = scmp.ne.s32.totalorder %s55, %s56
      %p68 = scmp.eq.s32.totalorder %s25, 1
      %p69 = por %p67, %p68
      %p71 = scmp.ne.s32.totalorder %s56, %s70
      %p72 = scmp.eq.s32.totalorder %s25, 0
      %p73 = por %p71, %p72
      %s75 = sadd.s32 %s74, 1
      %p78 = scmp.eq.s32.totalorder %s19, 1
      %p79 = scmp.ne.s32.totalorder %s74, %s76
      %p80 = scmp.eq.s32.totalorder %s19, 0
      %p81 = por %p79, %p80
      %p82 = scmp.ne.s32.totalorder %s74, %s76
      %p83 = scmp.eq.s32.totalorder %s24, 1
      %p84 = por %p82, %p83
      %p85 = scmp.ne.s32.totalorder %s76, %s77
      %p86 = scmp.eq.s32.totalorder %s24, 0
      %p87 = por %p85, %p86
      %p88 = scmp.ne.s32.totalorder %s76, %s77
      %p89 = scmp.eq.s32.totalorder %s25, 1
      %p90 = por %p88, %p89
      %p92 = scmp.ne.s32.totalorder %s77, %s91
      %p93 = scmp.eq.s32.totalorder %s25, 0
      %p94 = por %p92, %p93
      %s96 = sadd.s32 %s95, 1
      %p99 = scmp.eq.s32.totalorder %s19, 1
      %p100 = scmp.ne.s32.totalorder %s95, %s97
      %p101 = scmp.eq.s32.totalorder %s19, 0
      %p102 = por %p100, %p101
      %p103 = scmp.ne.s32.totalorder %s95, %s97
      %p104 = scmp.eq.s32.totalorder %s24, 1
      %p105 = por %p103, %p104
      %p106 = scmp.ne.s32.totalorder %s97, %s98
      %p107 = scmp.eq.s32.totalorder %s24, 0
      %p108 = por %p106, %p107
      %p109 = scmp.ne.s32.totalorder %s97, %s98
      %p110 = scmp.eq.s32.totalorder %s25, 1
      %p111 = por %p109, %p110
      %p113 = scmp.ne.s32.totalorder %s98, %s112
      %p114 = scmp.eq.s32.totalorder %s25, 0
      %p115 = por %p113, %p114
      %s117 = sadd.s32 %s116, 1
      %p120 = scmp.eq.s32.totalorder %s19, 1
      %p121 = scmp.ne.s32.totalorder %s116, %s118
      %p122 = scmp.eq.s32.totalorder %s19, 0
      %p123 = por %p121, %p122
      %p124 = scmp.ne.s32.totalorder %s116, %s118
      %p125 = scmp.eq.s32.totalorder %s24, 1
      %p126 = por %p124, %p125
      %p127 = scmp.ne.s32.totalorder %s118, %s119
      %p128 = scmp.eq.s32.totalorder %s24, 0
      %p129 = por %p127, %p128
      %p130 = scmp.ne.s32.totalorder %s118, %s119
      %p131 = scmp.eq.s32.totalorder %s25, 1
      %p132 = por %p130, %p131
      %p134 = scmp.ne.s32.totalorder %s119, %s133
      %p135 = scmp.eq.s32.totalorder %s25, 0
      %p136 = por %p134, %p135
      %s137 = ssub.s32 %s19, %s26
      %p138 = scmp.eq.s32.totalorder %s137, 0
      %s140 = sadd.s32 %s139, 1
      %s141 = scalar_select %p138, %s139, %s140
      %p144 = pneg %p138
      %p145 = scmp.eq.s32.totalorder %s19, 1
      %p146 = por %p144, %p145
      %p147 = scmp.ne.s32.totalorder %s139, %s142
      %p148 = scmp.eq.s32.totalorder %s19, 0
      %p149 = por %p147, %p148
      %p150 = scmp.ne.s32.totalorder %s139, %s142
      %p151 = scmp.eq.s32.totalorder %s24, 1
      %p152 = por %p150, %p151
      %p153 = scmp.ne.s32.totalorder %s142, %s143
      %p154 = scmp.eq.s32.totalorder %s24, 0
      %p155 = por %p153, %p154
      %p156 = scmp.ne.s32.totalorder %s142, %s143
      %p157 = scmp.eq.s32.totalorder %s25, 1
      %p158 = por %p156, %p157
      %p160 = scmp.ne.s32.totalorder %s143, %s159
      %p161 = scmp.eq.s32.totalorder %s25, 0
      %p162 = por %p160, %p161
      %p163 = scmp.le.s32.totalorder 1, %s19
      %p164 = scmp.lt.s32.totalorder %s19, 3
      %p165 = pnand %p163, %p164
      %p166 = pneg %p165
      // Predicated region
      $region9: #{net_forward.14} parent=5 // pred_check
        _
      $region10: #{net_forward.14} parent=5 // pred_check_branch
        %168 = sbr.rel (%p165) target = $region12
      $region11: #{net_forward.14} parent=5 // pred_region
        %s169 = ssub.s32 %s19, 1
        // Predicated region
        $region13: #{net_forward.14} parent=11 // pred_check
          %p170 = pneg %p66
        $region14: #{net_forward.14} parent=11 // pred_check_branch
          %172 = sbr.rel (%p170) target = $region16
        $region15: #{net_forward.14} parent=11 // pred_region
          %s174 = ssub.s32 2304, 2304
          %175 = vsyncadd [#allocation7], %s174
          %s176 = sshll.u32 [#allocation6], 4
          %s177 = int_to_ptr.vmem [resolvable:$true] %s176
          %182 = dma.hbm_to_vmem [thread:$0]  %s1, 2304, %s177, [#allocation7], 64, 64, 4
        $region16: #{net_forward.14} parent=11 // pred_fallthru
          _
        // Predicated region
        $region17: #{net_forward.14} parent=11 // pred_check
          %p183 = pneg %p87
        $region18: #{net_forward.14} parent=11 // pred_check_branch
          %185 = sbr.rel (%p183) target = $region20
        $region19: #{net_forward.14} parent=11 // pred_region
          %s187 = ssub.s32 16, 16
          %188 = vsyncadd [#allocation7], %s187
          %s190 = sshll.u32 [#allocation8], 4
          %s191 = int_to_ptr.vmem [resolvable:$true] %s190
          %193 = dma.hbm_to_vmem [thread:$0]  %s2, 16, %s191, [#allocation7]
        $region20: #{net_forward.14} parent=11 // pred_fallthru
          _
        // Predicated region
        $region21: #{net_forward.14} parent=11 // pred_check
          %p194 = pneg %p108
        $region22: #{net_forward.14} parent=11 // pred_check_branch
          %196 = sbr.rel (%p194) target = $region24
        $region23: #{net_forward.14} parent=11 // pred_region
          %s198 = ssub.s32 2304, 2304
          %199 = vsyncadd [#allocation10], %s198
          %s200 = sshll.u32 [#allocation9], 4
          %s201 = int_to_ptr.vmem [resolvable:$true] %s200
          %206 = dma.hbm_to_vmem [thread:$0]  %s3, 2304, %s201, [#allocation10], 64, 64, 4
        $region24: #{net_forward.14} parent=11 // pred_fallthru
          _
        // Predicated region
        $region25: #{net_forward.14} parent=11 // pred_check
          %p207 = pneg %p129
        $region26: #{net_forward.14} parent=11 // pred_check_branch
          %209 = sbr.rel (%p207) target = $region28
        $region27: #{net_forward.14} parent=11 // pred_region
          %s211 = ssub.s32 16, 16
          %212 = vsyncadd [#allocation10], %s211
          %s214 = sshll.u32 [#allocation11], 4
          %s215 = int_to_ptr.vmem [resolvable:$true] %s214
          %217 = dma.hbm_to_vmem [thread:$0]  %s4, 16, %s215, [#allocation10]
        $region28: #{net_forward.14} parent=11 // pred_fallthru
          _
      $region12: #{net_forward.14} parent=5 // pred_fallthru
        _
      %p218 = scmp.lt.s32.totalorder %s19, 2
      // Predicated region
      $region29: #{net_forward.14} parent=5 // pred_check
        %p219 = pneg %p218
      $region30: #{net_forward.14} parent=5 // pred_check_branch
        %221 = sbr.rel (%p219) target = $region32
      $region31: #{net_forward.14} parent=5 // pred_region
        // Predicated region
        $region33: #{net_forward.14} parent=31 // pred_check
          %p222 = pneg %p39
        $region34: #{net_forward.14} parent=31 // pred_check_branch
          %224 = sbr.rel (%p222) target = $region36
        $region35: #{net_forward.14} parent=31 // pred_region
          %s225 = sand.u32 %s29, 1
          %s226 = scalar_lea.sflag [#allocation4], %s225
          %s227 = sand.u32 %s29, 1
          %s228 = smul.addr %s227, 80
          %s229 = scalar_lea.vmem [#allocation3], %s228
          %s231 = ssub.s32 1280, 1280
          %232 = vsyncadd %s226, %s231
          %s233 = smul.addr %s19, 20
          %s234 = smul.addr %s233, 64
          %s235 = scalar_lea.hbm %s0, %s234
          %s236 = sshll.u32 %s229, 4
          %s237 = int_to_ptr.vmem [resolvable:$true] %s236
          %242 = dma.hbm_to_vmem [thread:$0]  %s235, 1280, %s237, %s226, 64, 64, 4
        $region36: #{net_forward.14} parent=31 // pred_fallthru
          _
      $region32: #{net_forward.14} parent=5 // pred_fallthru
        _
      %p243 = scmp.le.s32.totalorder 1, %s19
      %p244 = scmp.lt.s32.totalorder %s19, 3
      %p245 = pnand %p243, %p244
      %p246 = pneg %p245
      // Predicated region
      $region37: #{net_forward.14} parent=5 // pred_check
        _
      $region38: #{net_forward.14} parent=5 // pred_check_branch
        %248 = sbr.rel (%p245) target = $region40
      $region39: #{net_forward.14} parent=5 // pred_region
        %s249 = ssub.s32 %s19, 1
        %s250 = sand.u32 %s32, 1
        %s251 = scalar_lea.sflag [#allocation4], %s250
        %s252 = sand.u32 %s32, 1
        %s253 = smul.addr %s252, 80
        %s254 = scalar_lea.vmem [#allocation3], %s253
        // Predicated region
        $region41: #{net_forward.14} parent=39 // pred_check
          %p255 = pneg %p45
        $region42: #{net_forward.14} parent=39 // pred_check_branch
          %257 = sbr.rel (%p255) target = $region44
        $region43: #{net_forward.14} parent=39 // pred_region
          %258 = dma.done %s251, 1280
        $region44: #{net_forward.14} parent=39 // pred_fallthru
          _
        // Predicated region
        $region45: #{net_forward.14} parent=39 // pred_check
          %p259 = pneg %p66
        $region46: #{net_forward.14} parent=39 // pred_check_branch
          %261 = sbr.rel (%p259) target = $region48
        $region47: #{net_forward.14} parent=39 // pred_region
          %262 = dma.done [#allocation7], 2304
        $region48: #{net_forward.14} parent=39 // pred_fallthru
          _
        // Predicated region
        $region49: #{net_forward.14} parent=39 // pred_check
          %p263 = pneg %p87
        $region50: #{net_forward.14} parent=39 // pred_check_branch
          %265 = sbr.rel (%p263) target = $region52
        $region51: #{net_forward.14} parent=39 // pred_region
          %266 = dma.done [#allocation7], 16
        $region52: #{net_forward.14} parent=39 // pred_fallthru
          _
        // Predicated region
        $region53: #{net_forward.14} parent=39 // pred_check
          %p267 = pneg %p108
        $region54: #{net_forward.14} parent=39 // pred_check_branch
          %269 = sbr.rel (%p267) target = $region56
        $region55: #{net_forward.14} parent=39 // pred_region
          %270 = dma.done [#allocation10], 2304
        $region56: #{net_forward.14} parent=39 // pred_fallthru
          _
        // Predicated region
        $region57: #{net_forward.14} parent=39 // pred_check
          %p271 = pneg %p129
        $region58: #{net_forward.14} parent=39 // pred_check_branch
          %273 = sbr.rel (%p271) target = $region60
        $region59: #{net_forward.14} parent=39 // pred_region
          %274 = dma.done [#allocation10], 16
        $region60: #{net_forward.14} parent=39 // pred_fallthru
          _
        %s275 = sand.u32 %s32, 1
        %s276 = scalar_lea.sflag [#allocation4], %s275
        %s277 = sand.u32 %s32, 1
        %s278 = smul.addr %s277, 80
        %s279 = scalar_lea.vmem [#allocation3], %s278
        %p280 = pneg %p45
        %p281 = pneg %p42
        %p282 = pneg %p66
        %p283 = pneg %p63
        %p284 = pneg %p87
        %p285 = pneg %p84
        %p286 = pneg %p108
        %p287 = pneg %p105
        %p288 = pneg %p129
        %p289 = pneg %p126
        %p290 = pneg %p155
        %p291 = pneg %p152
        %s292 = sand.u32 %s142, 1
        %s293 = scalar_lea.sflag [#allocation5], %s292
        %s294 = sand.u32 %s142, 1
        %s295 = smul.addr %s294, 32
        %s296 = scalar_lea.vmem [#allocation12], %s295
        %v298 = vld [vmem:[%s254] sm:$0xf]
        %v299 = vld [vmem:[%s254 + $0x4] sm:$0x1]
        %v300 = vld [vmem:[%s254 + $0x8] sm:$0xf]
        %v301 = vld [vmem:[%s254 + $0xc] sm:$0x1]
        %v302 = vld [vmem:[%s254 + $0x10] sm:$0xf]
        %v303 = vld [vmem:[%s254 + $0x14] sm:$0x1]
        %v304 = vld [vmem:[%s254 + $0x18] sm:$0xf]
        %v305 = vld [vmem:[%s254 + $0x1c] sm:$0x1]
        %v306 = vld [vmem:[%s254 + $0x20] sm:$0xf]
        %v307 = vld [vmem:[%s254 + $0x24] sm:$0x1]
        %v308 = vld [vmem:[%s254 + $0x28] sm:$0xf]
        %v309 = vld [vmem:[%s254 + $0x2c] sm:$0x1]
        %v310 = vld [vmem:[%s254 + $0x30] sm:$0xf]
        %v311 = vld [vmem:[%s254 + $0x34] sm:$0x1]
        %v312 = vld [vmem:[%s254 + $0x38] sm:$0xf]
        %v313 = vld [vmem:[%s254 + $0x3c] sm:$0x1]
        %v314 = vld [vmem:[%s254 + $0x40] sm:$0xf]
        %v315 = vld [vmem:[%s254 + $0x44] sm:$0x1]
        %v316 = vld [vmem:[%s254 + $0x48] sm:$0xf]
        %v317 = vld [vmem:[%s254 + $0x4c] sm:$0x1]
        %v318 = vunpack.c.l.bf16 %v298
        %v319 = vunpack.c.l.bf16 %v299
        %v320 = vunpack.c.l.bf16 %v300
        %v321 = vunpack.c.l.bf16 %v301
        %v322 = vunpack.c.l.bf16 %v302
        %v323 = vunpack.c.l.bf16 %v303
        %v324 = vunpack.c.l.bf16 %v304
        %v325 = vunpack.c.l.bf16 %v305
        %v326 = vunpack.c.l.bf16 %v306
        %v327 = vunpack.c.l.bf16 %v307
        %v328 = vunpack.c.l.bf16 %v308
        %v329 = vunpack.c.l.bf16 %v309
        %v330 = vunpack.c.l.bf16 %v310
        %v331 = vunpack.c.l.bf16 %v311
        %v332 = vunpack.c.l.bf16 %v312
        %v333 = vunpack.c.l.bf16 %v313
        %v334 = vunpack.c.l.bf16 %v314
        %v335 = vunpack.c.l.bf16 %v315
        %v336 = vunpack.c.l.bf16 %v316
        %v337 = vunpack.c.l.bf16 %v317
        %vm354 = vcmask 1046528
        %v355 = vrot.slane %v318, 1
        %v356 = vrot.slane %v319, 1
        %v357 = vsel %vm354, %v355, %v356
        %v358 = vrot.slane %v320, 1
        %v359 = vrot.slane %v321, 1
        %v360 = vsel %vm354, %v358, %v359
        %v361 = vrot.slane %v322, 1
        %v362 = vrot.slane %v323, 1
        %v363 = vsel %vm354, %v361, %v362
        %v364 = vrot.slane %v324, 1
        %v365 = vrot.slane %v325, 1
        %v366 = vsel %vm354, %v364, %v365
        %v367 = vrot.slane %v326, 1
        %v368 = vrot.slane %v327, 1
        %v369 = vsel %vm354, %v367, %v368
        %v370 = vrot.slane %v328, 1
        %v371 = vrot.slane %v329, 1
        %v372 = vsel %vm354, %v370, %v371
        %v373 = vrot.slane %v330, 1
        %v374 = vrot.slane %v331, 1
        %v375 = vsel %vm354, %v373, %v374
        %v376 = vrot.slane %v332, 1
        %v377 = vrot.slane %v333, 1
        %v378 = vsel %vm354, %v376, %v377
        %vm379 = vcmask 1045504
        %v380 = vrot.slane %v318, 2
        %v381 = vrot.slane %v319, 2
        %v382 = vsel %vm379, %v380, %v381
        %v383 = vrot.slane %v320, 2
        %v384 = vrot.slane %v321, 2
        %v385 = vsel %vm379, %v383, %v384
        %v386 = vrot.slane %v322, 2
        %v387 = vrot.slane %v323, 2
        %v388 = vsel %vm379, %v386, %v387
        %v389 = vrot.slane %v324, 2
        %v390 = vrot.slane %v325, 2
        %v391 = vsel %vm379, %v389, %v390
        %v392 = vrot.slane %v326, 2
        %v393 = vrot.slane %v327, 2
        %v394 = vsel %vm379, %v392, %v393
        %v395 = vrot.slane %v328, 2
        %v396 = vrot.slane %v329, 2
        %v397 = vsel %vm379, %v395, %v396
        %v398 = vrot.slane %v330, 2
        %v399 = vrot.slane %v331, 2
        %v400 = vsel %vm379, %v398, %v399
        %v401 = vrot.slane %v332, 2
        %v402 = vrot.slane %v333, 2
        %v403 = vsel %vm379, %v401, %v402
        %v406 = vrot.slane %v334, 1
        %v407 = vrot.slane %v335, 1
        %v408 = vsel %vm354, %v406, %v407
        %v417 = vrot.slane %v334, 2
        %v418 = vrot.slane %v335, 2
        %v419 = vsel %vm379, %v417, %v418
        %v422 = vrot.slane %v336, 1
        %v423 = vrot.slane %v337, 1
        %v424 = vsel %vm354, %v422, %v423
        %v425 = vrot.slane %v336, 2
        %v426 = vrot.slane %v337, 2
        %v427 = vsel %vm379, %v425, %v426
        %436 = vrot.lane.b32.xlu0 %v357, 32
        %v437 = vpop.permute.xlu0 %436
        %438 = vrot.lane.b32.xlu0 %v360, 32
        %v439 = vpop.permute.xlu0 %438
        %440 = vrot.lane.b32.xlu0 %v363, 32
        %v441 = vpop.permute.xlu0 %440
        %442 = vrot.lane.b32.xlu0 %v366, 32
        %v443 = vpop.permute.xlu0 %442
        %444 = vrot.lane.b32.xlu0 %v369, 32
        %v445 = vpop.permute.xlu0 %444
        %446 = vrot.lane.b32.xlu0 %v372, 32
        %v447 = vpop.permute.xlu0 %446
        %448 = vrot.lane.b32.xlu0 %v375, 32
        %v449 = vpop.permute.xlu0 %448
        %450 = vrot.lane.b32.xlu0 %v378, 32
        %v451 = vpop.permute.xlu0 %450
        %460 = vrot.lane.b32.xlu0 %v382, 64
        %v461 = vpop.permute.xlu0 %460
        %462 = vrot.lane.b32.xlu0 %v385, 64
        %v463 = vpop.permute.xlu0 %462
        %464 = vrot.lane.b32.xlu0 %v388, 64
        %v465 = vpop.permute.xlu0 %464
        %466 = vrot.lane.b32.xlu0 %v391, 64
        %v467 = vpop.permute.xlu0 %466
        %468 = vrot.lane.b32.xlu0 %v394, 64
        %v469 = vpop.permute.xlu0 %468
        %470 = vrot.lane.b32.xlu0 %v397, 64
        %v471 = vpop.permute.xlu0 %470
        %472 = vrot.lane.b32.xlu0 %v400, 64
        %v473 = vpop.permute.xlu0 %472
        %474 = vrot.lane.b32.xlu0 %v403, 64
        %v475 = vpop.permute.xlu0 %474
        %484 = vrot.lane.b32.xlu0 %v320, 96
        %v485 = vpop.permute.xlu0 %484
        %486 = vrot.lane.b32.xlu0 %v322, 96
        %v487 = vpop.permute.xlu0 %486
        %488 = vrot.lane.b32.xlu0 %v324, 96
        %v489 = vpop.permute.xlu0 %488
        %490 = vrot.lane.b32.xlu0 %v326, 96
        %v491 = vpop.permute.xlu0 %490
        %492 = vrot.lane.b32.xlu0 %v328, 96
        %v493 = vpop.permute.xlu0 %492
        %494 = vrot.lane.b32.xlu0 %v330, 96
        %v495 = vpop.permute.xlu0 %494
        %496 = vrot.lane.b32.xlu0 %v332, 96
        %v497 = vpop.permute.xlu0 %496
        %498 = vrot.lane.b32.xlu0 %v334, 96
        %v499 = vpop.permute.xlu0 %498
        %508 = vrot.lane.b32.xlu0 %v385, 32
        %v509 = vpop.permute.xlu0 %508
        %510 = vrot.lane.b32.xlu0 %v388, 32
        %v511 = vpop.permute.xlu0 %510
        %512 = vrot.lane.b32.xlu0 %v391, 32
        %v513 = vpop.permute.xlu0 %512
        %514 = vrot.lane.b32.xlu0 %v394, 32
        %v515 = vpop.permute.xlu0 %514
        %516 = vrot.lane.b32.xlu0 %v397, 32
        %v517 = vpop.permute.xlu0 %516
        %518 = vrot.lane.b32.xlu0 %v400, 32
        %v519 = vpop.permute.xlu0 %518
        %520 = vrot.lane.b32.xlu0 %v403, 32
        %v521 = vpop.permute.xlu0 %520
        %522 = vrot.lane.b32.xlu0 %v419, 32
        %v523 = vpop.permute.xlu0 %522
        %532 = vrot.lane.b32.xlu0 %v322, 64
        %v533 = vpop.permute.xlu0 %532
        %534 = vrot.lane.b32.xlu0 %v324, 64
        %v535 = vpop.permute.xlu0 %534
        %536 = vrot.lane.b32.xlu0 %v326, 64
        %v537 = vpop.permute.xlu0 %536
        %538 = vrot.lane.b32.xlu0 %v328, 64
        %v539 = vpop.permute.xlu0 %538
        %540 = vrot.lane.b32.xlu0 %v330, 64
        %v541 = vpop.permute.xlu0 %540
        %542 = vrot.lane.b32.xlu0 %v332, 64
        %v543 = vpop.permute.xlu0 %542
        %544 = vrot.lane.b32.xlu0 %v334, 64
        %v545 = vpop.permute.xlu0 %544
        %546 = vrot.lane.b32.xlu0 %v336, 64
        %v547 = vpop.permute.xlu0 %546
        %556 = vrot.lane.b32.xlu0 %v363, 96
        %v557 = vpop.permute.xlu0 %556
        %558 = vrot.lane.b32.xlu0 %v366, 96
        %v559 = vpop.permute.xlu0 %558
        %560 = vrot.lane.b32.xlu0 %v369, 96
        %v561 = vpop.permute.xlu0 %560
        %562 = vrot.lane.b32.xlu0 %v372, 96
        %v563 = vpop.permute.xlu0 %562
        %564 = vrot.lane.b32.xlu0 %v375, 96
        %v565 = vpop.permute.xlu0 %564
        %566 = vrot.lane.b32.xlu0 %v378, 96
        %v567 = vpop.permute.xlu0 %566
        %568 = vrot.lane.b32.xlu0 %v408, 96
        %v569 = vpop.permute.xlu0 %568
        %570 = vrot.lane.b32.xlu0 %v424, 96
        %v571 = vpop.permute.xlu0 %570
        %vm580 = vcmask 261120
        %v581 = vsel %vm580, %v318, %v437
        %v582 = vsel %vm580, %v320, %v439
        %v583 = vsel %vm580, %v322, %v441
        %v584 = vsel %vm580, %v324, %v443
        %v585 = vsel %vm580, %v326, %v445
        %v586 = vsel %vm580, %v328, %v447
        %v587 = vsel %vm580, %v330, %v449
        %v588 = vsel %vm580, %v332, %v451
        %vm589 = vcmask 523264
        %v590 = vsel %vm589, %v581, %v461
        %v591 = vsel %vm589, %v582, %v463
        %v592 = vsel %vm589, %v583, %v465
        %v593 = vsel %vm589, %v584, %v467
        %v594 = vsel %vm589, %v585, %v469
        %v595 = vsel %vm589, %v586, %v471
        %v596 = vsel %vm589, %v587, %v473
        %v597 = vsel %vm589, %v588, %v475
        %vm598 = vcmask 785408
        %v599 = vsel %vm598, %v590, %v485
        %v600 = vsel %vm598, %v591, %v487
        %v601 = vsel %vm598, %v592, %v489
        %v602 = vsel %vm598, %v593, %v491
        %v603 = vsel %vm598, %v594, %v493
        %v604 = vsel %vm598, %v595, %v495
        %v605 = vsel %vm598, %v596, %v497
        %v606 = vsel %vm598, %v597, %v499
        %v607 = vsel %vm580, %v360, %v509
        %v608 = vsel %vm580, %v363, %v511
        %v609 = vsel %vm580, %v366, %v513
        %v610 = vsel %vm580, %v369, %v515
        %v611 = vsel %vm580, %v372, %v517
        %v612 = vsel %vm580, %v375, %v519
        %v613 = vsel %vm580, %v378, %v521
        %v614 = vsel %vm580, %v408, %v523
        %v615 = vsel %vm589, %v607, %v533
        %v616 = vsel %vm589, %v608, %v535
        %v617 = vsel %vm589, %v609, %v537
        %v618 = vsel %vm589, %v610, %v539
        %v619 = vsel %vm589, %v611, %v541
        %v620 = vsel %vm589, %v612, %v543
        %v621 = vsel %vm589, %v613, %v545
        %v622 = vsel %vm589, %v614, %v547
        %v623 = vsel %vm598, %v615, %v557
        %v624 = vsel %vm598, %v616, %v559
        %v625 = vsel %vm598, %v617, %v561
        %v626 = vsel %vm598, %v618, %v563
        %v627 = vsel %vm598, %v619, %v565
        %v628 = vsel %vm598, %v620, %v567
        %v629 = vsel %vm598, %v621, %v569
        %v630 = vsel %vm598, %v622, %v571
        %v631 = vpack.c.bf16 %v600, %v599
        %v632 = vpack.c.bf16 %v624, %v623
        %v633 = vpack.c.bf16 %v391, %v388
        %v634 = vpack.c.bf16 %v602, %v601
        %v635 = vpack.c.bf16 %v626, %v625
        %v636 = vpack.c.bf16 %v397, %v394
        %v637 = vpack.c.bf16 %v604, %v603
        %v638 = vpack.c.bf16 %v628, %v627
        %v639 = vpack.c.bf16 %v403, %v400
        %v640 = vpack.c.bf16 %v606, %v605
        %v641 = vpack.c.bf16 %v630, %v629
        %v642 = vpack.c.bf16 %v427, %v419
        %v643 = vld [vmem:[#allocation6] sm:$0xf]
        %v644 = vld [vmem:[#allocation6 + $0x4] sm:$0xf]
        %v645 = vld [vmem:[#allocation6 + $0x8] sm:$0xf]
        %v646 = vld [vmem:[#allocation6 + $0xc] sm:$0xf]
        %v647 = vld [vmem:[#allocation6 + $0x10] sm:$0xf]
        %v648 = vld [vmem:[#allocation6 + $0x14] sm:$0xf]
        %v649 = vld [vmem:[#allocation6 + $0x18] sm:$0xf]
        %v650 = vld [vmem:[#allocation6 + $0x1c] sm:$0xf]
        %v651 = vld [vmem:[#allocation6 + $0x20] sm:$0xf]
        %v652 = vld [vmem:[#allocation6 + $0x24] sm:$0xf]
        %v653 = vld [vmem:[#allocation6 + $0x28] sm:$0xf]
        %v654 = vld [vmem:[#allocation6 + $0x2c] sm:$0xf]
        %v655 = vld [vmem:[#allocation6 + $0x30] sm:$0xf]
        %v656 = vld [vmem:[#allocation6 + $0x34] sm:$0xf]
        %v657 = vld [vmem:[#allocation6 + $0x38] sm:$0xf]
        %v658 = vld [vmem:[#allocation6 + $0x3c] sm:$0xf]
        %v659 = vld [vmem:[#allocation6 + $0x40] sm:$0xf]
        %v660 = vld [vmem:[#allocation6 + $0x44] sm:$0xf]
        %v661 = vld [vmem:[#allocation6 + $0x48] sm:$0xf]
        %v662 = vld [vmem:[#allocation6 + $0x4c] sm:$0xf]
        %v663 = vld [vmem:[#allocation6 + $0x50] sm:$0xf]
        %v664 = vld [vmem:[#allocation6 + $0x54] sm:$0xf]
        %v665 = vld [vmem:[#allocation6 + $0x58] sm:$0xf]
        %v666 = vld [vmem:[#allocation6 + $0x5c] sm:$0xf]
        %v667 = vld [vmem:[#allocation6 + $0x60] sm:$0xf]
        %v668 = vld [vmem:[#allocation6 + $0x64] sm:$0xf]
        %v669 = vld [vmem:[#allocation6 + $0x68] sm:$0xf]
        %v670 = vld [vmem:[#allocation6 + $0x6c] sm:$0xf]
        %v671 = vld [vmem:[#allocation6 + $0x70] sm:$0xf]
        %v672 = vld [vmem:[#allocation6 + $0x74] sm:$0xf]
        %v673 = vld [vmem:[#allocation6 + $0x78] sm:$0xf]
        %v674 = vld [vmem:[#allocation6 + $0x7c] sm:$0xf]
        %v675 = vld [vmem:[#allocation6 + $0x80] sm:$0xf]
        %v676 = vld [vmem:[#allocation6 + $0x84] sm:$0xf]
        %v677 = vld [vmem:[#allocation6 + $0x88] sm:$0xf]
        %v678 = vld [vmem:[#allocation6 + $0x8c] sm:$0xf]
        %v679 = vld [vmem:[#allocation8] sm:$0x1]
        %v681 = vlaneseq
        %v682 = vshrl.u32 %v681, 7
        %v683 = vsub.s32 0, %v682
        %v684 = vrot.slane %v679, %v683
        %v722 = vunpack.c.l.b16 %v643
        %v723 = vunpack.c.l.b16 %v644
        %v724 = vunpack.c.l.b16 %v645
        %v725 = vunpack.c.l.b16 %v646
        %v726 = vunpack.c.l.b16 %v647
        %v727 = vunpack.c.l.b16 %v648
        %v728 = vunpack.c.l.b16 %v649
        %v729 = vunpack.c.l.b16 %v650
        %v730 = vunpack.c.l.b16 %v651
        %v731 = vunpack.c.l.b16 %v652
        %v732 = vunpack.c.l.b16 %v653
        %v733 = vunpack.c.l.b16 %v654
        %v734 = vunpack.c.l.b16 %v655
        %v735 = vunpack.c.l.b16 %v656
        %v736 = vunpack.c.l.b16 %v657
        %v737 = vunpack.c.l.b16 %v658
        %v738 = vunpack.c.l.b16 %v659
        %v739 = vunpack.c.l.b16 %v660
        %v740 = vunpack.c.l.b16 %v661
        %v741 = vunpack.c.l.b16 %v662
        %v742 = vunpack.c.l.b16 %v663
        %v743 = vunpack.c.l.b16 %v664
        %v744 = vunpack.c.l.b16 %v665
        %v745 = vunpack.c.l.b16 %v666
        %v746 = vunpack.c.l.b16 %v667
        %v747 = vunpack.c.l.b16 %v668
        %v748 = vunpack.c.l.b16 %v669
        %v749 = vunpack.c.l.b16 %v670
        %v750 = vunpack.c.l.b16 %v671
        %v751 = vunpack.c.l.b16 %v672
        %v752 = vunpack.c.l.b16 %v673
        %v753 = vunpack.c.l.b16 %v674
        %v754 = vunpack.c.l.b16 %v675
        %v755 = vunpack.c.l.b16 %v676
        %v756 = vunpack.c.l.b16 %v677
        %v757 = vunpack.c.l.b16 %v678
        %v758 = vpack.c.b16 %v723, %v722
        %v759 = vpack.c.b16 %v725, %v724
        %v760 = vpack.c.b16 %v727, %v726
        %v761 = vpack.c.b16 %v729, %v728
        %v762 = vpack.c.b16 %v731, %v730
        %v763 = vpack.c.b16 %v733, %v732
        %v764 = vpack.c.b16 %v735, %v734
        %v765 = vpack.c.b16 %v737, %v736
        %v766 = vpack.c.b16 %v739, %v738
        %v767 = vpack.c.b16 %v741, %v740
        %v768 = vpack.c.b16 %v743, %v742
        %v769 = vpack.c.b16 %v745, %v744
        %v770 = vpack.c.b16 %v747, %v746
        %v771 = vpack.c.b16 %v749, %v748
        %v772 = vpack.c.b16 %v751, %v750
        %v773 = vpack.c.b16 %v753, %v752
        %v774 = vpack.c.b16 %v755, %v754
        %v775 = vpack.c.b16 %v757, %v756
        %v795 = vsel %vm580, %v633, 0
        %v798 = vsel %vm580, %v636, 0
        %v801 = vsel %vm580, %v639, 0
        %v804 = vsel %vm580, %v642, 0
        %806 = vmatprep.subr.bf16.mxu0 0
        %807 = vmatpush1.bf16.msra.mxu0 %v758
        %808 = vmatprep.subr.bf16.mxu0 0
        %809 = vmatpush1.bf16.msra.mxu0 %v759
        %810 = vmatprep.subr.bf16.mxu0 0
        %811 = vmatpush1.bf16.msra.mxu0 %v760
        %812 = vmatprep.subr.bf16.mxu0 0
        %813 = vmatpush1.bf16.msra.mxu0 %v761
        %814 = vmatprep.subr.bf16.mxu0 0
        %815 = vmatpush1.bf16.msra.mxu0 %v762
        %816 = vmatprep.subr.bf16.mxu0 0
        %817 = vmatpush1.bf16.msra.mxu0 %v763
        %818 = vmatprep.subr.bf16.mxu0 0
        %819 = vmatpush1.bf16.msra.mxu0 %v764
        %820 = vmatprep.subr.bf16.mxu0 0
        %821 = vmatpush1.bf16.msra.mxu0 %v765
        %822 = vmatprep.subr.bf16.mxu0 0
        %823 = vmatpush1.bf16.msra.mxu0 %v766
        %824 = vmatprep.subr.bf16.mxu0 0
        %825 = vmatpush1.bf16.msra.mxu0 %v767
        %826 = vmatprep.subr.bf16.mxu0 0
        %827 = vmatpush1.bf16.msra.mxu0 %v768
        %828 = vmatprep.subr.bf16.mxu0 0
        %829 = vmatpush1.bf16.msra.mxu0 %v769
        %830 = vmatprep.subr.bf16.mxu0 0
        %831 = vmatpush1.bf16.msra.mxu0 %v770
        %832 = vmatprep.subr.bf16.mxu0 0
        %833 = vmatpush1.bf16.msra.mxu0 %v771
        %834 = vmatprep.subr.bf16.mxu0 0
        %835 = vmatpush1.bf16.msra.mxu0 %v772
        %836 = vmatprep.subr.bf16.mxu0 0
        %837 = vmatpush1.bf16.msra.mxu0 %v773
        %838 = vmatprep.mubr.bf16.mxu0 %v632
        %839 = vmatmul.mubr.bf16.gmra.mrb[0].mxu0 %v631
        %v840 = vpop.f32.mrb[0].mxu0
        %v841 = vadd.f32 %v684, %v840
        %v842 = vpop.f32.mrb[0].mxu0
        %v843 = vpop.f32.mrb[0].mxu0
        %v844 = vadd.f32 %v684, %v843
        %v845 = vpop.f32.mrb[0].mxu0
        %846 = vmatprep.mubr.bf16.mxu0 %v635
        %847 = vmatmul.mubr.bf16.gmra.mrb[0].mxu0 %v634
        %v848 = vpop.f32.mrb[0].mxu0
        %v849 = vadd.f32 %v684, %v848
        %v850 = vpop.f32.mrb[0].mxu0
        %v851 = vpop.f32.mrb[0].mxu0
        %v852 = vadd.f32 %v684, %v851
        %v853 = vpop.f32.mrb[0].mxu0
        %854 = vmatprep.mubr.bf16.mxu0 %v638
        %855 = vmatmul.mubr.bf16.gmra.mrb[0].mxu0 %v637
        %v856 = vpop.f32.mrb[0].mxu0
        %v857 = vadd.f32 %v684, %v856
        %v858 = vpop.f32.mrb[0].mxu0
        %v859 = vpop.f32.mrb[0].mxu0
        %v860 = vadd.f32 %v684, %v859
        %v861 = vpop.f32.mrb[0].mxu0
        %862 = vmatprep.mubr.bf16.mxu0 %v641
        %863 = vmatmul.mubr.bf16.gmra.mrb[0].mxu0 %v640
        %v864 = vpop.f32.mrb[0].mxu0
        %v865 = vadd.f32 %v684, %v864
        %v866 = vpop.f32.mrb[0].mxu0
        %v867 = vpop.f32.mrb[0].mxu0
        %v868 = vadd.f32 %v684, %v867
        %v869 = vpop.f32.mrb[0].mxu0
        %870 = vdwg.mxu0
        %871 = vmatprep.subr.bf16.mxu0 0
        %872 = vmatpush1.bf16.msra.mxu0 %v774
        %873 = vmatprep.subr.bf16.mxu0 0
        %874 = vmatpush1.bf16.msra.mxu0 %v775
        %875 = vmatprep.subr.bf16.mxu0 0
        %876 = vmatpush1.bf16.msra.mxu0 0
        %877 = vmatprep.subr.bf16.mxu0 0
        %878 = vmatpush1.bf16.msra.mxu0 0
        %879 = vmatprep.subr.bf16.mxu0 0
        %880 = vmatpush1.bf16.msra.mxu0 0
        %881 = vmatprep.subr.bf16.mxu0 0
        %882 = vmatpush1.bf16.msra.mxu0 0
        %883 = vmatprep.subr.bf16.mxu0 0
        %884 = vmatpush1.bf16.msra.mxu0 0
        %885 = vmatprep.subr.bf16.mxu0 0
        %886 = vmatpush1.bf16.msra.mxu0 0
        %887 = vmatprep.subr.bf16.mxu0 0
        %888 = vmatpush1.bf16.msra.mxu0 0
        %889 = vmatprep.subr.bf16.mxu0 0
        %890 = vmatpush1.bf16.msra.mxu0 0
        %891 = vmatprep.subr.bf16.mxu0 0
        %892 = vmatpush1.bf16.msra.mxu0 0
        %893 = vmatprep.subr.bf16.mxu0 0
        %894 = vmatpush1.bf16.msra.mxu0 0
        %895 = vmatprep.subr.bf16.mxu0 0
        %896 = vmatpush1.bf16.msra.mxu0 0
        %897 = vmatprep.subr.bf16.mxu0 0
        %898 = vmatpush1.bf16.msra.mxu0 0
        %899 = vmatprep.subr.bf16.mxu0 0
        %900 = vmatpush1.bf16.msra.mxu0 0
        %901 = vmatprep.subr.bf16.mxu0 0
        %902 = vmatpush1.bf16.msra.mxu0 0
        %903 = vmatprep.mubr.bf16.mxu0 0
        %904 = vmatmul.mubr.bf16.gmra.mrb[0].mxu0 %v795
        %v905 = vpop.f32.mrb[0].mxu0
        %v906 = vadd.f32 %v841, %v905
        %v907 = vpop.f32.mrb[0].mxu0
        %v908 = vpop.f32.mrb[0].mxu0
        %v909 = vadd.f32 %v844, %v908
        %v910 = vpop.f32.mrb[0].mxu0
        %911 = vmatprep.mubr.bf16.mxu0 0
        %912 = vmatmul.mubr.bf16.gmra.mrb[0].mxu0 %v798
        %v913 = vpop.f32.mrb[0].mxu0
        %v914 = vadd.f32 %v849, %v913
        %v915 = vpop.f32.mrb[0].mxu0
        %v916 = vpop.f32.mrb[0].mxu0
        %v917 = vadd.f32 %v852, %v916
        %v918 = vpop.f32.mrb[0].mxu0
        %919 = vmatprep.mubr.bf16.mxu0 0
        %920 = vmatmul.mubr.bf16.gmra.mrb[0].mxu0 %v801
        %v921 = vpop.f32.mrb[0].mxu0
        %v922 = vadd.f32 %v857, %v921
        %v923 = vpop.f32.mrb[0].mxu0
        %v924 = vpop.f32.mrb[0].mxu0
        %v925 = vadd.f32 %v860, %v924
        %v926 = vpop.f32.mrb[0].mxu0
        %927 = vmatprep.mubr.bf16.mxu0 0
        %928 = vmatmul.mubr.bf16.gmra.mrb[0].mxu0 %v804
        %v929 = vpop.f32.mrb[0].mxu0
        %v930 = vadd.f32 %v865, %v929
        %v931 = vpop.f32.mrb[0].mxu0
        %v932 = vpop.f32.mrb[0].mxu0
        %v933 = vadd.f32 %v868, %v932
        %v934 = vpop.f32.mrb[0].mxu0
        %935 = vdwg.mxu0
        %v936 = vmax.f32 %v906, 0.0
        %v937 = vmax.f32 %v909, 0.0
        %v938 = vmax.f32 %v914, 0.0
        %v939 = vmax.f32 %v917, 0.0
        %v940 = vmax.f32 %v922, 0.0
        %v941 = vmax.f32 %v925, 0.0
        %v942 = vmax.f32 %v930, 0.0
        %v943 = vmax.f32 %v933, 0.0
        %944 = vst.msk [vmem:[#allocation2] sm:$0xff] %vm580, 0.0
        %vm945 = vcmask 254976
        %946 = vst.msk [vmem:[#allocation2 + $0x8] sm:$0x3] %vm945, 0.0
        %947 = vst.msk [vmem:[#allocation2 + $0x10] sm:$0xff] %vm580, 0.0
        %948 = vst.msk [vmem:[#allocation2 + $0x18] sm:$0x3] %vm945, 0.0
        %949 = vst.msk [vmem:[#allocation2 + $0x20] sm:$0xff] %vm580, 0.0
        %950 = vst.msk [vmem:[#allocation2 + $0x28] sm:$0x3] %vm945, 0.0
        %951 = vst.msk [vmem:[#allocation2 + $0x30] sm:$0xff] %vm580, 0.0
        %952 = vst.msk [vmem:[#allocation2 + $0x38] sm:$0x3] %vm945, 0.0
        %953 = vst.msk [vmem:[#allocation2 + $0x40] sm:$0xff] %vm580, 0.0
        %954 = vst.msk [vmem:[#allocation2 + $0x48] sm:$0x3] %vm945, 0.0
        %955 = vst.msk [vmem:[#allocation2 + $0x50] sm:$0xff] %vm580, 0.0
        %956 = vst.msk [vmem:[#allocation2 + $0x58] sm:$0x3] %vm945, 0.0
        %957 = vst.msk [vmem:[#allocation2 + $0x60] sm:$0xff] %vm580, 0.0
        %958 = vst.msk [vmem:[#allocation2 + $0x68] sm:$0x3] %vm945, 0.0
        %959 = vst.msk [vmem:[#allocation2 + $0x70] sm:$0xff] %vm580, 0.0
        %960 = vst.msk [vmem:[#allocation2 + $0x78] sm:$0x3] %vm945, 0.0
        %961 = vst.msk [vmem:[#allocation2 + $0x80] sm:$0xff] %vm580, 0.0
        %962 = vst.msk [vmem:[#allocation2 + $0x88] sm:$0x3] %vm945, 0.0
        %963 = vst.msk [vmem:[#allocation2 + $0x90] sm:$0xff] %vm580, 0.0
        %964 = vst.msk [vmem:[#allocation2 + $0x98] sm:$0x3] %vm945, 0.0
        %s965 = scalar_lea.vmem [#allocation2], 16
        %966 = vst.msk [vmem:[%s965 + $0x1] sm:$0xff] %vm580, %v936
        %967 = vst.msk [vmem:[%s965 + $0x11] sm:$0xff] %vm580, %v937
        %968 = vst.msk [vmem:[%s965 + $0x21] sm:$0xff] %vm580, %v938
        %969 = vst.msk [vmem:[%s965 + $0x31] sm:$0xff] %vm580, %v939
        %970 = vst.msk [vmem:[%s965 + $0x41] sm:$0xff] %vm580, %v940
        %971 = vst.msk [vmem:[%s965 + $0x51] sm:$0xff] %vm580, %v941
        %972 = vst.msk [vmem:[%s965 + $0x61] sm:$0xff] %vm580, %v942
        %973 = vst.msk [vmem:[%s965 + $0x71] sm:$0xff] %vm580, %v943
        %v974 = vld [vmem:[#allocation2] sm:$0xff]
        %v975 = vld [vmem:[#allocation2 + $0x8] sm:$0x3]
        %v976 = vld [vmem:[#allocation2 + $0x10] sm:$0xff]
        %v977 = vld [vmem:[#allocation2 + $0x18] sm:$0x3]
        %v978 = vld [vmem:[#allocation2 + $0x20] sm:$0xff]
        %v979 = vld [vmem:[#allocation2 + $0x28] sm:$0x3]
        %v980 = vld [vmem:[#allocation2 + $0x30] sm:$0xff]
        %v981 = vld [vmem:[#allocation2 + $0x38] sm:$0x3]
        %v982 = vld [vmem:[#allocation2 + $0x40] sm:$0xff]
        %v983 = vld [vmem:[#allocation2 + $0x48] sm:$0x3]
        %v984 = vld [vmem:[#allocation2 + $0x50] sm:$0xff]
        %v985 = vld [vmem:[#allocation2 + $0x58] sm:$0x3]
        %v986 = vld [vmem:[#allocation2 + $0x60] sm:$0xff]
        %v987 = vld [vmem:[#allocation2 + $0x68] sm:$0x3]
        %v988 = vld [vmem:[#allocation2 + $0x70] sm:$0xff]
        %v989 = vld [vmem:[#allocation2 + $0x78] sm:$0x3]
        %v990 = vld [vmem:[#allocation2 + $0x80] sm:$0xff]
        %v991 = vld [vmem:[#allocation2 + $0x88] sm:$0x3]
        %v992 = vld [vmem:[#allocation2 + $0x90] sm:$0xff]
        %v993 = vld [vmem:[#allocation2 + $0x98] sm:$0x3]
        %v1010 = vrot.slane %v974, 1
        %v1011 = vrot.slane %v975, 1
        %v1012 = vsel %vm354, %v1010, %v1011
        %v1013 = vrot.slane %v976, 1
        %v1014 = vrot.slane %v977, 1
        %v1015 = vsel %vm354, %v1013, %v1014
        %v1016 = vrot.slane %v978, 1
        %v1017 = vrot.slane %v979, 1
        %v1018 = vsel %vm354, %v1016, %v1017
        %v1019 = vrot.slane %v980, 1
        %v1020 = vrot.slane %v981, 1
        %v1021 = vsel %vm354, %v1019, %v1020
        %v1022 = vrot.slane %v982, 1
        %v1023 = vrot.slane %v983, 1
        %v1024 = vsel %vm354, %v1022, %v1023
        %v1025 = vrot.slane %v984, 1
        %v1026 = vrot.slane %v985, 1
        %v1027 = vsel %vm354, %v1025, %v1026
        %v1028 = vrot.slane %v986, 1
        %v1029 = vrot.slane %v987, 1
        %v1030 = vsel %vm354, %v1028, %v1029
        %v1031 = vrot.slane %v988, 1
        %v1032 = vrot.slane %v989, 1
        %v1033 = vsel %vm354, %v1031, %v1032
        %v1034 = vrot.slane %v974, 2
        %v1035 = vrot.slane %v975, 2
        %v1036 = vsel %vm379, %v1034, %v1035
        %v1037 = vrot.slane %v976, 2
        %v1038 = vrot.slane %v977, 2
        %v1039 = vsel %vm379, %v1037, %v1038
        %v1040 = vrot.slane %v978, 2
        %v1041 = vrot.slane %v979, 2
        %v1042 = vsel %vm379, %v1040, %v1041
        %v1043 = vrot.slane %v980, 2
        %v1044 = vrot.slane %v981, 2
        %v1045 = vsel %vm379, %v1043, %v1044
        %v1046 = vrot.slane %v982, 2
        %v1047 = vrot.slane %v983, 2
        %v1048 = vsel %vm379, %v1046, %v1047
        %v1049 = vrot.slane %v984, 2
        %v1050 = vrot.slane %v985, 2
        %v1051 = vsel %vm379, %v1049, %v1050
        %v1052 = vrot.slane %v986, 2
        %v1053 = vrot.slane %v987, 2
        %v1054 = vsel %vm379, %v1052, %v1053
        %v1055 = vrot.slane %v988, 2
        %v1056 = vrot.slane %v989, 2
        %v1057 = vsel %vm379, %v1055, %v1056
        %v1060 = vrot.slane %v990, 1
        %v1061 = vrot.slane %v991, 1
        %v1062 = vsel %vm354, %v1060, %v1061
        %v1071 = vrot.slane %v990, 2
        %v1072 = vrot.slane %v991, 2
        %v1073 = vsel %vm379, %v1071, %v1072
        %v1076 = vrot.slane %v992, 1
        %v1077 = vrot.slane %v993, 1
        %v1078 = vsel %vm354, %v1076, %v1077
        %v1079 = vrot.slane %v992, 2
        %v1080 = vrot.slane %v993, 2
        %v1081 = vsel %vm379, %v1079, %v1080
        %1090 = vrot.lane.b32.xlu0 %v1012, 32
        %v1091 = vpop.permute.xlu0 %1090
        %1092 = vrot.lane.b32.xlu0 %v1015, 32
        %v1093 = vpop.permute.xlu0 %1092
        %1094 = vrot.lane.b32.xlu0 %v1018, 32
        %v1095 = vpop.permute.xlu0 %1094
        %1096 = vrot.lane.b32.xlu0 %v1021, 32
        %v1097 = vpop.permute.xlu0 %1096
        %1098 = vrot.lane.b32.xlu0 %v1024, 32
        %v1099 = vpop.permute.xlu0 %1098
        %1100 = vrot.lane.b32.xlu0 %v1027, 32
        %v1101 = vpop.permute.xlu0 %1100
        %1102 = vrot.lane.b32.xlu0 %v1030, 32
        %v1103 = vpop.permute.xlu0 %1102
        %1104 = vrot.lane.b32.xlu0 %v1033, 32
        %v1105 = vpop.permute.xlu0 %1104
        %1114 = vrot.lane.b32.xlu0 %v1036, 64
        %v1115 = vpop.permute.xlu0 %1114
        %1116 = vrot.lane.b32.xlu0 %v1039, 64
        %v1117 = vpop.permute.xlu0 %1116
        %1118 = vrot.lane.b32.xlu0 %v1042, 64
        %v1119 = vpop.permute.xlu0 %1118
        %1120 = vrot.lane.b32.xlu0 %v1045, 64
        %v1121 = vpop.permute.xlu0 %1120
        %1122 = vrot.lane.b32.xlu0 %v1048, 64
        %v1123 = vpop.permute.xlu0 %1122
        %1124 = vrot.lane.b32.xlu0 %v1051, 64
        %v1125 = vpop.permute.xlu0 %1124
        %1126 = vrot.lane.b32.xlu0 %v1054, 64
        %v1127 = vpop.permute.xlu0 %1126
        %1128 = vrot.lane.b32.xlu0 %v1057, 64
        %v1129 = vpop.permute.xlu0 %1128
        %1138 = vrot.lane.b32.xlu0 %v976, 96
        %v1139 = vpop.permute.xlu0 %1138
        %1140 = vrot.lane.b32.xlu0 %v978, 96
        %v1141 = vpop.permute.xlu0 %1140
        %1142 = vrot.lane.b32.xlu0 %v980, 96
        %v1143 = vpop.permute.xlu0 %1142
        %1144 = vrot.lane.b32.xlu0 %v982, 96
        %v1145 = vpop.permute.xlu0 %1144
        %1146 = vrot.lane.b32.xlu0 %v984, 96
        %v1147 = vpop.permute.xlu0 %1146
        %1148 = vrot.lane.b32.xlu0 %v986, 96
        %v1149 = vpop.permute.xlu0 %1148
        %1150 = vrot.lane.b32.xlu0 %v988, 96
        %v1151 = vpop.permute.xlu0 %1150
        %1152 = vrot.lane.b32.xlu0 %v990, 96
        %v1153 = vpop.permute.xlu0 %1152
        %1162 = vrot.lane.b32.xlu0 %v1039, 32
        %v1163 = vpop.permute.xlu0 %1162
        %1164 = vrot.lane.b32.xlu0 %v1042, 32
        %v1165 = vpop.permute.xlu0 %1164
        %1166 = vrot.lane.b32.xlu0 %v1045, 32
        %v1167 = vpop.permute.xlu0 %1166
        %1168 = vrot.lane.b32.xlu0 %v1048, 32
        %v1169 = vpop.permute.xlu0 %1168
        %1170 = vrot.lane.b32.xlu0 %v1051, 32
        %v1171 = vpop.permute.xlu0 %1170
        %1172 = vrot.lane.b32.xlu0 %v1054, 32
        %v1173 = vpop.permute.xlu0 %1172
        %1174 = vrot.lane.b32.xlu0 %v1057, 32
        %v1175 = vpop.permute.xlu0 %1174
        %1176 = vrot.lane.b32.xlu0 %v1073, 32
        %v1177 = vpop.permute.xlu0 %1176
        %1186 = vrot.lane.b32.xlu0 %v978, 64
        %v1187 = vpop.permute.xlu0 %1186
        %1188 = vrot.lane.b32.xlu0 %v980, 64
        %v1189 = vpop.permute.xlu0 %1188
        %1190 = vrot.lane.b32.xlu0 %v982, 64
        %v1191 = vpop.permute.xlu0 %1190
        %1192 = vrot.lane.b32.xlu0 %v984, 64
        %v1193 = vpop.permute.xlu0 %1192
        %1194 = vrot.lane.b32.xlu0 %v986, 64
        %v1195 = vpop.permute.xlu0 %1194
        %1196 = vrot.lane.b32.xlu0 %v988, 64
        %v1197 = vpop.permute.xlu0 %1196
        %1198 = vrot.lane.b32.xlu0 %v990, 64
        %v1199 = vpop.permute.xlu0 %1198
        %1200 = vrot.lane.b32.xlu0 %v992, 64
        %v1201 = vpop.permute.xlu0 %1200
        %1210 = vrot.lane.b32.xlu0 %v1018, 96
        %v1211 = vpop.permute.xlu0 %1210
        %1212 = vrot.lane.b32.xlu0 %v1021, 96
        %v1213 = vpop.permute.xlu0 %1212
        %1214 = vrot.lane.b32.xlu0 %v1024, 96
        %v1215 = vpop.permute.xlu0 %1214
        %1216 = vrot.lane.b32.xlu0 %v1027, 96
        %v1217 = vpop.permute.xlu0 %1216
        %1218 = vrot.lane.b32.xlu0 %v1030, 96
        %v1219 = vpop.permute.xlu0 %1218
        %1220 = vrot.lane.b32.xlu0 %v1033, 96
        %v1221 = vpop.permute.xlu0 %1220
        %1222 = vrot.lane.b32.xlu0 %v1062, 96
        %v1223 = vpop.permute.xlu0 %1222
        %1224 = vrot.lane.b32.xlu0 %v1078, 96
        %v1225 = vpop.permute.xlu0 %1224
        %v1234 = vsel %vm580, %v974, %v1091
        %v1235 = vsel %vm580, %v976, %v1093
        %v1236 = vsel %vm580, %v978, %v1095
        %v1237 = vsel %vm580, %v980, %v1097
        %v1238 = vsel %vm580, %v982, %v1099
        %v1239 = vsel %vm580, %v984, %v1101
        %v1240 = vsel %vm580, %v986, %v1103
        %v1241 = vsel %vm580, %v988, %v1105
        %v1242 = vsel %vm589, %v1234, %v1115
        %v1243 = vsel %vm589, %v1235, %v1117
        %v1244 = vsel %vm589, %v1236, %v1119
        %v1245 = vsel %vm589, %v1237, %v1121
        %v1246 = vsel %vm589, %v1238, %v1123
        %v1247 = vsel %vm589, %v1239, %v1125
        %v1248 = vsel %vm589, %v1240, %v1127
        %v1249 = vsel %vm589, %v1241, %v1129
        %v1250 = vsel %vm598, %v1242, %v1139
        %v1251 = vsel %vm598, %v1243, %v1141
        %v1252 = vsel %vm598, %v1244, %v1143
        %v1253 = vsel %vm598, %v1245, %v1145
        %v1254 = vsel %vm598, %v1246, %v1147
        %v1255 = vsel %vm598, %v1247, %v1149
        %v1256 = vsel %vm598, %v1248, %v1151
        %v1257 = vsel %vm598, %v1249, %v1153
        %v1258 = vsel %vm580, %v1015, %v1163
        %v1259 = vsel %vm580, %v1018, %v1165
        %v1260 = vsel %vm580, %v1021, %v1167
        %v1261 = vsel %vm580, %v1024, %v1169
        %v1262 = vsel %vm580, %v1027, %v1171
        %v1263 = vsel %vm580, %v1030, %v1173
        %v1264 = vsel %vm580, %v1033, %v1175
        %v1265 = vsel %vm580, %v1062, %v1177
        %v1266 = vsel %vm589, %v1258, %v1187
        %v1267 = vsel %vm589, %v1259, %v1189
        %v1268 = vsel %vm589, %v1260, %v1191
        %v1269 = vsel %vm589, %v1261, %v1193
        %v1270 = vsel %vm589, %v1262, %v1195
        %v1271 = vsel %vm589, %v1263, %v1197
        %v1272 = vsel %vm589, %v1264, %v1199
        %v1273 = vsel %vm589, %v1265, %v1201
        %v1274 = vsel %vm598, %v1266, %v1211
        %v1275 = vsel %vm598, %v1267, %v1213
        %v1276 = vsel %vm598, %v1268, %v1215
        %v1277 = vsel %vm598, %v1269, %v1217
        %v1278 = vsel %vm598, %v1270, %v1219
        %v1279 = vsel %vm598, %v1271, %v1221
        %v1280 = vsel %vm598, %v1272, %v1223
        %v1281 = vsel %vm598, %v1273, %v1225
        %v1282 = vpack.c.bf16 %v1251, %v1250
        %v1283 = vpack.c.bf16 %v1275, %v1274
        %v1284 = vpack.c.bf16 %v1045, %v1042
        %v1285 = vpack.c.bf16 %v1253, %v1252
        %v1286 = vpack.c.bf16 %v1277, %v1276
        %v1287 = vpack.c.bf16 %v1051, %v1048
        %v1288 = vpack.c.bf16 %v1255, %v1254
        %v1289 = vpack.c.bf16 %v1279, %v1278
        %v1290 = vpack.c.bf16 %v1057, %v1054
        %v1291 = vpack.c.bf16 %v1257, %v1256
        %v1292 = vpack.c.bf16 %v1281, %v1280
        %v1293 = vpack.c.bf16 %v1081, %v1073
        %v1294 = vld [vmem:[#allocation9] sm:$0xf]
        %v1295 = vld [vmem:[#allocation9 + $0x4] sm:$0xf]
        %v1296 = vld [vmem:[#allocation9 + $0x8] sm:$0xf]
        %v1297 = vld [vmem:[#allocation9 + $0xc] sm:$0xf]
        %v1298 = vld [vmem:[#allocation9 + $0x10] sm:$0xf]
        %v1299 = vld [vmem:[#allocation9 + $0x14] sm:$0xf]
        %v1300 = vld [vmem:[#allocation9 + $0x18] sm:$0xf]
        %v1301 = vld [vmem:[#allocation9 + $0x1c] sm:$0xf]
        %v1302 = vld [vmem:[#allocation9 + $0x20] sm:$0xf]
        %v1303 = vld [vmem:[#allocation9 + $0x24] sm:$0xf]
        %v1304 = vld [vmem:[#allocation9 + $0x28] sm:$0xf]
        %v1305 = vld [vmem:[#allocation9 + $0x2c] sm:$0xf]
        %v1306 = vld [vmem:[#allocation9 + $0x30] sm:$0xf]
        %v1307 = vld [vmem:[#allocation9 + $0x34] sm:$0xf]
        %v1308 = vld [vmem:[#allocation9 + $0x38] sm:$0xf]
        %v1309 = vld [vmem:[#allocation9 + $0x3c] sm:$0xf]
        %v1310 = vld [vmem:[#allocation9 + $0x40] sm:$0xf]
        %v1311 = vld [vmem:[#allocation9 + $0x44] sm:$0xf]
        %v1312 = vld [vmem:[#allocation9 + $0x48] sm:$0xf]
        %v1313 = vld [vmem:[#allocation9 + $0x4c] sm:$0xf]
        %v1314 = vld [vmem:[#allocation9 + $0x50] sm:$0xf]
        %v1315 = vld [vmem:[#allocation9 + $0x54] sm:$0xf]
        %v1316 = vld [vmem:[#allocation9 + $0x58] sm:$0xf]
        %v1317 = vld [vmem:[#allocation9 + $0x5c] sm:$0xf]
        %v1318 = vld [vmem:[#allocation9 + $0x60] sm:$0xf]
        %v1319 = vld [vmem:[#allocation9 + $0x64] sm:$0xf]
        %v1320 = vld [vmem:[#allocation9 + $0x68] sm:$0xf]
        %v1321 = vld [vmem:[#allocation9 + $0x6c] sm:$0xf]
        %v1322 = vld [vmem:[#allocation9 + $0x70] sm:$0xf]
        %v1323 = vld [vmem:[#allocation9 + $0x74] sm:$0xf]
        %v1324 = vld [vmem:[#allocation9 + $0x78] sm:$0xf]
        %v1325 = vld [vmem:[#allocation9 + $0x7c] sm:$0xf]
        %v1326 = vld [vmem:[#allocation9 + $0x80] sm:$0xf]
        %v1327 = vld [vmem:[#allocation9 + $0x84] sm:$0xf]
        %v1328 = vld [vmem:[#allocation9 + $0x88] sm:$0xf]
        %v1329 = vld [vmem:[#allocation9 + $0x8c] sm:$0xf]
        %v1330 = vld [vmem:[#allocation11] sm:$0x1]
        %v1332 = vlaneseq
        %v1333 = vshrl.u32 %v1332, 7
        %v1334 = vsub.s32 0, %v1333
        %v1335 = vrot.slane %v1330, %v1334
        %v1373 = vunpack.c.l.b16 %v1294
        %v1374 = vunpack.c.l.b16 %v1295
        %v1375 = vunpack.c.l.b16 %v1296
        %v1376 = vunpack.c.l.b16 %v1297
        %v1377 = vunpack.c.l.b16 %v1298
        %v1378 = vunpack.c.l.b16 %v1299
        %v1379 = vunpack.c.l.b16 %v1300
        %v1380 = vunpack.c.l.b16 %v1301
        %v1381 = vunpack.c.l.b16 %v1302
        %v1382 = vunpack.c.l.b16 %v1303
        %v1383 = vunpack.c.l.b16 %v1304
        %v1384 = vunpack.c.l.b16 %v1305
        %v1385 = vunpack.c.l.b16 %v1306
        %v1386 = vunpack.c.l.b16 %v1307
        %v1387 = vunpack.c.l.b16 %v1308
        %v1388 = vunpack.c.l.b16 %v1309
        %v1389 = vunpack.c.l.b16 %v1310
        %v1390 = vunpack.c.l.b16 %v1311
        %v1391 = vunpack.c.l.b16 %v1312
        %v1392 = vunpack.c.l.b16 %v1313
        %v1393 = vunpack.c.l.b16 %v1314
        %v1394 = vunpack.c.l.b16 %v1315
        %v1395 = vunpack.c.l.b16 %v1316
        %v1396 = vunpack.c.l.b16 %v1317
        %v1397 = vunpack.c.l.b16 %v1318
        %v1398 = vunpack.c.l.b16 %v1319
        %v1399 = vunpack.c.l.b16 %v1320
        %v1400 = vunpack.c.l.b16 %v1321
        %v1401 = vunpack.c.l.b16 %v1322
        %v1402 = vunpack.c.l.b16 %v1323
        %v1403 = vunpack.c.l.b16 %v1324
        %v1404 = vunpack.c.l.b16 %v1325
        %v1405 = vunpack.c.l.b16 %v1326
        %v1406 = vunpack.c.l.b16 %v1327
        %v1407 = vunpack.c.l.b16 %v1328
        %v1408 = vunpack.c.l.b16 %v1329
        %v1409 = vpack.c.b16 %v1374, %v1373
        %v1410 = vpack.c.b16 %v1376, %v1375
        %v1411 = vpack.c.b16 %v1378, %v1377
        %v1412 = vpack.c.b16 %v1380, %v1379
        %v1413 = vpack.c.b16 %v1382, %v1381
        %v1414 = vpack.c.b16 %v1384, %v1383
        %v1415 = vpack.c.b16 %v1386, %v1385
        %v1416 = vpack.c.b16 %v1388, %v1387
        %v1417 = vpack.c.b16 %v1390, %v1389
        %v1418 = vpack.c.b16 %v1392, %v1391
        %v1419 = vpack.c.b16 %v1394, %v1393
        %v1420 = vpack.c.b16 %v1396, %v1395
        %v1421 = vpack.c.b16 %v1398, %v1397
        %v1422 = vpack.c.b16 %v1400, %v1399
        %v1423 = vpack.c.b16 %v1402, %v1401
        %v1424 = vpack.c.b16 %v1404, %v1403
        %v1425 = vpack.c.b16 %v1406, %v1405
        %v1426 = vpack.c.b16 %v1408, %v1407
        %v1446 = vsel %vm580, %v1284, 0
        %v1449 = vsel %vm580, %v1287, 0
        %v1452 = vsel %vm580, %v1290, 0
        %v1455 = vsel %vm580, %v1293, 0
        %1457 = vmatprep.subr.bf16.mxu0 0
        %1458 = vmatpush1.bf16.msra.mxu0 %v1409
        %1459 = vmatprep.subr.bf16.mxu0 0
        %1460 = vmatpush1.bf16.msra.mxu0 %v1410
        %1461 = vmatprep.subr.bf16.mxu0 0
        %1462 = vmatpush1.bf16.msra.mxu0 %v1411
        %1463 = vmatprep.subr.bf16.mxu0 0
        %1464 = vmatpush1.bf16.msra.mxu0 %v1412
        %1465 = vmatprep.subr.bf16.mxu0 0
        %1466 = vmatpush1.bf16.msra.mxu0 %v1413
        %1467 = vmatprep.subr.bf16.mxu0 0
        %1468 = vmatpush1.bf16.msra.mxu0 %v1414
        %1469 = vmatprep.subr.bf16.mxu0 0
        %1470 = vmatpush1.bf16.msra.mxu0 %v1415
        %1471 = vmatprep.subr.bf16.mxu0 0
        %1472 = vmatpush1.bf16.msra.mxu0 %v1416
        %1473 = vmatprep.subr.bf16.mxu0 0
        %1474 = vmatpush1.bf16.msra.mxu0 %v1417
        %1475 = vmatprep.subr.bf16.mxu0 0
        %1476 = vmatpush1.bf16.msra.mxu0 %v1418
        %1477 = vmatprep.subr.bf16.mxu0 0
        %1478 = vmatpush1.bf16.msra.mxu0 %v1419
        %1479 = vmatprep.subr.bf16.mxu0 0
        %1480 = vmatpush1.bf16.msra.mxu0 %v1420
        %1481 = vmatprep.subr.bf16.mxu0 0
        %1482 = vmatpush1.bf16.msra.mxu0 %v1421
        %1483 = vmatprep.subr.bf16.mxu0 0
        %1484 = vmatpush1.bf16.msra.mxu0 %v1422
        %1485 = vmatprep.subr.bf16.mxu0 0
        %1486 = vmatpush1.bf16.msra.mxu0 %v1423
        %1487 = vmatprep.subr.bf16.mxu0 0
        %1488 = vmatpush1.bf16.msra.mxu0 %v1424
        %1489 = vmatprep.mubr.bf16.mxu0 %v1283
        %1490 = vmatmul.mubr.bf16.gmra.mrb[0].mxu0 %v1282
        %v1491 = vpop.f32.mrb[0].mxu0
        %v1492 = vadd.f32 %v1335, %v1491
        %v1493 = vpop.f32.mrb[0].mxu0
        %v1494 = vpop.f32.mrb[0].mxu0
        %v1495 = vadd.f32 %v1335, %v1494
        %v1496 = vpop.f32.mrb[0].mxu0
        %1497 = vmatprep.mubr.bf16.mxu0 %v1286
        %1498 = vmatmul.mubr.bf16.gmra.mrb[0].mxu0 %v1285
        %v1499 = vpop.f32.mrb[0].mxu0
        %v1500 = vadd.f32 %v1335, %v1499
        %v1501 = vpop.f32.mrb[0].mxu0
        %v1502 = vpop.f32.mrb[0].mxu0
        %v1503 = vadd.f32 %v1335, %v1502
        %v1504 = vpop.f32.mrb[0].mxu0
        %1505 = vmatprep.mubr.bf16.mxu0 %v1289
        %1506 = vmatmul.mubr.bf16.gmra.mrb[0].mxu0 %v1288
        %v1507 = vpop.f32.mrb[0].mxu0
        %v1508 = vadd.f32 %v1335, %v1507
        %v1509 = vpop.f32.mrb[0].mxu0
        %v1510 = vpop.f32.mrb[0].mxu0
        %v1511 = vadd.f32 %v1335, %v1510
        %v1512 = vpop.f32.mrb[0].mxu0
        %1513 = vmatprep.mubr.bf16.mxu0 %v1292
        %1514 = vmatmul.mubr.bf16.gmra.mrb[0].mxu0 %v1291
        %v1515 = vpop.f32.mrb[0].mxu0
        %v1516 = vadd.f32 %v1335, %v1515
        %v1517 = vpop.f32.mrb[0].mxu0
        %v1518 = vpop.f32.mrb[0].mxu0
        %v1519 = vadd.f32 %v1335, %v1518
        %v1520 = vpop.f32.mrb[0].mxu0
        %1521 = vdwg.mxu0
        %1522 = vmatprep.subr.bf16.mxu0 0
        %1523 = vmatpush1.bf16.msra.mxu0 %v1425
        %1524 = vmatprep.subr.bf16.mxu0 0
        %1525 = vmatpush1.bf16.msra.mxu0 %v1426
        %1526 = vmatprep.subr.bf16.mxu0 0
        %1527 = vmatpush1.bf16.msra.mxu0 0
        %1528 = vmatprep.subr.bf16.mxu0 0
        %1529 = vmatpush1.bf16.msra.mxu0 0
        %1530 = vmatprep.subr.bf16.mxu0 0
        %1531 = vmatpush1.bf16.msra.mxu0 0
        %1532 = vmatprep.subr.bf16.mxu0 0
        %1533 = vmatpush1.bf16.msra.mxu0 0
        %1534 = vmatprep.subr.bf16.mxu0 0
        %1535 = vmatpush1.bf16.msra.mxu0 0
        %1536 = vmatprep.subr.bf16.mxu0 0
        %1537 = vmatpush1.bf16.msra.mxu0 0
        %1538 = vmatprep.subr.bf16.mxu0 0
        %1539 = vmatpush1.bf16.msra.mxu0 0
        %1540 = vmatprep.subr.bf16.mxu0 0
        %1541 = vmatpush1.bf16.msra.mxu0 0
        %1542 = vmatprep.subr.bf16.mxu0 0
        %1543 = vmatpush1.bf16.msra.mxu0 0
        %1544 = vmatprep.subr.bf16.mxu0 0
        %1545 = vmatpush1.bf16.msra.mxu0 0
        %1546 = vmatprep.subr.bf16.mxu0 0
        %1547 = vmatpush1.bf16.msra.mxu0 0
        %1548 = vmatprep.subr.bf16.mxu0 0
        %1549 = vmatpush1.bf16.msra.mxu0 0
        %1550 = vmatprep.subr.bf16.mxu0 0
        %1551 = vmatpush1.bf16.msra.mxu0 0
        %1552 = vmatprep.subr.bf16.mxu0 0
        %1553 = vmatpush1.bf16.msra.mxu0 0
        %1554 = vmatprep.mubr.bf16.mxu0 0
        %1555 = vmatmul.mubr.bf16.gmra.mrb[0].mxu0 %v1446
        %v1556 = vpop.f32.mrb[0].mxu0
        %v1557 = vadd.f32 %v1492, %v1556
        %v1558 = vpop.f32.mrb[0].mxu0
        %v1559 = vpop.f32.mrb[0].mxu0
        %v1560 = vadd.f32 %v1495, %v1559
        %v1561 = vpop.f32.mrb[0].mxu0
        %1562 = vmatprep.mubr.bf16.mxu0 0
        %1563 = vmatmul.mubr.bf16.gmra.mrb[0].mxu0 %v1449
        %v1564 = vpop.f32.mrb[0].mxu0
        %v1565 = vadd.f32 %v1500, %v1564
        %v1566 = vpop.f32.mrb[0].mxu0
        %v1567 = vpop.f32.mrb[0].mxu0
        %v1568 = vadd.f32 %v1503, %v1567
        %v1569 = vpop.f32.mrb[0].mxu0
        %1570 = vmatprep.mubr.bf16.mxu0 0
        %1571 = vmatmul.mubr.bf16.gmra.mrb[0].mxu0 %v1452
        %v1572 = vpop.f32.mrb[0].mxu0
        %v1573 = vadd.f32 %v1508, %v1572
        %v1574 = vpop.f32.mrb[0].mxu0
        %v1575 = vpop.f32.mrb[0].mxu0
        %v1576 = vadd.f32 %v1511, %v1575
        %v1577 = vpop.f32.mrb[0].mxu0
        %1578 = vmatprep.mubr.bf16.mxu0 0
        %1579 = vmatmul.mubr.bf16.gmra.mrb[0].mxu0 %v1455
        %v1580 = vpop.f32.mrb[0].mxu0
        %v1581 = vadd.f32 %v1516, %v1580
        %v1582 = vpop.f32.mrb[0].mxu0
        %v1583 = vpop.f32.mrb[0].mxu0
        %v1584 = vadd.f32 %v1519, %v1583
        %v1585 = vpop.f32.mrb[0].mxu0
        %1586 = vdwg.mxu0
        %v1587 = vadd.f32 %v360, %v1557
        %v1588 = vadd.f32 %v363, %v1560
        %v1589 = vadd.f32 %v366, %v1565
        %v1590 = vadd.f32 %v369, %v1568
        %v1591 = vadd.f32 %v372, %v1573
        %v1592 = vadd.f32 %v375, %v1576
        %v1593 = vadd.f32 %v378, %v1581
        %v1594 = vadd.f32 %v408, %v1584
        %v1595 = vpack.c.bf16 %v1588, %v1587
        %v1596 = vpack.c.bf16 %v1590, %v1589
        %v1597 = vpack.c.bf16 %v1592, %v1591
        %v1598 = vpack.c.bf16 %v1594, %v1593
        %v1603 = vunpack.c.l.b16 %v1595
        %v1604 = vunpack.c.h.b16 %v1595
        %v1605 = vunpack.c.l.b16 %v1596
        %v1606 = vunpack.c.h.b16 %v1596
        %v1607 = vunpack.c.l.b16 %v1597
        %v1608 = vunpack.c.h.b16 %v1597
        %v1609 = vunpack.c.l.b16 %v1598
        %v1610 = vunpack.c.h.b16 %v1598
        %v1611 = vpack.c.b16 %v1603, %v1603
        %v1612 = vpack.c.b16 %v1604, %v1604
        %v1613 = vpack.c.b16 %v1605, %v1605
        %v1614 = vpack.c.b16 %v1606, %v1606
        %v1615 = vpack.c.b16 %v1607, %v1607
        %v1616 = vpack.c.b16 %v1608, %v1608
        %v1617 = vpack.c.b16 %v1609, %v1609
        %v1618 = vpack.c.b16 %v1610, %v1610
        %vm1627 = vcmask 257024
        %1628 = vst.msk [vmem:[%s296] sm:$0xf] %vm1627, %v1611
        %1629 = vst.msk [vmem:[%s296 + $0x4] sm:$0xf] %vm1627, %v1612
        %1630 = vst.msk [vmem:[%s296 + $0x8] sm:$0xf] %vm1627, %v1613
        %1631 = vst.msk [vmem:[%s296 + $0xc] sm:$0xf] %vm1627, %v1614
        %1632 = vst.msk [vmem:[%s296 + $0x10] sm:$0xf] %vm1627, %v1615
        %1633 = vst.msk [vmem:[%s296 + $0x14] sm:$0xf] %vm1627, %v1616
        %1634 = vst.msk [vmem:[%s296 + $0x18] sm:$0xf] %vm1627, %v1617
        %1635 = vst.msk [vmem:[%s296 + $0x1c] sm:$0xf] %vm1627, %v1618
        %s1636 = sand.u32 %s142, 1
        %s1637 = scalar_lea.sflag [#allocation5], %s1636
        %s1638 = sand.u32 %s142, 1
        %s1639 = smul.addr %s1638, 32
        %s1640 = scalar_lea.vmem [#allocation12], %s1639
        // Predicated region
        $region61: #{net_forward.14} parent=39 // pred_check
          %p1641 = pneg %p152
        $region62: #{net_forward.14} parent=39 // pred_check_branch
          %1643 = sbr.rel (%p1641) target = $region64
        $region63: #{net_forward.14} parent=39 // pred_region
          %s1645 = ssub.s32 512, 512
          %1646 = vsyncadd %s1637, %s1645
          %s1647 = smul.addr %s24, 8
          %s1648 = smul.addr %s1647, 64
          %s1649 = scalar_lea.hbm %s5, %s1648
          %s1650 = sshll.u32 %s1640, 4
          %s1651 = int_to_ptr.vmem [resolvable:$true] %s1650
          %1656 = dma.vmem_to_hbm [thread:$0]  %s1651, 512, %s1649, %s1637, 64, 64, 4
        $region64: #{net_forward.14} parent=39 // pred_fallthru
          _
      $region40: #{net_forward.14} parent=5 // pred_fallthru
        _
      %p1657 = scmp.le.s32.totalorder 2, %s19
      // Predicated region
      $region65: #{net_forward.14} parent=5 // pred_check
        %p1658 = pneg %p1657
      $region66: #{net_forward.14} parent=5 // pred_check_branch
        %1660 = sbr.rel (%p1658) target = $region68
      $region67: #{net_forward.14} parent=5 // pred_region
        %s1661 = ssub.s32 %s19, 2
        // Predicated region
        $region69: #{net_forward.14} parent=67 // pred_check
          %p1662 = pneg %p158
        $region70: #{net_forward.14} parent=67 // pred_check_branch
          %1664 = sbr.rel (%p1662) target = $region72
        $region71: #{net_forward.14} parent=67 // pred_region
          %s1665 = sand.u32 %s143, 1
          %s1666 = scalar_lea.sflag [#allocation5], %s1665
          %s1667 = sand.u32 %s143, 1
          %s1668 = smul.addr %s1667, 32
          %s1669 = scalar_lea.vmem [#allocation12], %s1668
          %1670 = dma.done %s1666, 512
        $region72: #{net_forward.14} parent=67 // pred_fallthru
          _
      $region68: #{net_forward.14} parent=5 // pred_fallthru
        _
    $region6: #{net_forward.14} parent=1 // loop_footer
      %s23 = sadd.s32 1, %s19
    $region7: #{net_forward.14} parent=1 // loop_footer_branch
      %18 = sbr.rel target = $region3
    $region8: #{net_forward.14} parent=1 // loop_exit
      _
    %1671 = vsyncpa [#allocation4], 1
    %s1672 = scalar_lea.sflag [#allocation4], 1
    %1673 = vsyncpa %s1672, 1
    %1674 = vsyncpa [#allocation7], 1
    %1675 = vsyncpa [#allocation10], 1
    %1676 = vsyncpa [#allocation5], 1
    %s1677 = scalar_lea.sflag [#allocation5], 1
    %1678 = vsyncpa %s1677, 1

// kernel: net_forward.24
$region0: #{net_forward.24}
  #allocation0 [shape = 'u32[]', space=smem, size = 0x4, offset = 0x4, fixed_abs, tag = 'smem constant byte address 0x4 - core index']
  #allocation1 [shape = 'u32[144,128]{1,0:T(1,128)}', space=vmem, size = 0x12000, scoped, tag = 'internal scratch']
  %s0 = inlined_call_operand.hbm [shape: bf16[2,10,10,32], index: 0, kind: input, shape index: {}]
  %s1 = inlined_call_operand.hbm [shape: bf16[288,128], index: 1, kind: input, shape index: {}]
  %s2 = inlined_call_operand.hbm [shape: f32[1,128], index: 2, kind: input, shape index: {}]
  %s3 = inlined_call_operand.hbm [shape: bf16[2,64,128], index: 3, kind: output, shape index: {}]
  %s4 = sld [smem:[#allocation0]]
  $region57: #{net_forward.24} parent=0
    _
  %s6 = ssub.s32 1, %s4
  %s7 = scalar_select 0, %s6, %s4
  $region1: #{net_forward.24} parent=0
    #allocation2 [shape = 'u8[81920]{0}', space=vmem, size = 0x14000, scoped, tag = 'input window, operand 0']
    #allocation3 [shape = 's32[2]{0}', space=sflag, size = 0x8, scoped, tag = 'scoped memory for net_forward.24']
    #allocation4 [shape = 's32[2]{0}', space=sflag, size = 0x8, scoped, tag = 'scoped memory for net_forward.24']
    #allocation5 [shape = 'u8[73728]{0}', space=vmem, size = 0x12000, scoped, tag = 'input window, operand 1, single buffered']
    #allocation6 [shape = 's32[1]{0}', space=sflag, size = 0x4, scoped, tag = 'scoped memory for net_forward.24']
    #allocation7 [shape = 'u8[512]{0}', space=vmem, size = 0x400, scoped, tag = 'input window, operand 2, single buffered']
    #allocation8 [shape = 'u8[32768]{0}', space=vmem, size = 0x8000, scoped, tag = 'output window, operand 0']
    %8 = vsyncpa [#allocation3], 0
    %s9 = scalar_lea.sflag [#allocation3], 1
    %10 = vsyncpa %s9, 0
    %11 = vsyncpa [#allocation6], 0
    %12 = vsyncpa [#allocation4], 0
    %s13 = scalar_lea.sflag [#allocation4], 1
    %14 = vsyncpa %s13, 0
    loop: start=0, step=1, limit=4
    $region2: #{net_forward.24} parent=1 // loop_pre_header
      _
    $region3: #{net_forward.24} parent=1 // loop_header
      %s16 = sphi 0, %s20
      %p17 = scmp.ge.s32.totalorder %s16, 4
      %s23 = sphi 0, %s35
      %s24 = sphi 0, %s31
      %s25 = sphi 0, %s23
      %s26 = sphi 0, %s24
      %s27 = sphi 0, %s25
      %s28 = sphi 0, %s26
      %s38 = sphi 0, %s40
      %s41 = sphi 0, %s38
      %s42 = sphi 0, %s41
      %s58 = sphi 0, %s42
      %s62 = sphi 0, %s62
      %s64 = sphi 0, %s62
      %s65 = sphi 0, %s64
      %s79 = sphi 0, %s65
      %s83 = sphi 0, %s83
      %s85 = sphi 0, %s83
      %s86 = sphi 0, %s85
      %s100 = sphi 0, %s86
      %s108 = sphi 0, %s110
      %s111 = sphi 0, %s108
      %s112 = sphi 0, %s111
      %s128 = sphi 0, %s112
    $region4: #{net_forward.24} parent=1 // loop_header_branch
      %19 = sbr.rel (%p17) target = $region8
    $region5: #{net_forward.24} parent=1 // loop_body
      %s21 = ssub.s32 %s16, 1
      %s22 = ssub.s32 %s16, 2
      %s29 = sadd.s32 1, %s24
      %p30 = scmp.ge.s32.totalorder %s29, 1
      %s31 = scalar_select %p30, 0, %s29
      %s32 = sadd.s32 1, %s23
      %s33 = scalar_select %p30, %s32, %s23
      %p34 = scmp.ge.s32.totalorder %s33, 2
      %s35 = scalar_select %p34, 0, %s33
      %s36 = ssub.s32 %s23, %s35
      %p37 = scmp.eq.s32.totalorder %s36, 0
      %s39 = sadd.s32 %s38, 1
      %s40 = scalar_select %p37, %s38, %s39
      %p43 = pneg %p37
      %p44 = scmp.eq.s32.totalorder %s16, 1
      %p45 = por %p43, %p44
      %p46 = scmp.ne.s32.totalorder %s38, %s41
      %p47 = scmp.eq.s32.totalorder %s16, 0
      %p48 = por %p46, %p47
      %p49 = scmp.ne.s32.totalorder %s38, %s41
      %p50 = scmp.eq.s32.totalorder %s21, 1
      %p51 = por %p49, %p50
      %p52 = scmp.ne.s32.totalorder %s41, %s42
      %p53 = scmp.eq.s32.totalorder %s21, 0
      %p54 = por %p52, %p53
      %p55 = scmp.ne.s32.totalorder %s41, %s42
      %p56 = scmp.eq.s32.totalorder %s22, 1
      %p57 = por %p55, %p56
      %p59 = scmp.ne.s32.totalorder %s42, %s58
      %p60 = scmp.eq.s32.totalorder %s22, 0
      %p61 = por %p59, %p60
      %s63 = sadd.s32 %s62, 1
      %p66 = scmp.eq.s32.totalorder %s16, 1
      %p67 = scmp.ne.s32.totalorder %s62, %s64
      %p68 = scmp.eq.s32.totalorder %s16, 0
      %p69 = por %p67, %p68
      %p70 = scmp.ne.s32.totalorder %s62, %s64
      %p71 = scmp.eq.s32.totalorder %s21, 1
      %p72 = por %p70, %p71
      %p73 = scmp.ne.s32.totalorder %s64, %s65
      %p74 = scmp.eq.s32.totalorder %s21, 0
      %p75 = por %p73, %p74
      %p76 = scmp.ne.s32.totalorder %s64, %s65
      %p77 = scmp.eq.s32.totalorder %s22, 1
      %p78 = por %p76, %p77
      %p80 = scmp.ne.s32.totalorder %s65, %s79
      %p81 = scmp.eq.s32.totalorder %s22, 0
      %p82 = por %p80, %p81
      %s84 = sadd.s32 %s83, 1
      %p87 = scmp.eq.s32.totalorder %s16, 1
      %p88 = scmp.ne.s32.totalorder %s83, %s85
      %p89 = scmp.eq.s32.totalorder %s16, 0
      %p90 = por %p88, %p89
      %p91 = scmp.ne.s32.totalorder %s83, %s85
      %p92 = scmp.eq.s32.totalorder %s21, 1
      %p93 = por %p91, %p92
      %p94 = scmp.ne.s32.totalorder %s85, %s86
      %p95 = scmp.eq.s32.totalorder %s21, 0
      %p96 = por %p94, %p95
      %p97 = scmp.ne.s32.totalorder %s85, %s86
      %p98 = scmp.eq.s32.totalorder %s22, 1
      %p99 = por %p97, %p98
      %p101 = scmp.ne.s32.totalorder %s86, %s100
      %p102 = scmp.eq.s32.totalorder %s22, 0
      %p103 = por %p101, %p102
      %s104 = ssub.s32 %s23, %s35
      %s105 = ssub.s32 %s24, %s31
      %s106 = sor.u32 %s104, %s105
      %p107 = scmp.eq.s32.totalorder %s106, 0
      %s109 = sadd.s32 %s108, 1
      %s110 = scalar_select %p107, %s108, %s109
      %p113 = pneg %p107
      %p114 = scmp.eq.s32.totalorder %s16, 1
      %p115 = por %p113, %p114
      %p116 = scmp.ne.s32.totalorder %s108, %s111
      %p117 = scmp.eq.s32.totalorder %s16, 0
      %p118 = por %p116, %p117
      %p119 = scmp.ne.s32.totalorder %s108, %s111
      %p120 = scmp.eq.s32.totalorder %s21, 1
      %p121 = por %p119, %p120
      %p122 = scmp.ne.s32.totalorder %s111, %s112
      %p123 = scmp.eq.s32.totalorder %s21, 0
      %p124 = por %p122, %p123
      %p125 = scmp.ne.s32.totalorder %s111, %s112
      %p126 = scmp.eq.s32.totalorder %s22, 1
      %p127 = por %p125, %p126
      %p129 = scmp.ne.s32.totalorder %s112, %s128
      %p130 = scmp.eq.s32.totalorder %s22, 0
      %p131 = por %p129, %p130
      %p132 = scmp.le.s32.totalorder 1, %s16
      %p133 = scmp.lt.s32.totalorder %s16, 3
      %p134 = pnand %p132, %p133
      %p135 = pneg %p134
      // Predicated region
      $region9: #{net_forward.24} parent=5 // pred_check
        _
      $region10: #{net_forward.24} parent=5 // pred_check_branch
        %137 = sbr.rel (%p134) target = $region12
      $region11: #{net_forward.24} parent=5 // pred_region
        %s138 = ssub.s32 %s16, 1
        // Predicated region
        $region13: #{net_forward.24} parent=11 // pred_check
          %p139 = pneg %p75
        $region14: #{net_forward.24} parent=11 // pred_check_branch
          %141 = sbr.rel (%p139) target = $region16
        $region15: #{net_forward.24} parent=11 // pred_region
          %s143 = ssub.s32 2304, 2304
          %144 = vsyncadd [#allocation6], %s143
          %s145 = sshll.u32 [#allocation5], 4
          %s146 = int_to_ptr.vmem [resolvable:$true] %s145
          %151 = dma.hbm_to_vmem [thread:$0]  %s1, 2304, %s146, [#allocation6], 64, 64, 4
        $region16: #{net_forward.24} parent=11 // pred_fallthru
          _
        // Predicated region
        $region17: #{net_forward.24} parent=11 // pred_check
          %p152 = pneg %p96
        $region18: #{net_forward.24} parent=11 // pred_check_branch
          %154 = sbr.rel (%p152) target = $region20
        $region19: #{net_forward.24} parent=11 // pred_region
          %s156 = ssub.s32 16, 16
          %157 = vsyncadd [#allocation6], %s156
          %s159 = sshll.u32 [#allocation7], 4
          %s160 = int_to_ptr.vmem [resolvable:$true] %s159
          %162 = dma.hbm_to_vmem [thread:$0]  %s2, 16, %s160, [#allocation6]
        $region20: #{net_forward.24} parent=11 // pred_fallthru
          _
      $region12: #{net_forward.24} parent=5 // pred_fallthru
        _
      %p163 = scmp.lt.s32.totalorder %s16, 2
      // Predicated region
      $region21: #{net_forward.24} parent=5 // pred_check
        %p164 = pneg %p163
      $region22: #{net_forward.24} parent=5 // pred_check_branch
        %166 = sbr.rel (%p164) target = $region24
      $region23: #{net_forward.24} parent=5 // pred_region
        // Predicated region
        $region25: #{net_forward.24} parent=23 // pred_check
          %p167 = pneg %p48
        $region26: #{net_forward.24} parent=23 // pred_check_branch
          %169 = sbr.rel (%p167) target = $region28
        $region27: #{net_forward.24} parent=23 // pred_region
          %s170 = sand.u32 %s38, 1
          %s171 = scalar_lea.sflag [#allocation3], %s170
          %s172 = sand.u32 %s38, 1
          %s173 = smul.addr %s172, 80
          %s174 = scalar_lea.vmem [#allocation2], %s173
          %s176 = ssub.s32 1280, 1280
          %177 = vsyncadd %s171, %s176
          %s178 = smul.addr %s23, 20
          %s179 = smul.addr %s178, 64
          %s180 = scalar_lea.hbm %s0, %s179
          %s181 = sshll.u32 %s174, 4
          %s182 = int_to_ptr.vmem [resolvable:$true] %s181
          %187 = dma.hbm_to_vmem [thread:$0]  %s180, 1280, %s182, %s171, 64, 64, 4
        $region28: #{net_forward.24} parent=23 // pred_fallthru
          _
      $region24: #{net_forward.24} parent=5 // pred_fallthru
        _
      %p188 = scmp.le.s32.totalorder 1, %s16
      %p189 = scmp.lt.s32.totalorder %s16, 3
      %p190 = pnand %p188, %p189
      %p191 = pneg %p190
      // Predicated region
      $region29: #{net_forward.24} parent=5 // pred_check
        _
      $region30: #{net_forward.24} parent=5 // pred_check_branch
        %193 = sbr.rel (%p190) target = $region32
      $region31: #{net_forward.24} parent=5 // pred_region
        %s194 = ssub.s32 %s16, 1
        %s195 = sand.u32 %s41, 1
        %s196 = scalar_lea.sflag [#allocation3], %s195
        %s197 = sand.u32 %s41, 1
        %s198 = smul.addr %s197, 80
        %s199 = scalar_lea.vmem [#allocation2], %s198
        // Predicated region
        $region33: #{net_forward.24} parent=31 // pred_check
          %p200 = pneg %p54
        $region34: #{net_forward.24} parent=31 // pred_check_branch
          %202 = sbr.rel (%p200) target = $region36
        $region35: #{net_forward.24} parent=31 // pred_region
          %203 = dma.done %s196, 1280
        $region36: #{net_forward.24} parent=31 // pred_fallthru
          _
        // Predicated region
        $region37: #{net_forward.24} parent=31 // pred_check
          %p204 = pneg %p75
        $region38: #{net_forward.24} parent=31 // pred_check_branch
          %206 = sbr.rel (%p204) target = $region40
        $region39: #{net_forward.24} parent=31 // pred_region
          %207 = dma.done [#allocation6], 2304
        $region40: #{net_forward.24} parent=31 // pred_fallthru
          _
        // Predicated region
        $region41: #{net_forward.24} parent=31 // pred_check
          %p208 = pneg %p96
        $region42: #{net_forward.24} parent=31 // pred_check_branch
          %210 = sbr.rel (%p208) target = $region44
        $region43: #{net_forward.24} parent=31 // pred_region
          %211 = dma.done [#allocation6], 16
        $region44: #{net_forward.24} parent=31 // pred_fallthru
          _
        %s212 = sand.u32 %s41, 1
        %s213 = scalar_lea.sflag [#allocation3], %s212
        %s214 = sand.u32 %s41, 1
        %s215 = smul.addr %s214, 80
        %s216 = scalar_lea.vmem [#allocation2], %s215
        %p217 = pneg %p54
        %p218 = pneg %p51
        %p219 = pneg %p75
        %p220 = pneg %p72
        %p221 = pneg %p96
        %p222 = pneg %p93
        %p223 = pneg %p124
        %p224 = pneg %p121
        %s225 = sand.u32 %s111, 1
        %s226 = scalar_lea.sflag [#allocation4], %s225
        %s227 = sand.u32 %s111, 1
        %s228 = smul.addr %s227, 32
        %s229 = scalar_lea.vmem [#allocation8], %s228
        %s230 = smul.u32 8, %s26
        %s232 = smul.u32 %s26, 8
        %s233 = smul.u32 %s232, 2
        %s234 = smul.addr %s233, 4
        %s235 = scalar_lea.vmem %s199, %s234 [#allocation2]
        %v236 = vld [vmem:[%s235] sm:$0xf]
        %v237 = vld [vmem:[%s235 + $0x4] sm:$0x1]
        %v238 = vld [vmem:[%s235 + $0x8] sm:$0xf]
        %v239 = vld [vmem:[%s235 + $0xc] sm:$0x1]
        %v240 = vld [vmem:[%s235 + $0x10] sm:$0xf]
        %v241 = vld [vmem:[%s235 + $0x14] sm:$0x1]
        %v242 = vld [vmem:[%s235 + $0x18] sm:$0xf]
        %v243 = vld [vmem:[%s235 + $0x1c] sm:$0x1]
        %v244 = vld [vmem:[%s235 + $0x20] sm:$0xf]
        %v245 = vld [vmem:[%s235 + $0x24] sm:$0x1]
        %v246 = vld [vmem:[%s235 + $0x28] sm:$0xf]
        %v247 = vld [vmem:[%s235 + $0x2c] sm:$0x1]
        %v248 = vld [vmem:[%s235 + $0x30] sm:$0xf]
        %v249 = vld [vmem:[%s235 + $0x34] sm:$0x1]
        %v250 = vld [vmem:[%s235 + $0x38] sm:$0xf]
        %v251 = vld [vmem:[%s235 + $0x3c] sm:$0x1]
        %v252 = vld [vmem:[%s235 + $0x40] sm:$0xf]
        %v253 = vld [vmem:[%s235 + $0x44] sm:$0x1]
        %v254 = vld [vmem:[%s235 + $0x48] sm:$0xf]
        %v255 = vld [vmem:[%s235 + $0x4c] sm:$0x1]
        %v256 = vunpack.c.l.bf16 %v236
        %v257 = vunpack.c.l.bf16 %v237
        %v258 = vunpack.c.l.bf16 %v238
        %v259 = vunpack.c.l.bf16 %v239
        %v260 = vunpack.c.l.bf16 %v240
        %v261 = vunpack.c.l.bf16 %v241
        %v262 = vunpack.c.l.bf16 %v242
        %v263 = vunpack.c.l.bf16 %v243
        %v264 = vunpack.c.l.bf16 %v244
        %v265 = vunpack.c.l.bf16 %v245
        %v266 = vunpack.c.l.bf16 %v246
        %v267 = vunpack.c.l.bf16 %v247
        %v268 = vunpack.c.l.bf16 %v248
        %v269 = vunpack.c.l.bf16 %v249
        %v270 = vunpack.c.l.bf16 %v250
        %v271 = vunpack.c.l.bf16 %v251
        %v272 = vunpack.c.l.bf16 %v252
        %v273 = vunpack.c.l.bf16 %v253
        %v274 = vunpack.c.l.bf16 %v254
        %v275 = vunpack.c.l.bf16 %v255
        %vm292 = vcmask 1046528
        %v293 = vrot.slane %v256, 1
        %v294 = vrot.slane %v257, 1
        %v295 = vsel %vm292, %v293, %v294
        %v296 = vrot.slane %v258, 1
        %v297 = vrot.slane %v259, 1
        %v298 = vsel %vm292, %v296, %v297
        %v299 = vrot.slane %v260, 1
        %v300 = vrot.slane %v261, 1
        %v301 = vsel %vm292, %v299, %v300
        %v302 = vrot.slane %v262, 1
        %v303 = vrot.slane %v263, 1
        %v304 = vsel %vm292, %v302, %v303
        %v305 = vrot.slane %v264, 1
        %v306 = vrot.slane %v265, 1
        %v307 = vsel %vm292, %v305, %v306
        %v308 = vrot.slane %v266, 1
        %v309 = vrot.slane %v267, 1
        %v310 = vsel %vm292, %v308, %v309
        %v311 = vrot.slane %v268, 1
        %v312 = vrot.slane %v269, 1
        %v313 = vsel %vm292, %v311, %v312
        %v314 = vrot.slane %v270, 1
        %v315 = vrot.slane %v271, 1
        %v316 = vsel %vm292, %v314, %v315
        %vm317 = vcmask 1045504
        %v318 = vrot.slane %v256, 2
        %v319 = vrot.slane %v257, 2
        %v320 = vsel %vm317, %v318, %v319
        %v321 = vrot.slane %v258, 2
        %v322 = vrot.slane %v259, 2
        %v323 = vsel %vm317, %v321, %v322
        %v324 = vrot.slane %v260, 2
        %v325 = vrot.slane %v261, 2
        %v326 = vsel %vm317, %v324, %v325
        %v327 = vrot.slane %v262, 2
        %v328 = vrot.slane %v263, 2
        %v329 = vsel %vm317, %v327, %v328
        %v330 = vrot.slane %v264, 2
        %v331 = vrot.slane %v265, 2
        %v332 = vsel %vm317, %v330, %v331
        %v333 = vrot.slane %v266, 2
        %v334 = vrot.slane %v267, 2
        %v335 = vsel %vm317, %v333, %v334
        %v336 = vrot.slane %v268, 2
        %v337 = vrot.slane %v269, 2
        %v338 = vsel %vm317, %v336, %v337
        %v339 = vrot.slane %v270, 2
        %v340 = vrot.slane %v271, 2
        %v341 = vsel %vm317, %v339, %v340
        %v344 = vrot.slane %v272, 1
        %v345 = vrot.slane %v273, 1
        %v346 = vsel %vm292, %v344, %v345
        %v355 = vrot.slane %v272, 2
        %v356 = vrot.slane %v273, 2
        %v357 = vsel %vm317, %v355, %v356
        %v360 = vrot.slane %v274, 1
        %v361 = vrot.slane %v275, 1
        %v362 = vsel %vm292, %v360, %v361
        %v363 = vrot.slane %v274, 2
        %v364 = vrot.slane %v275, 2
        %v365 = vsel %vm317, %v363, %v364
        %374 = vrot.lane.b32.xlu0 %v295, 32
        %v375 = vpop.permute.xlu0 %374
        %376 = vrot.lane.b32.xlu0 %v298, 32
        %v377 = vpop.permute.xlu0 %376
        %378 = vrot.lane.b32.xlu0 %v301, 32
        %v379 = vpop.permute.xlu0 %378
        %380 = vrot.lane.b32.xlu0 %v304, 32
        %v381 = vpop.permute.xlu0 %380
        %382 = vrot.lane.b32.xlu0 %v307, 32
        %v383 = vpop.permute.xlu0 %382
        %384 = vrot.lane.b32.xlu0 %v310, 32
        %v385 = vpop.permute.xlu0 %384
        %386 = vrot.lane.b32.xlu0 %v313, 32
        %v387 = vpop.permute.xlu0 %386
        %388 = vrot.lane.b32.xlu0 %v316, 32
        %v389 = vpop.permute.xlu0 %388
        %398 = vrot.lane.b32.xlu0 %v320, 64
        %v399 = vpop.permute.xlu0 %398
        %400 = vrot.lane.b32.xlu0 %v323, 64
        %v401 = vpop.permute.xlu0 %400
        %402 = vrot.lane.b32.xlu0 %v326, 64
        %v403 = vpop.permute.xlu0 %402
        %404 = vrot.lane.b32.xlu0 %v329, 64
        %v405 = vpop.permute.xlu0 %404
        %406 = vrot.lane.b32.xlu0 %v332, 64
        %v407 = vpop.permute.xlu0 %406
        %408 = vrot.lane.b32.xlu0 %v335, 64
        %v409 = vpop.permute.xlu0 %408
        %410 = vrot.lane.b32.xlu0 %v338, 64
        %v411 = vpop.permute.xlu0 %410
        %412 = vrot.lane.b32.xlu0 %v341, 64
        %v413 = vpop.permute.xlu0 %412
        %422 = vrot.lane.b32.xlu0 %v258, 96
        %v423 = vpop.permute.xlu0 %422
        %424 = vrot.lane.b32.xlu0 %v260, 96
        %v425 = vpop.permute.xlu0 %424
        %426 = vrot.lane.b32.xlu0 %v262, 96
        %v427 = vpop.permute.xlu0 %426
        %428 = vrot.lane.b32.xlu0 %v264, 96
        %v429 = vpop.permute.xlu0 %428
        %430 = vrot.lane.b32.xlu0 %v266, 96
        %v431 = vpop.permute.xlu0 %430
        %432 = vrot.lane.b32.xlu0 %v268, 96
        %v433 = vpop.permute.xlu0 %432
        %434 = vrot.lane.b32.xlu0 %v270, 96
        %v435 = vpop.permute.xlu0 %434
        %436 = vrot.lane.b32.xlu0 %v272, 96
        %v437 = vpop.permute.xlu0 %436
        %446 = vrot.lane.b32.xlu0 %v323, 32
        %v447 = vpop.permute.xlu0 %446
        %448 = vrot.lane.b32.xlu0 %v326, 32
        %v449 = vpop.permute.xlu0 %448
        %450 = vrot.lane.b32.xlu0 %v329, 32
        %v451 = vpop.permute.xlu0 %450
        %452 = vrot.lane.b32.xlu0 %v332, 32
        %v453 = vpop.permute.xlu0 %452
        %454 = vrot.lane.b32.xlu0 %v335, 32
        %v455 = vpop.permute.xlu0 %454
        %456 = vrot.lane.b32.xlu0 %v338, 32
        %v457 = vpop.permute.xlu0 %456
        %458 = vrot.lane.b32.xlu0 %v341, 32
        %v459 = vpop.permute.xlu0 %458
        %460 = vrot.lane.b32.xlu0 %v357, 32
        %v461 = vpop.permute.xlu0 %460
        %470 = vrot.lane.b32.xlu0 %v260, 64
        %v471 = vpop.permute.xlu0 %470
        %472 = vrot.lane.b32.xlu0 %v262, 64
        %v473 = vpop.permute.xlu0 %472
        %474 = vrot.lane.b32.xlu0 %v264, 64
        %v475 = vpop.permute.xlu0 %474
        %476 = vrot.lane.b32.xlu0 %v266, 64
        %v477 = vpop.permute.xlu0 %476
        %478 = vrot.lane.b32.xlu0 %v268, 64
        %v479 = vpop.permute.xlu0 %478
        %480 = vrot.lane.b32.xlu0 %v270, 64
        %v481 = vpop.permute.xlu0 %480
        %482 = vrot.lane.b32.xlu0 %v272, 64
        %v483 = vpop.permute.xlu0 %482
        %484 = vrot.lane.b32.xlu0 %v274, 64
        %v485 = vpop.permute.xlu0 %484
        %494 = vrot.lane.b32.xlu0 %v301, 96
        %v495 = vpop.permute.xlu0 %494
        %496 = vrot.lane.b32.xlu0 %v304, 96
        %v497 = vpop.permute.xlu0 %496
        %498 = vrot.lane.b32.xlu0 %v307, 96
        %v499 = vpop.permute.xlu0 %498
        %500 = vrot.lane.b32.xlu0 %v310, 96
        %v501 = vpop.permute.xlu0 %500
        %502 = vrot.lane.b32.xlu0 %v313, 96
        %v503 = vpop.permute.xlu0 %502
        %504 = vrot.lane.b32.xlu0 %v316, 96
        %v505 = vpop.permute.xlu0 %504
        %506 = vrot.lane.b32.xlu0 %v346, 96
        %v507 = vpop.permute.xlu0 %506
        %508 = vrot.lane.b32.xlu0 %v362, 96
        %v509 = vpop.permute.xlu0 %508
        %vm518 = vcmask 261120
        %v519 = vsel %vm518, %v256, %v375
        %v520 = vsel %vm518, %v258, %v377
        %v521 = vsel %vm518, %v260, %v379
        %v522 = vsel %vm518, %v262, %v381
        %v523 = vsel %vm518, %v264, %v383
        %v524 = vsel %vm518, %v266, %v385
        %v525 = vsel %vm518, %v268, %v387
        %v526 = vsel %vm518, %v270, %v389
        %vm527 = vcmask 523264
        %v528 = vsel %vm527, %v519, %v399
        %v529 = vsel %vm527, %v520, %v401
        %v530 = vsel %vm527, %v521, %v403
        %v531 = vsel %vm527, %v522, %v405
        %v532 = vsel %vm527, %v523, %v407
        %v533 = vsel %vm527, %v524, %v409
        %v534 = vsel %vm527, %v525, %v411
        %v535 = vsel %vm527, %v526, %v413
        %vm536 = vcmask 785408
        %v537 = vsel %vm536, %v528, %v423
        %v538 = vsel %vm536, %v529, %v425
        %v539 = vsel %vm536, %v530, %v427
        %v540 = vsel %vm536, %v531, %v429
        %v541 = vsel %vm536, %v532, %v431
        %v542 = vsel %vm536, %v533, %v433
        %v543 = vsel %vm536, %v534, %v435
        %v544 = vsel %vm536, %v535, %v437
        %v545 = vsel %vm518, %v298, %v447
        %v546 = vsel %vm518, %v301, %v449
        %v547 = vsel %vm518, %v304, %v451
        %v548 = vsel %vm518, %v307, %v453
        %v549 = vsel %vm518, %v310, %v455
        %v550 = vsel %vm518, %v313, %v457
        %v551 = vsel %vm518, %v316, %v459
        %v552 = vsel %vm518, %v346, %v461
        %v553 = vsel %vm527, %v545, %v471
        %v554 = vsel %vm527, %v546, %v473
        %v555 = vsel %vm527, %v547, %v475
        %v556 = vsel %vm527, %v548, %v477
        %v557 = vsel %vm527, %v549, %v479
        %v558 = vsel %vm527, %v550, %v481
        %v559 = vsel %vm527, %v551, %v483
        %v560 = vsel %vm527, %v552, %v485
        %v561 = vsel %vm536, %v553, %v495
        %v562 = vsel %vm536, %v554, %v497
        %v563 = vsel %vm536, %v555, %v499
        %v564 = vsel %vm536, %v556, %v501
        %v565 = vsel %vm536, %v557, %v503
        %v566 = vsel %vm536, %v558, %v505
        %v567 = vsel %vm536, %v559, %v507
        %v568 = vsel %vm536, %v560, %v509
        %v569 = vpack.c.bf16 %v538, %v537
        %v570 = vpack.c.bf16 %v562, %v561
        %v571 = vpack.c.bf16 %v329, %v326
        %v572 = vpack.c.bf16 %v540, %v539
        %v573 = vpack.c.bf16 %v564, %v563
        %v574 = vpack.c.bf16 %v335, %v332
        %v575 = vpack.c.bf16 %v542, %v541
        %v576 = vpack.c.bf16 %v566, %v565
        %v577 = vpack.c.bf16 %v341, %v338
        %v578 = vpack.c.bf16 %v544, %v543
        %v579 = vpack.c.bf16 %v568, %v567
        %v580 = vpack.c.bf16 %v365, %v357
        %v581 = vld [vmem:[#allocation5] sm:$0xf]
        %v582 = vld [vmem:[#allocation5 + $0x4] sm:$0xf]
        %v583 = vld [vmem:[#allocation5 + $0x8] sm:$0xf]
        %v584 = vld [vmem:[#allocation5 + $0xc] sm:$0xf]
        %v585 = vld [vmem:[#allocation5 + $0x10] sm:$0xf]
        %v586 = vld [vmem:[#allocation5 + $0x14] sm:$0xf]
        %v587 = vld [vmem:[#allocation5 + $0x18] sm:$0xf]
        %v588 = vld [vmem:[#allocation5 + $0x1c] sm:$0xf]
        %v589 = vld [vmem:[#allocation5 + $0x20] sm:$0xf]
        %v590 = vld [vmem:[#allocation5 + $0x24] sm:$0xf]
        %v591 = vld [vmem:[#allocation5 + $0x28] sm:$0xf]
        %v592 = vld [vmem:[#allocation5 + $0x2c] sm:$0xf]
        %v593 = vld [vmem:[#allocation5 + $0x30] sm:$0xf]
        %v594 = vld [vmem:[#allocation5 + $0x34] sm:$0xf]
        %v595 = vld [vmem:[#allocation5 + $0x38] sm:$0xf]
        %v596 = vld [vmem:[#allocation5 + $0x3c] sm:$0xf]
        %v597 = vld [vmem:[#allocation5 + $0x40] sm:$0xf]
        %v598 = vld [vmem:[#allocation5 + $0x44] sm:$0xf]
        %v599 = vld [vmem:[#allocation5 + $0x48] sm:$0xf]
        %v600 = vld [vmem:[#allocation5 + $0x4c] sm:$0xf]
        %v601 = vld [vmem:[#allocation5 + $0x50] sm:$0xf]
        %v602 = vld [vmem:[#allocation5 + $0x54] sm:$0xf]
        %v603 = vld [vmem:[#allocation5 + $0x58] sm:$0xf]
        %v604 = vld [vmem:[#allocation5 + $0x5c] sm:$0xf]
        %v605 = vld [vmem:[#allocation5 + $0x60] sm:$0xf]
        %v606 = vld [vmem:[#allocation5 + $0x64] sm:$0xf]
        %v607 = vld [vmem:[#allocation5 + $0x68] sm:$0xf]
        %v608 = vld [vmem:[#allocation5 + $0x6c] sm:$0xf]
        %v609 = vld [vmem:[#allocation5 + $0x70] sm:$0xf]
        %v610 = vld [vmem:[#allocation5 + $0x74] sm:$0xf]
        %v611 = vld [vmem:[#allocation5 + $0x78] sm:$0xf]
        %v612 = vld [vmem:[#allocation5 + $0x7c] sm:$0xf]
        %v613 = vld [vmem:[#allocation5 + $0x80] sm:$0xf]
        %v614 = vld [vmem:[#allocation5 + $0x84] sm:$0xf]
        %v615 = vld [vmem:[#allocation5 + $0x88] sm:$0xf]
        %v616 = vld [vmem:[#allocation5 + $0x8c] sm:$0xf]
        %v617 = vld [vmem:[#allocation7] sm:$0x1]
        %v619 = vlaneseq
        %v620 = vshrl.u32 %v619, 7
        %v621 = vsub.s32 0, %v620
        %v622 = vrot.slane %v617, %v621
        %v660 = vunpack.c.l.b16 %v581
        %v661 = vunpack.c.l.b16 %v582
        %v662 = vunpack.c.l.b16 %v583
        %v663 = vunpack.c.l.b16 %v584
        %v664 = vunpack.c.l.b16 %v585
        %v665 = vunpack.c.l.b16 %v586
        %v666 = vunpack.c.l.b16 %v587
        %v667 = vunpack.c.l.b16 %v588
        %v668 = vunpack.c.l.b16 %v589
        %v669 = vunpack.c.l.b16 %v590
        %v670 = vunpack.c.l.b16 %v591
        %v671 = vunpack.c.l.b16 %v592
        %v672 = vunpack.c.l.b16 %v593
        %v673 = vunpack.c.l.b16 %v594
        %v674 = vunpack.c.l.b16 %v595
        %v675 = vunpack.c.l.b16 %v596
        %v676 = vunpack.c.l.b16 %v597
        %v677 = vunpack.c.l.b16 %v598
        %v678 = vunpack.c.l.b16 %v599
        %v679 = vunpack.c.l.b16 %v600
        %v680 = vunpack.c.l.b16 %v601
        %v681 = vunpack.c.l.b16 %v602
        %v682 = vunpack.c.l.b16 %v603
        %v683 = vunpack.c.l.b16 %v604
        %v684 = vunpack.c.l.b16 %v605
        %v685 = vunpack.c.l.b16 %v606
        %v686 = vunpack.c.l.b16 %v607
        %v687 = vunpack.c.l.b16 %v608
        %v688 = vunpack.c.l.b16 %v609
        %v689 = vunpack.c.l.b16 %v610
        %v690 = vunpack.c.l.b16 %v611
        %v691 = vunpack.c.l.b16 %v612
        %v692 = vunpack.c.l.b16 %v613
        %v693 = vunpack.c.l.b16 %v614
        %v694 = vunpack.c.l.b16 %v615
        %v695 = vunpack.c.l.b16 %v616
        %v696 = vpack.c.b16 %v661, %v660
        %v697 = vpack.c.b16 %v663, %v662
        %v698 = vpack.c.b16 %v665, %v664
        %v699 = vpack.c.b16 %v667, %v666
        %v700 = vpack.c.b16 %v669, %v668
        %v701 = vpack.c.b16 %v671, %v670
        %v702 = vpack.c.b16 %v673, %v672
        %v703 = vpack.c.b16 %v675, %v674
        %v704 = vpack.c.b16 %v677, %v676
        %v705 = vpack.c.b16 %v679, %v678
        %v706 = vpack.c.b16 %v681, %v680
        %v707 = vpack.c.b16 %v683, %v682
        %v708 = vpack.c.b16 %v685, %v684
        %v709 = vpack.c.b16 %v687, %v686
        %v710 = vpack.c.b16 %v689, %v688
        %v711 = vpack.c.b16 %v691, %v690
        %v712 = vpack.c.b16 %v693, %v692
        %v713 = vpack.c.b16 %v695, %v694
        %v733 = vsel %vm518, %v571, 0
        %v736 = vsel %vm518, %v574, 0
        %v739 = vsel %vm518, %v577, 0
        %v742 = vsel %vm518, %v580, 0
        %744 = vmatprep.subr.bf16.mxu0 0
        %745 = vmatpush1.bf16.msra.mxu0 %v696
        %746 = vmatprep.subr.bf16.mxu0 0
        %747 = vmatpush1.bf16.msra.mxu0 %v697
        %748 = vmatprep.subr.bf16.mxu0 0
        %749 = vmatpush1.bf16.msra.mxu0 %v698
        %750 = vmatprep.subr.bf16.mxu0 0
        %751 = vmatpush1.bf16.msra.mxu0 %v699
        %752 = vmatprep.subr.bf16.mxu0 0
        %753 = vmatpush1.bf16.msra.mxu0 %v700
        %754 = vmatprep.subr.bf16.mxu0 0
        %755 = vmatpush1.bf16.msra.mxu0 %v701
        %756 = vmatprep.subr.bf16.mxu0 0
        %757 = vmatpush1.bf16.msra.mxu0 %v702
        %758 = vmatprep.subr.bf16.mxu0 0
        %759 = vmatpush1.bf16.msra.mxu0 %v703
        %760 = vmatprep.subr.bf16.mxu0 0
        %761 = vmatpush1.bf16.msra.mxu0 %v704
        %762 = vmatprep.subr.bf16.mxu0 0
        %763 = vmatpush1.bf16.msra.mxu0 %v705
        %764 = vmatprep.subr.bf16.mxu0 0
        %765 = vmatpush1.bf16.msra.mxu0 %v706
        %766 = vmatprep.subr.bf16.mxu0 0
        %767 = vmatpush1.bf16.msra.mxu0 %v707
        %768 = vmatprep.subr.bf16.mxu0 0
        %769 = vmatpush1.bf16.msra.mxu0 %v708
        %770 = vmatprep.subr.bf16.mxu0 0
        %771 = vmatpush1.bf16.msra.mxu0 %v709
        %772 = vmatprep.subr.bf16.mxu0 0
        %773 = vmatpush1.bf16.msra.mxu0 %v710
        %774 = vmatprep.subr.bf16.mxu0 0
        %775 = vmatpush1.bf16.msra.mxu0 %v711
        %776 = vmatprep.mubr.bf16.mxu0 %v570
        %777 = vmatmul.mubr.bf16.gmra.mrb[0].mxu0 %v569
        %v778 = vpop.f32.mrb[0].mxu0
        %v779 = vadd.f32 %v622, %v778
        %v780 = vpop.f32.mrb[0].mxu0
        %v781 = vpop.f32.mrb[0].mxu0
        %v782 = vadd.f32 %v622, %v781
        %v783 = vpop.f32.mrb[0].mxu0
        %784 = vmatprep.mubr.bf16.mxu0 %v573
        %785 = vmatmul.mubr.bf16.gmra.mrb[0].mxu0 %v572
        %v786 = vpop.f32.mrb[0].mxu0
        %v787 = vadd.f32 %v622, %v786
        %v788 = vpop.f32.mrb[0].mxu0
        %v789 = vpop.f32.mrb[0].mxu0
        %v790 = vadd.f32 %v622, %v789
        %v791 = vpop.f32.mrb[0].mxu0
        %792 = vmatprep.mubr.bf16.mxu0 %v576
        %793 = vmatmul.mubr.bf16.gmra.mrb[0].mxu0 %v575
        %v794 = vpop.f32.mrb[0].mxu0
        %v795 = vadd.f32 %v622, %v794
        %v796 = vpop.f32.mrb[0].mxu0
        %v797 = vpop.f32.mrb[0].mxu0
        %v798 = vadd.f32 %v622, %v797
        %v799 = vpop.f32.mrb[0].mxu0
        %800 = vmatprep.mubr.bf16.mxu0 %v579
        %801 = vmatmul.mubr.bf16.gmra.mrb[0].mxu0 %v578
        %v802 = vpop.f32.mrb[0].mxu0
        %v803 = vadd.f32 %v622, %v802
        %v804 = vpop.f32.mrb[0].mxu0
        %v805 = vpop.f32.mrb[0].mxu0
        %v806 = vadd.f32 %v622, %v805
        %v807 = vpop.f32.mrb[0].mxu0
        %808 = vdwg.mxu0
        %809 = vmatprep.subr.bf16.mxu0 0
        %810 = vmatpush1.bf16.msra.mxu0 %v712
        %811 = vmatprep.subr.bf16.mxu0 0
        %812 = vmatpush1.bf16.msra.mxu0 %v713
        %813 = vmatprep.subr.bf16.mxu0 0
        %814 = vmatpush1.bf16.msra.mxu0 0
        %815 = vmatprep.subr.bf16.mxu0 0
        %816 = vmatpush1.bf16.msra.mxu0 0
        %817 = vmatprep.subr.bf16.mxu0 0
        %818 = vmatpush1.bf16.msra.mxu0 0
        %819 = vmatprep.subr.bf16.mxu0 0
        %820 = vmatpush1.bf16.msra.mxu0 0
        %821 = vmatprep.subr.bf16.mxu0 0
        %822 = vmatpush1.bf16.msra.mxu0 0
        %823 = vmatprep.subr.bf16.mxu0 0
        %824 = vmatpush1.bf16.msra.mxu0 0
        %825 = vmatprep.subr.bf16.mxu0 0
        %826 = vmatpush1.bf16.msra.mxu0 0
        %827 = vmatprep.subr.bf16.mxu0 0
        %828 = vmatpush1.bf16.msra.mxu0 0
        %829 = vmatprep.subr.bf16.mxu0 0
        %830 = vmatpush1.bf16.msra.mxu0 0
        %831 = vmatprep.subr.bf16.mxu0 0
        %832 = vmatpush1.bf16.msra.mxu0 0
        %833 = vmatprep.subr.bf16.mxu0 0
        %834 = vmatpush1.bf16.msra.mxu0 0
        %835 = vmatprep.subr.bf16.mxu0 0
        %836 = vmatpush1.bf16.msra.mxu0 0
        %837 = vmatprep.subr.bf16.mxu0 0
        %838 = vmatpush1.bf16.msra.mxu0 0
        %839 = vmatprep.subr.bf16.mxu0 0
        %840 = vmatpush1.bf16.msra.mxu0 0
        %841 = vmatprep.mubr.bf16.mxu0 0
        %842 = vmatmul.mubr.bf16.gmra.mrb[0].mxu0 %v733
        %v843 = vpop.f32.mrb[0].mxu0
        %v844 = vadd.f32 %v779, %v843
        %v845 = vpop.f32.mrb[0].mxu0
        %v846 = vpop.f32.mrb[0].mxu0
        %v847 = vadd.f32 %v782, %v846
        %v848 = vpop.f32.mrb[0].mxu0
        %849 = vmatprep.mubr.bf16.mxu0 0
        %850 = vmatmul.mubr.bf16.gmra.mrb[0].mxu0 %v736
        %v851 = vpop.f32.mrb[0].mxu0
        %v852 = vadd.f32 %v787, %v851
        %v853 = vpop.f32.mrb[0].mxu0
        %v854 = vpop.f32.mrb[0].mxu0
        %v855 = vadd.f32 %v790, %v854
        %v856 = vpop.f32.mrb[0].mxu0
        %857 = vmatprep.mubr.bf16.mxu0 0
        %858 = vmatmul.mubr.bf16.gmra.mrb[0].mxu0 %v739
        %v859 = vpop.f32.mrb[0].mxu0
        %v860 = vadd.f32 %v795, %v859
        %v861 = vpop.f32.mrb[0].mxu0
        %v862 = vpop.f32.mrb[0].mxu0
        %v863 = vadd.f32 %v798, %v862
        %v864 = vpop.f32.mrb[0].mxu0
        %865 = vmatprep.mubr.bf16.mxu0 0
        %866 = vmatmul.mubr.bf16.gmra.mrb[0].mxu0 %v742
        %v867 = vpop.f32.mrb[0].mxu0
        %v868 = vadd.f32 %v803, %v867
        %v869 = vpop.f32.mrb[0].mxu0
        %v870 = vpop.f32.mrb[0].mxu0
        %v871 = vadd.f32 %v806, %v870
        %v872 = vpop.f32.mrb[0].mxu0
        %873 = vdwg.mxu0
        %v874 = vpack.c.bf16 %v847, %v844
        %v875 = vpack.c.bf16 %v855, %v852
        %v876 = vpack.c.bf16 %v863, %v860
        %v877 = vpack.c.bf16 %v871, %v868
        %v882 = vunpack.c.l.b16 %v874
        %v883 = vunpack.c.h.b16 %v874
        %v884 = vunpack.c.l.b16 %v875
        %v885 = vunpack.c.h.b16 %v875
        %v886 = vunpack.c.l.b16 %v876
        %v887 = vunpack.c.h.b16 %v876
        %v888 = vunpack.c.l.b16 %v877
        %v889 = vunpack.c.h.b16 %v877
        %v890 = vpack.c.b16 %v882, %v882
        %v891 = vpack.c.b16 %v883, %v883
        %v892 = vpack.c.b16 %v884, %v884
        %v893 = vpack.c.b16 %v885, %v885
        %v894 = vpack.c.b16 %v886, %v886
        %v895 = vpack.c.b16 %v887, %v887
        %v896 = vpack.c.b16 %v888, %v888
        %v897 = vpack.c.b16 %v889, %v889
        %906 = vst [vmem:[%s229] sm:$0xf] %v890
        %907 = vst [vmem:[%s229 + $0x4] sm:$0xf] %v891
        %908 = vst [vmem:[%s229 + $0x8] sm:$0xf] %v892
        %909 = vst [vmem:[%s229 + $0xc] sm:$0xf] %v893
        %910 = vst [vmem:[%s229 + $0x10] sm:$0xf] %v894
        %911 = vst [vmem:[%s229 + $0x14] sm:$0xf] %v895
        %912 = vst [vmem:[%s229 + $0x18] sm:$0xf] %v896
        %913 = vst [vmem:[%s229 + $0x1c] sm:$0xf] %v897
        %s914 = sand.u32 %s111, 1
        %s915 = scalar_lea.sflag [#allocation4], %s914
        %s916 = sand.u32 %s111, 1
        %s917 = smul.addr %s916, 32
        %s918 = scalar_lea.vmem [#allocation8], %s917
        // Predicated region
        $region45: #{net_forward.24} parent=31 // pred_check
          %p919 = pneg %p121
        $region46: #{net_forward.24} parent=31 // pred_check_branch
          %921 = sbr.rel (%p919) target = $region48
        $region47: #{net_forward.24} parent=31 // pred_region
          %s922 = smul.u32 8, %s26
          %s924 = ssub.s32 512, 512
          %925 = vsyncadd %s915, %s924
          %s926 = smul.addr %s25, 8
          %s927 = sadd.s32 %s922, %s926
          %s928 = smul.addr %s927, 64
          %s929 = scalar_lea.hbm %s3, %s928
          %s930 = sshll.u32 %s918, 4
          %s931 = int_to_ptr.vmem [resolvable:$true] %s930
          %936 = dma.vmem_to_hbm [thread:$0]  %s931, 512, %s929, %s915, 64, 64, 4
        $region48: #{net_forward.24} parent=31 // pred_fallthru
          _
      $region32: #{net_forward.24} parent=5 // pred_fallthru
        _
      %p937 = scmp.le.s32.totalorder 2, %s16
      // Predicated region
      $region49: #{net_forward.24} parent=5 // pred_check
        %p938 = pneg %p937
      $region50: #{net_forward.24} parent=5 // pred_check_branch
        %940 = sbr.rel (%p938) target = $region52
      $region51: #{net_forward.24} parent=5 // pred_region
        %s941 = ssub.s32 %s16, 2
        // Predicated region
        $region53: #{net_forward.24} parent=51 // pred_check
          %p942 = pneg %p127
        $region54: #{net_forward.24} parent=51 // pred_check_branch
          %944 = sbr.rel (%p942) target = $region56
        $region55: #{net_forward.24} parent=51 // pred_region
          %s945 = sand.u32 %s112, 1
          %s946 = scalar_lea.sflag [#allocation4], %s945
          %s947 = sand.u32 %s112, 1
          %s948 = smul.addr %s947, 32
          %s949 = scalar_lea.vmem [#allocation8], %s948
          %950 = dma.done %s946, 512
        $region56: #{net_forward.24} parent=51 // pred_fallthru
          _
      $region52: #{net_forward.24} parent=5 // pred_fallthru
        _
    $region6: #{net_forward.24} parent=1 // loop_footer
      %s20 = sadd.s32 1, %s16
    $region7: #{net_forward.24} parent=1 // loop_footer_branch
      %15 = sbr.rel target = $region3
    $region8: #{net_forward.24} parent=1 // loop_exit
      _
    %951 = vsyncpa [#allocation3], 1
    %s952 = scalar_lea.sflag [#allocation3], 1
    %953 = vsyncpa %s952, 1
    %954 = vsyncpa [#allocation6], 1
    %955 = vsyncpa [#allocation4], 1
    %s956 = scalar_lea.sflag [#allocation4], 1
    %957 = vsyncpa %s956, 1

// kernel: net_forward.25
$region0: #{net_forward.25}
  #allocation0 [shape = 'u32[]', space=smem, size = 0x4, offset = 0x4, fixed_abs, tag = 'smem constant byte address 0x4 - core index']
  #allocation1 [shape = 'u32[144,128]{1,0:T(1,128)}', space=vmem, size = 0x12000, scoped, tag = 'internal scratch']
  %s0 = inlined_call_operand.hbm [shape: bf16[2,18,18,32], index: 0, kind: input, shape index: {}]
  %s1 = inlined_call_operand.hbm [shape: bf16[288,3], index: 1, kind: input, shape index: {}]
  %s2 = inlined_call_operand.hbm [shape: f32[1,3], index: 2, kind: input, shape index: {}]
  %s3 = inlined_call_operand.hbm [shape: bf16[2,256,3], index: 3, kind: output, shape index: {}]
  %s4 = sld [smem:[#allocation0]]
  $region57: #{net_forward.25} parent=0
    _
  %s6 = ssub.s32 1, %s4
  %s7 = scalar_select 0, %s6, %s4
  $region1: #{net_forward.25} parent=0
    #allocation2 [shape = 'u8[221184]{0}', space=vmem, size = 0x36000, scoped, tag = 'input window, operand 0']
    #allocation3 [shape = 's32[2]{0}', space=sflag, size = 0x8, scoped, tag = 'scoped memory for net_forward.25']
    #allocation4 [shape = 's32[2]{0}', space=sflag, size = 0x8, scoped, tag = 'scoped memory for net_forward.25']
    #allocation5 [shape = 'u8[73728]{0}', space=vmem, size = 0x12000, scoped, tag = 'input window, operand 1, single buffered']
    #allocation6 [shape = 's32[1]{0}', space=sflag, size = 0x4, scoped, tag = 'scoped memory for net_forward.25']
    #allocation7 [shape = 'u8[512]{0}', space=vmem, size = 0x400, scoped, tag = 'input window, operand 2, single buffered']
    #allocation8 [shape = 'u8[131072]{0}', space=vmem, size = 0x20000, scoped, tag = 'output window, operand 0']
    %8 = vsyncpa [#allocation3], 0
    %s9 = scalar_lea.sflag [#allocation3], 1
    %10 = vsyncpa %s9, 0
    %11 = vsyncpa [#allocation6], 0
    %12 = vsyncpa [#allocation4], 0
    %s13 = scalar_lea.sflag [#allocation4], 1
    %14 = vsyncpa %s13, 0
    loop: start=0, step=1, limit=4
    $region2: #{net_forward.25} parent=1 // loop_pre_header
      _
    $region3: #{net_forward.25} parent=1 // loop_header
      %s16 = sphi 0, %s20
      %p17 = scmp.ge.s32.totalorder %s16, 4
      %s23 = sphi 0, %s35
      %s24 = sphi 0, %s31
      %s25 = sphi 0, %s23
      %s26 = sphi 0, %s24
      %s27 = sphi 0, %s25
      %s28 = sphi 0, %s26
      %s38 = sphi 0, %s40
      %s41 = sphi 0, %s38
      %s42 = sphi 0, %s41
      %s58 = sphi 0, %s42
      %s62 = sphi 0, %s62
      %s64 = sphi 0, %s62
      %s65 = sphi 0, %s64
      %s79 = sphi 0, %s65
      %s83 = sphi 0, %s83
      %s85 = sphi 0, %s83
      %s86 = sphi 0, %s85
      %s100 = sphi 0, %s86
      %s108 = sphi 0, %s110
      %s111 = sphi 0, %s108
      %s112 = sphi 0, %s111
      %s128 = sphi 0, %s112
    $region4: #{net_forward.25} parent=1 // loop_header_branch
      %19 = sbr.rel (%p17) target = $region8
    $region5: #{net_forward.25} parent=1 // loop_body
      %s21 = ssub.s32 %s16, 1
      %s22 = ssub.s32 %s16, 2
      %s29 = sadd.s32 1, %s24
      %p30 = scmp.ge.s32.totalorder %s29, 1
      %s31 = scalar_select %p30, 0, %s29
      %s32 = sadd.s32 1, %s23
      %s33 = scalar_select %p30, %s32, %s23
      %p34 = scmp.ge.s32.totalorder %s33, 2
      %s35 = scalar_select %p34, 0, %s33
      %s36 = ssub.s32 %s23, %s35
      %p37 = scmp.eq.s32.totalorder %s36, 0
      %s39 = sadd.s32 %s38, 1
      %s40 = scalar_select %p37, %s38, %s39
      %p43 = pneg %p37
      %p44 = scmp.eq.s32.totalorder %s16, 1
      %p45 = por %p43, %p44
      %p46 = scmp.ne.s32.totalorder %s38, %s41
      %p47 = scmp.eq.s32.totalorder %s16, 0
      %p48 = por %p46, %p47
      %p49 = scmp.ne.s32.totalorder %s38, %s41
      %p50 = scmp.eq.s32.totalorder %s21, 1
      %p51 = por %p49, %p50
      %p52 = scmp.ne.s32.totalorder %s41, %s42
      %p53 = scmp.eq.s32.totalorder %s21, 0
      %p54 = por %p52, %p53
      %p55 = scmp.ne.s32.totalorder %s41, %s42
      %p56 = scmp.eq.s32.totalorder %s22, 1
      %p57 = por %p55, %p56
      %p59 = scmp.ne.s32.totalorder %s42, %s58
      %p60 = scmp.eq.s32.totalorder %s22, 0
      %p61 = por %p59, %p60
      %s63 = sadd.s32 %s62, 1
      %p66 = scmp.eq.s32.totalorder %s16, 1
      %p67 = scmp.ne.s32.totalorder %s62, %s64
      %p68 = scmp.eq.s32.totalorder %s16, 0
      %p69 = por %p67, %p68
      %p70 = scmp.ne.s32.totalorder %s62, %s64
      %p71 = scmp.eq.s32.totalorder %s21, 1
      %p72 = por %p70, %p71
      %p73 = scmp.ne.s32.totalorder %s64, %s65
      %p74 = scmp.eq.s32.totalorder %s21, 0
      %p75 = por %p73, %p74
      %p76 = scmp.ne.s32.totalorder %s64, %s65
      %p77 = scmp.eq.s32.totalorder %s22, 1
      %p78 = por %p76, %p77
      %p80 = scmp.ne.s32.totalorder %s65, %s79
      %p81 = scmp.eq.s32.totalorder %s22, 0
      %p82 = por %p80, %p81
      %s84 = sadd.s32 %s83, 1
      %p87 = scmp.eq.s32.totalorder %s16, 1
      %p88 = scmp.ne.s32.totalorder %s83, %s85
      %p89 = scmp.eq.s32.totalorder %s16, 0
      %p90 = por %p88, %p89
      %p91 = scmp.ne.s32.totalorder %s83, %s85
      %p92 = scmp.eq.s32.totalorder %s21, 1
      %p93 = por %p91, %p92
      %p94 = scmp.ne.s32.totalorder %s85, %s86
      %p95 = scmp.eq.s32.totalorder %s21, 0
      %p96 = por %p94, %p95
      %p97 = scmp.ne.s32.totalorder %s85, %s86
      %p98 = scmp.eq.s32.totalorder %s22, 1
      %p99 = por %p97, %p98
      %p101 = scmp.ne.s32.totalorder %s86, %s100
      %p102 = scmp.eq.s32.totalorder %s22, 0
      %p103 = por %p101, %p102
      %s104 = ssub.s32 %s23, %s35
      %s105 = ssub.s32 %s24, %s31
      %s106 = sor.u32 %s104, %s105
      %p107 = scmp.eq.s32.totalorder %s106, 0
      %s109 = sadd.s32 %s108, 1
      %s110 = scalar_select %p107, %s108, %s109
      %p113 = pneg %p107
      %p114 = scmp.eq.s32.totalorder %s16, 1
      %p115 = por %p113, %p114
      %p116 = scmp.ne.s32.totalorder %s108, %s111
      %p117 = scmp.eq.s32.totalorder %s16, 0
      %p118 = por %p116, %p117
      %p119 = scmp.ne.s32.totalorder %s108, %s111
      %p120 = scmp.eq.s32.totalorder %s21, 1
      %p121 = por %p119, %p120
      %p122 = scmp.ne.s32.totalorder %s111, %s112
      %p123 = scmp.eq.s32.totalorder %s21, 0
      %p124 = por %p122, %p123
      %p125 = scmp.ne.s32.totalorder %s111, %s112
      %p126 = scmp.eq.s32.totalorder %s22, 1
      %p127 = por %p125, %p126
      %p129 = scmp.ne.s32.totalorder %s112, %s128
      %p130 = scmp.eq.s32.totalorder %s22, 0
      %p131 = por %p129, %p130
      %p132 = scmp.le.s32.totalorder 1, %s16
      %p133 = scmp.lt.s32.totalorder %s16, 3
      %p134 = pnand %p132, %p133
      %p135 = pneg %p134
      // Predicated region
      $region9: #{net_forward.25} parent=5 // pred_check
        _
      $region10: #{net_forward.25} parent=5 // pred_check_branch
        %137 = sbr.rel (%p134) target = $region12
      $region11: #{net_forward.25} parent=5 // pred_region
        %s138 = ssub.s32 %s16, 1
        // Predicated region
        $region13: #{net_forward.25} parent=11 // pred_check
          %p139 = pneg %p75
        $region14: #{net_forward.25} parent=11 // pred_check_branch
          %141 = sbr.rel (%p139) target = $region16
        $region15: #{net_forward.25} parent=11 // pred_region
          %s143 = ssub.s32 2304, 2304
          %144 = vsyncadd [#allocation6], %s143
          %s145 = sshll.u32 [#allocation5], 4
          %s146 = int_to_ptr.vmem [resolvable:$true] %s145
          %151 = dma.hbm_to_vmem [thread:$0]  %s1, 2304, %s146, [#allocation6], 64, 64, 4
        $region16: #{net_forward.25} parent=11 // pred_fallthru
          _
        // Predicated region
        $region17: #{net_forward.25} parent=11 // pred_check
          %p152 = pneg %p96
        $region18: #{net_forward.25} parent=11 // pred_check_branch
          %154 = sbr.rel (%p152) target = $region20
        $region19: #{net_forward.25} parent=11 // pred_region
          %s156 = ssub.s32 16, 16
          %157 = vsyncadd [#allocation6], %s156
          %s159 = sshll.u32 [#allocation7], 4
          %s160 = int_to_ptr.vmem [resolvable:$true] %s159
          %162 = dma.hbm_to_vmem [thread:$0]  %s2, 16, %s160, [#allocation6]
        $region20: #{net_forward.25} parent=11 // pred_fallthru
          _
      $region12: #{net_forward.25} parent=5 // pred_fallthru
        _
      %p163 = scmp.lt.s32.totalorder %s16, 2
      // Predicated region
      $region21: #{net_forward.25} parent=5 // pred_check
        %p164 = pneg %p163
      $region22: #{net_forward.25} parent=5 // pred_check_branch
        %166 = sbr.rel (%p164) target = $region24
      $region23: #{net_forward.25} parent=5 // pred_region
        // Predicated region
        $region25: #{net_forward.25} parent=23 // pred_check
          %p167 = pneg %p48
        $region26: #{net_forward.25} parent=23 // pred_check_branch
          %169 = sbr.rel (%p167) target = $region28
        $region27: #{net_forward.25} parent=23 // pred_region
          %s170 = sand.u32 %s38, 1
          %s171 = scalar_lea.sflag [#allocation3], %s170
          %s172 = sand.u32 %s38, 1
          %s173 = smul.addr %s172, 216
          %s174 = scalar_lea.vmem [#allocation2], %s173
          %s176 = ssub.s32 3456, 3456
          %177 = vsyncadd %s171, %s176
          %s178 = smul.addr %s23, 54
          %s179 = smul.addr %s178, 64
          %s180 = scalar_lea.hbm %s0, %s179
          %s181 = sshll.u32 %s174, 4
          %s182 = int_to_ptr.vmem [resolvable:$true] %s181
          %187 = dma.hbm_to_vmem [thread:$0]  %s180, 3456, %s182, %s171, 64, 64, 4
        $region28: #{net_forward.25} parent=23 // pred_fallthru
          _
      $region24: #{net_forward.25} parent=5 // pred_fallthru
        _
      %p188 = scmp.le.s32.totalorder 1, %s16
      %p189 = scmp.lt.s32.totalorder %s16, 3
      %p190 = pnand %p188, %p189
      %p191 = pneg %p190
      // Predicated region
      $region29: #{net_forward.25} parent=5 // pred_check
        _
      $region30: #{net_forward.25} parent=5 // pred_check_branch
        %193 = sbr.rel (%p190) target = $region32
      $region31: #{net_forward.25} parent=5 // pred_region
        %s194 = ssub.s32 %s16, 1
        %s195 = sand.u32 %s41, 1
        %s196 = scalar_lea.sflag [#allocation3], %s195
        %s197 = sand.u32 %s41, 1
        %s198 = smul.addr %s197, 216
        %s199 = scalar_lea.vmem [#allocation2], %s198
        // Predicated region
        $region33: #{net_forward.25} parent=31 // pred_check
          %p200 = pneg %p54
        $region34: #{net_forward.25} parent=31 // pred_check_branch
          %202 = sbr.rel (%p200) target = $region36
        $region35: #{net_forward.25} parent=31 // pred_region
          %203 = dma.done %s196, 3456
        $region36: #{net_forward.25} parent=31 // pred_fallthru
          _
        // Predicated region
        $region37: #{net_forward.25} parent=31 // pred_check
          %p204 = pneg %p75
        $region38: #{net_forward.25} parent=31 // pred_check_branch
          %206 = sbr.rel (%p204) target = $region40
        $region39: #{net_forward.25} parent=31 // pred_region
          %207 = dma.done [#allocation6], 2304
        $region40: #{net_forward.25} parent=31 // pred_fallthru
          _
        // Predicated region
        $region41: #{net_forward.25} parent=31 // pred_check
          %p208 = pneg %p96
        $region42: #{net_forward.25} parent=31 // pred_check_branch
          %210 = sbr.rel (%p208) target = $region44
        $region43: #{net_forward.25} parent=31 // pred_region
          %211 = dma.done [#allocation6], 16
        $region44: #{net_forward.25} parent=31 // pred_fallthru
          _
        %s212 = sand.u32 %s41, 1
        %s213 = scalar_lea.sflag [#allocation3], %s212
        %s214 = sand.u32 %s41, 1
        %s215 = smul.addr %s214, 216
        %s216 = scalar_lea.vmem [#allocation2], %s215
        %p217 = pneg %p54
        %p218 = pneg %p51
        %p219 = pneg %p75
        %p220 = pneg %p72
        %p221 = pneg %p96
        %p222 = pneg %p93
        %p223 = pneg %p124
        %p224 = pneg %p121
        %s225 = sand.u32 %s111, 1
        %s226 = scalar_lea.sflag [#allocation4], %s225
        %s227 = sand.u32 %s111, 1
        %s228 = smul.addr %s227, 128
        %s229 = scalar_lea.vmem [#allocation8], %s228
        %s230 = smul.u32 32, %s26
        %s232 = smul.u32 %s26, 16
        %s233 = smul.u32 %s232, 3
        %s234 = smul.addr %s233, 4
        %s235 = scalar_lea.vmem %s199, %s234 [#allocation2]
        %v236 = vld [vmem:[%s235] sm:$0xf]
        %v237 = vld [vmem:[%s235 + $0x4] sm:$0xf]
        %v238 = vld [vmem:[%s235 + $0x8] sm:$0x1]
        %v239 = vld [vmem:[%s235 + $0xc] sm:$0xf]
        %v240 = vld [vmem:[%s235 + $0x10] sm:$0xf]
        %v241 = vld [vmem:[%s235 + $0x14] sm:$0x1]
        %v242 = vld [vmem:[%s235 + $0x18] sm:$0xf]
        %v243 = vld [vmem:[%s235 + $0x1c] sm:$0xf]
        %v244 = vld [vmem:[%s235 + $0x20] sm:$0x1]
        %v245 = vld [vmem:[%s235 + $0x24] sm:$0xf]
        %v246 = vld [vmem:[%s235 + $0x28] sm:$0xf]
        %v247 = vld [vmem:[%s235 + $0x2c] sm:$0x1]
        %v248 = vld [vmem:[%s235 + $0x30] sm:$0xf]
        %v249 = vld [vmem:[%s235 + $0x34] sm:$0xf]
        %v250 = vld [vmem:[%s235 + $0x38] sm:$0x1]
        %v251 = vld [vmem:[%s235 + $0x3c] sm:$0xf]
        %v252 = vld [vmem:[%s235 + $0x40] sm:$0xf]
        %v253 = vld [vmem:[%s235 + $0x44] sm:$0x1]
        %v254 = vld [vmem:[%s235 + $0x48] sm:$0xf]
        %v255 = vld [vmem:[%s235 + $0x4c] sm:$0xf]
        %v256 = vld [vmem:[%s235 + $0x50] sm:$0x1]
        %v257 = vld [vmem:[%s235 + $0x54] sm:$0xf]
        %v258 = vld [vmem:[%s235 + $0x58] sm:$0xf]
        %v259 = vld [vmem:[%s235 + $0x5c] sm:$0x1]
        %v260 = vld [vmem:[%s235 + $0x60] sm:$0xf]
        %v261 = vld [vmem:[%s235 + $0x64] sm:$0xf]
        %v262 = vld [vmem:[%s235 + $0x68] sm:$0x1]
        %v263 = vld [vmem:[%s235 + $0x6c] sm:$0xf]
        %v264 = vld [vmem:[%s235 + $0x70] sm:$0xf]
        %v265 = vld [vmem:[%s235 + $0x74] sm:$0x1]
        %v266 = vld [vmem:[%s235 + $0x78] sm:$0xf]
        %v267 = vld [vmem:[%s235 + $0x7c] sm:$0xf]
        %v268 = vld [vmem:[%s235 + $0x80] sm:$0x1]
        %v269 = vld [vmem:[%s235 + $0x84] sm:$0xf]
        %v270 = vld [vmem:[%s235 + $0x88] sm:$0xf]
        %v271 = vld [vmem:[%s235 + $0x8c] sm:$0x1]
        %v272 = vld [vmem:[%s235 + $0x90] sm:$0xf]
        %v273 = vld [vmem:[%s235 + $0x94] sm:$0xf]
        %v274 = vld [vmem:[%s235 + $0x98] sm:$0x1]
        %v275 = vld [vmem:[%s235 + $0x9c] sm:$0xf]
        %v276 = vld [vmem:[%s235 + $0xa0] sm:$0xf]
        %v277 = vld [vmem:[%s235 + $0xa4] sm:$0x1]
        %v278 = vld [vmem:[%s235 + $0xa8] sm:$0xf]
        %v279 = vld [vmem:[%s235 + $0xac] sm:$0xf]
        %v280 = vld [vmem:[%s235 + $0xb0] sm:$0x1]
        %v281 = vld [vmem:[%s235 + $0xb4] sm:$0xf]
        %v282 = vld [vmem:[%s235 + $0xb8] sm:$0xf]
        %v283 = vld [vmem:[%s235 + $0xbc] sm:$0x1]
        %v284 = vld [vmem:[%s235 + $0xc0] sm:$0xf]
        %v285 = vld [vmem:[%s235 + $0xc4] sm:$0xf]
        %v286 = vld [vmem:[%s235 + $0xc8] sm:$0x1]
        %v287 = vld [vmem:[%s235 + $0xcc] sm:$0xf]
        %v288 = vld [vmem:[%s235 + $0xd0] sm:$0xf]
        %v289 = vld [vmem:[%s235 + $0xd4] sm:$0x1]
        %v290 = vunpack.c.l.bf16 %v236
        %v291 = vunpack.c.l.bf16 %v237
        %v292 = vunpack.c.l.bf16 %v238
        %v293 = vunpack.c.l.bf16 %v239
        %v294 = vunpack.c.l.bf16 %v240
        %v295 = vunpack.c.l.bf16 %v241
        %v296 = vunpack.c.l.bf16 %v242
        %v297 = vunpack.c.l.bf16 %v243
        %v298 = vunpack.c.l.bf16 %v244
        %v299 = vunpack.c.l.bf16 %v245
        %v300 = vunpack.c.l.bf16 %v246
        %v301 = vunpack.c.l.bf16 %v247
        %v302 = vunpack.c.l.bf16 %v248
        %v303 = vunpack.c.l.bf16 %v249
        %v304 = vunpack.c.l.bf16 %v250
        %v305 = vunpack.c.l.bf16 %v251
        %v306 = vunpack.c.l.bf16 %v252
        %v307 = vunpack.c.l.bf16 %v253
        %v308 = vunpack.c.l.bf16 %v254
        %v309 = vunpack.c.l.bf16 %v255
        %v310 = vunpack.c.l.bf16 %v256
        %v311 = vunpack.c.l.bf16 %v257
        %v312 = vunpack.c.l.bf16 %v258
        %v313 = vunpack.c.l.bf16 %v259
        %v314 = vunpack.c.l.bf16 %v260
        %v315 = vunpack.c.l.bf16 %v261
        %v316 = vunpack.c.l.bf16 %v262
        %v317 = vunpack.c.l.bf16 %v263
        %v318 = vunpack.c.l.bf16 %v264
        %v319 = vunpack.c.l.bf16 %v265
        %v320 = vunpack.c.l.bf16 %v266
        %v321 = vunpack.c.l.bf16 %v267
        %v322 = vunpack.c.l.bf16 %v268
        %v323 = vunpack.c.l.bf16 %v269
        %v324 = vunpack.c.l.bf16 %v270
        %v325 = vunpack.c.l.bf16 %v271
        %v326 = vunpack.c.l.bf16 %v272
        %v327 = vunpack.c.l.bf16 %v273
        %v328 = vunpack.c.l.bf16 %v274
        %v329 = vunpack.c.l.bf16 %v275
        %v330 = vunpack.c.l.bf16 %v276
        %v331 = vunpack.c.l.bf16 %v277
        %v332 = vunpack.c.l.bf16 %v278
        %v333 = vunpack.c.l.bf16 %v279
        %v334 = vunpack.c.l.bf16 %v280
        %v335 = vunpack.c.l.bf16 %v281
        %v336 = vunpack.c.l.bf16 %v282
        %v337 = vunpack.c.l.bf16 %v283
        %v338 = vunpack.c.l.bf16 %v284
        %v339 = vunpack.c.l.bf16 %v285
        %v340 = vunpack.c.l.bf16 %v286
        %v341 = vunpack.c.l.bf16 %v287
        %v342 = vunpack.c.l.bf16 %v288
        %v343 = vunpack.c.l.bf16 %v289
        %vm392 = vcmask 1046528
        %v393 = vrot.slane %v290, 1
        %v394 = vrot.slane %v291, 1
        %v395 = vsel %vm392, %v393, %v394
        %v396 = vrot.slane %v292, 1
        %v397 = vsel %vm392, %v394, %v396
        %v398 = vrot.slane %v293, 1
        %v399 = vrot.slane %v294, 1
        %v400 = vsel %vm392, %v398, %v399
        %v401 = vrot.slane %v295, 1
        %v402 = vsel %vm392, %v399, %v401
        %v403 = vrot.slane %v296, 1
        %v404 = vrot.slane %v297, 1
        %v405 = vsel %vm392, %v403, %v404
        %v406 = vrot.slane %v298, 1
        %v407 = vsel %vm392, %v404, %v406
        %v408 = vrot.slane %v299, 1
        %v409 = vrot.slane %v300, 1
        %v410 = vsel %vm392, %v408, %v409
        %v411 = vrot.slane %v301, 1
        %v412 = vsel %vm392, %v409, %v411
        %v413 = vrot.slane %v302, 1
        %v414 = vrot.slane %v303, 1
        %v415 = vsel %vm392, %v413, %v414
        %v416 = vrot.slane %v304, 1
        %v417 = vsel %vm392, %v414, %v416
        %v418 = vrot.slane %v305, 1
        %v419 = vrot.slane %v306, 1
        %v420 = vsel %vm392, %v418, %v419
        %v421 = vrot.slane %v307, 1
        %v422 = vsel %vm392, %v419, %v421
        %v423 = vrot.slane %v308, 1
        %v424 = vrot.slane %v309, 1
        %v425 = vsel %vm392, %v423, %v424
        %v426 = vrot.slane %v310, 1
        %v427 = vsel %vm392, %v424, %v426
        %v428 = vrot.slane %v311, 1
        %v429 = vrot.slane %v312, 1
        %v430 = vsel %vm392, %v428, %v429
        %v431 = vrot.slane %v313, 1
        %v432 = vsel %vm392, %v429, %v431
        %v433 = vrot.slane %v314, 1
        %v434 = vrot.slane %v315, 1
        %v435 = vsel %vm392, %v433, %v434
        %v436 = vrot.slane %v316, 1
        %v437 = vsel %vm392, %v434, %v436
        %v438 = vrot.slane %v317, 1
        %v439 = vrot.slane %v318, 1
        %v440 = vsel %vm392, %v438, %v439
        %v441 = vrot.slane %v319, 1
        %v442 = vsel %vm392, %v439, %v441
        %v443 = vrot.slane %v320, 1
        %v444 = vrot.slane %v321, 1
        %v445 = vsel %vm392, %v443, %v444
        %v446 = vrot.slane %v322, 1
        %v447 = vsel %vm392, %v444, %v446
        %v448 = vrot.slane %v323, 1
        %v449 = vrot.slane %v324, 1
        %v450 = vsel %vm392, %v448, %v449
        %v451 = vrot.slane %v325, 1
        %v452 = vsel %vm392, %v449, %v451
        %v453 = vrot.slane %v326, 1
        %v454 = vrot.slane %v327, 1
        %v455 = vsel %vm392, %v453, %v454
        %v456 = vrot.slane %v328, 1
        %v457 = vsel %vm392, %v454, %v456
        %v458 = vrot.slane %v329, 1
        %v459 = vrot.slane %v330, 1
        %v460 = vsel %vm392, %v458, %v459
        %v461 = vrot.slane %v331, 1
        %v462 = vsel %vm392, %v459, %v461
        %v463 = vrot.slane %v332, 1
        %v464 = vrot.slane %v333, 1
        %v465 = vsel %vm392, %v463, %v464
        %v466 = vrot.slane %v334, 1
        %v467 = vsel %vm392, %v464, %v466
        %v468 = vrot.slane %v335, 1
        %v469 = vrot.slane %v336, 1
        %v470 = vsel %vm392, %v468, %v469
        %v471 = vrot.slane %v337, 1
        %v472 = vsel %vm392, %v469, %v471
        %vm473 = vcmask 1045504
        %v474 = vrot.slane %v290, 2
        %v475 = vrot.slane %v291, 2
        %v476 = vsel %vm473, %v474, %v475
        %v477 = vrot.slane %v292, 2
        %v478 = vsel %vm473, %v475, %v477
        %v479 = vrot.slane %v293, 2
        %v480 = vrot.slane %v294, 2
        %v481 = vsel %vm473, %v479, %v480
        %v482 = vrot.slane %v295, 2
        %v483 = vsel %vm473, %v480, %v482
        %v484 = vrot.slane %v296, 2
        %v485 = vrot.slane %v297, 2
        %v486 = vsel %vm473, %v484, %v485
        %v487 = vrot.slane %v298, 2
        %v488 = vsel %vm473, %v485, %v487
        %v489 = vrot.slane %v299, 2
        %v490 = vrot.slane %v300, 2
        %v491 = vsel %vm473, %v489, %v490
        %v492 = vrot.slane %v301, 2
        %v493 = vsel %vm473, %v490, %v492
        %v494 = vrot.slane %v302, 2
        %v495 = vrot.slane %v303, 2
        %v496 = vsel %vm473, %v494, %v495
        %v497 = vrot.slane %v304, 2
        %v498 = vsel %vm473, %v495, %v497
        %v499 = vrot.slane %v305, 2
        %v500 = vrot.slane %v306, 2
        %v501 = vsel %vm473, %v499, %v500
        %v502 = vrot.slane %v307, 2
        %v503 = vsel %vm473, %v500, %v502
        %v504 = vrot.slane %v308, 2
        %v505 = vrot.slane %v309, 2
        %v506 = vsel %vm473, %v504, %v505
        %v507 = vrot.slane %v310, 2
        %v508 = vsel %vm473, %v505, %v507
        %v509 = vrot.slane %v311, 2
        %v510 = vrot.slane %v312, 2
        %v511 = vsel %vm473, %v509, %v510
        %v512 = vrot.slane %v313, 2
        %v513 = vsel %vm473, %v510, %v512
        %v514 = vrot.slane %v314, 2
        %v515 = vrot.slane %v315, 2
        %v516 = vsel %vm473, %v514, %v515
        %v517 = vrot.slane %v316, 2
        %v518 = vsel %vm473, %v515, %v517
        %v519 = vrot.slane %v317, 2
        %v520 = vrot.slane %v318, 2
        %v521 = vsel %vm473, %v519, %v520
        %v522 = vrot.slane %v319, 2
        %v523 = vsel %vm473, %v520, %v522
        %v524 = vrot.slane %v320, 2
        %v525 = vrot.slane %v321, 2
        %v526 = vsel %vm473, %v524, %v525
        %v527 = vrot.slane %v322, 2
        %v528 = vsel %vm473, %v525, %v527
        %v529 = vrot.slane %v323, 2
        %v530 = vrot.slane %v324, 2
        %v531 = vsel %vm473, %v529, %v530
        %v532 = vrot.slane %v325, 2
        %v533 = vsel %vm473, %v530, %v532
        %v534 = vrot.slane %v326, 2
        %v535 = vrot.slane %v327, 2
        %v536 = vsel %vm473, %v534, %v535
        %v537 = vrot.slane %v328, 2
        %v538 = vsel %vm473, %v535, %v537
        %v539 = vrot.slane %v329, 2
        %v540 = vrot.slane %v330, 2
        %v541 = vsel %vm473, %v539, %v540
        %v542 = vrot.slane %v331, 2
        %v543 = vsel %vm473, %v540, %v542
        %v544 = vrot.slane %v332, 2
        %v545 = vrot.slane %v333, 2
        %v546 = vsel %vm473, %v544, %v545
        %v547 = vrot.slane %v334, 2
        %v548 = vsel %vm473, %v545, %v547
        %v549 = vrot.slane %v335, 2
        %v550 = vrot.slane %v336, 2
        %v551 = vsel %vm473, %v549, %v550
        %v552 = vrot.slane %v337, 2
        %v553 = vsel %vm473, %v550, %v552
        %v557 = vrot.slane %v338, 1
        %v558 = vrot.slane %v339, 1
        %v559 = vsel %vm392, %v557, %v558
        %v560 = vrot.slane %v340, 1
        %v561 = vsel %vm392, %v558, %v560
        %v594 = vrot.slane %v338, 2
        %v595 = vrot.slane %v339, 2
        %v596 = vsel %vm473, %v594, %v595
        %v597 = vrot.slane %v340, 2
        %v598 = vsel %vm473, %v595, %v597
        %v602 = vrot.slane %v341, 1
        %v603 = vrot.slane %v342, 1
        %v604 = vsel %vm392, %v602, %v603
        %v605 = vrot.slane %v343, 1
        %v606 = vsel %vm392, %v603, %v605
        %v607 = vrot.slane %v341, 2
        %v608 = vrot.slane %v342, 2
        %v609 = vsel %vm473, %v607, %v608
        %v610 = vrot.slane %v343, 2
        %v611 = vsel %vm473, %v608, %v610
        %644 = vrot.lane.b32.xlu0 %v395, 32
        %v645 = vpop.permute.xlu0 %644
        %646 = vrot.lane.b32.xlu0 %v397, 32
        %v647 = vpop.permute.xlu0 %646
        %648 = vrot.lane.b32.xlu0 %v400, 32
        %v649 = vpop.permute.xlu0 %648
        %650 = vrot.lane.b32.xlu0 %v402, 32
        %v651 = vpop.permute.xlu0 %650
        %652 = vrot.lane.b32.xlu0 %v405, 32
        %v653 = vpop.permute.xlu0 %652
        %654 = vrot.lane.b32.xlu0 %v407, 32
        %v655 = vpop.permute.xlu0 %654
        %656 = vrot.lane.b32.xlu0 %v410, 32
        %v657 = vpop.permute.xlu0 %656
        %658 = vrot.lane.b32.xlu0 %v412, 32
        %v659 = vpop.permute.xlu0 %658
        %660 = vrot.lane.b32.xlu0 %v415, 32
        %v661 = vpop.permute.xlu0 %660
        %662 = vrot.lane.b32.xlu0 %v417, 32
        %v663 = vpop.permute.xlu0 %662
        %664 = vrot.lane.b32.xlu0 %v420, 32
        %v665 = vpop.permute.xlu0 %664
        %666 = vrot.lane.b32.xlu0 %v422, 32
        %v667 = vpop.permute.xlu0 %666
        %668 = vrot.lane.b32.xlu0 %v425, 32
        %v669 = vpop.permute.xlu0 %668
        %670 = vrot.lane.b32.xlu0 %v427, 32
        %v671 = vpop.permute.xlu0 %670
        %672 = vrot.lane.b32.xlu0 %v430, 32
        %v673 = vpop.permute.xlu0 %672
        %674 = vrot.lane.b32.xlu0 %v432, 32
        %v675 = vpop.permute.xlu0 %674
        %676 = vrot.lane.b32.xlu0 %v435, 32
        %v677 = vpop.permute.xlu0 %676
        %678 = vrot.lane.b32.xlu0 %v437, 32
        %v679 = vpop.permute.xlu0 %678
        %680 = vrot.lane.b32.xlu0 %v440, 32
        %v681 = vpop.permute.xlu0 %680
        %682 = vrot.lane.b32.xlu0 %v442, 32
        %v683 = vpop.permute.xlu0 %682
        %684 = vrot.lane.b32.xlu0 %v445, 32
        %v685 = vpop.permute.xlu0 %684
        %686 = vrot.lane.b32.xlu0 %v447, 32
        %v687 = vpop.permute.xlu0 %686
        %688 = vrot.lane.b32.xlu0 %v450, 32
        %v689 = vpop.permute.xlu0 %688
        %690 = vrot.lane.b32.xlu0 %v452, 32
        %v691 = vpop.permute.xlu0 %690
        %692 = vrot.lane.b32.xlu0 %v455, 32
        %v693 = vpop.permute.xlu0 %692
        %694 = vrot.lane.b32.xlu0 %v457, 32
        %v695 = vpop.permute.xlu0 %694
        %696 = vrot.lane.b32.xlu0 %v460, 32
        %v697 = vpop.permute.xlu0 %696
        %698 = vrot.lane.b32.xlu0 %v462, 32
        %v699 = vpop.permute.xlu0 %698
        %700 = vrot.lane.b32.xlu0 %v465, 32
        %v701 = vpop.permute.xlu0 %700
        %702 = vrot.lane.b32.xlu0 %v467, 32
        %v703 = vpop.permute.xlu0 %702
        %704 = vrot.lane.b32.xlu0 %v470, 32
        %v705 = vpop.permute.xlu0 %704
        %706 = vrot.lane.b32.xlu0 %v472, 32
        %v707 = vpop.permute.xlu0 %706
        %740 = vrot.lane.b32.xlu0 %v476, 64
        %v741 = vpop.permute.xlu0 %740
        %742 = vrot.lane.b32.xlu0 %v478, 64
        %v743 = vpop.permute.xlu0 %742
        %744 = vrot.lane.b32.xlu0 %v481, 64
        %v745 = vpop.permute.xlu0 %744
        %746 = vrot.lane.b32.xlu0 %v483, 64
        %v747 = vpop.permute.xlu0 %746
        %748 = vrot.lane.b32.xlu0 %v486, 64
        %v749 = vpop.permute.xlu0 %748
        %750 = vrot.lane.b32.xlu0 %v488, 64
        %v751 = vpop.permute.xlu0 %750
        %752 = vrot.lane.b32.xlu0 %v491, 64
        %v753 = vpop.permute.xlu0 %752
        %754 = vrot.lane.b32.xlu0 %v493, 64
        %v755 = vpop.permute.xlu0 %754
        %756 = vrot.lane.b32.xlu0 %v496, 64
        %v757 = vpop.permute.xlu0 %756
        %758 = vrot.lane.b32.xlu0 %v498, 64
        %v759 = vpop.permute.xlu0 %758
        %760 = vrot.lane.b32.xlu0 %v501, 64
        %v761 = vpop.permute.xlu0 %760
        %762 = vrot.lane.b32.xlu0 %v503, 64
        %v763 = vpop.permute.xlu0 %762
        %764 = vrot.lane.b32.xlu0 %v506, 64
        %v765 = vpop.permute.xlu0 %764
        %766 = vrot.lane.b32.xlu0 %v508, 64
        %v767 = vpop.permute.xlu0 %766
        %768 = vrot.lane.b32.xlu0 %v511, 64
        %v769 = vpop.permute.xlu0 %768
        %770 = vrot.lane.b32.xlu0 %v513, 64
        %v771 = vpop.permute.xlu0 %770
        %772 = vrot.lane.b32.xlu0 %v516, 64
        %v773 = vpop.permute.xlu0 %772
        %774 = vrot.lane.b32.xlu0 %v518, 64
        %v775 = vpop.permute.xlu0 %774
        %776 = vrot.lane.b32.xlu0 %v521, 64
        %v777 = vpop.permute.xlu0 %776
        %778 = vrot.lane.b32.xlu0 %v523, 64
        %v779 = vpop.permute.xlu0 %778
        %780 = vrot.lane.b32.xlu0 %v526, 64
        %v781 = vpop.permute.xlu0 %780
        %782 = vrot.lane.b32.xlu0 %v528, 64
        %v783 = vpop.permute.xlu0 %782
        %784 = vrot.lane.b32.xlu0 %v531, 64
        %v785 = vpop.permute.xlu0 %784
        %786 = vrot.lane.b32.xlu0 %v533, 64
        %v787 = vpop.permute.xlu0 %786
        %788 = vrot.lane.b32.xlu0 %v536, 64
        %v789 = vpop.permute.xlu0 %788
        %790 = vrot.lane.b32.xlu0 %v538, 64
        %v791 = vpop.permute.xlu0 %790
        %792 = vrot.lane.b32.xlu0 %v541, 64
        %v793 = vpop.permute.xlu0 %792
        %794 = vrot.lane.b32.xlu0 %v543, 64
        %v795 = vpop.permute.xlu0 %794
        %796 = vrot.lane.b32.xlu0 %v546, 64
        %v797 = vpop.permute.xlu0 %796
        %798 = vrot.lane.b32.xlu0 %v548, 64
        %v799 = vpop.permute.xlu0 %798
        %800 = vrot.lane.b32.xlu0 %v551, 64
        %v801 = vpop.permute.xlu0 %800
        %802 = vrot.lane.b32.xlu0 %v553, 64
        %v803 = vpop.permute.xlu0 %802
        %836 = vrot.lane.b32.xlu0 %v293, 96
        %v837 = vpop.permute.xlu0 %836
        %838 = vrot.lane.b32.xlu0 %v294, 96
        %v839 = vpop.permute.xlu0 %838
        %840 = vrot.lane.b32.xlu0 %v296, 96
        %v841 = vpop.permute.xlu0 %840
        %842 = vrot.lane.b32.xlu0 %v297, 96
        %v843 = vpop.permute.xlu0 %842
        %844 = vrot.lane.b32.xlu0 %v299, 96
        %v845 = vpop.permute.xlu0 %844
        %846 = vrot.lane.b32.xlu0 %v300, 96
        %v847 = vpop.permute.xlu0 %846
        %848 = vrot.lane.b32.xlu0 %v302, 96
        %v849 = vpop.permute.xlu0 %848
        %850 = vrot.lane.b32.xlu0 %v303, 96
        %v851 = vpop.permute.xlu0 %850
        %852 = vrot.lane.b32.xlu0 %v305, 96
        %v853 = vpop.permute.xlu0 %852
        %854 = vrot.lane.b32.xlu0 %v306, 96
        %v855 = vpop.permute.xlu0 %854
        %856 = vrot.lane.b32.xlu0 %v308, 96
        %v857 = vpop.permute.xlu0 %856
        %858 = vrot.lane.b32.xlu0 %v309, 96
        %v859 = vpop.permute.xlu0 %858
        %860 = vrot.lane.b32.xlu0 %v311, 96
        %v861 = vpop.permute.xlu0 %860
        %862 = vrot.lane.b32.xlu0 %v312, 96
        %v863 = vpop.permute.xlu0 %862
        %864 = vrot.lane.b32.xlu0 %v314, 96
        %v865 = vpop.permute.xlu0 %864
        %866 = vrot.lane.b32.xlu0 %v315, 96
        %v867 = vpop.permute.xlu0 %866
        %868 = vrot.lane.b32.xlu0 %v317, 96
        %v869 = vpop.permute.xlu0 %868
        %870 = vrot.lane.b32.xlu0 %v318, 96
        %v871 = vpop.permute.xlu0 %870
        %872 = vrot.lane.b32.xlu0 %v320, 96
        %v873 = vpop.permute.xlu0 %872
        %874 = vrot.lane.b32.xlu0 %v321, 96
        %v875 = vpop.permute.xlu0 %874
        %876 = vrot.lane.b32.xlu0 %v323, 96
        %v877 = vpop.permute.xlu0 %876
        %878 = vrot.lane.b32.xlu0 %v324, 96
        %v879 = vpop.permute.xlu0 %878
        %880 = vrot.lane.b32.xlu0 %v326, 96
        %v881 = vpop.permute.xlu0 %880
        %882 = vrot.lane.b32.xlu0 %v327, 96
        %v883 = vpop.permute.xlu0 %882
        %884 = vrot.lane.b32.xlu0 %v329, 96
        %v885 = vpop.permute.xlu0 %884
        %886 = vrot.lane.b32.xlu0 %v330, 96
        %v887 = vpop.permute.xlu0 %886
        %888 = vrot.lane.b32.xlu0 %v332, 96
        %v889 = vpop.permute.xlu0 %888
        %890 = vrot.lane.b32.xlu0 %v333, 96
        %v891 = vpop.permute.xlu0 %890
        %892 = vrot.lane.b32.xlu0 %v335, 96
        %v893 = vpop.permute.xlu0 %892
        %894 = vrot.lane.b32.xlu0 %v336, 96
        %v895 = vpop.permute.xlu0 %894
        %896 = vrot.lane.b32.xlu0 %v338, 96
        %v897 = vpop.permute.xlu0 %896
        %898 = vrot.lane.b32.xlu0 %v339, 96
        %v899 = vpop.permute.xlu0 %898
        %932 = vrot.lane.b32.xlu0 %v481, 32
        %v933 = vpop.permute.xlu0 %932
        %934 = vrot.lane.b32.xlu0 %v483, 32
        %v935 = vpop.permute.xlu0 %934
        %936 = vrot.lane.b32.xlu0 %v486, 32
        %v937 = vpop.permute.xlu0 %936
        %938 = vrot.lane.b32.xlu0 %v488, 32
        %v939 = vpop.permute.xlu0 %938
        %940 = vrot.lane.b32.xlu0 %v491, 32
        %v941 = vpop.permute.xlu0 %940
        %942 = vrot.lane.b32.xlu0 %v493, 32
        %v943 = vpop.permute.xlu0 %942
        %944 = vrot.lane.b32.xlu0 %v496, 32
        %v945 = vpop.permute.xlu0 %944
        %946 = vrot.lane.b32.xlu0 %v498, 32
        %v947 = vpop.permute.xlu0 %946
        %948 = vrot.lane.b32.xlu0 %v501, 32
        %v949 = vpop.permute.xlu0 %948
        %950 = vrot.lane.b32.xlu0 %v503, 32
        %v951 = vpop.permute.xlu0 %950
        %952 = vrot.lane.b32.xlu0 %v506, 32
        %v953 = vpop.permute.xlu0 %952
        %954 = vrot.lane.b32.xlu0 %v508, 32
        %v955 = vpop.permute.xlu0 %954
        %956 = vrot.lane.b32.xlu0 %v511, 32
        %v957 = vpop.permute.xlu0 %956
        %958 = vrot.lane.b32.xlu0 %v513, 32
        %v959 = vpop.permute.xlu0 %958
        %960 = vrot.lane.b32.xlu0 %v516, 32
        %v961 = vpop.permute.xlu0 %960
        %962 = vrot.lane.b32.xlu0 %v518, 32
        %v963 = vpop.permute.xlu0 %962
        %964 = vrot.lane.b32.xlu0 %v521, 32
        %v965 = vpop.permute.xlu0 %964
        %966 = vrot.lane.b32.xlu0 %v523, 32
        %v967 = vpop.permute.xlu0 %966
        %968 = vrot.lane.b32.xlu0 %v526, 32
        %v969 = vpop.permute.xlu0 %968
        %970 = vrot.lane.b32.xlu0 %v528, 32
        %v971 = vpop.permute.xlu0 %970
        %972 = vrot.lane.b32.xlu0 %v531, 32
        %v973 = vpop.permute.xlu0 %972
        %974 = vrot.lane.b32.xlu0 %v533, 32
        %v975 = vpop.permute.xlu0 %974
        %976 = vrot.lane.b32.xlu0 %v536, 32
        %v977 = vpop.permute.xlu0 %976
        %978 = vrot.lane.b32.xlu0 %v538, 32
        %v979 = vpop.permute.xlu0 %978
        %980 = vrot.lane.b32.xlu0 %v541, 32
        %v981 = vpop.permute.xlu0 %980
        %982 = vrot.lane.b32.xlu0 %v543, 32
        %v983 = vpop.permute.xlu0 %982
        %984 = vrot.lane.b32.xlu0 %v546, 32
        %v985 = vpop.permute.xlu0 %984
        %986 = vrot.lane.b32.xlu0 %v548, 32
        %v987 = vpop.permute.xlu0 %986
        %988 = vrot.lane.b32.xlu0 %v551, 32
        %v989 = vpop.permute.xlu0 %988
        %990 = vrot.lane.b32.xlu0 %v553, 32
        %v991 = vpop.permute.xlu0 %990
        %992 = vrot.lane.b32.xlu0 %v596, 32
        %v993 = vpop.permute.xlu0 %992
        %994 = vrot.lane.b32.xlu0 %v598, 32
        %v995 = vpop.permute.xlu0 %994
        %1028 = vrot.lane.b32.xlu0 %v296, 64
        %v1029 = vpop.permute.xlu0 %1028
        %1030 = vrot.lane.b32.xlu0 %v297, 64
        %v1031 = vpop.permute.xlu0 %1030
        %1032 = vrot.lane.b32.xlu0 %v299, 64
        %v1033 = vpop.permute.xlu0 %1032
        %1034 = vrot.lane.b32.xlu0 %v300, 64
        %v1035 = vpop.permute.xlu0 %1034
        %1036 = vrot.lane.b32.xlu0 %v302, 64
        %v1037 = vpop.permute.xlu0 %1036
        %1038 = vrot.lane.b32.xlu0 %v303, 64
        %v1039 = vpop.permute.xlu0 %1038
        %1040 = vrot.lane.b32.xlu0 %v305, 64
        %v1041 = vpop.permute.xlu0 %1040
        %1042 = vrot.lane.b32.xlu0 %v306, 64
        %v1043 = vpop.permute.xlu0 %1042
        %1044 = vrot.lane.b32.xlu0 %v308, 64
        %v1045 = vpop.permute.xlu0 %1044
        %1046 = vrot.lane.b32.xlu0 %v309, 64
        %v1047 = vpop.permute.xlu0 %1046
        %1048 = vrot.lane.b32.xlu0 %v311, 64
        %v1049 = vpop.permute.xlu0 %1048
        %1050 = vrot.lane.b32.xlu0 %v312, 64
        %v1051 = vpop.permute.xlu0 %1050
        %1052 = vrot.lane.b32.xlu0 %v314, 64
        %v1053 = vpop.permute.xlu0 %1052
        %1054 = vrot.lane.b32.xlu0 %v315, 64
        %v1055 = vpop.permute.xlu0 %1054
        %1056 = vrot.lane.b32.xlu0 %v317, 64
        %v1057 = vpop.permute.xlu0 %1056
        %1058 = vrot.lane.b32.xlu0 %v318, 64
        %v1059 = vpop.permute.xlu0 %1058
        %1060 = vrot.lane.b32.xlu0 %v320, 64
        %v1061 = vpop.permute.xlu0 %1060
        %1062 = vrot.lane.b32.xlu0 %v321, 64
        %v1063 = vpop.permute.xlu0 %1062
        %1064 = vrot.lane.b32.xlu0 %v323, 64
        %v1065 = vpop.permute.xlu0 %1064
        %1066 = vrot.lane.b32.xlu0 %v324, 64
        %v1067 = vpop.permute.xlu0 %1066
        %1068 = vrot.lane.b32.xlu0 %v326, 64
        %v1069 = vpop.permute.xlu0 %1068
        %1070 = vrot.lane.b32.xlu0 %v327, 64
        %v1071 = vpop.permute.xlu0 %1070
        %1072 = vrot.lane.b32.xlu0 %v329, 64
        %v1073 = vpop.permute.xlu0 %1072
        %1074 = vrot.lane.b32.xlu0 %v330, 64
        %v1075 = vpop.permute.xlu0 %1074
        %1076 = vrot.lane.b32.xlu0 %v332, 64
        %v1077 = vpop.permute.xlu0 %1076
        %1078 = vrot.lane.b32.xlu0 %v333, 64
        %v1079 = vpop.permute.xlu0 %1078
        %1080 = vrot.lane.b32.xlu0 %v335, 64
        %v1081 = vpop.permute.xlu0 %1080
        %1082 = vrot.lane.b32.xlu0 %v336, 64
        %v1083 = vpop.permute.xlu0 %1082
        %1084 = vrot.lane.b32.xlu0 %v338, 64
        %v1085 = vpop.permute.xlu0 %1084
        %1086 = vrot.lane.b32.xlu0 %v339, 64
        %v1087 = vpop.permute.xlu0 %1086
        %1088 = vrot.lane.b32.xlu0 %v341, 64
        %v1089 = vpop.permute.xlu0 %1088
        %1090 = vrot.lane.b32.xlu0 %v342, 64
        %v1091 = vpop.permute.xlu0 %1090
        %1124 = vrot.lane.b32.xlu0 %v405, 96
        %v1125 = vpop.permute.xlu0 %1124
        %1126 = vrot.lane.b32.xlu0 %v407, 96
        %v1127 = vpop.permute.xlu0 %1126
        %1128 = vrot.lane.b32.xlu0 %v410, 96
        %v1129 = vpop.permute.xlu0 %1128
        %1130 = vrot.lane.b32.xlu0 %v412, 96
        %v1131 = vpop.permute.xlu0 %1130
        %1132 = vrot.lane.b32.xlu0 %v415, 96
        %v1133 = vpop.permute.xlu0 %1132
        %1134 = vrot.lane.b32.xlu0 %v417, 96
        %v1135 = vpop.permute.xlu0 %1134
        %1136 = vrot.lane.b32.xlu0 %v420, 96
        %v1137 = vpop.permute.xlu0 %1136
        %1138 = vrot.lane.b32.xlu0 %v422, 96
        %v1139 = vpop.permute.xlu0 %1138
        %1140 = vrot.lane.b32.xlu0 %v425, 96
        %v1141 = vpop.permute.xlu0 %1140
        %1142 = vrot.lane.b32.xlu0 %v427, 96
        %v1143 = vpop.permute.xlu0 %1142
        %1144 = vrot.lane.b32.xlu0 %v430, 96
        %v1145 = vpop.permute.xlu0 %1144
        %1146 = vrot.lane.b32.xlu0 %v432, 96
        %v1147 = vpop.permute.xlu0 %1146
        %1148 = vrot.lane.b32.xlu0 %v435, 96
        %v1149 = vpop.permute.xlu0 %1148
        %1150 = vrot.lane.b32.xlu0 %v437, 96
        %v1151 = vpop.permute.xlu0 %1150
        %1152 = vrot.lane.b32.xlu0 %v440, 96
        %v1153 = vpop.permute.xlu0 %1152
        %1154 = vrot.lane.b32.xlu0 %v442, 96
        %v1155 = vpop.permute.xlu0 %1154
        %1156 = vrot.lane.b32.xlu0 %v445, 96
        %v1157 = vpop.permute.xlu0 %1156
        %1158 = vrot.lane.b32.xlu0 %v447, 96
        %v1159 = vpop.permute.xlu0 %1158
        %1160 = vrot.lane.b32.xlu0 %v450, 96
        %v1161 = vpop.permute.xlu0 %1160
        %1162 = vrot.lane.b32.xlu0 %v452, 96
        %v1163 = vpop.permute.xlu0 %1162
        %1164 = vrot.lane.b32.xlu0 %v455, 96
        %v1165 = vpop.permute.xlu0 %1164
        %1166 = vrot.lane.b32.xlu0 %v457, 96
        %v1167 = vpop.permute.xlu0 %1166
        %1168 = vrot.lane.b32.xlu0 %v460, 96
        %v1169 = vpop.permute.xlu0 %1168
        %1170 = vrot.lane.b32.xlu0 %v462, 96
        %v1171 = vpop.permute.xlu0 %1170
        %1172 = vrot.lane.b32.xlu0 %v465, 96
        %v1173 = vpop.permute.xlu0 %1172
        %1174 = vrot.lane.b32.xlu0 %v467, 96
        %v1175 = vpop.permute.xlu0 %1174
        %1176 = vrot.lane.b32.xlu0 %v470, 96
        %v1177 = vpop.permute.xlu0 %1176
        %1178 = vrot.lane.b32.xlu0 %v472, 96
        %v1179 = vpop.permute.xlu0 %1178
        %1180 = vrot.lane.b32.xlu0 %v559, 96
        %v1181 = vpop.permute.xlu0 %1180
        %1182 = vrot.lane.b32.xlu0 %v561, 96
        %v1183 = vpop.permute.xlu0 %1182
        %1184 = vrot.lane.b32.xlu0 %v604, 96
        %v1185 = vpop.permute.xlu0 %1184
        %1186 = vrot.lane.b32.xlu0 %v606, 96
        %v1187 = vpop.permute.xlu0 %1186
        %vm1220 = vcmask 261120
        %v1221 = vsel %vm1220, %v290, %v645
        %v1222 = vsel %vm1220, %v291, %v647
        %v1223 = vsel %vm1220, %v293, %v649
        %v1224 = vsel %vm1220, %v294, %v651
        %v1225 = vsel %vm1220, %v296, %v653
        %v1226 = vsel %vm1220, %v297, %v655
        %v1227 = vsel %vm1220, %v299, %v657
        %v1228 = vsel %vm1220, %v300, %v659
        %v1229 = vsel %vm1220, %v302, %v661
        %v1230 = vsel %vm1220, %v303, %v663
        %v1231 = vsel %vm1220, %v305, %v665
        %v1232 = vsel %vm1220, %v306, %v667
        %v1233 = vsel %vm1220, %v308, %v669
        %v1234 = vsel %vm1220, %v309, %v671
        %v1235 = vsel %vm1220, %v311, %v673
        %v1236 = vsel %vm1220, %v312, %v675
        %v1237 = vsel %vm1220, %v314, %v677
        %v1238 = vsel %vm1220, %v315, %v679
        %v1239 = vsel %vm1220, %v317, %v681
        %v1240 = vsel %vm1220, %v318, %v683
        %v1241 = vsel %vm1220, %v320, %v685
        %v1242 = vsel %vm1220, %v321, %v687
        %v1243 = vsel %vm1220, %v323, %v689
        %v1244 = vsel %vm1220, %v324, %v691
        %v1245 = vsel %vm1220, %v326, %v693
        %v1246 = vsel %vm1220, %v327, %v695
        %v1247 = vsel %vm1220, %v329, %v697
        %v1248 = vsel %vm1220, %v330, %v699
        %v1249 = vsel %vm1220, %v332, %v701
        %v1250 = vsel %vm1220, %v333, %v703
        %v1251 = vsel %vm1220, %v335, %v705
        %v1252 = vsel %vm1220, %v336, %v707
        %vm1253 = vcmask 523264
        %v1254 = vsel %vm1253, %v1221, %v741
        %v1255 = vsel %vm1253, %v1222, %v743
        %v1256 = vsel %vm1253, %v1223, %v745
        %v1257 = vsel %vm1253, %v1224, %v747
        %v1258 = vsel %vm1253, %v1225, %v749
        %v1259 = vsel %vm1253, %v1226, %v751
        %v1260 = vsel %vm1253, %v1227, %v753
        %v1261 = vsel %vm1253, %v1228, %v755
        %v1262 = vsel %vm1253, %v1229, %v757
        %v1263 = vsel %vm1253, %v1230, %v759
        %v1264 = vsel %vm1253, %v1231, %v761
        %v1265 = vsel %vm1253, %v1232, %v763
        %v1266 = vsel %vm1253, %v1233, %v765
        %v1267 = vsel %vm1253, %v1234, %v767
        %v1268 = vsel %vm1253, %v1235, %v769
        %v1269 = vsel %vm1253, %v1236, %v771
        %v1270 = vsel %vm1253, %v1237, %v773
        %v1271 = vsel %vm1253, %v1238, %v775
        %v1272 = vsel %vm1253, %v1239, %v777
        %v1273 = vsel %vm1253, %v1240, %v779
        %v1274 = vsel %vm1253, %v1241, %v781
        %v1275 = vsel %vm1253, %v1242, %v783
        %v1276 = vsel %vm1253, %v1243, %v785
        %v1277 = vsel %vm1253, %v1244, %v787
        %v1278 = vsel %vm1253, %v1245, %v789
        %v1279 = vsel %vm1253, %v1246, %v791
        %v1280 = vsel %vm1253, %v1247, %v793
        %v1281 = vsel %vm1253, %v1248, %v795
        %v1282 = vsel %vm1253, %v1249, %v797
        %v1283 = vsel %vm1253, %v1250, %v799
        %v1284 = vsel %vm1253, %v1251, %v801
        %v1285 = vsel %vm1253, %v1252, %v803
        %vm1286 = vcmask 785408
        %v1287 = vsel %vm1286, %v1254, %v837
        %v1288 = vsel %vm1286, %v1255, %v839
        %v1289 = vsel %vm1286, %v1256, %v841
        %v1290 = vsel %vm1286, %v1257, %v843
        %v1291 = vsel %vm1286, %v1258, %v845
        %v1292 = vsel %vm1286, %v1259, %v847
        %v1293 = vsel %vm1286, %v1260, %v849
        %v1294 = vsel %vm1286, %v1261, %v851
        %v1295 = vsel %vm1286, %v1262, %v853
        %v1296 = vsel %vm1286, %v1263, %v855
        %v1297 = vsel %vm1286, %v1264, %v857
        %v1298 = vsel %vm1286, %v1265, %v859
        %v1299 = vsel %vm1286, %v1266, %v861
        %v1300 = vsel %vm1286, %v1267, %v863
        %v1301 = vsel %vm1286, %v1268, %v865
        %v1302 = vsel %vm1286, %v1269, %v867
        %v1303 = vsel %vm1286, %v1270, %v869
        %v1304 = vsel %vm1286, %v1271, %v871
        %v1305 = vsel %vm1286, %v1272, %v873
        %v1306 = vsel %vm1286, %v1273, %v875
        %v1307 = vsel %vm1286, %v1274, %v877
        %v1308 = vsel %vm1286, %v1275, %v879
        %v1309 = vsel %vm1286, %v1276, %v881
        %v1310 = vsel %vm1286, %v1277, %v883
        %v1311 = vsel %vm1286, %v1278, %v885
        %v1312 = vsel %vm1286, %v1279, %v887
        %v1313 = vsel %vm1286, %v1280, %v889
        %v1314 = vsel %vm1286, %v1281, %v891
        %v1315 = vsel %vm1286, %v1282, %v893
        %v1316 = vsel %vm1286, %v1283, %v895
        %v1317 = vsel %vm1286, %v1284, %v897
        %v1318 = vsel %vm1286, %v1285, %v899
        %v1319 = vsel %vm1220, %v400, %v933
        %v1320 = vsel %vm1220, %v402, %v935
        %v1321 = vsel %vm1220, %v405, %v937
        %v1322 = vsel %vm1220, %v407, %v939
        %v1323 = vsel %vm1220, %v410, %v941
        %v1324 = vsel %vm1220, %v412, %v943
        %v1325 = vsel %vm1220, %v415, %v945
        %v1326 = vsel %vm1220, %v417, %v947
        %v1327 = vsel %vm1220, %v420, %v949
        %v1328 = vsel %vm1220, %v422, %v951
        %v1329 = vsel %vm1220, %v425, %v953
        %v1330 = vsel %vm1220, %v427, %v955
        %v1331 = vsel %vm1220, %v430, %v957
        %v1332 = vsel %vm1220, %v432, %v959
        %v1333 = vsel %vm1220, %v435, %v961
        %v1334 = vsel %vm1220, %v437, %v963
        %v1335 = vsel %vm1220, %v440, %v965
        %v1336 = vsel %vm1220, %v442, %v967
        %v1337 = vsel %vm1220, %v445, %v969
        %v1338 = vsel %vm1220, %v447, %v971
        %v1339 = vsel %vm1220, %v450, %v973
        %v1340 = vsel %vm1220, %v452, %v975
        %v1341 = vsel %vm1220, %v455, %v977
        %v1342 = vsel %vm1220, %v457, %v979
        %v1343 = vsel %vm1220, %v460, %v981
        %v1344 = vsel %vm1220, %v462, %v983
        %v1345 = vsel %vm1220, %v465, %v985
        %v1346 = vsel %vm1220, %v467, %v987
        %v1347 = vsel %vm1220, %v470, %v989
        %v1348 = vsel %vm1220, %v472, %v991
        %v1349 = vsel %vm1220, %v559, %v993
        %v1350 = vsel %vm1220, %v561, %v995
        %v1351 = vsel %vm1253, %v1319, %v1029
        %v1352 = vsel %vm1253, %v1320, %v1031
        %v1353 = vsel %vm1253, %v1321, %v1033
        %v1354 = vsel %vm1253, %v1322, %v1035
        %v1355 = vsel %vm1253, %v1323, %v1037
        %v1356 = vsel %vm1253, %v1324, %v1039
        %v1357 = vsel %vm1253, %v1325, %v1041
        %v1358 = vsel %vm1253, %v1326, %v1043
        %v1359 = vsel %vm1253, %v1327, %v1045
        %v1360 = vsel %vm1253, %v1328, %v1047
        %v1361 = vsel %vm1253, %v1329, %v1049
        %v1362 = vsel %vm1253, %v1330, %v1051
        %v1363 = vsel %vm1253, %v1331, %v1053
        %v1364 = vsel %vm1253, %v1332, %v1055
        %v1365 = vsel %vm1253, %v1333, %v1057
        %v1366 = vsel %vm1253, %v1334, %v1059
        %v1367 = vsel %vm1253, %v1335, %v1061
        %v1368 = vsel %vm1253, %v1336, %v1063
        %v1369 = vsel %vm1253, %v1337, %v1065
        %v1370 = vsel %vm1253, %v1338, %v1067
        %v1371 = vsel %vm1253, %v1339, %v1069
        %v1372 = vsel %vm1253, %v1340, %v1071
        %v1373 = vsel %vm1253, %v1341, %v1073
        %v1374 = vsel %vm1253, %v1342, %v1075
        %v1375 = vsel %vm1253, %v1343, %v1077
        %v1376 = vsel %vm1253, %v1344, %v1079
        %v1377 = vsel %vm1253, %v1345, %v1081
        %v1378 = vsel %vm1253, %v1346, %v1083
        %v1379 = vsel %vm1253, %v1347, %v1085
        %v1380 = vsel %vm1253, %v1348, %v1087
        %v1381 = vsel %vm1253, %v1349, %v1089
        %v1382 = vsel %vm1253, %v1350, %v1091
        %v1383 = vsel %vm1286, %v1351, %v1125
        %v1384 = vsel %vm1286, %v1352, %v1127
        %v1385 = vsel %vm1286, %v1353, %v1129
        %v1386 = vsel %vm1286, %v1354, %v1131
        %v1387 = vsel %vm1286, %v1355, %v1133
        %v1388 = vsel %vm1286, %v1356, %v1135
        %v1389 = vsel %vm1286, %v1357, %v1137
        %v1390 = vsel %vm1286, %v1358, %v1139
        %v1391 = vsel %vm1286, %v1359, %v1141
        %v1392 = vsel %vm1286, %v1360, %v1143
        %v1393 = vsel %vm1286, %v1361, %v1145
        %v1394 = vsel %vm1286, %v1362, %v1147
        %v1395 = vsel %vm1286, %v1363, %v1149
        %v1396 = vsel %vm1286, %v1364, %v1151
        %v1397 = vsel %vm1286, %v1365, %v1153
        %v1398 = vsel %vm1286, %v1366, %v1155
        %v1399 = vsel %vm1286, %v1367, %v1157
        %v1400 = vsel %vm1286, %v1368, %v1159
        %v1401 = vsel %vm1286, %v1369, %v1161
        %v1402 = vsel %vm1286, %v1370, %v1163
        %v1403 = vsel %vm1286, %v1371, %v1165
        %v1404 = vsel %vm1286, %v1372, %v1167
        %v1405 = vsel %vm1286, %v1373, %v1169
        %v1406 = vsel %vm1286, %v1374, %v1171
        %v1407 = vsel %vm1286, %v1375, %v1173
        %v1408 = vsel %vm1286, %v1376, %v1175
        %v1409 = vsel %vm1286, %v1377, %v1177
        %v1410 = vsel %vm1286, %v1378, %v1179
        %v1411 = vsel %vm1286, %v1379, %v1181
        %v1412 = vsel %vm1286, %v1380, %v1183
        %v1413 = vsel %vm1286, %v1381, %v1185
        %v1414 = vsel %vm1286, %v1382, %v1187
        %v1415 = vpack.c.bf16 %v1288, %v1287
        %v1416 = vpack.c.bf16 %v1384, %v1383
        %v1417 = vpack.c.bf16 %v488, %v486
        %v1418 = vpack.c.bf16 %v1290, %v1289
        %v1419 = vpack.c.bf16 %v1386, %v1385
        %v1420 = vpack.c.bf16 %v493, %v491
        %v1421 = vpack.c.bf16 %v1292, %v1291
        %v1422 = vpack.c.bf16 %v1388, %v1387
        %v1423 = vpack.c.bf16 %v498, %v496
        %v1424 = vpack.c.bf16 %v1294, %v1293
        %v1425 = vpack.c.bf16 %v1390, %v1389
        %v1426 = vpack.c.bf16 %v503, %v501
        %v1427 = vpack.c.bf16 %v1296, %v1295
        %v1428 = vpack.c.bf16 %v1392, %v1391
        %v1429 = vpack.c.bf16 %v508, %v506
        %v1430 = vpack.c.bf16 %v1298, %v1297
        %v1431 = vpack.c.bf16 %v1394, %v1393
        %v1432 = vpack.c.bf16 %v513, %v511
        %v1433 = vpack.c.bf16 %v1300, %v1299
        %v1434 = vpack.c.bf16 %v1396, %v1395
        %v1435 = vpack.c.bf16 %v518, %v516
        %v1436 = vpack.c.bf16 %v1302, %v1301
        %v1437 = vpack.c.bf16 %v1398, %v1397
        %v1438 = vpack.c.bf16 %v523, %v521
        %v1439 = vpack.c.bf16 %v1304, %v1303
        %v1440 = vpack.c.bf16 %v1400, %v1399
        %v1441 = vpack.c.bf16 %v528, %v526
        %v1442 = vpack.c.bf16 %v1306, %v1305
        %v1443 = vpack.c.bf16 %v1402, %v1401
        %v1444 = vpack.c.bf16 %v533, %v531
        %v1445 = vpack.c.bf16 %v1308, %v1307
        %v1446 = vpack.c.bf16 %v1404, %v1403
        %v1447 = vpack.c.bf16 %v538, %v536
        %v1448 = vpack.c.bf16 %v1310, %v1309
        %v1449 = vpack.c.bf16 %v1406, %v1405
        %v1450 = vpack.c.bf16 %v543, %v541
        %v1451 = vpack.c.bf16 %v1312, %v1311
        %v1452 = vpack.c.bf16 %v1408, %v1407
        %v1453 = vpack.c.bf16 %v548, %v546
        %v1454 = vpack.c.bf16 %v1314, %v1313
        %v1455 = vpack.c.bf16 %v1410, %v1409
        %v1456 = vpack.c.bf16 %v553, %v551
        %v1457 = vpack.c.bf16 %v1316, %v1315
        %v1458 = vpack.c.bf16 %v1412, %v1411
        %v1459 = vpack.c.bf16 %v598, %v596
        %v1460 = vpack.c.bf16 %v1318, %v1317
        %v1461 = vpack.c.bf16 %v1414, %v1413
        %v1462 = vpack.c.bf16 %v611, %v609
        %v1463 = vld [vmem:[#allocation5] sm:$0xf]
        %v1464 = vld [vmem:[#allocation5 + $0x4] sm:$0xf]
        %v1465 = vld [vmem:[#allocation5 + $0x8] sm:$0xf]
        %v1466 = vld [vmem:[#allocation5 + $0xc] sm:$0xf]
        %v1467 = vld [vmem:[#allocation5 + $0x10] sm:$0xf]
        %v1468 = vld [vmem:[#allocation5 + $0x14] sm:$0xf]
        %v1469 = vld [vmem:[#allocation5 + $0x18] sm:$0xf]
        %v1470 = vld [vmem:[#allocation5 + $0x1c] sm:$0xf]
        %v1471 = vld [vmem:[#allocation5 + $0x20] sm:$0xf]
        %v1472 = vld [vmem:[#allocation5 + $0x24] sm:$0xf]
        %v1473 = vld [vmem:[#allocation5 + $0x28] sm:$0xf]
        %v1474 = vld [vmem:[#allocation5 + $0x2c] sm:$0xf]
        %v1475 = vld [vmem:[#allocation5 + $0x30] sm:$0xf]
        %v1476 = vld [vmem:[#allocation5 + $0x34] sm:$0xf]
        %v1477 = vld [vmem:[#allocation5 + $0x38] sm:$0xf]
        %v1478 = vld [vmem:[#allocation5 + $0x3c] sm:$0xf]
        %v1479 = vld [vmem:[#allocation5 + $0x40] sm:$0xf]
        %v1480 = vld [vmem:[#allocation5 + $0x44] sm:$0xf]
        %v1481 = vld [vmem:[#allocation5 + $0x48] sm:$0xf]
        %v1482 = vld [vmem:[#allocation5 + $0x4c] sm:$0xf]
        %v1483 = vld [vmem:[#allocation5 + $0x50] sm:$0xf]
        %v1484 = vld [vmem:[#allocation5 + $0x54] sm:$0xf]
        %v1485 = vld [vmem:[#allocation5 + $0x58] sm:$0xf]
        %v1486 = vld [vmem:[#allocation5 + $0x5c] sm:$0xf]
        %v1487 = vld [vmem:[#allocation5 + $0x60] sm:$0xf]
        %v1488 = vld [vmem:[#allocation5 + $0x64] sm:$0xf]
        %v1489 = vld [vmem:[#allocation5 + $0x68] sm:$0xf]
        %v1490 = vld [vmem:[#allocation5 + $0x6c] sm:$0xf]
        %v1491 = vld [vmem:[#allocation5 + $0x70] sm:$0xf]
        %v1492 = vld [vmem:[#allocation5 + $0x74] sm:$0xf]
        %v1493 = vld [vmem:[#allocation5 + $0x78] sm:$0xf]
        %v1494 = vld [vmem:[#allocation5 + $0x7c] sm:$0xf]
        %v1495 = vld [vmem:[#allocation5 + $0x80] sm:$0xf]
        %v1496 = vld [vmem:[#allocation5 + $0x84] sm:$0xf]
        %v1497 = vld [vmem:[#allocation5 + $0x88] sm:$0xf]
        %v1498 = vld [vmem:[#allocation5 + $0x8c] sm:$0xf]
        %v1499 = vld [vmem:[#allocation7] sm:$0x1]
        %v1501 = vlaneseq
        %v1502 = vshrl.u32 %v1501, 7
        %v1503 = vsub.s32 0, %v1502
        %v1504 = vrot.slane %v1499, %v1503
        %v1542 = vunpack.c.l.b16 %v1463
        %v1543 = vunpack.c.l.b16 %v1464
        %v1544 = vunpack.c.l.b16 %v1465
        %v1545 = vunpack.c.l.b16 %v1466
        %v1546 = vunpack.c.l.b16 %v1467
        %v1547 = vunpack.c.l.b16 %v1468
        %v1548 = vunpack.c.l.b16 %v1469
        %v1549 = vunpack.c.l.b16 %v1470
        %v1550 = vunpack.c.l.b16 %v1471
        %v1551 = vunpack.c.l.b16 %v1472
        %v1552 = vunpack.c.l.b16 %v1473
        %v1553 = vunpack.c.l.b16 %v1474
        %v1554 = vunpack.c.l.b16 %v1475
        %v1555 = vunpack.c.l.b16 %v1476
        %v1556 = vunpack.c.l.b16 %v1477
        %v1557 = vunpack.c.l.b16 %v1478
        %v1558 = vunpack.c.l.b16 %v1479
        %v1559 = vunpack.c.l.b16 %v1480
        %v1560 = vunpack.c.l.b16 %v1481
        %v1561 = vunpack.c.l.b16 %v1482
        %v1562 = vunpack.c.l.b16 %v1483
        %v1563 = vunpack.c.l.b16 %v1484
        %v1564 = vunpack.c.l.b16 %v1485
        %v1565 = vunpack.c.l.b16 %v1486
        %v1566 = vunpack.c.l.b16 %v1487
        %v1567 = vunpack.c.l.b16 %v1488
        %v1568 = vunpack.c.l.b16 %v1489
        %v1569 = vunpack.c.l.b16 %v1490
        %v1570 = vunpack.c.l.b16 %v1491
        %v1571 = vunpack.c.l.b16 %v1492
        %v1572 = vunpack.c.l.b16 %v1493
        %v1573 = vunpack.c.l.b16 %v1494
        %v1574 = vunpack.c.l.b16 %v1495
        %v1575 = vunpack.c.l.b16 %v1496
        %v1576 = vunpack.c.l.b16 %v1497
        %v1577 = vunpack.c.l.b16 %v1498
        %v1578 = vpack.c.b16 %v1543, %v1542
        %v1579 = vpack.c.b16 %v1545, %v1544
        %v1580 = vpack.c.b16 %v1547, %v1546
        %v1581 = vpack.c.b16 %v1549, %v1548
        %v1582 = vpack.c.b16 %v1551, %v1550
        %v1583 = vpack.c.b16 %v1553, %v1552
        %v1584 = vpack.c.b16 %v1555, %v1554
        %v1585 = vpack.c.b16 %v1557, %v1556
        %v1586 = vpack.c.b16 %v1559, %v1558
        %v1587 = vpack.c.b16 %v1561, %v1560
        %v1588 = vpack.c.b16 %v1563, %v1562
        %v1589 = vpack.c.b16 %v1565, %v1564
        %v1590 = vpack.c.b16 %v1567, %v1566
        %v1591 = vpack.c.b16 %v1569, %v1568
        %v1592 = vpack.c.b16 %v1571, %v1570
        %v1593 = vpack.c.b16 %v1573, %v1572
        %v1594 = vpack.c.b16 %v1575, %v1574
        %v1595 = vpack.c.b16 %v1577, %v1576
        %v1615 = vsel %vm1220, %v1417, 0
        %v1618 = vsel %vm1220, %v1420, 0
        %v1621 = vsel %vm1220, %v1423, 0
        %v1624 = vsel %vm1220, %v1426, 0
        %v1627 = vsel %vm1220, %v1429, 0
        %v1630 = vsel %vm1220, %v1432, 0
        %v1633 = vsel %vm1220, %v1435, 0
        %v1636 = vsel %vm1220, %v1438, 0
        %v1639 = vsel %vm1220, %v1441, 0
        %v1642 = vsel %vm1220, %v1444, 0
        %v1645 = vsel %vm1220, %v1447, 0
        %v1648 = vsel %vm1220, %v1450, 0
        %v1651 = vsel %vm1220, %v1453, 0
        %v1654 = vsel %vm1220, %v1456, 0
        %v1657 = vsel %vm1220, %v1459, 0
        %v1660 = vsel %vm1220, %v1462, 0
        %1662 = vmatprep.subr.bf16.mxu0 0
        %1663 = vmatpush1.bf16.msra.mxu0 %v1578
        %1664 = vmatprep.subr.bf16.mxu0 0
        %1665 = vmatpush1.bf16.msra.mxu0 %v1579
        %1666 = vmatprep.subr.bf16.mxu0 0
        %1667 = vmatpush1.bf16.msra.mxu0 %v1580
        %1668 = vmatprep.subr.bf16.mxu0 0
        %1669 = vmatpush1.bf16.msra.mxu0 %v1581
        %1670 = vmatprep.subr.bf16.mxu0 0
        %1671 = vmatpush1.bf16.msra.mxu0 %v1582
        %1672 = vmatprep.subr.bf16.mxu0 0
        %1673 = vmatpush1.bf16.msra.mxu0 %v1583
        %1674 = vmatprep.subr.bf16.mxu0 0
        %1675 = vmatpush1.bf16.msra.mxu0 %v1584
        %1676 = vmatprep.subr.bf16.mxu0 0
        %1677 = vmatpush1.bf16.msra.mxu0 %v1585
        %1678 = vmatprep.subr.bf16.mxu0 0
        %1679 = vmatpush1.bf16.msra.mxu0 %v1586
        %1680 = vmatprep.subr.bf16.mxu0 0
        %1681 = vmatpush1.bf16.msra.mxu0 %v1587
        %1682 = vmatprep.subr.bf16.mxu0 0
        %1683 = vmatpush1.bf16.msra.mxu0 %v1588
        %1684 = vmatprep.subr.bf16.mxu0 0
        %1685 = vmatpush1.bf16.msra.mxu0 %v1589
        %1686 = vmatprep.subr.bf16.mxu0 0
        %1687 = vmatpush1.bf16.msra.mxu0 %v1590
        %1688 = vmatprep.subr.bf16.mxu0 0
        %1689 = vmatpush1.bf16.msra.mxu0 %v1591
        %1690 = vmatprep.subr.bf16.mxu0 0
        %1691 = vmatpush1.bf16.msra.mxu0 %v1592
        %1692 = vmatprep.subr.bf16.mxu0 0
        %1693 = vmatpush1.bf16.msra.mxu0 %v1593
        %1694 = vmatprep.mubr.bf16.mxu0 %v1416
        %1695 = vmatmul.mubr.bf16.gmra.mrb[0].mxu0 %v1415
        %v1696 = vpop.f32.mrb[0].mxu0
        %v1697 = vadd.f32 %v1504, %v1696
        %v1698 = vpop.f32.mrb[0].mxu0
        %v1699 = vpop.f32.mrb[0].mxu0
        %v1700 = vadd.f32 %v1504, %v1699
        %v1701 = vpop.f32.mrb[0].mxu0
        %1702 = vmatprep.mubr.bf16.mxu0 %v1419
        %1703 = vmatmul.mubr.bf16.gmra.mrb[0].mxu0 %v1418
        %v1704 = vpop.f32.mrb[0].mxu0
        %v1705 = vadd.f32 %v1504, %v1704
        %v1706 = vpop.f32.mrb[0].mxu0
        %v1707 = vpop.f32.mrb[0].mxu0
        %v1708 = vadd.f32 %v1504, %v1707
        %v1709 = vpop.f32.mrb[0].mxu0
        %1710 = vmatprep.mubr.bf16.mxu0 %v1422
        %1711 = vmatmul.mubr.bf16.gmra.mrb[0].mxu0 %v1421
        %v1712 = vpop.f32.mrb[0].mxu0
        %v1713 = vadd.f32 %v1504, %v1712
        %v1714 = vpop.f32.mrb[0].mxu0
        %v1715 = vpop.f32.mrb[0].mxu0
        %v1716 = vadd.f32 %v1504, %v1715
        %v1717 = vpop.f32.mrb[0].mxu0
        %1718 = vmatprep.mubr.bf16.mxu0 %v1425
        %1719 = vmatmul.mubr.bf16.gmra.mrb[0].mxu0 %v1424
        %v1720 = vpop.f32.mrb[0].mxu0
        %v1721 = vadd.f32 %v1504, %v1720
        %v1722 = vpop.f32.mrb[0].mxu0
        %v1723 = vpop.f32.mrb[0].mxu0
        %v1724 = vadd.f32 %v1504, %v1723
        %v1725 = vpop.f32.mrb[0].mxu0
        %1726 = vmatprep.mubr.bf16.mxu0 %v1428
        %1727 = vmatmul.mubr.bf16.gmra.mrb[0].mxu0 %v1427
        %v1728 = vpop.f32.mrb[0].mxu0
        %v1729 = vadd.f32 %v1504, %v1728
        %v1730 = vpop.f32.mrb[0].mxu0
        %v1731 = vpop.f32.mrb[0].mxu0
        %v1732 = vadd.f32 %v1504, %v1731
        %v1733 = vpop.f32.mrb[0].mxu0
        %1734 = vmatprep.mubr.bf16.mxu0 %v1431
        %1735 = vmatmul.mubr.bf16.gmra.mrb[0].mxu0 %v1430
        %v1736 = vpop.f32.mrb[0].mxu0
        %v1737 = vadd.f32 %v1504, %v1736
        %v1738 = vpop.f32.mrb[0].mxu0
        %v1739 = vpop.f32.mrb[0].mxu0
        %v1740 = vadd.f32 %v1504, %v1739
        %v1741 = vpop.f32.mrb[0].mxu0
        %1742 = vmatprep.mubr.bf16.mxu0 %v1434
        %1743 = vmatmul.mubr.bf16.gmra.mrb[0].mxu0 %v1433
        %v1744 = vpop.f32.mrb[0].mxu0
        %v1745 = vadd.f32 %v1504, %v1744
        %v1746 = vpop.f32.mrb[0].mxu0
        %v1747 = vpop.f32.mrb[0].mxu0
        %v1748 = vadd.f32 %v1504, %v1747
        %v1749 = vpop.f32.mrb[0].mxu0
        %1750 = vmatprep.mubr.bf16.mxu0 %v1437
        %1751 = vmatmul.mubr.bf16.gmra.mrb[0].mxu0 %v1436
        %v1752 = vpop.f32.mrb[0].mxu0
        %v1753 = vadd.f32 %v1504, %v1752
        %v1754 = vpop.f32.mrb[0].mxu0
        %v1755 = vpop.f32.mrb[0].mxu0
        %v1756 = vadd.f32 %v1504, %v1755
        %v1757 = vpop.f32.mrb[0].mxu0
        %1758 = vmatprep.mubr.bf16.mxu0 %v1440
        %1759 = vmatmul.mubr.bf16.gmra.mrb[0].mxu0 %v1439
        %v1760 = vpop.f32.mrb[0].mxu0
        %v1761 = vadd.f32 %v1504, %v1760
        %v1762 = vpop.f32.mrb[0].mxu0
        %v1763 = vpop.f32.mrb[0].mxu0
        %v1764 = vadd.f32 %v1504, %v1763
        %v1765 = vpop.f32.mrb[0].mxu0
        %1766 = vmatprep.mubr.bf16.mxu0 %v1443
        %1767 = vmatmul.mubr.bf16.gmra.mrb[0].mxu0 %v1442
        %v1768 = vpop.f32.mrb[0].mxu0
        %v1769 = vadd.f32 %v1504, %v1768
        %v1770 = vpop.f32.mrb[0].mxu0
        %v1771 = vpop.f32.mrb[0].mxu0
        %v1772 = vadd.f32 %v1504, %v1771
        %v1773 = vpop.f32.mrb[0].mxu0
        %1774 = vmatprep.mubr.bf16.mxu0 %v1446
        %1775 = vmatmul.mubr.bf16.gmra.mrb[0].mxu0 %v1445
        %v1776 = vpop.f32.mrb[0].mxu0
        %v1777 = vadd.f32 %v1504, %v1776
        %v1778 = vpop.f32.mrb[0].mxu0
        %v1779 = vpop.f32.mrb[0].mxu0
        %v1780 = vadd.f32 %v1504, %v1779
        %v1781 = vpop.f32.mrb[0].mxu0
        %1782 = vmatprep.mubr.bf16.mxu0 %v1449
        %1783 = vmatmul.mubr.bf16.gmra.mrb[0].mxu0 %v1448
        %v1784 = vpop.f32.mrb[0].mxu0
        %v1785 = vadd.f32 %v1504, %v1784
        %v1786 = vpop.f32.mrb[0].mxu0
        %v1787 = vpop.f32.mrb[0].mxu0
        %v1788 = vadd.f32 %v1504, %v1787
        %v1789 = vpop.f32.mrb[0].mxu0
        %1790 = vmatprep.mubr.bf16.mxu0 %v1452
        %1791 = vmatmul.mubr.bf16.gmra.mrb[0].mxu0 %v1451
        %v1792 = vpop.f32.mrb[0].mxu0
        %v1793 = vadd.f32 %v1504, %v1792
        %v1794 = vpop.f32.mrb[0].mxu0
        %v1795 = vpop.f32.mrb[0].mxu0
        %v1796 = vadd.f32 %v1504, %v1795
        %v1797 = vpop.f32.mrb[0].mxu0
        %1798 = vmatprep.mubr.bf16.mxu0 %v1455
        %1799 = vmatmul.mubr.bf16.gmra.mrb[0].mxu0 %v1454
        %v1800 = vpop.f32.mrb[0].mxu0
        %v1801 = vadd.f32 %v1504, %v1800
        %v1802 = vpop.f32.mrb[0].mxu0
        %v1803 = vpop.f32.mrb[0].mxu0
        %v1804 = vadd.f32 %v1504, %v1803
        %v1805 = vpop.f32.mrb[0].mxu0
        %1806 = vmatprep.mubr.bf16.mxu0 %v1458
        %1807 = vmatmul.mubr.bf16.gmra.mrb[0].mxu0 %v1457
        %v1808 = vpop.f32.mrb[0].mxu0
        %v1809 = vadd.f32 %v1504, %v1808
        %v1810 = vpop.f32.mrb[0].mxu0
        %v1811 = vpop.f32.mrb[0].mxu0
        %v1812 = vadd.f32 %v1504, %v1811
        %v1813 = vpop.f32.mrb[0].mxu0
        %1814 = vmatprep.mubr.bf16.mxu0 %v1461
        %1815 = vmatmul.mubr.bf16.gmra.mrb[0].mxu0 %v1460
        %v1816 = vpop.f32.mrb[0].mxu0
        %v1817 = vadd.f32 %v1504, %v1816
        %v1818 = vpop.f32.mrb[0].mxu0
        %v1819 = vpop.f32.mrb[0].mxu0
        %v1820 = vadd.f32 %v1504, %v1819
        %v1821 = vpop.f32.mrb[0].mxu0
        %1822 = vdwg.mxu0
        %1823 = vmatprep.subr.bf16.mxu0 0
        %1824 = vmatpush1.bf16.msra.mxu0 %v1594
        %1825 = vmatprep.subr.bf16.mxu0 0
        %1826 = vmatpush1.bf16.msra.mxu0 %v1595
        %1827 = vmatprep.subr.bf16.mxu0 0
        %1828 = vmatpush1.bf16.msra.mxu0 0
        %1829 = vmatprep.subr.bf16.mxu0 0
        %1830 = vmatpush1.bf16.msra.mxu0 0
        %1831 = vmatprep.subr.bf16.mxu0 0
        %1832 = vmatpush1.bf16.msra.mxu0 0
        %1833 = vmatprep.subr.bf16.mxu0 0
        %1834 = vmatpush1.bf16.msra.mxu0 0
        %1835 = vmatprep.subr.bf16.mxu0 0
        %1836 = vmatpush1.bf16.msra.mxu0 0
        %1837 = vmatprep.subr.bf16.mxu0 0
        %1838 = vmatpush1.bf16.msra.mxu0 0
        %1839 = vmatprep.subr.bf16.mxu0 0
        %1840 = vmatpush1.bf16.msra.mxu0 0
        %1841 = vmatprep.subr.bf16.mxu0 0
        %1842 = vmatpush1.bf16.msra.mxu0 0
        %1843 = vmatprep.subr.bf16.mxu0 0
        %1844 = vmatpush1.bf16.msra.mxu0 0
        %1845 = vmatprep.subr.bf16.mxu0 0
        %1846 = vmatpush1.bf16.msra.mxu0 0
        %1847 = vmatprep.subr.bf16.mxu0 0
        %1848 = vmatpush1.bf16.msra.mxu0 0
        %1849 = vmatprep.subr.bf16.mxu0 0
        %1850 = vmatpush1.bf16.msra.mxu0 0
        %1851 = vmatprep.subr.bf16.mxu0 0
        %1852 = vmatpush1.bf16.msra.mxu0 0
        %1853 = vmatprep.subr.bf16.mxu0 0
        %1854 = vmatpush1.bf16.msra.mxu0 0
        %1855 = vmatprep.mubr.bf16.mxu0 0
        %1856 = vmatmul.mubr.bf16.gmra.mrb[0].mxu0 %v1615
        %v1857 = vpop.f32.mrb[0].mxu0
        %v1858 = vadd.f32 %v1697, %v1857
        %v1859 = vpop.f32.mrb[0].mxu0
        %v1860 = vpop.f32.mrb[0].mxu0
        %v1861 = vadd.f32 %v1700, %v1860
        %v1862 = vpop.f32.mrb[0].mxu0
        %1863 = vmatprep.mubr.bf16.mxu0 0
        %1864 = vmatmul.mubr.bf16.gmra.mrb[0].mxu0 %v1618
        %v1865 = vpop.f32.mrb[0].mxu0
        %v1866 = vadd.f32 %v1705, %v1865
        %v1867 = vpop.f32.mrb[0].mxu0
        %v1868 = vpop.f32.mrb[0].mxu0
        %v1869 = vadd.f32 %v1708, %v1868
        %v1870 = vpop.f32.mrb[0].mxu0
        %1871 = vmatprep.mubr.bf16.mxu0 0
        %1872 = vmatmul.mubr.bf16.gmra.mrb[0].mxu0 %v1621
        %v1873 = vpop.f32.mrb[0].mxu0
        %v1874 = vadd.f32 %v1713, %v1873
        %v1875 = vpop.f32.mrb[0].mxu0
        %v1876 = vpop.f32.mrb[0].mxu0
        %v1877 = vadd.f32 %v1716, %v1876
        %v1878 = vpop.f32.mrb[0].mxu0
        %1879 = vmatprep.mubr.bf16.mxu0 0
        %1880 = vmatmul.mubr.bf16.gmra.mrb[0].mxu0 %v1624
        %v1881 = vpop.f32.mrb[0].mxu0
        %v1882 = vadd.f32 %v1721, %v1881
        %v1883 = vpop.f32.mrb[0].mxu0
        %v1884 = vpop.f32.mrb[0].mxu0
        %v1885 = vadd.f32 %v1724, %v1884
        %v1886 = vpop.f32.mrb[0].mxu0
        %1887 = vmatprep.mubr.bf16.mxu0 0
        %1888 = vmatmul.mubr.bf16.gmra.mrb[0].mxu0 %v1627
        %v1889 = vpop.f32.mrb[0].mxu0
        %v1890 = vadd.f32 %v1729, %v1889
        %v1891 = vpop.f32.mrb[0].mxu0
        %v1892 = vpop.f32.mrb[0].mxu0
        %v1893 = vadd.f32 %v1732, %v1892
        %v1894 = vpop.f32.mrb[0].mxu0
        %1895 = vmatprep.mubr.bf16.mxu0 0
        %1896 = vmatmul.mubr.bf16.gmra.mrb[0].mxu0 %v1630
        %v1897 = vpop.f32.mrb[0].mxu0
        %v1898 = vadd.f32 %v1737, %v1897
        %v1899 = vpop.f32.mrb[0].mxu0
        %v1900 = vpop.f32.mrb[0].mxu0
        %v1901 = vadd.f32 %v1740, %v1900
        %v1902 = vpop.f32.mrb[0].mxu0
        %1903 = vmatprep.mubr.bf16.mxu0 0
        %1904 = vmatmul.mubr.bf16.gmra.mrb[0].mxu0 %v1633
        %v1905 = vpop.f32.mrb[0].mxu0
        %v1906 = vadd.f32 %v1745, %v1905
        %v1907 = vpop.f32.mrb[0].mxu0
        %v1908 = vpop.f32.mrb[0].mxu0
        %v1909 = vadd.f32 %v1748, %v1908
        %v1910 = vpop.f32.mrb[0].mxu0
        %1911 = vmatprep.mubr.bf16.mxu0 0
        %1912 = vmatmul.mubr.bf16.gmra.mrb[0].mxu0 %v1636
        %v1913 = vpop.f32.mrb[0].mxu0
        %v1914 = vadd.f32 %v1753, %v1913
        %v1915 = vpop.f32.mrb[0].mxu0
        %v1916 = vpop.f32.mrb[0].mxu0
        %v1917 = vadd.f32 %v1756, %v1916
        %v1918 = vpop.f32.mrb[0].mxu0
        %1919 = vmatprep.mubr.bf16.mxu0 0
        %1920 = vmatmul.mubr.bf16.gmra.mrb[0].mxu0 %v1639
        %v1921 = vpop.f32.mrb[0].mxu0
        %v1922 = vadd.f32 %v1761, %v1921
        %v1923 = vpop.f32.mrb[0].mxu0
        %v1924 = vpop.f32.mrb[0].mxu0
        %v1925 = vadd.f32 %v1764, %v1924
        %v1926 = vpop.f32.mrb[0].mxu0
        %1927 = vmatprep.mubr.bf16.mxu0 0
        %1928 = vmatmul.mubr.bf16.gmra.mrb[0].mxu0 %v1642
        %v1929 = vpop.f32.mrb[0].mxu0
        %v1930 = vadd.f32 %v1769, %v1929
        %v1931 = vpop.f32.mrb[0].mxu0
        %v1932 = vpop.f32.mrb[0].mxu0
        %v1933 = vadd.f32 %v1772, %v1932
        %v1934 = vpop.f32.mrb[0].mxu0
        %1935 = vmatprep.mubr.bf16.mxu0 0
        %1936 = vmatmul.mubr.bf16.gmra.mrb[0].mxu0 %v1645
        %v1937 = vpop.f32.mrb[0].mxu0
        %v1938 = vadd.f32 %v1777, %v1937
        %v1939 = vpop.f32.mrb[0].mxu0
        %v1940 = vpop.f32.mrb[0].mxu0
        %v1941 = vadd.f32 %v1780, %v1940
        %v1942 = vpop.f32.mrb[0].mxu0
        %1943 = vmatprep.mubr.bf16.mxu0 0
        %1944 = vmatmul.mubr.bf16.gmra.mrb[0].mxu0 %v1648
        %v1945 = vpop.f32.mrb[0].mxu0
        %v1946 = vadd.f32 %v1785, %v1945
        %v1947 = vpop.f32.mrb[0].mxu0
        %v1948 = vpop.f32.mrb[0].mxu0
        %v1949 = vadd.f32 %v1788, %v1948
        %v1950 = vpop.f32.mrb[0].mxu0
        %1951 = vmatprep.mubr.bf16.mxu0 0
        %1952 = vmatmul.mubr.bf16.gmra.mrb[0].mxu0 %v1651
        %v1953 = vpop.f32.mrb[0].mxu0
        %v1954 = vadd.f32 %v1793, %v1953
        %v1955 = vpop.f32.mrb[0].mxu0
        %v1956 = vpop.f32.mrb[0].mxu0
        %v1957 = vadd.f32 %v1796, %v1956
        %v1958 = vpop.f32.mrb[0].mxu0
        %1959 = vmatprep.mubr.bf16.mxu0 0
        %1960 = vmatmul.mubr.bf16.gmra.mrb[0].mxu0 %v1654
        %v1961 = vpop.f32.mrb[0].mxu0
        %v1962 = vadd.f32 %v1801, %v1961
        %v1963 = vpop.f32.mrb[0].mxu0
        %v1964 = vpop.f32.mrb[0].mxu0
        %v1965 = vadd.f32 %v1804, %v1964
        %v1966 = vpop.f32.mrb[0].mxu0
        %1967 = vmatprep.mubr.bf16.mxu0 0
        %1968 = vmatmul.mubr.bf16.gmra.mrb[0].mxu0 %v1657
        %v1969 = vpop.f32.mrb[0].mxu0
        %v1970 = vadd.f32 %v1809, %v1969
        %v1971 = vpop.f32.mrb[0].mxu0
        %v1972 = vpop.f32.mrb[0].mxu0
        %v1973 = vadd.f32 %v1812, %v1972
        %v1974 = vpop.f32.mrb[0].mxu0
        %1975 = vmatprep.mubr.bf16.mxu0 0
        %1976 = vmatmul.mubr.bf16.gmra.mrb[0].mxu0 %v1660
        %v1977 = vpop.f32.mrb[0].mxu0
        %v1978 = vadd.f32 %v1817, %v1977
        %v1979 = vpop.f32.mrb[0].mxu0
        %v1980 = vpop.f32.mrb[0].mxu0
        %v1981 = vadd.f32 %v1820, %v1980
        %v1982 = vpop.f32.mrb[0].mxu0
        %1983 = vdwg.mxu0
        %v1984 = vpack.c.bf16 %v1861, %v1858
        %v1985 = vpack.c.bf16 %v1869, %v1866
        %v1986 = vpack.c.bf16 %v1877, %v1874
        %v1987 = vpack.c.bf16 %v1885, %v1882
        %v1988 = vpack.c.bf16 %v1893, %v1890
        %v1989 = vpack.c.bf16 %v1901, %v1898
        %v1990 = vpack.c.bf16 %v1909, %v1906
        %v1991 = vpack.c.bf16 %v1917, %v1914
        %v1992 = vpack.c.bf16 %v1925, %v1922
        %v1993 = vpack.c.bf16 %v1933, %v1930
        %v1994 = vpack.c.bf16 %v1941, %v1938
        %v1995 = vpack.c.bf16 %v1949, %v1946
        %v1996 = vpack.c.bf16 %v1957, %v1954
        %v1997 = vpack.c.bf16 %v1965, %v1962
        %v1998 = vpack.c.bf16 %v1973, %v1970
        %v1999 = vpack.c.bf16 %v1981, %v1978
        %v2016 = vunpack.c.l.b16 %v1984
        %v2017 = vunpack.c.h.b16 %v1984
        %v2018 = vunpack.c.l.b16 %v1985
        %v2019 = vunpack.c.h.b16 %v1985
        %v2020 = vunpack.c.l.b16 %v1986
        %v2021 = vunpack.c.h.b16 %v1986
        %v2022 = vunpack.c.l.b16 %v1987
        %v2023 = vunpack.c.h.b16 %v1987
        %v2024 = vunpack.c.l.b16 %v1988
        %v2025 = vunpack.c.h.b16 %v1988
        %v2026 = vunpack.c.l.b16 %v1989
        %v2027 = vunpack.c.h.b16 %v1989
        %v2028 = vunpack.c.l.b16 %v1990
        %v2029 = vunpack.c.h.b16 %v1990
        %v2030 = vunpack.c.l.b16 %v1991
        %v2031 = vunpack.c.h.b16 %v1991
        %v2032 = vunpack.c.l.b16 %v1992
        %v2033 = vunpack.c.h.b16 %v1992
        %v2034 = vunpack.c.l.b16 %v1993
        %v2035 = vunpack.c.h.b16 %v1993
        %v2036 = vunpack.c.l.b16 %v1994
        %v2037 = vunpack.c.h.b16 %v1994
        %v2038 = vunpack.c.l.b16 %v1995
        %v2039 = vunpack.c.h.b16 %v1995
        %v2040 = vunpack.c.l.b16 %v1996
        %v2041 = vunpack.c.h.b16 %v1996
        %v2042 = vunpack.c.l.b16 %v1997
        %v2043 = vunpack.c.h.b16 %v1997
        %v2044 = vunpack.c.l.b16 %v1998
        %v2045 = vunpack.c.h.b16 %v1998
        %v2046 = vunpack.c.l.b16 %v1999
        %v2047 = vunpack.c.h.b16 %v1999
        %v2048 = vpack.c.b16 %v2016, %v2016
        %v2049 = vpack.c.b16 %v2017, %v2017
        %v2050 = vpack.c.b16 %v2018, %v2018
        %v2051 = vpack.c.b16 %v2019, %v2019
        %v2052 = vpack.c.b16 %v2020, %v2020
        %v2053 = vpack.c.b16 %v2021, %v2021
        %v2054 = vpack.c.b16 %v2022, %v2022
        %v2055 = vpack.c.b16 %v2023, %v2023
        %v2056 = vpack.c.b16 %v2024, %v2024
        %v2057 = vpack.c.b16 %v2025, %v2025
        %v2058 = vpack.c.b16 %v2026, %v2026
        %v2059 = vpack.c.b16 %v2027, %v2027
        %v2060 = vpack.c.b16 %v2028, %v2028
        %v2061 = vpack.c.b16 %v2029, %v2029
        %v2062 = vpack.c.b16 %v2030, %v2030
        %v2063 = vpack.c.b16 %v2031, %v2031
        %v2064 = vpack.c.b16 %v2032, %v2032
        %v2065 = vpack.c.b16 %v2033, %v2033
        %v2066 = vpack.c.b16 %v2034, %v2034
        %v2067 = vpack.c.b16 %v2035, %v2035
        %v2068 = vpack.c.b16 %v2036, %v2036
        %v2069 = vpack.c.b16 %v2037, %v2037
        %v2070 = vpack.c.b16 %v2038, %v2038
        %v2071 = vpack.c.b16 %v2039, %v2039
        %v2072 = vpack.c.b16 %v2040, %v2040
        %v2073 = vpack.c.b16 %v2041, %v2041
        %v2074 = vpack.c.b16 %v2042, %v2042
        %v2075 = vpack.c.b16 %v2043, %v2043
        %v2076 = vpack.c.b16 %v2044, %v2044
        %v2077 = vpack.c.b16 %v2045, %v2045
        %v2078 = vpack.c.b16 %v2046, %v2046
        %v2079 = vpack.c.b16 %v2047, %v2047
        %vm2112 = vcmask 19456
        %2113 = vst.msk [vmem:[%s229] sm:$0xf] %vm2112, %v2048
        %2114 = vst.msk [vmem:[%s229 + $0x4] sm:$0xf] %vm2112, %v2049
        %2115 = vst.msk [vmem:[%s229 + $0x8] sm:$0xf] %vm2112, %v2050
        %2116 = vst.msk [vmem:[%s229 + $0xc] sm:$0xf] %vm2112, %v2051
        %2117 = vst.msk [vmem:[%s229 + $0x10] sm:$0xf] %vm2112, %v2052
        %2118 = vst.msk [vmem:[%s229 + $0x14] sm:$0xf] %vm2112, %v2053
        %2119 = vst.msk [vmem:[%s229 + $0x18] sm:$0xf] %vm2112, %v2054
        %2120 = vst.msk [vmem:[%s229 + $0x1c] sm:$0xf] %vm2112, %v2055
        %2121 = vst.msk [vmem:[%s229 + $0x20] sm:$0xf] %vm2112, %v2056
        %2122 = vst.msk [vmem:[%s229 + $0x24] sm:$0xf] %vm2112, %v2057
        %2123 = vst.msk [vmem:[%s229 + $0x28] sm:$0xf] %vm2112, %v2058
        %2124 = vst.msk [vmem:[%s229 + $0x2c] sm:$0xf] %vm2112, %v2059
        %2125 = vst.msk [vmem:[%s229 + $0x30] sm:$0xf] %vm2112, %v2060
        %2126 = vst.msk [vmem:[%s229 + $0x34] sm:$0xf] %vm2112, %v2061
        %2127 = vst.msk [vmem:[%s229 + $0x38] sm:$0xf] %vm2112, %v2062
        %2128 = vst.msk [vmem:[%s229 + $0x3c] sm:$0xf] %vm2112, %v2063
        %2129 = vst.msk [vmem:[%s229 + $0x40] sm:$0xf] %vm2112, %v2064
        %2130 = vst.msk [vmem:[%s229 + $0x44] sm:$0xf] %vm2112, %v2065
        %2131 = vst.msk [vmem:[%s229 + $0x48] sm:$0xf] %vm2112, %v2066
        %2132 = vst.msk [vmem:[%s229 + $0x4c] sm:$0xf] %vm2112, %v2067
        %2133 = vst.msk [vmem:[%s229 + $0x50] sm:$0xf] %vm2112, %v2068
        %2134 = vst.msk [vmem:[%s229 + $0x54] sm:$0xf] %vm2112, %v2069
        %2135 = vst.msk [vmem:[%s229 + $0x58] sm:$0xf] %vm2112, %v2070
        %2136 = vst.msk [vmem:[%s229 + $0x5c] sm:$0xf] %vm2112, %v2071
        %2137 = vst.msk [vmem:[%s229 + $0x60] sm:$0xf] %vm2112, %v2072
        %2138 = vst.msk [vmem:[%s229 + $0x64] sm:$0xf] %vm2112, %v2073
        %2139 = vst.msk [vmem:[%s229 + $0x68] sm:$0xf] %vm2112, %v2074
        %2140 = vst.msk [vmem:[%s229 + $0x6c] sm:$0xf] %vm2112, %v2075
        %2141 = vst.msk [vmem:[%s229 + $0x70] sm:$0xf] %vm2112, %v2076
        %2142 = vst.msk [vmem:[%s229 + $0x74] sm:$0xf] %vm2112, %v2077
        %2143 = vst.msk [vmem:[%s229 + $0x78] sm:$0xf] %vm2112, %v2078
        %2144 = vst.msk [vmem:[%s229 + $0x7c] sm:$0xf] %vm2112, %v2079
        %s2145 = sand.u32 %s111, 1
        %s2146 = scalar_lea.sflag [#allocation4], %s2145
        %s2147 = sand.u32 %s111, 1
        %s2148 = smul.addr %s2147, 128
        %s2149 = scalar_lea.vmem [#allocation8], %s2148
        // Predicated region
        $region45: #{net_forward.25} parent=31 // pred_check
          %p2150 = pneg %p121
        $region46: #{net_forward.25} parent=31 // pred_check_branch
          %2152 = sbr.rel (%p2150) target = $region48
        $region47: #{net_forward.25} parent=31 // pred_region
          %s2153 = smul.u32 32, %s26
          %s2155 = ssub.s32 2048, 2048
          %2156 = vsyncadd %s2146, %s2155
          %s2157 = smul.addr %s25, 32
          %s2158 = sadd.s32 %s2153, %s2157
          %s2159 = smul.addr %s2158, 64
          %s2160 = scalar_lea.hbm %s3, %s2159
          %s2161 = sshll.u32 %s2149, 4
          %s2162 = int_to_ptr.vmem [resolvable:$true] %s2161
          %2167 = dma.vmem_to_hbm [thread:$0]  %s2162, 2048, %s2160, %s2146, 64, 64, 4
        $region48: #{net_forward.25} parent=31 // pred_fallthru
          _
      $region32: #{net_forward.25} parent=5 // pred_fallthru
        _
      %p2168 = scmp.le.s32.totalorder 2, %s16
      // Predicated region
      $region49: #{net_forward.25} parent=5 // pred_check
        %p2169 = pneg %p2168
      $region50: #{net_forward.25} parent=5 // pred_check_branch
        %2171 = sbr.rel (%p2169) target = $region52
      $region51: #{net_forward.25} parent=5 // pred_region
        %s2172 = ssub.s32 %s16, 2
        // Predicated region
        $region53: #{net_forward.25} parent=51 // pred_check
          %p2173 = pneg %p127
        $region54: #{net_forward.25} parent=51 // pred_check_branch
          %2175 = sbr.rel (%p2173) target = $region56
        $region55: #{net_forward.25} parent=51 // pred_region
          %s2176 = sand.u32 %s112, 1
          %s2177 = scalar_lea.sflag [#allocation4], %s2176
          %s2178 = sand.u32 %s112, 1
          %s2179 = smul.addr %s2178, 128
          %s2180 = scalar_lea.vmem [#allocation8], %s2179
          %2181 = dma.done %s2177, 2048
        $region56: #{net_forward.25} parent=51 // pred_fallthru
          _
      $region52: #{net_forward.25} parent=5 // pred_fallthru
        _
    $region6: #{net_forward.25} parent=1 // loop_footer
      %s20 = sadd.s32 1, %s16
    $region7: #{net_forward.25} parent=1 // loop_footer_branch
      %15 = sbr.rel target = $region3
    $region8: #{net_forward.25} parent=1 // loop_exit
      _
    %2182 = vsyncpa [#allocation3], 1
    %s2183 = scalar_lea.sflag [#allocation3], 1
    %2184 = vsyncpa %s2183, 1
    %2185 = vsyncpa [#allocation6], 1
    %2186 = vsyncpa [#allocation4], 1
    %s2187 = scalar_lea.sflag [#allocation4], 1
    %2188 = vsyncpa %s2187, 1

</llo_original>
